<compile_context>
chip_gen: v7x
topology: tpu7x:2x2x1
jax: 0.10.0
libtpu: 0.0.40
codegen_flags: <defaults>
</compile_context>

<pallas_src>
import jax
import jax.numpy as jnp
from jax import lax
from jax.experimental import pallas as pl
from jax.experimental.pallas import tpu as pltpu

BN_EPS = 1e-5


# ----------------------------------------------------------------------------
# In-kernel helpers (all shapes / loop bounds are static Python values)
# ----------------------------------------------------------------------------

def _sum_c11(v):
    """(C, H, W) -> (C, 1, 1): sum over the minor (sublane, lane) dims."""
    return jnp.sum(jnp.sum(v, axis=2, keepdims=True), axis=1, keepdims=True)


def _maxpool2x2(x, h, w):
    """2x2 / stride-2 max pool of a (C, h, w) value.

    Only static slices + elementwise max + concat -> lowers cleanly in Mosaic.
    """
    hh, wh = h // 2, w // 2
    rows = []
    for i in range(hh):
        rmax = jnp.maximum(x[:, 2 * i:2 * i + 1, :], x[:, 2 * i + 1:2 * i + 2, :])
        cols = []
        for j in range(wh):
            cols.append(jnp.maximum(rmax[:, :, 2 * j:2 * j + 1],
                                    rmax[:, :, 2 * j + 1:2 * j + 2]))
        rows.append(jnp.concatenate(cols, axis=2))        # (C, 1, wh)
    return jnp.concatenate(rows, axis=1)                  # (C, hh, wh)


def _make_fused_kernel(plan, batch, height, width, nfilters):
    """Build the single fused kernel for the whole NoiseModel forward.

    Ref order (positional):
      x_ref (N, 3, H, W) VMEM
      per noise layer: noise (C, h, w) VMEM, conv_w (O, C) SMEM, conv_b (O,) SMEM
      fc_wT (F, K) VMEM, fc_b (1, K) VMEM
      out_ref (R, K) VMEM
    """

    def kernel(*refs):
        out_ref = refs[-1]
        x_ref = refs[0]
        idx = 1

        h, w = height, width
        # Per-sample activations carried as (C, h, w) values -- VMEM/vreg resident.
        acts = [x_ref[n] for n in range(batch)]

        for step in plan:
            if step[0] == "pool":
                acts = [_maxpool2x2(a, h, w) for a in acts]
                h, w = h // 2, w // 2
                continue

            _, cin, cout = step
            noise_ref, cw_ref, cb_ref = refs[idx], refs[idx + 1], refs[idx + 2]
            idx += 3

            # (1) noise add (broadcast over batch in-kernel) + ReLU
            noise = noise_ref[...]                               # (cin, h, w)
            relu = [jnp.maximum(a + noise, 0.0) for a in acts]

            # (2) BatchNorm2d training-mode batch stats, single traversal.
            s = _sum_c11(relu[0])
            sq = _sum_c11(relu[0] * relu[0])
            for n in range(1, batch):
                s = s + _sum_c11(relu[n])
                sq = sq + _sum_c11(relu[n] * relu[n])
            inv_cnt = 1.0 / float(batch * h * w)
            mean = s * inv_cnt
            var = sq * inv_cnt - mean * mean
            scale = lax.rsqrt(var + BN_EPS)                      # (cin, 1, 1)

            # (3) 1x1 conv as unrolled VPU multiply-adds over channels
            #     (scalar weights from SMEM; no degenerate MXU matmul).
            new_acts = []
            for n in range(batch):
                bn = (relu[n] - mean) * scale                    # (cin, h, w)
                outs = []
                for o in range(cout):
                    z = bn[0] * cw_ref[o, 0]
                    for c in range(1, cin):
                        z = z + bn[c] * cw_ref[o, c]
                    outs.append(z + cb_ref[o])                   # (h, w)
                new_acts.append(jnp.stack(outs, axis=0))         # (cout, h, w)
            acts = new_acts

        # (4) classifier: reproduce torch's `x.view(-1, F)` on contiguous NCHW
        #     by concatenating rows in NCHW flat order, then Linear(F, K)
        #     as F unrolled VPU multiply-adds.
        fc_wt_ref, fc_b_ref = refs[idx], refs[idx + 1]
        planes = []
        for n in range(batch):
            a = acts[n]                                          # (F, h, w)
            for c in range(nfilters):
                prow = [a[c, i:i + 1, :] for i in range(h)]      # (1, w) each
                planes.append(jnp.concatenate(prow, axis=1))     # (1, h*w)
        flat = jnp.concatenate(planes, axis=1)                   # (1, N*F*h*w) NCHW order
        nrows = (batch * nfilters * h * w) // nfilters
        feat = jnp.concatenate(
            [flat[:, r * nfilters:(r + 1) * nfilters] for r in range(nrows)],
            axis=0)                                              # (R, F)

        wt = fc_wt_ref[...]                                      # (F, K)
        logits = feat[:, 0:1] * wt[0:1, :]
        for j in range(1, nfilters):
            logits = logits + feat[:, j:j + 1] * wt[j:j + 1, :]
        out_ref[...] = logits + fc_b_ref[...]                    # (R, K)

    return kernel


# ----------------------------------------------------------------------------
# Wrapper
# ----------------------------------------------------------------------------

def noise_model_forward(params, x):
    batch, _, height, width = x.shape
    plan = params["plan"]
    nfilters, nclasses = params["nfilters"], params["nclasses"]

    n_pools = sum(1 for s in plan if s[0] == "pool")
    fh, fw = height >> n_pools, width >> n_pools
    nrows = (batch * nfilters * fh * fw) // nfilters

    vmem = pl.BlockSpec(memory_space=pltpu.MemorySpace.VMEM)
    smem = pl.BlockSpec(memory_space=pltpu.MemorySpace.SMEM)

    inputs, in_specs = [x], [vmem]
    for layer in params["layers"]:
        if layer is None:            # pool step, no parameters
            continue
        inputs += [layer["noise"], layer["w"], layer["b"]]
        in_specs += [vmem, smem, smem]
    inputs += [params["fc_wT"], params["fc_b"]]
    in_specs += [vmem, vmem]

    kernel = _make_fused_kernel(plan, batch, height, width, nfilters)
    return pl.pallas_call(
        kernel,
        out_shape=jax.ShapeDtypeStruct((nrows, nclasses), jnp.float32),
        in_specs=in_specs,
        out_specs=vmem,
        compiler_params=pltpu.CompilerParams(vmem_limit_bytes=16 * 1024 * 1024),
    )(*inputs)


# ----------------------------------------------------------------------------
# Synthetic parameter / noise-buffer init (fresh-module semantics)
# ----------------------------------------------------------------------------

def init_params(key, nblocks, nlayers, nfilters, nclasses, level, in_shape):
    N, C0, H, W = in_shape
    # torch hardcodes in_planes=3 for the first NoiseLayer
    plan = [("noise", 3, nfilters)]
    for _ in range(1, nlayers):
        for _ in range(nblocks):
            plan.append(("noise", nfilters, nfilters))
        plan.append(("pool",))

    def conv_init(k, cin, cout):
        kw, kb = jax.random.split(k)
        bound = 1.0 / float(cin) ** 0.5          # torch Conv2d fan-in bound
        wgt = jax.random.uniform(kw, (cout, cin), jnp.float32, -bound, bound)
        bias = jax.random.uniform(kb, (cout,), jnp.float32, -bound, bound)
        return wgt, bias

    layers = []
    cur_h, cur_w = H, W
    for step in plan:
        if step[0] == "pool":
            layers.append(None)
            cur_h, cur_w = cur_h // 2, cur_w // 2
            continue
        _, cin, cout = step
        key, kn, kc = jax.random.split(key, 3)
        u = jax.random.uniform(kn, (cin, cur_h, cur_w), jnp.float32)
        noise = (2.0 * u - 1.0) * level          # fixed per-layer noise buffer
        wgt, bias = conv_init(kc, cin, cout)
        layers.append({"noise": noise, "w": wgt, "b": bias})

    key, kw, kb = jax.random.split(key, 3)
    bound = 1.0 / float(nfilters) ** 0.5
    fc_w = jax.random.uniform(kw, (nclasses, nfilters), jnp.float32, -bound, bound)
    fc_b = jax.random.uniform(kb, (nclasses,), jnp.float32, -bound, bound)

    return {
        "plan": plan,
        "layers": layers,
        "fc_wT": jnp.transpose(fc_w),            # (F, K)
        "fc_b": fc_b.reshape(1, nclasses),       # (1, K)
        "nfilters": nfilters,
        "nclasses": nclasses,
    }


# ----------------------------------------------------------------------------
# Pure-JAX reference (for a numerical sanity check)
# ----------------------------------------------------------------------------

def reference_forward(params, x):
    act = x
    for step, layer in zip(params["plan"], params["layers"]):
        if step[0] == "pool":
            n, c, h, w = act.shape
            act = act.reshape(n, c, h // 2, 2, w // 2, 2).max(axis=(3, 5))
            continue
        y = act + layer["noise"][None]
        r = jnp.maximum(y, 0.0)
        mean = r.mean(axis=(0, 2, 3), keepdims=True)
        var = ((r - mean) ** 2).mean(axis=(0, 2, 3), keepdims=True)
        bn = (r - mean) * lax.rsqrt(var + BN_EPS)
        act = jnp.einsum("nchw,oc->nohw", bn, layer["w"]) + layer["b"][None, :, None, None]
    flat = act.reshape(-1, params["nfilters"])
    return flat @ params["fc_wT"] + params["fc_b"]


if __name__ == "__main__":
    # small config: nblocks=2, nlayers=2, nchannels=3, nfilters=8, nclasses=10, level=0.1
    nblocks, nlayers, nfilters, nclasses, level = 2, 2, 8, 10, 0.1
    N, H, W = 2, 8, 8

    key = jax.random.PRNGKey(0)
    key, kx = jax.random.split(key)
    x = jax.random.normal(kx, (N, 3, H, W), jnp.float32)

    params = init_params(key, nblocks, nlayers, nfilters, nclasses, level, x.shape)

    out = noise_model_forward(params, x)
    out = jax.block_until_ready(out)

    ref = reference_forward(params, x)
    assert out.shape == (N * (H // 2) * (W // 2), nclasses), out.shape
    max_err = float(jnp.max(jnp.abs(out - ref)))
    assert max_err < 1e-3, f"kernel/reference mismatch: {max_err}"
    print("KERNEL_OK")
</pallas_src>

<mosaic_0001>
module attributes {stable_mosaic.version = 11 : i64} {
  func.func @kernel(%arg0: memref<2x3x8x8xf32, #tpu.memory_space<vmem>>, %arg1: memref<3x8x8xf32, #tpu.memory_space<vmem>>, %arg2: memref<8x3xf32, #tpu.memory_space<smem>>, %arg3: memref<8xf32, #tpu.memory_space<smem>>, %arg4: memref<8x8x8xf32, #tpu.memory_space<vmem>>, %arg5: memref<8x8xf32, #tpu.memory_space<smem>>, %arg6: memref<8xf32, #tpu.memory_space<smem>>, %arg7: memref<8x8x8xf32, #tpu.memory_space<vmem>>, %arg8: memref<8x8xf32, #tpu.memory_space<smem>>, %arg9: memref<8xf32, #tpu.memory_space<smem>>, %arg10: memref<8x10xf32, #tpu.memory_space<vmem>>, %arg11: memref<1x10xf32, #tpu.memory_space<vmem>>, %arg12: memref<32x10xf32, #tpu.memory_space<vmem>>) attributes {dimension_semantics = [], scalar_prefetch = 0 : i64, scratch_operands = 0 : i64, tpu.core_type = #tpu.core_type<tc>} {
    %c0 = arith.constant 0 : index
    %c0_0 = arith.constant 0 : index
    %c0_1 = arith.constant 0 : index
    %c0_2 = arith.constant 0 : index
    %0 = vector.load %arg0[%c0, %c0_0, %c0_1, %c0_2] : memref<2x3x8x8xf32, #tpu.memory_space<vmem>>, vector<1x3x8x8xf32>
    %1 = vector.shape_cast %0 : vector<1x3x8x8xf32> to vector<3x8x8xf32>
    %c1 = arith.constant 1 : index
    %c0_3 = arith.constant 0 : index
    %c0_4 = arith.constant 0 : index
    %c0_5 = arith.constant 0 : index
    %2 = vector.load %arg0[%c1, %c0_3, %c0_4, %c0_5] : memref<2x3x8x8xf32, #tpu.memory_space<vmem>>, vector<1x3x8x8xf32>
    %3 = vector.shape_cast %2 : vector<1x3x8x8xf32> to vector<3x8x8xf32>
    %c0_6 = arith.constant 0 : index
    %c0_7 = arith.constant 0 : index
    %c0_8 = arith.constant 0 : index
    %4 = vector.load %arg1[%c0_6, %c0_7, %c0_8] : memref<3x8x8xf32, #tpu.memory_space<vmem>>, vector<3x8x8xf32>
    %5 = arith.addf %1, %4 : vector<3x8x8xf32>
    %cst = arith.constant 0.000000e+00 : f32
    %6 = vector.broadcast %cst : f32 to vector<3x8x8xf32>
    %7 = arith.maximumf %5, %6 : vector<3x8x8xf32>
    %8 = arith.addf %3, %4 : vector<3x8x8xf32>
    %cst_9 = arith.constant 0.000000e+00 : f32
    %9 = vector.broadcast %cst_9 : f32 to vector<3x8x8xf32>
    %10 = arith.maximumf %8, %9 : vector<3x8x8xf32>
    %cst_10 = arith.constant dense<0.000000e+00> : vector<3x8xf32>
    %11 = vector.multi_reduction <add>, %7, %cst_10 [2] : vector<3x8x8xf32> to vector<3x8xf32>
    %12 = vector.shape_cast %11 : vector<3x8xf32> to vector<3x8x1xf32>
    %cst_11 = arith.constant dense<0.000000e+00> : vector<3x1xf32>
    %13 = vector.multi_reduction <add>, %12, %cst_11 [1] : vector<3x8x1xf32> to vector<3x1xf32>
    %14 = vector.shape_cast %13 : vector<3x1xf32> to vector<3x1x1xf32>
    %15 = arith.mulf %7, %7 : vector<3x8x8xf32>
    %cst_12 = arith.constant dense<0.000000e+00> : vector<3x8xf32>
    %16 = vector.multi_reduction <add>, %15, %cst_12 [2] : vector<3x8x8xf32> to vector<3x8xf32>
    %17 = vector.shape_cast %16 : vector<3x8xf32> to vector<3x8x1xf32>
    %cst_13 = arith.constant dense<0.000000e+00> : vector<3x1xf32>
    %18 = vector.multi_reduction <add>, %17, %cst_13 [1] : vector<3x8x1xf32> to vector<3x1xf32>
    %19 = vector.shape_cast %18 : vector<3x1xf32> to vector<3x1x1xf32>
    %cst_14 = arith.constant dense<0.000000e+00> : vector<3x8xf32>
    %20 = vector.multi_reduction <add>, %10, %cst_14 [2] : vector<3x8x8xf32> to vector<3x8xf32>
    %21 = vector.shape_cast %20 : vector<3x8xf32> to vector<3x8x1xf32>
    %cst_15 = arith.constant dense<0.000000e+00> : vector<3x1xf32>
    %22 = vector.multi_reduction <add>, %21, %cst_15 [1] : vector<3x8x1xf32> to vector<3x1xf32>
    %23 = vector.shape_cast %22 : vector<3x1xf32> to vector<3x1x1xf32>
    %24 = arith.addf %14, %23 : vector<3x1x1xf32>
    %25 = arith.mulf %10, %10 : vector<3x8x8xf32>
    %cst_16 = arith.constant dense<0.000000e+00> : vector<3x8xf32>
    %26 = vector.multi_reduction <add>, %25, %cst_16 [2] : vector<3x8x8xf32> to vector<3x8xf32>
    %27 = vector.shape_cast %26 : vector<3x8xf32> to vector<3x8x1xf32>
    %cst_17 = arith.constant dense<0.000000e+00> : vector<3x1xf32>
    %28 = vector.multi_reduction <add>, %27, %cst_17 [1] : vector<3x8x1xf32> to vector<3x1xf32>
    %29 = vector.shape_cast %28 : vector<3x1xf32> to vector<3x1x1xf32>
    %30 = arith.addf %19, %29 : vector<3x1x1xf32>
    %cst_18 = arith.constant 7.812500e-03 : f32
    %31 = vector.broadcast %cst_18 : f32 to vector<3x1x1xf32>
    %32 = arith.mulf %24, %31 : vector<3x1x1xf32>
    %cst_19 = arith.constant 7.812500e-03 : f32
    %33 = vector.broadcast %cst_19 : f32 to vector<3x1x1xf32>
    %34 = arith.mulf %30, %33 : vector<3x1x1xf32>
    %35 = arith.mulf %32, %32 : vector<3x1x1xf32>
    %36 = arith.subf %34, %35 : vector<3x1x1xf32>
    %cst_20 = arith.constant 9.99999974E-6 : f32
    %37 = vector.broadcast %cst_20 : f32 to vector<3x1x1xf32>
    %38 = arith.addf %36, %37 : vector<3x1x1xf32>
    %39 = math.rsqrt %38 : vector<3x1x1xf32>
    %40 = vector.broadcast %32 : vector<3x1x1xf32> to vector<3x8x8xf32>
    %41 = arith.subf %7, %40 : vector<3x8x8xf32>
    %42 = vector.broadcast %39 : vector<3x1x1xf32> to vector<3x8x8xf32>
    %43 = arith.mulf %41, %42 : vector<3x8x8xf32>
    %44 = vector.extract_strided_slice %43 {offsets = [0, 0, 0], sizes = [1, 8, 8], strides = [1, 1, 1]} : vector<3x8x8xf32> to vector<1x8x8xf32>
    %45 = vector.shape_cast %44 : vector<1x8x8xf32> to vector<8x8xf32>
    %c0_21 = arith.constant 0 : index
    %c0_22 = arith.constant 0 : index
    %46 = memref.load %arg2[%c0_21, %c0_22] : memref<8x3xf32, #tpu.memory_space<smem>>
    %47 = vector.broadcast %46 : f32 to vector<8x8xf32>
    %48 = arith.mulf %45, %47 : vector<8x8xf32>
    %49 = vector.extract_strided_slice %43 {offsets = [1, 0, 0], sizes = [1, 8, 8], strides = [1, 1, 1]} : vector<3x8x8xf32> to vector<1x8x8xf32>
    %50 = vector.shape_cast %49 : vector<1x8x8xf32> to vector<8x8xf32>
    %c0_23 = arith.constant 0 : index
    %c1_24 = arith.constant 1 : index
    %51 = memref.load %arg2[%c0_23, %c1_24] : memref<8x3xf32, #tpu.memory_space<smem>>
    %52 = vector.broadcast %51 : f32 to vector<8x8xf32>
    %53 = arith.mulf %50, %52 : vector<8x8xf32>
    %54 = arith.addf %48, %53 : vector<8x8xf32>
    %55 = vector.extract_strided_slice %43 {offsets = [2, 0, 0], sizes = [1, 8, 8], strides = [1, 1, 1]} : vector<3x8x8xf32> to vector<1x8x8xf32>
    %56 = vector.shape_cast %55 : vector<1x8x8xf32> to vector<8x8xf32>
    %c0_25 = arith.constant 0 : index
    %c2 = arith.constant 2 : index
    %57 = memref.load %arg2[%c0_25, %c2] : memref<8x3xf32, #tpu.memory_space<smem>>
    %58 = vector.broadcast %57 : f32 to vector<8x8xf32>
    %59 = arith.mulf %56, %58 : vector<8x8xf32>
    %60 = arith.addf %54, %59 : vector<8x8xf32>
    %c0_26 = arith.constant 0 : index
    %61 = memref.load %arg3[%c0_26] : memref<8xf32, #tpu.memory_space<smem>>
    %62 = vector.broadcast %61 : f32 to vector<8x8xf32>
    %63 = arith.addf %60, %62 : vector<8x8xf32>
    %64 = vector.extract_strided_slice %43 {offsets = [0, 0, 0], sizes = [1, 8, 8], strides = [1, 1, 1]} : vector<3x8x8xf32> to vector<1x8x8xf32>
    %65 = vector.shape_cast %64 : vector<1x8x8xf32> to vector<8x8xf32>
    %c1_27 = arith.constant 1 : index
    %c0_28 = arith.constant 0 : index
    %66 = memref.load %arg2[%c1_27, %c0_28] : memref<8x3xf32, #tpu.memory_space<smem>>
    %67 = vector.broadcast %66 : f32 to vector<8x8xf32>
    %68 = arith.mulf %65, %67 : vector<8x8xf32>
    %69 = vector.extract_strided_slice %43 {offsets = [1, 0, 0], sizes = [1, 8, 8], strides = [1, 1, 1]} : vector<3x8x8xf32> to vector<1x8x8xf32>
    %70 = vector.shape_cast %69 : vector<1x8x8xf32> to vector<8x8xf32>
    %c1_29 = arith.constant 1 : index
    %c1_30 = arith.constant 1 : index
    %71 = memref.load %arg2[%c1_29, %c1_30] : memref<8x3xf32, #tpu.memory_space<smem>>
    %72 = vector.broadcast %71 : f32 to vector<8x8xf32>
    %73 = arith.mulf %70, %72 : vector<8x8xf32>
    %74 = arith.addf %68, %73 : vector<8x8xf32>
    %75 = vector.extract_strided_slice %43 {offsets = [2, 0, 0], sizes = [1, 8, 8], strides = [1, 1, 1]} : vector<3x8x8xf32> to vector<1x8x8xf32>
    %76 = vector.shape_cast %75 : vector<1x8x8xf32> to vector<8x8xf32>
    %c1_31 = arith.constant 1 : index
    %c2_32 = arith.constant 2 : index
    %77 = memref.load %arg2[%c1_31, %c2_32] : memref<8x3xf32, #tpu.memory_space<smem>>
    %78 = vector.broadcast %77 : f32 to vector<8x8xf32>
    %79 = arith.mulf %76, %78 : vector<8x8xf32>
    %80 = arith.addf %74, %79 : vector<8x8xf32>
    %c1_33 = arith.constant 1 : index
    %81 = memref.load %arg3[%c1_33] : memref<8xf32, #tpu.memory_space<smem>>
    %82 = vector.broadcast %81 : f32 to vector<8x8xf32>
    %83 = arith.addf %80, %82 : vector<8x8xf32>
    %84 = vector.extract_strided_slice %43 {offsets = [0, 0, 0], sizes = [1, 8, 8], strides = [1, 1, 1]} : vector<3x8x8xf32> to vector<1x8x8xf32>
    %85 = vector.shape_cast %84 : vector<1x8x8xf32> to vector<8x8xf32>
    %c2_34 = arith.constant 2 : index
    %c0_35 = arith.constant 0 : index
    %86 = memref.load %arg2[%c2_34, %c0_35] : memref<8x3xf32, #tpu.memory_space<smem>>
    %87 = vector.broadcast %86 : f32 to vector<8x8xf32>
    %88 = arith.mulf %85, %87 : vector<8x8xf32>
    %89 = vector.extract_strided_slice %43 {offsets = [1, 0, 0], sizes = [1, 8, 8], strides = [1, 1, 1]} : vector<3x8x8xf32> to vector<1x8x8xf32>
    %90 = vector.shape_cast %89 : vector<1x8x8xf32> to vector<8x8xf32>
    %c2_36 = arith.constant 2 : index
    %c1_37 = arith.constant 1 : index
    %91 = memref.load %arg2[%c2_36, %c1_37] : memref<8x3xf32, #tpu.memory_space<smem>>
    %92 = vector.broadcast %91 : f32 to vector<8x8xf32>
    %93 = arith.mulf %90, %92 : vector<8x8xf32>
    %94 = arith.addf %88, %93 : vector<8x8xf32>
    %95 = vector.extract_strided_slice %43 {offsets = [2, 0, 0], sizes = [1, 8, 8], strides = [1, 1, 1]} : vector<3x8x8xf32> to vector<1x8x8xf32>
    %96 = vector.shape_cast %95 : vector<1x8x8xf32> to vector<8x8xf32>
    %c2_38 = arith.constant 2 : index
    %c2_39 = arith.constant 2 : index
    %97 = memref.load %arg2[%c2_38, %c2_39] : memref<8x3xf32, #tpu.memory_space<smem>>
    %98 = vector.broadcast %97 : f32 to vector<8x8xf32>
    %99 = arith.mulf %96, %98 : vector<8x8xf32>
    %100 = arith.addf %94, %99 : vector<8x8xf32>
    %c2_40 = arith.constant 2 : index
    %101 = memref.load %arg3[%c2_40] : memref<8xf32, #tpu.memory_space<smem>>
    %102 = vector.broadcast %101 : f32 to vector<8x8xf32>
    %103 = arith.addf %100, %102 : vector<8x8xf32>
    %104 = vector.extract_strided_slice %43 {offsets = [0, 0, 0], sizes = [1, 8, 8], strides = [1, 1, 1]} : vector<3x8x8xf32> to vector<1x8x8xf32>
    %105 = vector.shape_cast %104 : vector<1x8x8xf32> to vector<8x8xf32>
    %c3 = arith.constant 3 : index
    %c0_41 = arith.constant 0 : index
    %106 = memref.load %arg2[%c3, %c0_41] : memref<8x3xf32, #tpu.memory_space<smem>>
    %107 = vector.broadcast %106 : f32 to vector<8x8xf32>
    %108 = arith.mulf %105, %107 : vector<8x8xf32>
    %109 = vector.extract_strided_slice %43 {offsets = [1, 0, 0], sizes = [1, 8, 8], strides = [1, 1, 1]} : vector<3x8x8xf32> to vector<1x8x8xf32>
    %110 = vector.shape_cast %109 : vector<1x8x8xf32> to vector<8x8xf32>
    %c3_42 = arith.constant 3 : index
    %c1_43 = arith.constant 1 : index
    %111 = memref.load %arg2[%c3_42, %c1_43] : memref<8x3xf32, #tpu.memory_space<smem>>
    %112 = vector.broadcast %111 : f32 to vector<8x8xf32>
    %113 = arith.mulf %110, %112 : vector<8x8xf32>
    %114 = arith.addf %108, %113 : vector<8x8xf32>
    %115 = vector.extract_strided_slice %43 {offsets = [2, 0, 0], sizes = [1, 8, 8], strides = [1, 1, 1]} : vector<3x8x8xf32> to vector<1x8x8xf32>
    %116 = vector.shape_cast %115 : vector<1x8x8xf32> to vector<8x8xf32>
    %c3_44 = arith.constant 3 : index
    %c2_45 = arith.constant 2 : index
    %117 = memref.load %arg2[%c3_44, %c2_45] : memref<8x3xf32, #tpu.memory_space<smem>>
    %118 = vector.broadcast %117 : f32 to vector<8x8xf32>
    %119 = arith.mulf %116, %118 : vector<8x8xf32>
    %120 = arith.addf %114, %119 : vector<8x8xf32>
    %c3_46 = arith.constant 3 : index
    %121 = memref.load %arg3[%c3_46] : memref<8xf32, #tpu.memory_space<smem>>
    %122 = vector.broadcast %121 : f32 to vector<8x8xf32>
    %123 = arith.addf %120, %122 : vector<8x8xf32>
    %124 = vector.extract_strided_slice %43 {offsets = [0, 0, 0], sizes = [1, 8, 8], strides = [1, 1, 1]} : vector<3x8x8xf32> to vector<1x8x8xf32>
    %125 = vector.shape_cast %124 : vector<1x8x8xf32> to vector<8x8xf32>
    %c4 = arith.constant 4 : index
    %c0_47 = arith.constant 0 : index
    %126 = memref.load %arg2[%c4, %c0_47] : memref<8x3xf32, #tpu.memory_space<smem>>
    %127 = vector.broadcast %126 : f32 to vector<8x8xf32>
    %128 = arith.mulf %125, %127 : vector<8x8xf32>
    %129 = vector.extract_strided_slice %43 {offsets = [1, 0, 0], sizes = [1, 8, 8], strides = [1, 1, 1]} : vector<3x8x8xf32> to vector<1x8x8xf32>
    %130 = vector.shape_cast %129 : vector<1x8x8xf32> to vector<8x8xf32>
    %c4_48 = arith.constant 4 : index
    %c1_49 = arith.constant 1 : index
    %131 = memref.load %arg2[%c4_48, %c1_49] : memref<8x3xf32, #tpu.memory_space<smem>>
    %132 = vector.broadcast %131 : f32 to vector<8x8xf32>
    %133 = arith.mulf %130, %132 : vector<8x8xf32>
    %134 = arith.addf %128, %133 : vector<8x8xf32>
    %135 = vector.extract_strided_slice %43 {offsets = [2, 0, 0], sizes = [1, 8, 8], strides = [1, 1, 1]} : vector<3x8x8xf32> to vector<1x8x8xf32>
    %136 = vector.shape_cast %135 : vector<1x8x8xf32> to vector<8x8xf32>
    %c4_50 = arith.constant 4 : index
    %c2_51 = arith.constant 2 : index
    %137 = memref.load %arg2[%c4_50, %c2_51] : memref<8x3xf32, #tpu.memory_space<smem>>
    %138 = vector.broadcast %137 : f32 to vector<8x8xf32>
    %139 = arith.mulf %136, %138 : vector<8x8xf32>
    %140 = arith.addf %134, %139 : vector<8x8xf32>
    %c4_52 = arith.constant 4 : index
    %141 = memref.load %arg3[%c4_52] : memref<8xf32, #tpu.memory_space<smem>>
    %142 = vector.broadcast %141 : f32 to vector<8x8xf32>
    %143 = arith.addf %140, %142 : vector<8x8xf32>
    %144 = vector.extract_strided_slice %43 {offsets = [0, 0, 0], sizes = [1, 8, 8], strides = [1, 1, 1]} : vector<3x8x8xf32> to vector<1x8x8xf32>
    %145 = vector.shape_cast %144 : vector<1x8x8xf32> to vector<8x8xf32>
    %c5 = arith.constant 5 : index
    %c0_53 = arith.constant 0 : index
    %146 = memref.load %arg2[%c5, %c0_53] : memref<8x3xf32, #tpu.memory_space<smem>>
    %147 = vector.broadcast %146 : f32 to vector<8x8xf32>
    %148 = arith.mulf %145, %147 : vector<8x8xf32>
    %149 = vector.extract_strided_slice %43 {offsets = [1, 0, 0], sizes = [1, 8, 8], strides = [1, 1, 1]} : vector<3x8x8xf32> to vector<1x8x8xf32>
    %150 = vector.shape_cast %149 : vector<1x8x8xf32> to vector<8x8xf32>
    %c5_54 = arith.constant 5 : index
    %c1_55 = arith.constant 1 : index
    %151 = memref.load %arg2[%c5_54, %c1_55] : memref<8x3xf32, #tpu.memory_space<smem>>
    %152 = vector.broadcast %151 : f32 to vector<8x8xf32>
    %153 = arith.mulf %150, %152 : vector<8x8xf32>
    %154 = arith.addf %148, %153 : vector<8x8xf32>
    %155 = vector.extract_strided_slice %43 {offsets = [2, 0, 0], sizes = [1, 8, 8], strides = [1, 1, 1]} : vector<3x8x8xf32> to vector<1x8x8xf32>
    %156 = vector.shape_cast %155 : vector<1x8x8xf32> to vector<8x8xf32>
    %c5_56 = arith.constant 5 : index
    %c2_57 = arith.constant 2 : index
    %157 = memref.load %arg2[%c5_56, %c2_57] : memref<8x3xf32, #tpu.memory_space<smem>>
    %158 = vector.broadcast %157 : f32 to vector<8x8xf32>
    %159 = arith.mulf %156, %158 : vector<8x8xf32>
    %160 = arith.addf %154, %159 : vector<8x8xf32>
    %c5_58 = arith.constant 5 : index
    %161 = memref.load %arg3[%c5_58] : memref<8xf32, #tpu.memory_space<smem>>
    %162 = vector.broadcast %161 : f32 to vector<8x8xf32>
    %163 = arith.addf %160, %162 : vector<8x8xf32>
    %164 = vector.extract_strided_slice %43 {offsets = [0, 0, 0], sizes = [1, 8, 8], strides = [1, 1, 1]} : vector<3x8x8xf32> to vector<1x8x8xf32>
    %165 = vector.shape_cast %164 : vector<1x8x8xf32> to vector<8x8xf32>
    %c6 = arith.constant 6 : index
    %c0_59 = arith.constant 0 : index
    %166 = memref.load %arg2[%c6, %c0_59] : memref<8x3xf32, #tpu.memory_space<smem>>
    %167 = vector.broadcast %166 : f32 to vector<8x8xf32>
    %168 = arith.mulf %165, %167 : vector<8x8xf32>
    %169 = vector.extract_strided_slice %43 {offsets = [1, 0, 0], sizes = [1, 8, 8], strides = [1, 1, 1]} : vector<3x8x8xf32> to vector<1x8x8xf32>
    %170 = vector.shape_cast %169 : vector<1x8x8xf32> to vector<8x8xf32>
    %c6_60 = arith.constant 6 : index
    %c1_61 = arith.constant 1 : index
    %171 = memref.load %arg2[%c6_60, %c1_61] : memref<8x3xf32, #tpu.memory_space<smem>>
    %172 = vector.broadcast %171 : f32 to vector<8x8xf32>
    %173 = arith.mulf %170, %172 : vector<8x8xf32>
    %174 = arith.addf %168, %173 : vector<8x8xf32>
    %175 = vector.extract_strided_slice %43 {offsets = [2, 0, 0], sizes = [1, 8, 8], strides = [1, 1, 1]} : vector<3x8x8xf32> to vector<1x8x8xf32>
    %176 = vector.shape_cast %175 : vector<1x8x8xf32> to vector<8x8xf32>
    %c6_62 = arith.constant 6 : index
    %c2_63 = arith.constant 2 : index
    %177 = memref.load %arg2[%c6_62, %c2_63] : memref<8x3xf32, #tpu.memory_space<smem>>
    %178 = vector.broadcast %177 : f32 to vector<8x8xf32>
    %179 = arith.mulf %176, %178 : vector<8x8xf32>
    %180 = arith.addf %174, %179 : vector<8x8xf32>
    %c6_64 = arith.constant 6 : index
    %181 = memref.load %arg3[%c6_64] : memref<8xf32, #tpu.memory_space<smem>>
    %182 = vector.broadcast %181 : f32 to vector<8x8xf32>
    %183 = arith.addf %180, %182 : vector<8x8xf32>
    %184 = vector.extract_strided_slice %43 {offsets = [0, 0, 0], sizes = [1, 8, 8], strides = [1, 1, 1]} : vector<3x8x8xf32> to vector<1x8x8xf32>
    %185 = vector.shape_cast %184 : vector<1x8x8xf32> to vector<8x8xf32>
    %c7 = arith.constant 7 : index
    %c0_65 = arith.constant 0 : index
    %186 = memref.load %arg2[%c7, %c0_65] : memref<8x3xf32, #tpu.memory_space<smem>>
    %187 = vector.broadcast %186 : f32 to vector<8x8xf32>
    %188 = arith.mulf %185, %187 : vector<8x8xf32>
    %189 = vector.extract_strided_slice %43 {offsets = [1, 0, 0], sizes = [1, 8, 8], strides = [1, 1, 1]} : vector<3x8x8xf32> to vector<1x8x8xf32>
    %190 = vector.shape_cast %189 : vector<1x8x8xf32> to vector<8x8xf32>
    %c7_66 = arith.constant 7 : index
    %c1_67 = arith.constant 1 : index
    %191 = memref.load %arg2[%c7_66, %c1_67] : memref<8x3xf32, #tpu.memory_space<smem>>
    %192 = vector.broadcast %191 : f32 to vector<8x8xf32>
    %193 = arith.mulf %190, %192 : vector<8x8xf32>
    %194 = arith.addf %188, %193 : vector<8x8xf32>
    %195 = vector.extract_strided_slice %43 {offsets = [2, 0, 0], sizes = [1, 8, 8], strides = [1, 1, 1]} : vector<3x8x8xf32> to vector<1x8x8xf32>
    %196 = vector.shape_cast %195 : vector<1x8x8xf32> to vector<8x8xf32>
    %c7_68 = arith.constant 7 : index
    %c2_69 = arith.constant 2 : index
    %197 = memref.load %arg2[%c7_68, %c2_69] : memref<8x3xf32, #tpu.memory_space<smem>>
    %198 = vector.broadcast %197 : f32 to vector<8x8xf32>
    %199 = arith.mulf %196, %198 : vector<8x8xf32>
    %200 = arith.addf %194, %199 : vector<8x8xf32>
    %c7_70 = arith.constant 7 : index
    %201 = memref.load %arg3[%c7_70] : memref<8xf32, #tpu.memory_space<smem>>
    %202 = vector.broadcast %201 : f32 to vector<8x8xf32>
    %203 = arith.addf %200, %202 : vector<8x8xf32>
    %204 = vector.shape_cast %63 : vector<8x8xf32> to vector<1x8x8xf32>
    %205 = vector.shape_cast %83 : vector<8x8xf32> to vector<1x8x8xf32>
    %206 = vector.shape_cast %103 : vector<8x8xf32> to vector<1x8x8xf32>
    %207 = vector.shape_cast %123 : vector<8x8xf32> to vector<1x8x8xf32>
    %208 = vector.shape_cast %143 : vector<8x8xf32> to vector<1x8x8xf32>
    %209 = vector.shape_cast %163 : vector<8x8xf32> to vector<1x8x8xf32>
    %210 = vector.shape_cast %183 : vector<8x8xf32> to vector<1x8x8xf32>
    %211 = vector.shape_cast %203 : vector<8x8xf32> to vector<1x8x8xf32>
    %212 = tpu.concatenate %204, %205, %206, %207, %208, %209, %210, %211 in 0 : vector<1x8x8xf32>, vector<1x8x8xf32>, vector<1x8x8xf32>, vector<1x8x8xf32>, vector<1x8x8xf32>, vector<1x8x8xf32>, vector<1x8x8xf32>, vector<1x8x8xf32> -> vector<8x8x8xf32>
    %213 = vector.broadcast %32 : vector<3x1x1xf32> to vector<3x8x8xf32>
    %214 = arith.subf %10, %213 : vector<3x8x8xf32>
    %215 = vector.broadcast %39 : vector<3x1x1xf32> to vector<3x8x8xf32>
    %216 = arith.mulf %214, %215 : vector<3x8x8xf32>
    %217 = vector.extract_strided_slice %216 {offsets = [0, 0, 0], sizes = [1, 8, 8], strides = [1, 1, 1]} : vector<3x8x8xf32> to vector<1x8x8xf32>
    %218 = vector.shape_cast %217 : vector<1x8x8xf32> to vector<8x8xf32>
    %c0_71 = arith.constant 0 : index
    %c0_72 = arith.constant 0 : index
    %219 = memref.load %arg2[%c0_71, %c0_72] : memref<8x3xf32, #tpu.memory_space<smem>>
    %220 = vector.broadcast %219 : f32 to vector<8x8xf32>
    %221 = arith.mulf %218, %220 : vector<8x8xf32>
    %222 = vector.extract_strided_slice %216 {offsets = [1, 0, 0], sizes = [1, 8, 8], strides = [1, 1, 1]} : vector<3x8x8xf32> to vector<1x8x8xf32>
    %223 = vector.shape_cast %222 : vector<1x8x8xf32> to vector<8x8xf32>
    %c0_73 = arith.constant 0 : index
    %c1_74 = arith.constant 1 : index
    %224 = memref.load %arg2[%c0_73, %c1_74] : memref<8x3xf32, #tpu.memory_space<smem>>
    %225 = vector.broadcast %224 : f32 to vector<8x8xf32>
    %226 = arith.mulf %223, %225 : vector<8x8xf32>
    %227 = arith.addf %221, %226 : vector<8x8xf32>
    %228 = vector.extract_strided_slice %216 {offsets = [2, 0, 0], sizes = [1, 8, 8], strides = [1, 1, 1]} : vector<3x8x8xf32> to vector<1x8x8xf32>
    %229 = vector.shape_cast %228 : vector<1x8x8xf32> to vector<8x8xf32>
    %c0_75 = arith.constant 0 : index
    %c2_76 = arith.constant 2 : index
    %230 = memref.load %arg2[%c0_75, %c2_76] : memref<8x3xf32, #tpu.memory_space<smem>>
    %231 = vector.broadcast %230 : f32 to vector<8x8xf32>
    %232 = arith.mulf %229, %231 : vector<8x8xf32>
    %233 = arith.addf %227, %232 : vector<8x8xf32>
    %c0_77 = arith.constant 0 : index
    %234 = memref.load %arg3[%c0_77] : memref<8xf32, #tpu.memory_space<smem>>
    %235 = vector.broadcast %234 : f32 to vector<8x8xf32>
    %236 = arith.addf %233, %235 : vector<8x8xf32>
    %237 = vector.extract_strided_slice %216 {offsets = [0, 0, 0], sizes = [1, 8, 8], strides = [1, 1, 1]} : vector<3x8x8xf32> to vector<1x8x8xf32>
    %238 = vector.shape_cast %237 : vector<1x8x8xf32> to vector<8x8xf32>
    %c1_78 = arith.constant 1 : index
    %c0_79 = arith.constant 0 : index
    %239 = memref.load %arg2[%c1_78, %c0_79] : memref<8x3xf32, #tpu.memory_space<smem>>
    %240 = vector.broadcast %239 : f32 to vector<8x8xf32>
    %241 = arith.mulf %238, %240 : vector<8x8xf32>
    %242 = vector.extract_strided_slice %216 {offsets = [1, 0, 0], sizes = [1, 8, 8], strides = [1, 1, 1]} : vector<3x8x8xf32> to vector<1x8x8xf32>
    %243 = vector.shape_cast %242 : vector<1x8x8xf32> to vector<8x8xf32>
    %c1_80 = arith.constant 1 : index
    %c1_81 = arith.constant 1 : index
    %244 = memref.load %arg2[%c1_80, %c1_81] : memref<8x3xf32, #tpu.memory_space<smem>>
    %245 = vector.broadcast %244 : f32 to vector<8x8xf32>
    %246 = arith.mulf %243, %245 : vector<8x8xf32>
    %247 = arith.addf %241, %246 : vector<8x8xf32>
    %248 = vector.extract_strided_slice %216 {offsets = [2, 0, 0], sizes = [1, 8, 8], strides = [1, 1, 1]} : vector<3x8x8xf32> to vector<1x8x8xf32>
    %249 = vector.shape_cast %248 : vector<1x8x8xf32> to vector<8x8xf32>
    %c1_82 = arith.constant 1 : index
    %c2_83 = arith.constant 2 : index
    %250 = memref.load %arg2[%c1_82, %c2_83] : memref<8x3xf32, #tpu.memory_space<smem>>
    %251 = vector.broadcast %250 : f32 to vector<8x8xf32>
    %252 = arith.mulf %249, %251 : vector<8x8xf32>
    %253 = arith.addf %247, %252 : vector<8x8xf32>
    %c1_84 = arith.constant 1 : index
    %254 = memref.load %arg3[%c1_84] : memref<8xf32, #tpu.memory_space<smem>>
    %255 = vector.broadcast %254 : f32 to vector<8x8xf32>
    %256 = arith.addf %253, %255 : vector<8x8xf32>
    %257 = vector.extract_strided_slice %216 {offsets = [0, 0, 0], sizes = [1, 8, 8], strides = [1, 1, 1]} : vector<3x8x8xf32> to vector<1x8x8xf32>
    %258 = vector.shape_cast %257 : vector<1x8x8xf32> to vector<8x8xf32>
    %c2_85 = arith.constant 2 : index
    %c0_86 = arith.constant 0 : index
    %259 = memref.load %arg2[%c2_85, %c0_86] : memref<8x3xf32, #tpu.memory_space<smem>>
    %260 = vector.broadcast %259 : f32 to vector<8x8xf32>
    %261 = arith.mulf %258, %260 : vector<8x8xf32>
    %262 = vector.extract_strided_slice %216 {offsets = [1, 0, 0], sizes = [1, 8, 8], strides = [1, 1, 1]} : vector<3x8x8xf32> to vector<1x8x8xf32>
    %263 = vector.shape_cast %262 : vector<1x8x8xf32> to vector<8x8xf32>
    %c2_87 = arith.constant 2 : index
    %c1_88 = arith.constant 1 : index
    %264 = memref.load %arg2[%c2_87, %c1_88] : memref<8x3xf32, #tpu.memory_space<smem>>
    %265 = vector.broadcast %264 : f32 to vector<8x8xf32>
    %266 = arith.mulf %263, %265 : vector<8x8xf32>
    %267 = arith.addf %261, %266 : vector<8x8xf32>
    %268 = vector.extract_strided_slice %216 {offsets = [2, 0, 0], sizes = [1, 8, 8], strides = [1, 1, 1]} : vector<3x8x8xf32> to vector<1x8x8xf32>
    %269 = vector.shape_cast %268 : vector<1x8x8xf32> to vector<8x8xf32>
    %c2_89 = arith.constant 2 : index
    %c2_90 = arith.constant 2 : index
    %270 = memref.load %arg2[%c2_89, %c2_90] : memref<8x3xf32, #tpu.memory_space<smem>>
    %271 = vector.broadcast %270 : f32 to vector<8x8xf32>
    %272 = arith.mulf %269, %271 : vector<8x8xf32>
    %273 = arith.addf %267, %272 : vector<8x8xf32>
    %c2_91 = arith.constant 2 : index
    %274 = memref.load %arg3[%c2_91] : memref<8xf32, #tpu.memory_space<smem>>
    %275 = vector.broadcast %274 : f32 to vector<8x8xf32>
    %276 = arith.addf %273, %275 : vector<8x8xf32>
    %277 = vector.extract_strided_slice %216 {offsets = [0, 0, 0], sizes = [1, 8, 8], strides = [1, 1, 1]} : vector<3x8x8xf32> to vector<1x8x8xf32>
    %278 = vector.shape_cast %277 : vector<1x8x8xf32> to vector<8x8xf32>
    %c3_92 = arith.constant 3 : index
    %c0_93 = arith.constant 0 : index
    %279 = memref.load %arg2[%c3_92, %c0_93] : memref<8x3xf32, #tpu.memory_space<smem>>
    %280 = vector.broadcast %279 : f32 to vector<8x8xf32>
    %281 = arith.mulf %278, %280 : vector<8x8xf32>
    %282 = vector.extract_strided_slice %216 {offsets = [1, 0, 0], sizes = [1, 8, 8], strides = [1, 1, 1]} : vector<3x8x8xf32> to vector<1x8x8xf32>
    %283 = vector.shape_cast %282 : vector<1x8x8xf32> to vector<8x8xf32>
    %c3_94 = arith.constant 3 : index
    %c1_95 = arith.constant 1 : index
    %284 = memref.load %arg2[%c3_94, %c1_95] : memref<8x3xf32, #tpu.memory_space<smem>>
    %285 = vector.broadcast %284 : f32 to vector<8x8xf32>
    %286 = arith.mulf %283, %285 : vector<8x8xf32>
    %287 = arith.addf %281, %286 : vector<8x8xf32>
    %288 = vector.extract_strided_slice %216 {offsets = [2, 0, 0], sizes = [1, 8, 8], strides = [1, 1, 1]} : vector<3x8x8xf32> to vector<1x8x8xf32>
    %289 = vector.shape_cast %288 : vector<1x8x8xf32> to vector<8x8xf32>
    %c3_96 = arith.constant 3 : index
    %c2_97 = arith.constant 2 : index
    %290 = memref.load %arg2[%c3_96, %c2_97] : memref<8x3xf32, #tpu.memory_space<smem>>
    %291 = vector.broadcast %290 : f32 to vector<8x8xf32>
    %292 = arith.mulf %289, %291 : vector<8x8xf32>
    %293 = arith.addf %287, %292 : vector<8x8xf32>
    %c3_98 = arith.constant 3 : index
    %294 = memref.load %arg3[%c3_98] : memref<8xf32, #tpu.memory_space<smem>>
    %295 = vector.broadcast %294 : f32 to vector<8x8xf32>
    %296 = arith.addf %293, %295 : vector<8x8xf32>
    %297 = vector.extract_strided_slice %216 {offsets = [0, 0, 0], sizes = [1, 8, 8], strides = [1, 1, 1]} : vector<3x8x8xf32> to vector<1x8x8xf32>
    %298 = vector.shape_cast %297 : vector<1x8x8xf32> to vector<8x8xf32>
    %c4_99 = arith.constant 4 : index
    %c0_100 = arith.constant 0 : index
    %299 = memref.load %arg2[%c4_99, %c0_100] : memref<8x3xf32, #tpu.memory_space<smem>>
    %300 = vector.broadcast %299 : f32 to vector<8x8xf32>
    %301 = arith.mulf %298, %300 : vector<8x8xf32>
    %302 = vector.extract_strided_slice %216 {offsets = [1, 0, 0], sizes = [1, 8, 8], strides = [1, 1, 1]} : vector<3x8x8xf32> to vector<1x8x8xf32>
    %303 = vector.shape_cast %302 : vector<1x8x8xf32> to vector<8x8xf32>
    %c4_101 = arith.constant 4 : index
    %c1_102 = arith.constant 1 : index
    %304 = memref.load %arg2[%c4_101, %c1_102] : memref<8x3xf32, #tpu.memory_space<smem>>
    %305 = vector.broadcast %304 : f32 to vector<8x8xf32>
    %306 = arith.mulf %303, %305 : vector<8x8xf32>
    %307 = arith.addf %301, %306 : vector<8x8xf32>
    %308 = vector.extract_strided_slice %216 {offsets = [2, 0, 0], sizes = [1, 8, 8], strides = [1, 1, 1]} : vector<3x8x8xf32> to vector<1x8x8xf32>
    %309 = vector.shape_cast %308 : vector<1x8x8xf32> to vector<8x8xf32>
    %c4_103 = arith.constant 4 : index
    %c2_104 = arith.constant 2 : index
    %310 = memref.load %arg2[%c4_103, %c2_104] : memref<8x3xf32, #tpu.memory_space<smem>>
    %311 = vector.broadcast %310 : f32 to vector<8x8xf32>
    %312 = arith.mulf %309, %311 : vector<8x8xf32>
    %313 = arith.addf %307, %312 : vector<8x8xf32>
    %c4_105 = arith.constant 4 : index
    %314 = memref.load %arg3[%c4_105] : memref<8xf32, #tpu.memory_space<smem>>
    %315 = vector.broadcast %314 : f32 to vector<8x8xf32>
    %316 = arith.addf %313, %315 : vector<8x8xf32>
    %317 = vector.extract_strided_slice %216 {offsets = [0, 0, 0], sizes = [1, 8, 8], strides = [1, 1, 1]} : vector<3x8x8xf32> to vector<1x8x8xf32>
    %318 = vector.shape_cast %317 : vector<1x8x8xf32> to vector<8x8xf32>
    %c5_106 = arith.constant 5 : index
    %c0_107 = arith.constant 0 : index
    %319 = memref.load %arg2[%c5_106, %c0_107] : memref<8x3xf32, #tpu.memory_space<smem>>
    %320 = vector.broadcast %319 : f32 to vector<8x8xf32>
    %321 = arith.mulf %318, %320 : vector<8x8xf32>
    %322 = vector.extract_strided_slice %216 {offsets = [1, 0, 0], sizes = [1, 8, 8], strides = [1, 1, 1]} : vector<3x8x8xf32> to vector<1x8x8xf32>
    %323 = vector.shape_cast %322 : vector<1x8x8xf32> to vector<8x8xf32>
    %c5_108 = arith.constant 5 : index
    %c1_109 = arith.constant 1 : index
    %324 = memref.load %arg2[%c5_108, %c1_109] : memref<8x3xf32, #tpu.memory_space<smem>>
    %325 = vector.broadcast %324 : f32 to vector<8x8xf32>
    %326 = arith.mulf %323, %325 : vector<8x8xf32>
    %327 = arith.addf %321, %326 : vector<8x8xf32>
    %328 = vector.extract_strided_slice %216 {offsets = [2, 0, 0], sizes = [1, 8, 8], strides = [1, 1, 1]} : vector<3x8x8xf32> to vector<1x8x8xf32>
    %329 = vector.shape_cast %328 : vector<1x8x8xf32> to vector<8x8xf32>
    %c5_110 = arith.constant 5 : index
    %c2_111 = arith.constant 2 : index
    %330 = memref.load %arg2[%c5_110, %c2_111] : memref<8x3xf32, #tpu.memory_space<smem>>
    %331 = vector.broadcast %330 : f32 to vector<8x8xf32>
    %332 = arith.mulf %329, %331 : vector<8x8xf32>
    %333 = arith.addf %327, %332 : vector<8x8xf32>
    %c5_112 = arith.constant 5 : index
    %334 = memref.load %arg3[%c5_112] : memref<8xf32, #tpu.memory_space<smem>>
    %335 = vector.broadcast %334 : f32 to vector<8x8xf32>
    %336 = arith.addf %333, %335 : vector<8x8xf32>
    %337 = vector.extract_strided_slice %216 {offsets = [0, 0, 0], sizes = [1, 8, 8], strides = [1, 1, 1]} : vector<3x8x8xf32> to vector<1x8x8xf32>
    %338 = vector.shape_cast %337 : vector<1x8x8xf32> to vector<8x8xf32>
    %c6_113 = arith.constant 6 : index
    %c0_114 = arith.constant 0 : index
    %339 = memref.load %arg2[%c6_113, %c0_114] : memref<8x3xf32, #tpu.memory_space<smem>>
    %340 = vector.broadcast %339 : f32 to vector<8x8xf32>
    %341 = arith.mulf %338, %340 : vector<8x8xf32>
    %342 = vector.extract_strided_slice %216 {offsets = [1, 0, 0], sizes = [1, 8, 8], strides = [1, 1, 1]} : vector<3x8x8xf32> to vector<1x8x8xf32>
    %343 = vector.shape_cast %342 : vector<1x8x8xf32> to vector<8x8xf32>
    %c6_115 = arith.constant 6 : index
    %c1_116 = arith.constant 1 : index
    %344 = memref.load %arg2[%c6_115, %c1_116] : memref<8x3xf32, #tpu.memory_space<smem>>
    %345 = vector.broadcast %344 : f32 to vector<8x8xf32>
    %346 = arith.mulf %343, %345 : vector<8x8xf32>
    %347 = arith.addf %341, %346 : vector<8x8xf32>
    %348 = vector.extract_strided_slice %216 {offsets = [2, 0, 0], sizes = [1, 8, 8], strides = [1, 1, 1]} : vector<3x8x8xf32> to vector<1x8x8xf32>
    %349 = vector.shape_cast %348 : vector<1x8x8xf32> to vector<8x8xf32>
    %c6_117 = arith.constant 6 : index
    %c2_118 = arith.constant 2 : index
    %350 = memref.load %arg2[%c6_117, %c2_118] : memref<8x3xf32, #tpu.memory_space<smem>>
    %351 = vector.broadcast %350 : f32 to vector<8x8xf32>
    %352 = arith.mulf %349, %351 : vector<8x8xf32>
    %353 = arith.addf %347, %352 : vector<8x8xf32>
    %c6_119 = arith.constant 6 : index
    %354 = memref.load %arg3[%c6_119] : memref<8xf32, #tpu.memory_space<smem>>
    %355 = vector.broadcast %354 : f32 to vector<8x8xf32>
    %356 = arith.addf %353, %355 : vector<8x8xf32>
    %357 = vector.extract_strided_slice %216 {offsets = [0, 0, 0], sizes = [1, 8, 8], strides = [1, 1, 1]} : vector<3x8x8xf32> to vector<1x8x8xf32>
    %358 = vector.shape_cast %357 : vector<1x8x8xf32> to vector<8x8xf32>
    %c7_120 = arith.constant 7 : index
    %c0_121 = arith.constant 0 : index
    %359 = memref.load %arg2[%c7_120, %c0_121] : memref<8x3xf32, #tpu.memory_space<smem>>
    %360 = vector.broadcast %359 : f32 to vector<8x8xf32>
    %361 = arith.mulf %358, %360 : vector<8x8xf32>
    %362 = vector.extract_strided_slice %216 {offsets = [1, 0, 0], sizes = [1, 8, 8], strides = [1, 1, 1]} : vector<3x8x8xf32> to vector<1x8x8xf32>
    %363 = vector.shape_cast %362 : vector<1x8x8xf32> to vector<8x8xf32>
    %c7_122 = arith.constant 7 : index
    %c1_123 = arith.constant 1 : index
    %364 = memref.load %arg2[%c7_122, %c1_123] : memref<8x3xf32, #tpu.memory_space<smem>>
    %365 = vector.broadcast %364 : f32 to vector<8x8xf32>
    %366 = arith.mulf %363, %365 : vector<8x8xf32>
    %367 = arith.addf %361, %366 : vector<8x8xf32>
    %368 = vector.extract_strided_slice %216 {offsets = [2, 0, 0], sizes = [1, 8, 8], strides = [1, 1, 1]} : vector<3x8x8xf32> to vector<1x8x8xf32>
    %369 = vector.shape_cast %368 : vector<1x8x8xf32> to vector<8x8xf32>
    %c7_124 = arith.constant 7 : index
    %c2_125 = arith.constant 2 : index
    %370 = memref.load %arg2[%c7_124, %c2_125] : memref<8x3xf32, #tpu.memory_space<smem>>
    %371 = vector.broadcast %370 : f32 to vector<8x8xf32>
    %372 = arith.mulf %369, %371 : vector<8x8xf32>
    %373 = arith.addf %367, %372 : vector<8x8xf32>
    %c7_126 = arith.constant 7 : index
    %374 = memref.load %arg3[%c7_126] : memref<8xf32, #tpu.memory_space<smem>>
    %375 = vector.broadcast %374 : f32 to vector<8x8xf32>
    %376 = arith.addf %373, %375 : vector<8x8xf32>
    %377 = vector.shape_cast %236 : vector<8x8xf32> to vector<1x8x8xf32>
    %378 = vector.shape_cast %256 : vector<8x8xf32> to vector<1x8x8xf32>
    %379 = vector.shape_cast %276 : vector<8x8xf32> to vector<1x8x8xf32>
    %380 = vector.shape_cast %296 : vector<8x8xf32> to vector<1x8x8xf32>
    %381 = vector.shape_cast %316 : vector<8x8xf32> to vector<1x8x8xf32>
    %382 = vector.shape_cast %336 : vector<8x8xf32> to vector<1x8x8xf32>
    %383 = vector.shape_cast %356 : vector<8x8xf32> to vector<1x8x8xf32>
    %384 = vector.shape_cast %376 : vector<8x8xf32> to vector<1x8x8xf32>
    %385 = tpu.concatenate %377, %378, %379, %380, %381, %382, %383, %384 in 0 : vector<1x8x8xf32>, vector<1x8x8xf32>, vector<1x8x8xf32>, vector<1x8x8xf32>, vector<1x8x8xf32>, vector<1x8x8xf32>, vector<1x8x8xf32>, vector<1x8x8xf32> -> vector<8x8x8xf32>
    %c0_127 = arith.constant 0 : index
    %c0_128 = arith.constant 0 : index
    %c0_129 = arith.constant 0 : index
    %386 = vector.load %arg4[%c0_127, %c0_128, %c0_129] : memref<8x8x8xf32, #tpu.memory_space<vmem>>, vector<8x8x8xf32>
    %387 = arith.addf %212, %386 : vector<8x8x8xf32>
    %cst_130 = arith.constant 0.000000e+00 : f32
    %388 = vector.broadcast %cst_130 : f32 to vector<8x8x8xf32>
    %389 = arith.maximumf %387, %388 : vector<8x8x8xf32>
    %390 = arith.addf %385, %386 : vector<8x8x8xf32>
    %cst_131 = arith.constant 0.000000e+00 : f32
    %391 = vector.broadcast %cst_131 : f32 to vector<8x8x8xf32>
    %392 = arith.maximumf %390, %391 : vector<8x8x8xf32>
    %cst_132 = arith.constant dense<0.000000e+00> : vector<8x8xf32>
    %393 = vector.multi_reduction <add>, %389, %cst_132 [2] : vector<8x8x8xf32> to vector<8x8xf32>
    %394 = vector.shape_cast %393 : vector<8x8xf32> to vector<8x8x1xf32>
    %cst_133 = arith.constant dense<0.000000e+00> : vector<8x1xf32>
    %395 = vector.multi_reduction <add>, %394, %cst_133 [1] : vector<8x8x1xf32> to vector<8x1xf32>
    %396 = vector.shape_cast %395 : vector<8x1xf32> to vector<8x1x1xf32>
    %397 = arith.mulf %389, %389 : vector<8x8x8xf32>
    %cst_134 = arith.constant dense<0.000000e+00> : vector<8x8xf32>
    %398 = vector.multi_reduction <add>, %397, %cst_134 [2] : vector<8x8x8xf32> to vector<8x8xf32>
    %399 = vector.shape_cast %398 : vector<8x8xf32> to vector<8x8x1xf32>
    %cst_135 = arith.constant dense<0.000000e+00> : vector<8x1xf32>
    %400 = vector.multi_reduction <add>, %399, %cst_135 [1] : vector<8x8x1xf32> to vector<8x1xf32>
    %401 = vector.shape_cast %400 : vector<8x1xf32> to vector<8x1x1xf32>
    %cst_136 = arith.constant dense<0.000000e+00> : vector<8x8xf32>
    %402 = vector.multi_reduction <add>, %392, %cst_136 [2] : vector<8x8x8xf32> to vector<8x8xf32>
    %403 = vector.shape_cast %402 : vector<8x8xf32> to vector<8x8x1xf32>
    %cst_137 = arith.constant dense<0.000000e+00> : vector<8x1xf32>
    %404 = vector.multi_reduction <add>, %403, %cst_137 [1] : vector<8x8x1xf32> to vector<8x1xf32>
    %405 = vector.shape_cast %404 : vector<8x1xf32> to vector<8x1x1xf32>
    %406 = arith.addf %396, %405 : vector<8x1x1xf32>
    %407 = arith.mulf %392, %392 : vector<8x8x8xf32>
    %cst_138 = arith.constant dense<0.000000e+00> : vector<8x8xf32>
    %408 = vector.multi_reduction <add>, %407, %cst_138 [2] : vector<8x8x8xf32> to vector<8x8xf32>
    %409 = vector.shape_cast %408 : vector<8x8xf32> to vector<8x8x1xf32>
    %cst_139 = arith.constant dense<0.000000e+00> : vector<8x1xf32>
    %410 = vector.multi_reduction <add>, %409, %cst_139 [1] : vector<8x8x1xf32> to vector<8x1xf32>
    %411 = vector.shape_cast %410 : vector<8x1xf32> to vector<8x1x1xf32>
    %412 = arith.addf %401, %411 : vector<8x1x1xf32>
    %cst_140 = arith.constant 7.812500e-03 : f32
    %413 = vector.broadcast %cst_140 : f32 to vector<8x1x1xf32>
    %414 = arith.mulf %406, %413 : vector<8x1x1xf32>
    %cst_141 = arith.constant 7.812500e-03 : f32
    %415 = vector.broadcast %cst_141 : f32 to vector<8x1x1xf32>
    %416 = arith.mulf %412, %415 : vector<8x1x1xf32>
    %417 = arith.mulf %414, %414 : vector<8x1x1xf32>
    %418 = arith.subf %416, %417 : vector<8x1x1xf32>
    %cst_142 = arith.constant 9.99999974E-6 : f32
    %419 = vector.broadcast %cst_142 : f32 to vector<8x1x1xf32>
    %420 = arith.addf %418, %419 : vector<8x1x1xf32>
    %421 = math.rsqrt %420 : vector<8x1x1xf32>
    %422 = vector.broadcast %414 : vector<8x1x1xf32> to vector<8x8x8xf32>
    %423 = arith.subf %389, %422 : vector<8x8x8xf32>
    %424 = vector.broadcast %421 : vector<8x1x1xf32> to vector<8x8x8xf32>
    %425 = arith.mulf %423, %424 : vector<8x8x8xf32>
    %426 = vector.extract_strided_slice %425 {offsets = [0, 0, 0], sizes = [1, 8, 8], strides = [1, 1, 1]} : vector<8x8x8xf32> to vector<1x8x8xf32>
    %427 = vector.shape_cast %426 : vector<1x8x8xf32> to vector<8x8xf32>
    %c0_143 = arith.constant 0 : index
    %c0_144 = arith.constant 0 : index
    %428 = memref.load %arg5[%c0_143, %c0_144] : memref<8x8xf32, #tpu.memory_space<smem>>
    %429 = vector.broadcast %428 : f32 to vector<8x8xf32>
    %430 = arith.mulf %427, %429 : vector<8x8xf32>
    %431 = vector.extract_strided_slice %425 {offsets = [1, 0, 0], sizes = [1, 8, 8], strides = [1, 1, 1]} : vector<8x8x8xf32> to vector<1x8x8xf32>
    %432 = vector.shape_cast %431 : vector<1x8x8xf32> to vector<8x8xf32>
    %c0_145 = arith.constant 0 : index
    %c1_146 = arith.constant 1 : index
    %433 = memref.load %arg5[%c0_145, %c1_146] : memref<8x8xf32, #tpu.memory_space<smem>>
    %434 = vector.broadcast %433 : f32 to vector<8x8xf32>
    %435 = arith.mulf %432, %434 : vector<8x8xf32>
    %436 = arith.addf %430, %435 : vector<8x8xf32>
    %437 = vector.extract_strided_slice %425 {offsets = [2, 0, 0], sizes = [1, 8, 8], strides = [1, 1, 1]} : vector<8x8x8xf32> to vector<1x8x8xf32>
    %438 = vector.shape_cast %437 : vector<1x8x8xf32> to vector<8x8xf32>
    %c0_147 = arith.constant 0 : index
    %c2_148 = arith.constant 2 : index
    %439 = memref.load %arg5[%c0_147, %c2_148] : memref<8x8xf32, #tpu.memory_space<smem>>
    %440 = vector.broadcast %439 : f32 to vector<8x8xf32>
    %441 = arith.mulf %438, %440 : vector<8x8xf32>
    %442 = arith.addf %436, %441 : vector<8x8xf32>
    %443 = vector.extract_strided_slice %425 {offsets = [3, 0, 0], sizes = [1, 8, 8], strides = [1, 1, 1]} : vector<8x8x8xf32> to vector<1x8x8xf32>
    %444 = vector.shape_cast %443 : vector<1x8x8xf32> to vector<8x8xf32>
    %c0_149 = arith.constant 0 : index
    %c3_150 = arith.constant 3 : index
    %445 = memref.load %arg5[%c0_149, %c3_150] : memref<8x8xf32, #tpu.memory_space<smem>>
    %446 = vector.broadcast %445 : f32 to vector<8x8xf32>
    %447 = arith.mulf %444, %446 : vector<8x8xf32>
    %448 = arith.addf %442, %447 : vector<8x8xf32>
    %449 = vector.extract_strided_slice %425 {offsets = [4, 0, 0], sizes = [1, 8, 8], strides = [1, 1, 1]} : vector<8x8x8xf32> to vector<1x8x8xf32>
    %450 = vector.shape_cast %449 : vector<1x8x8xf32> to vector<8x8xf32>
    %c0_151 = arith.constant 0 : index
    %c4_152 = arith.constant 4 : index
    %451 = memref.load %arg5[%c0_151, %c4_152] : memref<8x8xf32, #tpu.memory_space<smem>>
    %452 = vector.broadcast %451 : f32 to vector<8x8xf32>
    %453 = arith.mulf %450, %452 : vector<8x8xf32>
    %454 = arith.addf %448, %453 : vector<8x8xf32>
    %455 = vector.extract_strided_slice %425 {offsets = [5, 0, 0], sizes = [1, 8, 8], strides = [1, 1, 1]} : vector<8x8x8xf32> to vector<1x8x8xf32>
    %456 = vector.shape_cast %455 : vector<1x8x8xf32> to vector<8x8xf32>
    %c0_153 = arith.constant 0 : index
    %c5_154 = arith.constant 5 : index
    %457 = memref.load %arg5[%c0_153, %c5_154] : memref<8x8xf32, #tpu.memory_space<smem>>
    %458 = vector.broadcast %457 : f32 to vector<8x8xf32>
    %459 = arith.mulf %456, %458 : vector<8x8xf32>
    %460 = arith.addf %454, %459 : vector<8x8xf32>
    %461 = vector.extract_strided_slice %425 {offsets = [6, 0, 0], sizes = [1, 8, 8], strides = [1, 1, 1]} : vector<8x8x8xf32> to vector<1x8x8xf32>
    %462 = vector.shape_cast %461 : vector<1x8x8xf32> to vector<8x8xf32>
    %c0_155 = arith.constant 0 : index
    %c6_156 = arith.constant 6 : index
    %463 = memref.load %arg5[%c0_155, %c6_156] : memref<8x8xf32, #tpu.memory_space<smem>>
    %464 = vector.broadcast %463 : f32 to vector<8x8xf32>
    %465 = arith.mulf %462, %464 : vector<8x8xf32>
    %466 = arith.addf %460, %465 : vector<8x8xf32>
    %467 = vector.extract_strided_slice %425 {offsets = [7, 0, 0], sizes = [1, 8, 8], strides = [1, 1, 1]} : vector<8x8x8xf32> to vector<1x8x8xf32>
    %468 = vector.shape_cast %467 : vector<1x8x8xf32> to vector<8x8xf32>
    %c0_157 = arith.constant 0 : index
    %c7_158 = arith.constant 7 : index
    %469 = memref.load %arg5[%c0_157, %c7_158] : memref<8x8xf32, #tpu.memory_space<smem>>
    %470 = vector.broadcast %469 : f32 to vector<8x8xf32>
    %471 = arith.mulf %468, %470 : vector<8x8xf32>
    %472 = arith.addf %466, %471 : vector<8x8xf32>
    %c0_159 = arith.constant 0 : index
    %473 = memref.load %arg6[%c0_159] : memref<8xf32, #tpu.memory_space<smem>>
    %474 = vector.broadcast %473 : f32 to vector<8x8xf32>
    %475 = arith.addf %472, %474 : vector<8x8xf32>
    %476 = vector.extract_strided_slice %425 {offsets = [0, 0, 0], sizes = [1, 8, 8], strides = [1, 1, 1]} : vector<8x8x8xf32> to vector<1x8x8xf32>
    %477 = vector.shape_cast %476 : vector<1x8x8xf32> to vector<8x8xf32>
    %c1_160 = arith.constant 1 : index
    %c0_161 = arith.constant 0 : index
    %478 = memref.load %arg5[%c1_160, %c0_161] : memref<8x8xf32, #tpu.memory_space<smem>>
    %479 = vector.broadcast %478 : f32 to vector<8x8xf32>
    %480 = arith.mulf %477, %479 : vector<8x8xf32>
    %481 = vector.extract_strided_slice %425 {offsets = [1, 0, 0], sizes = [1, 8, 8], strides = [1, 1, 1]} : vector<8x8x8xf32> to vector<1x8x8xf32>
    %482 = vector.shape_cast %481 : vector<1x8x8xf32> to vector<8x8xf32>
    %c1_162 = arith.constant 1 : index
    %c1_163 = arith.constant 1 : index
    %483 = memref.load %arg5[%c1_162, %c1_163] : memref<8x8xf32, #tpu.memory_space<smem>>
    %484 = vector.broadcast %483 : f32 to vector<8x8xf32>
    %485 = arith.mulf %482, %484 : vector<8x8xf32>
    %486 = arith.addf %480, %485 : vector<8x8xf32>
    %487 = vector.extract_strided_slice %425 {offsets = [2, 0, 0], sizes = [1, 8, 8], strides = [1, 1, 1]} : vector<8x8x8xf32> to vector<1x8x8xf32>
    %488 = vector.shape_cast %487 : vector<1x8x8xf32> to vector<8x8xf32>
    %c1_164 = arith.constant 1 : index
    %c2_165 = arith.constant 2 : index
    %489 = memref.load %arg5[%c1_164, %c2_165] : memref<8x8xf32, #tpu.memory_space<smem>>
    %490 = vector.broadcast %489 : f32 to vector<8x8xf32>
    %491 = arith.mulf %488, %490 : vector<8x8xf32>
    %492 = arith.addf %486, %491 : vector<8x8xf32>
    %493 = vector.extract_strided_slice %425 {offsets = [3, 0, 0], sizes = [1, 8, 8], strides = [1, 1, 1]} : vector<8x8x8xf32> to vector<1x8x8xf32>
    %494 = vector.shape_cast %493 : vector<1x8x8xf32> to vector<8x8xf32>
    %c1_166 = arith.constant 1 : index
    %c3_167 = arith.constant 3 : index
    %495 = memref.load %arg5[%c1_166, %c3_167] : memref<8x8xf32, #tpu.memory_space<smem>>
    %496 = vector.broadcast %495 : f32 to vector<8x8xf32>
    %497 = arith.mulf %494, %496 : vector<8x8xf32>
    %498 = arith.addf %492, %497 : vector<8x8xf32>
    %499 = vector.extract_strided_slice %425 {offsets = [4, 0, 0], sizes = [1, 8, 8], strides = [1, 1, 1]} : vector<8x8x8xf32> to vector<1x8x8xf32>
    %500 = vector.shape_cast %499 : vector<1x8x8xf32> to vector<8x8xf32>
    %c1_168 = arith.constant 1 : index
    %c4_169 = arith.constant 4 : index
    %501 = memref.load %arg5[%c1_168, %c4_169] : memref<8x8xf32, #tpu.memory_space<smem>>
    %502 = vector.broadcast %501 : f32 to vector<8x8xf32>
    %503 = arith.mulf %500, %502 : vector<8x8xf32>
    %504 = arith.addf %498, %503 : vector<8x8xf32>
    %505 = vector.extract_strided_slice %425 {offsets = [5, 0, 0], sizes = [1, 8, 8], strides = [1, 1, 1]} : vector<8x8x8xf32> to vector<1x8x8xf32>
    %506 = vector.shape_cast %505 : vector<1x8x8xf32> to vector<8x8xf32>
    %c1_170 = arith.constant 1 : index
    %c5_171 = arith.constant 5 : index
    %507 = memref.load %arg5[%c1_170, %c5_171] : memref<8x8xf32, #tpu.memory_space<smem>>
    %508 = vector.broadcast %507 : f32 to vector<8x8xf32>
    %509 = arith.mulf %506, %508 : vector<8x8xf32>
    %510 = arith.addf %504, %509 : vector<8x8xf32>
    %511 = vector.extract_strided_slice %425 {offsets = [6, 0, 0], sizes = [1, 8, 8], strides = [1, 1, 1]} : vector<8x8x8xf32> to vector<1x8x8xf32>
    %512 = vector.shape_cast %511 : vector<1x8x8xf32> to vector<8x8xf32>
    %c1_172 = arith.constant 1 : index
    %c6_173 = arith.constant 6 : index
    %513 = memref.load %arg5[%c1_172, %c6_173] : memref<8x8xf32, #tpu.memory_space<smem>>
    %514 = vector.broadcast %513 : f32 to vector<8x8xf32>
    %515 = arith.mulf %512, %514 : vector<8x8xf32>
    %516 = arith.addf %510, %515 : vector<8x8xf32>
    %517 = vector.extract_strided_slice %425 {offsets = [7, 0, 0], sizes = [1, 8, 8], strides = [1, 1, 1]} : vector<8x8x8xf32> to vector<1x8x8xf32>
    %518 = vector.shape_cast %517 : vector<1x8x8xf32> to vector<8x8xf32>
    %c1_174 = arith.constant 1 : index
    %c7_175 = arith.constant 7 : index
    %519 = memref.load %arg5[%c1_174, %c7_175] : memref<8x8xf32, #tpu.memory_space<smem>>
    %520 = vector.broadcast %519 : f32 to vector<8x8xf32>
    %521 = arith.mulf %518, %520 : vector<8x8xf32>
    %522 = arith.addf %516, %521 : vector<8x8xf32>
    %c1_176 = arith.constant 1 : index
    %523 = memref.load %arg6[%c1_176] : memref<8xf32, #tpu.memory_space<smem>>
    %524 = vector.broadcast %523 : f32 to vector<8x8xf32>
    %525 = arith.addf %522, %524 : vector<8x8xf32>
    %526 = vector.extract_strided_slice %425 {offsets = [0, 0, 0], sizes = [1, 8, 8], strides = [1, 1, 1]} : vector<8x8x8xf32> to vector<1x8x8xf32>
    %527 = vector.shape_cast %526 : vector<1x8x8xf32> to vector<8x8xf32>
    %c2_177 = arith.constant 2 : index
    %c0_178 = arith.constant 0 : index
    %528 = memref.load %arg5[%c2_177, %c0_178] : memref<8x8xf32, #tpu.memory_space<smem>>
    %529 = vector.broadcast %528 : f32 to vector<8x8xf32>
    %530 = arith.mulf %527, %529 : vector<8x8xf32>
    %531 = vector.extract_strided_slice %425 {offsets = [1, 0, 0], sizes = [1, 8, 8], strides = [1, 1, 1]} : vector<8x8x8xf32> to vector<1x8x8xf32>
    %532 = vector.shape_cast %531 : vector<1x8x8xf32> to vector<8x8xf32>
    %c2_179 = arith.constant 2 : index
    %c1_180 = arith.constant 1 : index
    %533 = memref.load %arg5[%c2_179, %c1_180] : memref<8x8xf32, #tpu.memory_space<smem>>
    %534 = vector.broadcast %533 : f32 to vector<8x8xf32>
    %535 = arith.mulf %532, %534 : vector<8x8xf32>
    %536 = arith.addf %530, %535 : vector<8x8xf32>
    %537 = vector.extract_strided_slice %425 {offsets = [2, 0, 0], sizes = [1, 8, 8], strides = [1, 1, 1]} : vector<8x8x8xf32> to vector<1x8x8xf32>
    %538 = vector.shape_cast %537 : vector<1x8x8xf32> to vector<8x8xf32>
    %c2_181 = arith.constant 2 : index
    %c2_182 = arith.constant 2 : index
    %539 = memref.load %arg5[%c2_181, %c2_182] : memref<8x8xf32, #tpu.memory_space<smem>>
    %540 = vector.broadcast %539 : f32 to vector<8x8xf32>
    %541 = arith.mulf %538, %540 : vector<8x8xf32>
    %542 = arith.addf %536, %541 : vector<8x8xf32>
    %543 = vector.extract_strided_slice %425 {offsets = [3, 0, 0], sizes = [1, 8, 8], strides = [1, 1, 1]} : vector<8x8x8xf32> to vector<1x8x8xf32>
    %544 = vector.shape_cast %543 : vector<1x8x8xf32> to vector<8x8xf32>
    %c2_183 = arith.constant 2 : index
    %c3_184 = arith.constant 3 : index
    %545 = memref.load %arg5[%c2_183, %c3_184] : memref<8x8xf32, #tpu.memory_space<smem>>
    %546 = vector.broadcast %545 : f32 to vector<8x8xf32>
    %547 = arith.mulf %544, %546 : vector<8x8xf32>
    %548 = arith.addf %542, %547 : vector<8x8xf32>
    %549 = vector.extract_strided_slice %425 {offsets = [4, 0, 0], sizes = [1, 8, 8], strides = [1, 1, 1]} : vector<8x8x8xf32> to vector<1x8x8xf32>
    %550 = vector.shape_cast %549 : vector<1x8x8xf32> to vector<8x8xf32>
    %c2_185 = arith.constant 2 : index
    %c4_186 = arith.constant 4 : index
    %551 = memref.load %arg5[%c2_185, %c4_186] : memref<8x8xf32, #tpu.memory_space<smem>>
    %552 = vector.broadcast %551 : f32 to vector<8x8xf32>
    %553 = arith.mulf %550, %552 : vector<8x8xf32>
    %554 = arith.addf %548, %553 : vector<8x8xf32>
    %555 = vector.extract_strided_slice %425 {offsets = [5, 0, 0], sizes = [1, 8, 8], strides = [1, 1, 1]} : vector<8x8x8xf32> to vector<1x8x8xf32>
    %556 = vector.shape_cast %555 : vector<1x8x8xf32> to vector<8x8xf32>
    %c2_187 = arith.constant 2 : index
    %c5_188 = arith.constant 5 : index
    %557 = memref.load %arg5[%c2_187, %c5_188] : memref<8x8xf32, #tpu.memory_space<smem>>
    %558 = vector.broadcast %557 : f32 to vector<8x8xf32>
    %559 = arith.mulf %556, %558 : vector<8x8xf32>
    %560 = arith.addf %554, %559 : vector<8x8xf32>
    %561 = vector.extract_strided_slice %425 {offsets = [6, 0, 0], sizes = [1, 8, 8], strides = [1, 1, 1]} : vector<8x8x8xf32> to vector<1x8x8xf32>
    %562 = vector.shape_cast %561 : vector<1x8x8xf32> to vector<8x8xf32>
    %c2_189 = arith.constant 2 : index
    %c6_190 = arith.constant 6 : index
    %563 = memref.load %arg5[%c2_189, %c6_190] : memref<8x8xf32, #tpu.memory_space<smem>>
    %564 = vector.broadcast %563 : f32 to vector<8x8xf32>
    %565 = arith.mulf %562, %564 : vector<8x8xf32>
    %566 = arith.addf %560, %565 : vector<8x8xf32>
    %567 = vector.extract_strided_slice %425 {offsets = [7, 0, 0], sizes = [1, 8, 8], strides = [1, 1, 1]} : vector<8x8x8xf32> to vector<1x8x8xf32>
    %568 = vector.shape_cast %567 : vector<1x8x8xf32> to vector<8x8xf32>
    %c2_191 = arith.constant 2 : index
    %c7_192 = arith.constant 7 : index
    %569 = memref.load %arg5[%c2_191, %c7_192] : memref<8x8xf32, #tpu.memory_space<smem>>
    %570 = vector.broadcast %569 : f32 to vector<8x8xf32>
    %571 = arith.mulf %568, %570 : vector<8x8xf32>
    %572 = arith.addf %566, %571 : vector<8x8xf32>
    %c2_193 = arith.constant 2 : index
    %573 = memref.load %arg6[%c2_193] : memref<8xf32, #tpu.memory_space<smem>>
    %574 = vector.broadcast %573 : f32 to vector<8x8xf32>
    %575 = arith.addf %572, %574 : vector<8x8xf32>
    %576 = vector.extract_strided_slice %425 {offsets = [0, 0, 0], sizes = [1, 8, 8], strides = [1, 1, 1]} : vector<8x8x8xf32> to vector<1x8x8xf32>
    %577 = vector.shape_cast %576 : vector<1x8x8xf32> to vector<8x8xf32>
    %c3_194 = arith.constant 3 : index
    %c0_195 = arith.constant 0 : index
    %578 = memref.load %arg5[%c3_194, %c0_195] : memref<8x8xf32, #tpu.memory_space<smem>>
    %579 = vector.broadcast %578 : f32 to vector<8x8xf32>
    %580 = arith.mulf %577, %579 : vector<8x8xf32>
    %581 = vector.extract_strided_slice %425 {offsets = [1, 0, 0], sizes = [1, 8, 8], strides = [1, 1, 1]} : vector<8x8x8xf32> to vector<1x8x8xf32>
    %582 = vector.shape_cast %581 : vector<1x8x8xf32> to vector<8x8xf32>
    %c3_196 = arith.constant 3 : index
    %c1_197 = arith.constant 1 : index
    %583 = memref.load %arg5[%c3_196, %c1_197] : memref<8x8xf32, #tpu.memory_space<smem>>
    %584 = vector.broadcast %583 : f32 to vector<8x8xf32>
    %585 = arith.mulf %582, %584 : vector<8x8xf32>
    %586 = arith.addf %580, %585 : vector<8x8xf32>
    %587 = vector.extract_strided_slice %425 {offsets = [2, 0, 0], sizes = [1, 8, 8], strides = [1, 1, 1]} : vector<8x8x8xf32> to vector<1x8x8xf32>
    %588 = vector.shape_cast %587 : vector<1x8x8xf32> to vector<8x8xf32>
    %c3_198 = arith.constant 3 : index
    %c2_199 = arith.constant 2 : index
    %589 = memref.load %arg5[%c3_198, %c2_199] : memref<8x8xf32, #tpu.memory_space<smem>>
    %590 = vector.broadcast %589 : f32 to vector<8x8xf32>
    %591 = arith.mulf %588, %590 : vector<8x8xf32>
    %592 = arith.addf %586, %591 : vector<8x8xf32>
    %593 = vector.extract_strided_slice %425 {offsets = [3, 0, 0], sizes = [1, 8, 8], strides = [1, 1, 1]} : vector<8x8x8xf32> to vector<1x8x8xf32>
    %594 = vector.shape_cast %593 : vector<1x8x8xf32> to vector<8x8xf32>
    %c3_200 = arith.constant 3 : index
    %c3_201 = arith.constant 3 : index
    %595 = memref.load %arg5[%c3_200, %c3_201] : memref<8x8xf32, #tpu.memory_space<smem>>
    %596 = vector.broadcast %595 : f32 to vector<8x8xf32>
    %597 = arith.mulf %594, %596 : vector<8x8xf32>
    %598 = arith.addf %592, %597 : vector<8x8xf32>
    %599 = vector.extract_strided_slice %425 {offsets = [4, 0, 0], sizes = [1, 8, 8], strides = [1, 1, 1]} : vector<8x8x8xf32> to vector<1x8x8xf32>
    %600 = vector.shape_cast %599 : vector<1x8x8xf32> to vector<8x8xf32>
    %c3_202 = arith.constant 3 : index
    %c4_203 = arith.constant 4 : index
    %601 = memref.load %arg5[%c3_202, %c4_203] : memref<8x8xf32, #tpu.memory_space<smem>>
    %602 = vector.broadcast %601 : f32 to vector<8x8xf32>
    %603 = arith.mulf %600, %602 : vector<8x8xf32>
    %604 = arith.addf %598, %603 : vector<8x8xf32>
    %605 = vector.extract_strided_slice %425 {offsets = [5, 0, 0], sizes = [1, 8, 8], strides = [1, 1, 1]} : vector<8x8x8xf32> to vector<1x8x8xf32>
    %606 = vector.shape_cast %605 : vector<1x8x8xf32> to vector<8x8xf32>
    %c3_204 = arith.constant 3 : index
    %c5_205 = arith.constant 5 : index
    %607 = memref.load %arg5[%c3_204, %c5_205] : memref<8x8xf32, #tpu.memory_space<smem>>
    %608 = vector.broadcast %607 : f32 to vector<8x8xf32>
    %609 = arith.mulf %606, %608 : vector<8x8xf32>
    %610 = arith.addf %604, %609 : vector<8x8xf32>
    %611 = vector.extract_strided_slice %425 {offsets = [6, 0, 0], sizes = [1, 8, 8], strides = [1, 1, 1]} : vector<8x8x8xf32> to vector<1x8x8xf32>
    %612 = vector.shape_cast %611 : vector<1x8x8xf32> to vector<8x8xf32>
    %c3_206 = arith.constant 3 : index
    %c6_207 = arith.constant 6 : index
    %613 = memref.load %arg5[%c3_206, %c6_207] : memref<8x8xf32, #tpu.memory_space<smem>>
    %614 = vector.broadcast %613 : f32 to vector<8x8xf32>
    %615 = arith.mulf %612, %614 : vector<8x8xf32>
    %616 = arith.addf %610, %615 : vector<8x8xf32>
    %617 = vector.extract_strided_slice %425 {offsets = [7, 0, 0], sizes = [1, 8, 8], strides = [1, 1, 1]} : vector<8x8x8xf32> to vector<1x8x8xf32>
    %618 = vector.shape_cast %617 : vector<1x8x8xf32> to vector<8x8xf32>
    %c3_208 = arith.constant 3 : index
    %c7_209 = arith.constant 7 : index
    %619 = memref.load %arg5[%c3_208, %c7_209] : memref<8x8xf32, #tpu.memory_space<smem>>
    %620 = vector.broadcast %619 : f32 to vector<8x8xf32>
    %621 = arith.mulf %618, %620 : vector<8x8xf32>
    %622 = arith.addf %616, %621 : vector<8x8xf32>
    %c3_210 = arith.constant 3 : index
    %623 = memref.load %arg6[%c3_210] : memref<8xf32, #tpu.memory_space<smem>>
    %624 = vector.broadcast %623 : f32 to vector<8x8xf32>
    %625 = arith.addf %622, %624 : vector<8x8xf32>
    %626 = vector.extract_strided_slice %425 {offsets = [0, 0, 0], sizes = [1, 8, 8], strides = [1, 1, 1]} : vector<8x8x8xf32> to vector<1x8x8xf32>
    %627 = vector.shape_cast %626 : vector<1x8x8xf32> to vector<8x8xf32>
    %c4_211 = arith.constant 4 : index
    %c0_212 = arith.constant 0 : index
    %628 = memref.load %arg5[%c4_211, %c0_212] : memref<8x8xf32, #tpu.memory_space<smem>>
    %629 = vector.broadcast %628 : f32 to vector<8x8xf32>
    %630 = arith.mulf %627, %629 : vector<8x8xf32>
    %631 = vector.extract_strided_slice %425 {offsets = [1, 0, 0], sizes = [1, 8, 8], strides = [1, 1, 1]} : vector<8x8x8xf32> to vector<1x8x8xf32>
    %632 = vector.shape_cast %631 : vector<1x8x8xf32> to vector<8x8xf32>
    %c4_213 = arith.constant 4 : index
    %c1_214 = arith.constant 1 : index
    %633 = memref.load %arg5[%c4_213, %c1_214] : memref<8x8xf32, #tpu.memory_space<smem>>
    %634 = vector.broadcast %633 : f32 to vector<8x8xf32>
    %635 = arith.mulf %632, %634 : vector<8x8xf32>
    %636 = arith.addf %630, %635 : vector<8x8xf32>
    %637 = vector.extract_strided_slice %425 {offsets = [2, 0, 0], sizes = [1, 8, 8], strides = [1, 1, 1]} : vector<8x8x8xf32> to vector<1x8x8xf32>
    %638 = vector.shape_cast %637 : vector<1x8x8xf32> to vector<8x8xf32>
    %c4_215 = arith.constant 4 : index
    %c2_216 = arith.constant 2 : index
    %639 = memref.load %arg5[%c4_215, %c2_216] : memref<8x8xf32, #tpu.memory_space<smem>>
    %640 = vector.broadcast %639 : f32 to vector<8x8xf32>
    %641 = arith.mulf %638, %640 : vector<8x8xf32>
    %642 = arith.addf %636, %641 : vector<8x8xf32>
    %643 = vector.extract_strided_slice %425 {offsets = [3, 0, 0], sizes = [1, 8, 8], strides = [1, 1, 1]} : vector<8x8x8xf32> to vector<1x8x8xf32>
    %644 = vector.shape_cast %643 : vector<1x8x8xf32> to vector<8x8xf32>
    %c4_217 = arith.constant 4 : index
    %c3_218 = arith.constant 3 : index
    %645 = memref.load %arg5[%c4_217, %c3_218] : memref<8x8xf32, #tpu.memory_space<smem>>
    %646 = vector.broadcast %645 : f32 to vector<8x8xf32>
    %647 = arith.mulf %644, %646 : vector<8x8xf32>
    %648 = arith.addf %642, %647 : vector<8x8xf32>
    %649 = vector.extract_strided_slice %425 {offsets = [4, 0, 0], sizes = [1, 8, 8], strides = [1, 1, 1]} : vector<8x8x8xf32> to vector<1x8x8xf32>
    %650 = vector.shape_cast %649 : vector<1x8x8xf32> to vector<8x8xf32>
    %c4_219 = arith.constant 4 : index
    %c4_220 = arith.constant 4 : index
    %651 = memref.load %arg5[%c4_219, %c4_220] : memref<8x8xf32, #tpu.memory_space<smem>>
    %652 = vector.broadcast %651 : f32 to vector<8x8xf32>
    %653 = arith.mulf %650, %652 : vector<8x8xf32>
    %654 = arith.addf %648, %653 : vector<8x8xf32>
    %655 = vector.extract_strided_slice %425 {offsets = [5, 0, 0], sizes = [1, 8, 8], strides = [1, 1, 1]} : vector<8x8x8xf32> to vector<1x8x8xf32>
    %656 = vector.shape_cast %655 : vector<1x8x8xf32> to vector<8x8xf32>
    %c4_221 = arith.constant 4 : index
    %c5_222 = arith.constant 5 : index
    %657 = memref.load %arg5[%c4_221, %c5_222] : memref<8x8xf32, #tpu.memory_space<smem>>
    %658 = vector.broadcast %657 : f32 to vector<8x8xf32>
    %659 = arith.mulf %656, %658 : vector<8x8xf32>
    %660 = arith.addf %654, %659 : vector<8x8xf32>
    %661 = vector.extract_strided_slice %425 {offsets = [6, 0, 0], sizes = [1, 8, 8], strides = [1, 1, 1]} : vector<8x8x8xf32> to vector<1x8x8xf32>
    %662 = vector.shape_cast %661 : vector<1x8x8xf32> to vector<8x8xf32>
    %c4_223 = arith.constant 4 : index
    %c6_224 = arith.constant 6 : index
    %663 = memref.load %arg5[%c4_223, %c6_224] : memref<8x8xf32, #tpu.memory_space<smem>>
    %664 = vector.broadcast %663 : f32 to vector<8x8xf32>
    %665 = arith.mulf %662, %664 : vector<8x8xf32>
    %666 = arith.addf %660, %665 : vector<8x8xf32>
    %667 = vector.extract_strided_slice %425 {offsets = [7, 0, 0], sizes = [1, 8, 8], strides = [1, 1, 1]} : vector<8x8x8xf32> to vector<1x8x8xf32>
    %668 = vector.shape_cast %667 : vector<1x8x8xf32> to vector<8x8xf32>
    %c4_225 = arith.constant 4 : index
    %c7_226 = arith.constant 7 : index
    %669 = memref.load %arg5[%c4_225, %c7_226] : memref<8x8xf32, #tpu.memory_space<smem>>
    %670 = vector.broadcast %669 : f32 to vector<8x8xf32>
    %671 = arith.mulf %668, %670 : vector<8x8xf32>
    %672 = arith.addf %666, %671 : vector<8x8xf32>
    %c4_227 = arith.constant 4 : index
    %673 = memref.load %arg6[%c4_227] : memref<8xf32, #tpu.memory_space<smem>>
    %674 = vector.broadcast %673 : f32 to vector<8x8xf32>
    %675 = arith.addf %672, %674 : vector<8x8xf32>
    %676 = vector.extract_strided_slice %425 {offsets = [0, 0, 0], sizes = [1, 8, 8], strides = [1, 1, 1]} : vector<8x8x8xf32> to vector<1x8x8xf32>
    %677 = vector.shape_cast %676 : vector<1x8x8xf32> to vector<8x8xf32>
    %c5_228 = arith.constant 5 : index
    %c0_229 = arith.constant 0 : index
    %678 = memref.load %arg5[%c5_228, %c0_229] : memref<8x8xf32, #tpu.memory_space<smem>>
    %679 = vector.broadcast %678 : f32 to vector<8x8xf32>
    %680 = arith.mulf %677, %679 : vector<8x8xf32>
    %681 = vector.extract_strided_slice %425 {offsets = [1, 0, 0], sizes = [1, 8, 8], strides = [1, 1, 1]} : vector<8x8x8xf32> to vector<1x8x8xf32>
    %682 = vector.shape_cast %681 : vector<1x8x8xf32> to vector<8x8xf32>
    %c5_230 = arith.constant 5 : index
    %c1_231 = arith.constant 1 : index
    %683 = memref.load %arg5[%c5_230, %c1_231] : memref<8x8xf32, #tpu.memory_space<smem>>
    %684 = vector.broadcast %683 : f32 to vector<8x8xf32>
    %685 = arith.mulf %682, %684 : vector<8x8xf32>
    %686 = arith.addf %680, %685 : vector<8x8xf32>
    %687 = vector.extract_strided_slice %425 {offsets = [2, 0, 0], sizes = [1, 8, 8], strides = [1, 1, 1]} : vector<8x8x8xf32> to vector<1x8x8xf32>
    %688 = vector.shape_cast %687 : vector<1x8x8xf32> to vector<8x8xf32>
    %c5_232 = arith.constant 5 : index
    %c2_233 = arith.constant 2 : index
    %689 = memref.load %arg5[%c5_232, %c2_233] : memref<8x8xf32, #tpu.memory_space<smem>>
    %690 = vector.broadcast %689 : f32 to vector<8x8xf32>
    %691 = arith.mulf %688, %690 : vector<8x8xf32>
    %692 = arith.addf %686, %691 : vector<8x8xf32>
    %693 = vector.extract_strided_slice %425 {offsets = [3, 0, 0], sizes = [1, 8, 8], strides = [1, 1, 1]} : vector<8x8x8xf32> to vector<1x8x8xf32>
    %694 = vector.shape_cast %693 : vector<1x8x8xf32> to vector<8x8xf32>
    %c5_234 = arith.constant 5 : index
    %c3_235 = arith.constant 3 : index
    %695 = memref.load %arg5[%c5_234, %c3_235] : memref<8x8xf32, #tpu.memory_space<smem>>
    %696 = vector.broadcast %695 : f32 to vector<8x8xf32>
    %697 = arith.mulf %694, %696 : vector<8x8xf32>
    %698 = arith.addf %692, %697 : vector<8x8xf32>
    %699 = vector.extract_strided_slice %425 {offsets = [4, 0, 0], sizes = [1, 8, 8], strides = [1, 1, 1]} : vector<8x8x8xf32> to vector<1x8x8xf32>
    %700 = vector.shape_cast %699 : vector<1x8x8xf32> to vector<8x8xf32>
    %c5_236 = arith.constant 5 : index
    %c4_237 = arith.constant 4 : index
    %701 = memref.load %arg5[%c5_236, %c4_237] : memref<8x8xf32, #tpu.memory_space<smem>>
    %702 = vector.broadcast %701 : f32 to vector<8x8xf32>
    %703 = arith.mulf %700, %702 : vector<8x8xf32>
    %704 = arith.addf %698, %703 : vector<8x8xf32>
    %705 = vector.extract_strided_slice %425 {offsets = [5, 0, 0], sizes = [1, 8, 8], strides = [1, 1, 1]} : vector<8x8x8xf32> to vector<1x8x8xf32>
    %706 = vector.shape_cast %705 : vector<1x8x8xf32> to vector<8x8xf32>
    %c5_238 = arith.constant 5 : index
    %c5_239 = arith.constant 5 : index
    %707 = memref.load %arg5[%c5_238, %c5_239] : memref<8x8xf32, #tpu.memory_space<smem>>
    %708 = vector.broadcast %707 : f32 to vector<8x8xf32>
    %709 = arith.mulf %706, %708 : vector<8x8xf32>
    %710 = arith.addf %704, %709 : vector<8x8xf32>
    %711 = vector.extract_strided_slice %425 {offsets = [6, 0, 0], sizes = [1, 8, 8], strides = [1, 1, 1]} : vector<8x8x8xf32> to vector<1x8x8xf32>
    %712 = vector.shape_cast %711 : vector<1x8x8xf32> to vector<8x8xf32>
    %c5_240 = arith.constant 5 : index
    %c6_241 = arith.constant 6 : index
    %713 = memref.load %arg5[%c5_240, %c6_241] : memref<8x8xf32, #tpu.memory_space<smem>>
    %714 = vector.broadcast %713 : f32 to vector<8x8xf32>
    %715 = arith.mulf %712, %714 : vector<8x8xf32>
    %716 = arith.addf %710, %715 : vector<8x8xf32>
    %717 = vector.extract_strided_slice %425 {offsets = [7, 0, 0], sizes = [1, 8, 8], strides = [1, 1, 1]} : vector<8x8x8xf32> to vector<1x8x8xf32>
    %718 = vector.shape_cast %717 : vector<1x8x8xf32> to vector<8x8xf32>
    %c5_242 = arith.constant 5 : index
    %c7_243 = arith.constant 7 : index
    %719 = memref.load %arg5[%c5_242, %c7_243] : memref<8x8xf32, #tpu.memory_space<smem>>
    %720 = vector.broadcast %719 : f32 to vector<8x8xf32>
    %721 = arith.mulf %718, %720 : vector<8x8xf32>
    %722 = arith.addf %716, %721 : vector<8x8xf32>
    %c5_244 = arith.constant 5 : index
    %723 = memref.load %arg6[%c5_244] : memref<8xf32, #tpu.memory_space<smem>>
    %724 = vector.broadcast %723 : f32 to vector<8x8xf32>
    %725 = arith.addf %722, %724 : vector<8x8xf32>
    %726 = vector.extract_strided_slice %425 {offsets = [0, 0, 0], sizes = [1, 8, 8], strides = [1, 1, 1]} : vector<8x8x8xf32> to vector<1x8x8xf32>
    %727 = vector.shape_cast %726 : vector<1x8x8xf32> to vector<8x8xf32>
    %c6_245 = arith.constant 6 : index
    %c0_246 = arith.constant 0 : index
    %728 = memref.load %arg5[%c6_245, %c0_246] : memref<8x8xf32, #tpu.memory_space<smem>>
    %729 = vector.broadcast %728 : f32 to vector<8x8xf32>
    %730 = arith.mulf %727, %729 : vector<8x8xf32>
    %731 = vector.extract_strided_slice %425 {offsets = [1, 0, 0], sizes = [1, 8, 8], strides = [1, 1, 1]} : vector<8x8x8xf32> to vector<1x8x8xf32>
    %732 = vector.shape_cast %731 : vector<1x8x8xf32> to vector<8x8xf32>
    %c6_247 = arith.constant 6 : index
    %c1_248 = arith.constant 1 : index
    %733 = memref.load %arg5[%c6_247, %c1_248] : memref<8x8xf32, #tpu.memory_space<smem>>
    %734 = vector.broadcast %733 : f32 to vector<8x8xf32>
    %735 = arith.mulf %732, %734 : vector<8x8xf32>
    %736 = arith.addf %730, %735 : vector<8x8xf32>
    %737 = vector.extract_strided_slice %425 {offsets = [2, 0, 0], sizes = [1, 8, 8], strides = [1, 1, 1]} : vector<8x8x8xf32> to vector<1x8x8xf32>
    %738 = vector.shape_cast %737 : vector<1x8x8xf32> to vector<8x8xf32>
    %c6_249 = arith.constant 6 : index
    %c2_250 = arith.constant 2 : index
    %739 = memref.load %arg5[%c6_249, %c2_250] : memref<8x8xf32, #tpu.memory_space<smem>>
    %740 = vector.broadcast %739 : f32 to vector<8x8xf32>
    %741 = arith.mulf %738, %740 : vector<8x8xf32>
    %742 = arith.addf %736, %741 : vector<8x8xf32>
    %743 = vector.extract_strided_slice %425 {offsets = [3, 0, 0], sizes = [1, 8, 8], strides = [1, 1, 1]} : vector<8x8x8xf32> to vector<1x8x8xf32>
    %744 = vector.shape_cast %743 : vector<1x8x8xf32> to vector<8x8xf32>
    %c6_251 = arith.constant 6 : index
    %c3_252 = arith.constant 3 : index
    %745 = memref.load %arg5[%c6_251, %c3_252] : memref<8x8xf32, #tpu.memory_space<smem>>
    %746 = vector.broadcast %745 : f32 to vector<8x8xf32>
    %747 = arith.mulf %744, %746 : vector<8x8xf32>
    %748 = arith.addf %742, %747 : vector<8x8xf32>
    %749 = vector.extract_strided_slice %425 {offsets = [4, 0, 0], sizes = [1, 8, 8], strides = [1, 1, 1]} : vector<8x8x8xf32> to vector<1x8x8xf32>
    %750 = vector.shape_cast %749 : vector<1x8x8xf32> to vector<8x8xf32>
    %c6_253 = arith.constant 6 : index
    %c4_254 = arith.constant 4 : index
    %751 = memref.load %arg5[%c6_253, %c4_254] : memref<8x8xf32, #tpu.memory_space<smem>>
    %752 = vector.broadcast %751 : f32 to vector<8x8xf32>
    %753 = arith.mulf %750, %752 : vector<8x8xf32>
    %754 = arith.addf %748, %753 : vector<8x8xf32>
    %755 = vector.extract_strided_slice %425 {offsets = [5, 0, 0], sizes = [1, 8, 8], strides = [1, 1, 1]} : vector<8x8x8xf32> to vector<1x8x8xf32>
    %756 = vector.shape_cast %755 : vector<1x8x8xf32> to vector<8x8xf32>
    %c6_255 = arith.constant 6 : index
    %c5_256 = arith.constant 5 : index
    %757 = memref.load %arg5[%c6_255, %c5_256] : memref<8x8xf32, #tpu.memory_space<smem>>
    %758 = vector.broadcast %757 : f32 to vector<8x8xf32>
    %759 = arith.mulf %756, %758 : vector<8x8xf32>
    %760 = arith.addf %754, %759 : vector<8x8xf32>
    %761 = vector.extract_strided_slice %425 {offsets = [6, 0, 0], sizes = [1, 8, 8], strides = [1, 1, 1]} : vector<8x8x8xf32> to vector<1x8x8xf32>
    %762 = vector.shape_cast %761 : vector<1x8x8xf32> to vector<8x8xf32>
    %c6_257 = arith.constant 6 : index
    %c6_258 = arith.constant 6 : index
    %763 = memref.load %arg5[%c6_257, %c6_258] : memref<8x8xf32, #tpu.memory_space<smem>>
    %764 = vector.broadcast %763 : f32 to vector<8x8xf32>
    %765 = arith.mulf %762, %764 : vector<8x8xf32>
    %766 = arith.addf %760, %765 : vector<8x8xf32>
    %767 = vector.extract_strided_slice %425 {offsets = [7, 0, 0], sizes = [1, 8, 8], strides = [1, 1, 1]} : vector<8x8x8xf32> to vector<1x8x8xf32>
    %768 = vector.shape_cast %767 : vector<1x8x8xf32> to vector<8x8xf32>
    %c6_259 = arith.constant 6 : index
    %c7_260 = arith.constant 7 : index
    %769 = memref.load %arg5[%c6_259, %c7_260] : memref<8x8xf32, #tpu.memory_space<smem>>
    %770 = vector.broadcast %769 : f32 to vector<8x8xf32>
    %771 = arith.mulf %768, %770 : vector<8x8xf32>
    %772 = arith.addf %766, %771 : vector<8x8xf32>
    %c6_261 = arith.constant 6 : index
    %773 = memref.load %arg6[%c6_261] : memref<8xf32, #tpu.memory_space<smem>>
    %774 = vector.broadcast %773 : f32 to vector<8x8xf32>
    %775 = arith.addf %772, %774 : vector<8x8xf32>
    %776 = vector.extract_strided_slice %425 {offsets = [0, 0, 0], sizes = [1, 8, 8], strides = [1, 1, 1]} : vector<8x8x8xf32> to vector<1x8x8xf32>
    %777 = vector.shape_cast %776 : vector<1x8x8xf32> to vector<8x8xf32>
    %c7_262 = arith.constant 7 : index
    %c0_263 = arith.constant 0 : index
    %778 = memref.load %arg5[%c7_262, %c0_263] : memref<8x8xf32, #tpu.memory_space<smem>>
    %779 = vector.broadcast %778 : f32 to vector<8x8xf32>
    %780 = arith.mulf %777, %779 : vector<8x8xf32>
    %781 = vector.extract_strided_slice %425 {offsets = [1, 0, 0], sizes = [1, 8, 8], strides = [1, 1, 1]} : vector<8x8x8xf32> to vector<1x8x8xf32>
    %782 = vector.shape_cast %781 : vector<1x8x8xf32> to vector<8x8xf32>
    %c7_264 = arith.constant 7 : index
    %c1_265 = arith.constant 1 : index
    %783 = memref.load %arg5[%c7_264, %c1_265] : memref<8x8xf32, #tpu.memory_space<smem>>
    %784 = vector.broadcast %783 : f32 to vector<8x8xf32>
    %785 = arith.mulf %782, %784 : vector<8x8xf32>
    %786 = arith.addf %780, %785 : vector<8x8xf32>
    %787 = vector.extract_strided_slice %425 {offsets = [2, 0, 0], sizes = [1, 8, 8], strides = [1, 1, 1]} : vector<8x8x8xf32> to vector<1x8x8xf32>
    %788 = vector.shape_cast %787 : vector<1x8x8xf32> to vector<8x8xf32>
    %c7_266 = arith.constant 7 : index
    %c2_267 = arith.constant 2 : index
    %789 = memref.load %arg5[%c7_266, %c2_267] : memref<8x8xf32, #tpu.memory_space<smem>>
    %790 = vector.broadcast %789 : f32 to vector<8x8xf32>
    %791 = arith.mulf %788, %790 : vector<8x8xf32>
    %792 = arith.addf %786, %791 : vector<8x8xf32>
    %793 = vector.extract_strided_slice %425 {offsets = [3, 0, 0], sizes = [1, 8, 8], strides = [1, 1, 1]} : vector<8x8x8xf32> to vector<1x8x8xf32>
    %794 = vector.shape_cast %793 : vector<1x8x8xf32> to vector<8x8xf32>
    %c7_268 = arith.constant 7 : index
    %c3_269 = arith.constant 3 : index
    %795 = memref.load %arg5[%c7_268, %c3_269] : memref<8x8xf32, #tpu.memory_space<smem>>
    %796 = vector.broadcast %795 : f32 to vector<8x8xf32>
    %797 = arith.mulf %794, %796 : vector<8x8xf32>
    %798 = arith.addf %792, %797 : vector<8x8xf32>
    %799 = vector.extract_strided_slice %425 {offsets = [4, 0, 0], sizes = [1, 8, 8], strides = [1, 1, 1]} : vector<8x8x8xf32> to vector<1x8x8xf32>
    %800 = vector.shape_cast %799 : vector<1x8x8xf32> to vector<8x8xf32>
    %c7_270 = arith.constant 7 : index
    %c4_271 = arith.constant 4 : index
    %801 = memref.load %arg5[%c7_270, %c4_271] : memref<8x8xf32, #tpu.memory_space<smem>>
    %802 = vector.broadcast %801 : f32 to vector<8x8xf32>
    %803 = arith.mulf %800, %802 : vector<8x8xf32>
    %804 = arith.addf %798, %803 : vector<8x8xf32>
    %805 = vector.extract_strided_slice %425 {offsets = [5, 0, 0], sizes = [1, 8, 8], strides = [1, 1, 1]} : vector<8x8x8xf32> to vector<1x8x8xf32>
    %806 = vector.shape_cast %805 : vector<1x8x8xf32> to vector<8x8xf32>
    %c7_272 = arith.constant 7 : index
    %c5_273 = arith.constant 5 : index
    %807 = memref.load %arg5[%c7_272, %c5_273] : memref<8x8xf32, #tpu.memory_space<smem>>
    %808 = vector.broadcast %807 : f32 to vector<8x8xf32>
    %809 = arith.mulf %806, %808 : vector<8x8xf32>
    %810 = arith.addf %804, %809 : vector<8x8xf32>
    %811 = vector.extract_strided_slice %425 {offsets = [6, 0, 0], sizes = [1, 8, 8], strides = [1, 1, 1]} : vector<8x8x8xf32> to vector<1x8x8xf32>
    %812 = vector.shape_cast %811 : vector<1x8x8xf32> to vector<8x8xf32>
    %c7_274 = arith.constant 7 : index
    %c6_275 = arith.constant 6 : index
    %813 = memref.load %arg5[%c7_274, %c6_275] : memref<8x8xf32, #tpu.memory_space<smem>>
    %814 = vector.broadcast %813 : f32 to vector<8x8xf32>
    %815 = arith.mulf %812, %814 : vector<8x8xf32>
    %816 = arith.addf %810, %815 : vector<8x8xf32>
    %817 = vector.extract_strided_slice %425 {offsets = [7, 0, 0], sizes = [1, 8, 8], strides = [1, 1, 1]} : vector<8x8x8xf32> to vector<1x8x8xf32>
    %818 = vector.shape_cast %817 : vector<1x8x8xf32> to vector<8x8xf32>
    %c7_276 = arith.constant 7 : index
    %c7_277 = arith.constant 7 : index
    %819 = memref.load %arg5[%c7_276, %c7_277] : memref<8x8xf32, #tpu.memory_space<smem>>
    %820 = vector.broadcast %819 : f32 to vector<8x8xf32>
    %821 = arith.mulf %818, %820 : vector<8x8xf32>
    %822 = arith.addf %816, %821 : vector<8x8xf32>
    %c7_278 = arith.constant 7 : index
    %823 = memref.load %arg6[%c7_278] : memref<8xf32, #tpu.memory_space<smem>>
    %824 = vector.broadcast %823 : f32 to vector<8x8xf32>
    %825 = arith.addf %822, %824 : vector<8x8xf32>
    %826 = vector.shape_cast %475 : vector<8x8xf32> to vector<1x8x8xf32>
    %827 = vector.shape_cast %525 : vector<8x8xf32> to vector<1x8x8xf32>
    %828 = vector.shape_cast %575 : vector<8x8xf32> to vector<1x8x8xf32>
    %829 = vector.shape_cast %625 : vector<8x8xf32> to vector<1x8x8xf32>
    %830 = vector.shape_cast %675 : vector<8x8xf32> to vector<1x8x8xf32>
    %831 = vector.shape_cast %725 : vector<8x8xf32> to vector<1x8x8xf32>
    %832 = vector.shape_cast %775 : vector<8x8xf32> to vector<1x8x8xf32>
    %833 = vector.shape_cast %825 : vector<8x8xf32> to vector<1x8x8xf32>
    %834 = tpu.concatenate %826, %827, %828, %829, %830, %831, %832, %833 in 0 : vector<1x8x8xf32>, vector<1x8x8xf32>, vector<1x8x8xf32>, vector<1x8x8xf32>, vector<1x8x8xf32>, vector<1x8x8xf32>, vector<1x8x8xf32>, vector<1x8x8xf32> -> vector<8x8x8xf32>
    %835 = vector.broadcast %414 : vector<8x1x1xf32> to vector<8x8x8xf32>
    %836 = arith.subf %392, %835 : vector<8x8x8xf32>
    %837 = vector.broadcast %421 : vector<8x1x1xf32> to vector<8x8x8xf32>
    %838 = arith.mulf %836, %837 : vector<8x8x8xf32>
    %839 = vector.extract_strided_slice %838 {offsets = [0, 0, 0], sizes = [1, 8, 8], strides = [1, 1, 1]} : vector<8x8x8xf32> to vector<1x8x8xf32>
    %840 = vector.shape_cast %839 : vector<1x8x8xf32> to vector<8x8xf32>
    %c0_279 = arith.constant 0 : index
    %c0_280 = arith.constant 0 : index
    %841 = memref.load %arg5[%c0_279, %c0_280] : memref<8x8xf32, #tpu.memory_space<smem>>
    %842 = vector.broadcast %841 : f32 to vector<8x8xf32>
    %843 = arith.mulf %840, %842 : vector<8x8xf32>
    %844 = vector.extract_strided_slice %838 {offsets = [1, 0, 0], sizes = [1, 8, 8], strides = [1, 1, 1]} : vector<8x8x8xf32> to vector<1x8x8xf32>
    %845 = vector.shape_cast %844 : vector<1x8x8xf32> to vector<8x8xf32>
    %c0_281 = arith.constant 0 : index
    %c1_282 = arith.constant 1 : index
    %846 = memref.load %arg5[%c0_281, %c1_282] : memref<8x8xf32, #tpu.memory_space<smem>>
    %847 = vector.broadcast %846 : f32 to vector<8x8xf32>
    %848 = arith.mulf %845, %847 : vector<8x8xf32>
    %849 = arith.addf %843, %848 : vector<8x8xf32>
    %850 = vector.extract_strided_slice %838 {offsets = [2, 0, 0], sizes = [1, 8, 8], strides = [1, 1, 1]} : vector<8x8x8xf32> to vector<1x8x8xf32>
    %851 = vector.shape_cast %850 : vector<1x8x8xf32> to vector<8x8xf32>
    %c0_283 = arith.constant 0 : index
    %c2_284 = arith.constant 2 : index
    %852 = memref.load %arg5[%c0_283, %c2_284] : memref<8x8xf32, #tpu.memory_space<smem>>
    %853 = vector.broadcast %852 : f32 to vector<8x8xf32>
    %854 = arith.mulf %851, %853 : vector<8x8xf32>
    %855 = arith.addf %849, %854 : vector<8x8xf32>
    %856 = vector.extract_strided_slice %838 {offsets = [3, 0, 0], sizes = [1, 8, 8], strides = [1, 1, 1]} : vector<8x8x8xf32> to vector<1x8x8xf32>
    %857 = vector.shape_cast %856 : vector<1x8x8xf32> to vector<8x8xf32>
    %c0_285 = arith.constant 0 : index
    %c3_286 = arith.constant 3 : index
    %858 = memref.load %arg5[%c0_285, %c3_286] : memref<8x8xf32, #tpu.memory_space<smem>>
    %859 = vector.broadcast %858 : f32 to vector<8x8xf32>
    %860 = arith.mulf %857, %859 : vector<8x8xf32>
    %861 = arith.addf %855, %860 : vector<8x8xf32>
    %862 = vector.extract_strided_slice %838 {offsets = [4, 0, 0], sizes = [1, 8, 8], strides = [1, 1, 1]} : vector<8x8x8xf32> to vector<1x8x8xf32>
    %863 = vector.shape_cast %862 : vector<1x8x8xf32> to vector<8x8xf32>
    %c0_287 = arith.constant 0 : index
    %c4_288 = arith.constant 4 : index
    %864 = memref.load %arg5[%c0_287, %c4_288] : memref<8x8xf32, #tpu.memory_space<smem>>
    %865 = vector.broadcast %864 : f32 to vector<8x8xf32>
    %866 = arith.mulf %863, %865 : vector<8x8xf32>
    %867 = arith.addf %861, %866 : vector<8x8xf32>
    %868 = vector.extract_strided_slice %838 {offsets = [5, 0, 0], sizes = [1, 8, 8], strides = [1, 1, 1]} : vector<8x8x8xf32> to vector<1x8x8xf32>
    %869 = vector.shape_cast %868 : vector<1x8x8xf32> to vector<8x8xf32>
    %c0_289 = arith.constant 0 : index
    %c5_290 = arith.constant 5 : index
    %870 = memref.load %arg5[%c0_289, %c5_290] : memref<8x8xf32, #tpu.memory_space<smem>>
    %871 = vector.broadcast %870 : f32 to vector<8x8xf32>
    %872 = arith.mulf %869, %871 : vector<8x8xf32>
    %873 = arith.addf %867, %872 : vector<8x8xf32>
    %874 = vector.extract_strided_slice %838 {offsets = [6, 0, 0], sizes = [1, 8, 8], strides = [1, 1, 1]} : vector<8x8x8xf32> to vector<1x8x8xf32>
    %875 = vector.shape_cast %874 : vector<1x8x8xf32> to vector<8x8xf32>
    %c0_291 = arith.constant 0 : index
    %c6_292 = arith.constant 6 : index
    %876 = memref.load %arg5[%c0_291, %c6_292] : memref<8x8xf32, #tpu.memory_space<smem>>
    %877 = vector.broadcast %876 : f32 to vector<8x8xf32>
    %878 = arith.mulf %875, %877 : vector<8x8xf32>
    %879 = arith.addf %873, %878 : vector<8x8xf32>
    %880 = vector.extract_strided_slice %838 {offsets = [7, 0, 0], sizes = [1, 8, 8], strides = [1, 1, 1]} : vector<8x8x8xf32> to vector<1x8x8xf32>
    %881 = vector.shape_cast %880 : vector<1x8x8xf32> to vector<8x8xf32>
    %c0_293 = arith.constant 0 : index
    %c7_294 = arith.constant 7 : index
    %882 = memref.load %arg5[%c0_293, %c7_294] : memref<8x8xf32, #tpu.memory_space<smem>>
    %883 = vector.broadcast %882 : f32 to vector<8x8xf32>
    %884 = arith.mulf %881, %883 : vector<8x8xf32>
    %885 = arith.addf %879, %884 : vector<8x8xf32>
    %c0_295 = arith.constant 0 : index
    %886 = memref.load %arg6[%c0_295] : memref<8xf32, #tpu.memory_space<smem>>
    %887 = vector.broadcast %886 : f32 to vector<8x8xf32>
    %888 = arith.addf %885, %887 : vector<8x8xf32>
    %889 = vector.extract_strided_slice %838 {offsets = [0, 0, 0], sizes = [1, 8, 8], strides = [1, 1, 1]} : vector<8x8x8xf32> to vector<1x8x8xf32>
    %890 = vector.shape_cast %889 : vector<1x8x8xf32> to vector<8x8xf32>
    %c1_296 = arith.constant 1 : index
    %c0_297 = arith.constant 0 : index
    %891 = memref.load %arg5[%c1_296, %c0_297] : memref<8x8xf32, #tpu.memory_space<smem>>
    %892 = vector.broadcast %891 : f32 to vector<8x8xf32>
    %893 = arith.mulf %890, %892 : vector<8x8xf32>
    %894 = vector.extract_strided_slice %838 {offsets = [1, 0, 0], sizes = [1, 8, 8], strides = [1, 1, 1]} : vector<8x8x8xf32> to vector<1x8x8xf32>
    %895 = vector.shape_cast %894 : vector<1x8x8xf32> to vector<8x8xf32>
    %c1_298 = arith.constant 1 : index
    %c1_299 = arith.constant 1 : index
    %896 = memref.load %arg5[%c1_298, %c1_299] : memref<8x8xf32, #tpu.memory_space<smem>>
    %897 = vector.broadcast %896 : f32 to vector<8x8xf32>
    %898 = arith.mulf %895, %897 : vector<8x8xf32>
    %899 = arith.addf %893, %898 : vector<8x8xf32>
    %900 = vector.extract_strided_slice %838 {offsets = [2, 0, 0], sizes = [1, 8, 8], strides = [1, 1, 1]} : vector<8x8x8xf32> to vector<1x8x8xf32>
    %901 = vector.shape_cast %900 : vector<1x8x8xf32> to vector<8x8xf32>
    %c1_300 = arith.constant 1 : index
    %c2_301 = arith.constant 2 : index
    %902 = memref.load %arg5[%c1_300, %c2_301] : memref<8x8xf32, #tpu.memory_space<smem>>
    %903 = vector.broadcast %902 : f32 to vector<8x8xf32>
    %904 = arith.mulf %901, %903 : vector<8x8xf32>
    %905 = arith.addf %899, %904 : vector<8x8xf32>
    %906 = vector.extract_strided_slice %838 {offsets = [3, 0, 0], sizes = [1, 8, 8], strides = [1, 1, 1]} : vector<8x8x8xf32> to vector<1x8x8xf32>
    %907 = vector.shape_cast %906 : vector<1x8x8xf32> to vector<8x8xf32>
    %c1_302 = arith.constant 1 : index
    %c3_303 = arith.constant 3 : index
    %908 = memref.load %arg5[%c1_302, %c3_303] : memref<8x8xf32, #tpu.memory_space<smem>>
    %909 = vector.broadcast %908 : f32 to vector<8x8xf32>
    %910 = arith.mulf %907, %909 : vector<8x8xf32>
    %911 = arith.addf %905, %910 : vector<8x8xf32>
    %912 = vector.extract_strided_slice %838 {offsets = [4, 0, 0], sizes = [1, 8, 8], strides = [1, 1, 1]} : vector<8x8x8xf32> to vector<1x8x8xf32>
    %913 = vector.shape_cast %912 : vector<1x8x8xf32> to vector<8x8xf32>
    %c1_304 = arith.constant 1 : index
    %c4_305 = arith.constant 4 : index
    %914 = memref.load %arg5[%c1_304, %c4_305] : memref<8x8xf32, #tpu.memory_space<smem>>
    %915 = vector.broadcast %914 : f32 to vector<8x8xf32>
    %916 = arith.mulf %913, %915 : vector<8x8xf32>
    %917 = arith.addf %911, %916 : vector<8x8xf32>
    %918 = vector.extract_strided_slice %838 {offsets = [5, 0, 0], sizes = [1, 8, 8], strides = [1, 1, 1]} : vector<8x8x8xf32> to vector<1x8x8xf32>
    %919 = vector.shape_cast %918 : vector<1x8x8xf32> to vector<8x8xf32>
    %c1_306 = arith.constant 1 : index
    %c5_307 = arith.constant 5 : index
    %920 = memref.load %arg5[%c1_306, %c5_307] : memref<8x8xf32, #tpu.memory_space<smem>>
    %921 = vector.broadcast %920 : f32 to vector<8x8xf32>
    %922 = arith.mulf %919, %921 : vector<8x8xf32>
    %923 = arith.addf %917, %922 : vector<8x8xf32>
    %924 = vector.extract_strided_slice %838 {offsets = [6, 0, 0], sizes = [1, 8, 8], strides = [1, 1, 1]} : vector<8x8x8xf32> to vector<1x8x8xf32>
    %925 = vector.shape_cast %924 : vector<1x8x8xf32> to vector<8x8xf32>
    %c1_308 = arith.constant 1 : index
    %c6_309 = arith.constant 6 : index
    %926 = memref.load %arg5[%c1_308, %c6_309] : memref<8x8xf32, #tpu.memory_space<smem>>
    %927 = vector.broadcast %926 : f32 to vector<8x8xf32>
    %928 = arith.mulf %925, %927 : vector<8x8xf32>
    %929 = arith.addf %923, %928 : vector<8x8xf32>
    %930 = vector.extract_strided_slice %838 {offsets = [7, 0, 0], sizes = [1, 8, 8], strides = [1, 1, 1]} : vector<8x8x8xf32> to vector<1x8x8xf32>
    %931 = vector.shape_cast %930 : vector<1x8x8xf32> to vector<8x8xf32>
    %c1_310 = arith.constant 1 : index
    %c7_311 = arith.constant 7 : index
    %932 = memref.load %arg5[%c1_310, %c7_311] : memref<8x8xf32, #tpu.memory_space<smem>>
    %933 = vector.broadcast %932 : f32 to vector<8x8xf32>
    %934 = arith.mulf %931, %933 : vector<8x8xf32>
    %935 = arith.addf %929, %934 : vector<8x8xf32>
    %c1_312 = arith.constant 1 : index
    %936 = memref.load %arg6[%c1_312] : memref<8xf32, #tpu.memory_space<smem>>
    %937 = vector.broadcast %936 : f32 to vector<8x8xf32>
    %938 = arith.addf %935, %937 : vector<8x8xf32>
    %939 = vector.extract_strided_slice %838 {offsets = [0, 0, 0], sizes = [1, 8, 8], strides = [1, 1, 1]} : vector<8x8x8xf32> to vector<1x8x8xf32>
    %940 = vector.shape_cast %939 : vector<1x8x8xf32> to vector<8x8xf32>
    %c2_313 = arith.constant 2 : index
    %c0_314 = arith.constant 0 : index
    %941 = memref.load %arg5[%c2_313, %c0_314] : memref<8x8xf32, #tpu.memory_space<smem>>
    %942 = vector.broadcast %941 : f32 to vector<8x8xf32>
    %943 = arith.mulf %940, %942 : vector<8x8xf32>
    %944 = vector.extract_strided_slice %838 {offsets = [1, 0, 0], sizes = [1, 8, 8], strides = [1, 1, 1]} : vector<8x8x8xf32> to vector<1x8x8xf32>
    %945 = vector.shape_cast %944 : vector<1x8x8xf32> to vector<8x8xf32>
    %c2_315 = arith.constant 2 : index
    %c1_316 = arith.constant 1 : index
    %946 = memref.load %arg5[%c2_315, %c1_316] : memref<8x8xf32, #tpu.memory_space<smem>>
    %947 = vector.broadcast %946 : f32 to vector<8x8xf32>
    %948 = arith.mulf %945, %947 : vector<8x8xf32>
    %949 = arith.addf %943, %948 : vector<8x8xf32>
    %950 = vector.extract_strided_slice %838 {offsets = [2, 0, 0], sizes = [1, 8, 8], strides = [1, 1, 1]} : vector<8x8x8xf32> to vector<1x8x8xf32>
    %951 = vector.shape_cast %950 : vector<1x8x8xf32> to vector<8x8xf32>
    %c2_317 = arith.constant 2 : index
    %c2_318 = arith.constant 2 : index
    %952 = memref.load %arg5[%c2_317, %c2_318] : memref<8x8xf32, #tpu.memory_space<smem>>
    %953 = vector.broadcast %952 : f32 to vector<8x8xf32>
    %954 = arith.mulf %951, %953 : vector<8x8xf32>
    %955 = arith.addf %949, %954 : vector<8x8xf32>
    %956 = vector.extract_strided_slice %838 {offsets = [3, 0, 0], sizes = [1, 8, 8], strides = [1, 1, 1]} : vector<8x8x8xf32> to vector<1x8x8xf32>
    %957 = vector.shape_cast %956 : vector<1x8x8xf32> to vector<8x8xf32>
    %c2_319 = arith.constant 2 : index
    %c3_320 = arith.constant 3 : index
    %958 = memref.load %arg5[%c2_319, %c3_320] : memref<8x8xf32, #tpu.memory_space<smem>>
    %959 = vector.broadcast %958 : f32 to vector<8x8xf32>
    %960 = arith.mulf %957, %959 : vector<8x8xf32>
    %961 = arith.addf %955, %960 : vector<8x8xf32>
    %962 = vector.extract_strided_slice %838 {offsets = [4, 0, 0], sizes = [1, 8, 8], strides = [1, 1, 1]} : vector<8x8x8xf32> to vector<1x8x8xf32>
    %963 = vector.shape_cast %962 : vector<1x8x8xf32> to vector<8x8xf32>
    %c2_321 = arith.constant 2 : index
    %c4_322 = arith.constant 4 : index
    %964 = memref.load %arg5[%c2_321, %c4_322] : memref<8x8xf32, #tpu.memory_space<smem>>
    %965 = vector.broadcast %964 : f32 to vector<8x8xf32>
    %966 = arith.mulf %963, %965 : vector<8x8xf32>
    %967 = arith.addf %961, %966 : vector<8x8xf32>
    %968 = vector.extract_strided_slice %838 {offsets = [5, 0, 0], sizes = [1, 8, 8], strides = [1, 1, 1]} : vector<8x8x8xf32> to vector<1x8x8xf32>
    %969 = vector.shape_cast %968 : vector<1x8x8xf32> to vector<8x8xf32>
    %c2_323 = arith.constant 2 : index
    %c5_324 = arith.constant 5 : index
    %970 = memref.load %arg5[%c2_323, %c5_324] : memref<8x8xf32, #tpu.memory_space<smem>>
    %971 = vector.broadcast %970 : f32 to vector<8x8xf32>
    %972 = arith.mulf %969, %971 : vector<8x8xf32>
    %973 = arith.addf %967, %972 : vector<8x8xf32>
    %974 = vector.extract_strided_slice %838 {offsets = [6, 0, 0], sizes = [1, 8, 8], strides = [1, 1, 1]} : vector<8x8x8xf32> to vector<1x8x8xf32>
    %975 = vector.shape_cast %974 : vector<1x8x8xf32> to vector<8x8xf32>
    %c2_325 = arith.constant 2 : index
    %c6_326 = arith.constant 6 : index
    %976 = memref.load %arg5[%c2_325, %c6_326] : memref<8x8xf32, #tpu.memory_space<smem>>
    %977 = vector.broadcast %976 : f32 to vector<8x8xf32>
    %978 = arith.mulf %975, %977 : vector<8x8xf32>
    %979 = arith.addf %973, %978 : vector<8x8xf32>
    %980 = vector.extract_strided_slice %838 {offsets = [7, 0, 0], sizes = [1, 8, 8], strides = [1, 1, 1]} : vector<8x8x8xf32> to vector<1x8x8xf32>
    %981 = vector.shape_cast %980 : vector<1x8x8xf32> to vector<8x8xf32>
    %c2_327 = arith.constant 2 : index
    %c7_328 = arith.constant 7 : index
    %982 = memref.load %arg5[%c2_327, %c7_328] : memref<8x8xf32, #tpu.memory_space<smem>>
    %983 = vector.broadcast %982 : f32 to vector<8x8xf32>
    %984 = arith.mulf %981, %983 : vector<8x8xf32>
    %985 = arith.addf %979, %984 : vector<8x8xf32>
    %c2_329 = arith.constant 2 : index
    %986 = memref.load %arg6[%c2_329] : memref<8xf32, #tpu.memory_space<smem>>
    %987 = vector.broadcast %986 : f32 to vector<8x8xf32>
    %988 = arith.addf %985, %987 : vector<8x8xf32>
    %989 = vector.extract_strided_slice %838 {offsets = [0, 0, 0], sizes = [1, 8, 8], strides = [1, 1, 1]} : vector<8x8x8xf32> to vector<1x8x8xf32>
    %990 = vector.shape_cast %989 : vector<1x8x8xf32> to vector<8x8xf32>
    %c3_330 = arith.constant 3 : index
    %c0_331 = arith.constant 0 : index
    %991 = memref.load %arg5[%c3_330, %c0_331] : memref<8x8xf32, #tpu.memory_space<smem>>
    %992 = vector.broadcast %991 : f32 to vector<8x8xf32>
    %993 = arith.mulf %990, %992 : vector<8x8xf32>
    %994 = vector.extract_strided_slice %838 {offsets = [1, 0, 0], sizes = [1, 8, 8], strides = [1, 1, 1]} : vector<8x8x8xf32> to vector<1x8x8xf32>
    %995 = vector.shape_cast %994 : vector<1x8x8xf32> to vector<8x8xf32>
    %c3_332 = arith.constant 3 : index
    %c1_333 = arith.constant 1 : index
    %996 = memref.load %arg5[%c3_332, %c1_333] : memref<8x8xf32, #tpu.memory_space<smem>>
    %997 = vector.broadcast %996 : f32 to vector<8x8xf32>
    %998 = arith.mulf %995, %997 : vector<8x8xf32>
    %999 = arith.addf %993, %998 : vector<8x8xf32>
    %1000 = vector.extract_strided_slice %838 {offsets = [2, 0, 0], sizes = [1, 8, 8], strides = [1, 1, 1]} : vector<8x8x8xf32> to vector<1x8x8xf32>
    %1001 = vector.shape_cast %1000 : vector<1x8x8xf32> to vector<8x8xf32>
    %c3_334 = arith.constant 3 : index
    %c2_335 = arith.constant 2 : index
    %1002 = memref.load %arg5[%c3_334, %c2_335] : memref<8x8xf32, #tpu.memory_space<smem>>
    %1003 = vector.broadcast %1002 : f32 to vector<8x8xf32>
    %1004 = arith.mulf %1001, %1003 : vector<8x8xf32>
    %1005 = arith.addf %999, %1004 : vector<8x8xf32>
    %1006 = vector.extract_strided_slice %838 {offsets = [3, 0, 0], sizes = [1, 8, 8], strides = [1, 1, 1]} : vector<8x8x8xf32> to vector<1x8x8xf32>
    %1007 = vector.shape_cast %1006 : vector<1x8x8xf32> to vector<8x8xf32>
    %c3_336 = arith.constant 3 : index
    %c3_337 = arith.constant 3 : index
    %1008 = memref.load %arg5[%c3_336, %c3_337] : memref<8x8xf32, #tpu.memory_space<smem>>
    %1009 = vector.broadcast %1008 : f32 to vector<8x8xf32>
    %1010 = arith.mulf %1007, %1009 : vector<8x8xf32>
    %1011 = arith.addf %1005, %1010 : vector<8x8xf32>
    %1012 = vector.extract_strided_slice %838 {offsets = [4, 0, 0], sizes = [1, 8, 8], strides = [1, 1, 1]} : vector<8x8x8xf32> to vector<1x8x8xf32>
    %1013 = vector.shape_cast %1012 : vector<1x8x8xf32> to vector<8x8xf32>
    %c3_338 = arith.constant 3 : index
    %c4_339 = arith.constant 4 : index
    %1014 = memref.load %arg5[%c3_338, %c4_339] : memref<8x8xf32, #tpu.memory_space<smem>>
    %1015 = vector.broadcast %1014 : f32 to vector<8x8xf32>
    %1016 = arith.mulf %1013, %1015 : vector<8x8xf32>
    %1017 = arith.addf %1011, %1016 : vector<8x8xf32>
    %1018 = vector.extract_strided_slice %838 {offsets = [5, 0, 0], sizes = [1, 8, 8], strides = [1, 1, 1]} : vector<8x8x8xf32> to vector<1x8x8xf32>
    %1019 = vector.shape_cast %1018 : vector<1x8x8xf32> to vector<8x8xf32>
    %c3_340 = arith.constant 3 : index
    %c5_341 = arith.constant 5 : index
    %1020 = memref.load %arg5[%c3_340, %c5_341] : memref<8x8xf32, #tpu.memory_space<smem>>
    %1021 = vector.broadcast %1020 : f32 to vector<8x8xf32>
    %1022 = arith.mulf %1019, %1021 : vector<8x8xf32>
    %1023 = arith.addf %1017, %1022 : vector<8x8xf32>
    %1024 = vector.extract_strided_slice %838 {offsets = [6, 0, 0], sizes = [1, 8, 8], strides = [1, 1, 1]} : vector<8x8x8xf32> to vector<1x8x8xf32>
    %1025 = vector.shape_cast %1024 : vector<1x8x8xf32> to vector<8x8xf32>
    %c3_342 = arith.constant 3 : index
    %c6_343 = arith.constant 6 : index
    %1026 = memref.load %arg5[%c3_342, %c6_343] : memref<8x8xf32, #tpu.memory_space<smem>>
    %1027 = vector.broadcast %1026 : f32 to vector<8x8xf32>
    %1028 = arith.mulf %1025, %1027 : vector<8x8xf32>
    %1029 = arith.addf %1023, %1028 : vector<8x8xf32>
    %1030 = vector.extract_strided_slice %838 {offsets = [7, 0, 0], sizes = [1, 8, 8], strides = [1, 1, 1]} : vector<8x8x8xf32> to vector<1x8x8xf32>
    %1031 = vector.shape_cast %1030 : vector<1x8x8xf32> to vector<8x8xf32>
    %c3_344 = arith.constant 3 : index
    %c7_345 = arith.constant 7 : index
    %1032 = memref.load %arg5[%c3_344, %c7_345] : memref<8x8xf32, #tpu.memory_space<smem>>
    %1033 = vector.broadcast %1032 : f32 to vector<8x8xf32>
    %1034 = arith.mulf %1031, %1033 : vector<8x8xf32>
    %1035 = arith.addf %1029, %1034 : vector<8x8xf32>
    %c3_346 = arith.constant 3 : index
    %1036 = memref.load %arg6[%c3_346] : memref<8xf32, #tpu.memory_space<smem>>
    %1037 = vector.broadcast %1036 : f32 to vector<8x8xf32>
    %1038 = arith.addf %1035, %1037 : vector<8x8xf32>
    %1039 = vector.extract_strided_slice %838 {offsets = [0, 0, 0], sizes = [1, 8, 8], strides = [1, 1, 1]} : vector<8x8x8xf32> to vector<1x8x8xf32>
    %1040 = vector.shape_cast %1039 : vector<1x8x8xf32> to vector<8x8xf32>
    %c4_347 = arith.constant 4 : index
    %c0_348 = arith.constant 0 : index
    %1041 = memref.load %arg5[%c4_347, %c0_348] : memref<8x8xf32, #tpu.memory_space<smem>>
    %1042 = vector.broadcast %1041 : f32 to vector<8x8xf32>
    %1043 = arith.mulf %1040, %1042 : vector<8x8xf32>
    %1044 = vector.extract_strided_slice %838 {offsets = [1, 0, 0], sizes = [1, 8, 8], strides = [1, 1, 1]} : vector<8x8x8xf32> to vector<1x8x8xf32>
    %1045 = vector.shape_cast %1044 : vector<1x8x8xf32> to vector<8x8xf32>
    %c4_349 = arith.constant 4 : index
    %c1_350 = arith.constant 1 : index
    %1046 = memref.load %arg5[%c4_349, %c1_350] : memref<8x8xf32, #tpu.memory_space<smem>>
    %1047 = vector.broadcast %1046 : f32 to vector<8x8xf32>
    %1048 = arith.mulf %1045, %1047 : vector<8x8xf32>
    %1049 = arith.addf %1043, %1048 : vector<8x8xf32>
    %1050 = vector.extract_strided_slice %838 {offsets = [2, 0, 0], sizes = [1, 8, 8], strides = [1, 1, 1]} : vector<8x8x8xf32> to vector<1x8x8xf32>
    %1051 = vector.shape_cast %1050 : vector<1x8x8xf32> to vector<8x8xf32>
    %c4_351 = arith.constant 4 : index
    %c2_352 = arith.constant 2 : index
    %1052 = memref.load %arg5[%c4_351, %c2_352] : memref<8x8xf32, #tpu.memory_space<smem>>
    %1053 = vector.broadcast %1052 : f32 to vector<8x8xf32>
    %1054 = arith.mulf %1051, %1053 : vector<8x8xf32>
    %1055 = arith.addf %1049, %1054 : vector<8x8xf32>
    %1056 = vector.extract_strided_slice %838 {offsets = [3, 0, 0], sizes = [1, 8, 8], strides = [1, 1, 1]} : vector<8x8x8xf32> to vector<1x8x8xf32>
    %1057 = vector.shape_cast %1056 : vector<1x8x8xf32> to vector<8x8xf32>
    %c4_353 = arith.constant 4 : index
    %c3_354 = arith.constant 3 : index
    %1058 = memref.load %arg5[%c4_353, %c3_354] : memref<8x8xf32, #tpu.memory_space<smem>>
    %1059 = vector.broadcast %1058 : f32 to vector<8x8xf32>
    %1060 = arith.mulf %1057, %1059 : vector<8x8xf32>
    %1061 = arith.addf %1055, %1060 : vector<8x8xf32>
    %1062 = vector.extract_strided_slice %838 {offsets = [4, 0, 0], sizes = [1, 8, 8], strides = [1, 1, 1]} : vector<8x8x8xf32> to vector<1x8x8xf32>
    %1063 = vector.shape_cast %1062 : vector<1x8x8xf32> to vector<8x8xf32>
    %c4_355 = arith.constant 4 : index
    %c4_356 = arith.constant 4 : index
    %1064 = memref.load %arg5[%c4_355, %c4_356] : memref<8x8xf32, #tpu.memory_space<smem>>
    %1065 = vector.broadcast %1064 : f32 to vector<8x8xf32>
    %1066 = arith.mulf %1063, %1065 : vector<8x8xf32>
    %1067 = arith.addf %1061, %1066 : vector<8x8xf32>
    %1068 = vector.extract_strided_slice %838 {offsets = [5, 0, 0], sizes = [1, 8, 8], strides = [1, 1, 1]} : vector<8x8x8xf32> to vector<1x8x8xf32>
    %1069 = vector.shape_cast %1068 : vector<1x8x8xf32> to vector<8x8xf32>
    %c4_357 = arith.constant 4 : index
    %c5_358 = arith.constant 5 : index
    %1070 = memref.load %arg5[%c4_357, %c5_358] : memref<8x8xf32, #tpu.memory_space<smem>>
    %1071 = vector.broadcast %1070 : f32 to vector<8x8xf32>
    %1072 = arith.mulf %1069, %1071 : vector<8x8xf32>
    %1073 = arith.addf %1067, %1072 : vector<8x8xf32>
    %1074 = vector.extract_strided_slice %838 {offsets = [6, 0, 0], sizes = [1, 8, 8], strides = [1, 1, 1]} : vector<8x8x8xf32> to vector<1x8x8xf32>
    %1075 = vector.shape_cast %1074 : vector<1x8x8xf32> to vector<8x8xf32>
    %c4_359 = arith.constant 4 : index
    %c6_360 = arith.constant 6 : index
    %1076 = memref.load %arg5[%c4_359, %c6_360] : memref<8x8xf32, #tpu.memory_space<smem>>
    %1077 = vector.broadcast %1076 : f32 to vector<8x8xf32>
    %1078 = arith.mulf %1075, %1077 : vector<8x8xf32>
    %1079 = arith.addf %1073, %1078 : vector<8x8xf32>
    %1080 = vector.extract_strided_slice %838 {offsets = [7, 0, 0], sizes = [1, 8, 8], strides = [1, 1, 1]} : vector<8x8x8xf32> to vector<1x8x8xf32>
    %1081 = vector.shape_cast %1080 : vector<1x8x8xf32> to vector<8x8xf32>
    %c4_361 = arith.constant 4 : index
    %c7_362 = arith.constant 7 : index
    %1082 = memref.load %arg5[%c4_361, %c7_362] : memref<8x8xf32, #tpu.memory_space<smem>>
    %1083 = vector.broadcast %1082 : f32 to vector<8x8xf32>
    %1084 = arith.mulf %1081, %1083 : vector<8x8xf32>
    %1085 = arith.addf %1079, %1084 : vector<8x8xf32>
    %c4_363 = arith.constant 4 : index
    %1086 = memref.load %arg6[%c4_363] : memref<8xf32, #tpu.memory_space<smem>>
    %1087 = vector.broadcast %1086 : f32 to vector<8x8xf32>
    %1088 = arith.addf %1085, %1087 : vector<8x8xf32>
    %1089 = vector.extract_strided_slice %838 {offsets = [0, 0, 0], sizes = [1, 8, 8], strides = [1, 1, 1]} : vector<8x8x8xf32> to vector<1x8x8xf32>
    %1090 = vector.shape_cast %1089 : vector<1x8x8xf32> to vector<8x8xf32>
    %c5_364 = arith.constant 5 : index
    %c0_365 = arith.constant 0 : index
    %1091 = memref.load %arg5[%c5_364, %c0_365] : memref<8x8xf32, #tpu.memory_space<smem>>
    %1092 = vector.broadcast %1091 : f32 to vector<8x8xf32>
    %1093 = arith.mulf %1090, %1092 : vector<8x8xf32>
    %1094 = vector.extract_strided_slice %838 {offsets = [1, 0, 0], sizes = [1, 8, 8], strides = [1, 1, 1]} : vector<8x8x8xf32> to vector<1x8x8xf32>
    %1095 = vector.shape_cast %1094 : vector<1x8x8xf32> to vector<8x8xf32>
    %c5_366 = arith.constant 5 : index
    %c1_367 = arith.constant 1 : index
    %1096 = memref.load %arg5[%c5_366, %c1_367] : memref<8x8xf32, #tpu.memory_space<smem>>
    %1097 = vector.broadcast %1096 : f32 to vector<8x8xf32>
    %1098 = arith.mulf %1095, %1097 : vector<8x8xf32>
    %1099 = arith.addf %1093, %1098 : vector<8x8xf32>
    %1100 = vector.extract_strided_slice %838 {offsets = [2, 0, 0], sizes = [1, 8, 8], strides = [1, 1, 1]} : vector<8x8x8xf32> to vector<1x8x8xf32>
    %1101 = vector.shape_cast %1100 : vector<1x8x8xf32> to vector<8x8xf32>
    %c5_368 = arith.constant 5 : index
    %c2_369 = arith.constant 2 : index
    %1102 = memref.load %arg5[%c5_368, %c2_369] : memref<8x8xf32, #tpu.memory_space<smem>>
    %1103 = vector.broadcast %1102 : f32 to vector<8x8xf32>
    %1104 = arith.mulf %1101, %1103 : vector<8x8xf32>
    %1105 = arith.addf %1099, %1104 : vector<8x8xf32>
    %1106 = vector.extract_strided_slice %838 {offsets = [3, 0, 0], sizes = [1, 8, 8], strides = [1, 1, 1]} : vector<8x8x8xf32> to vector<1x8x8xf32>
    %1107 = vector.shape_cast %1106 : vector<1x8x8xf32> to vector<8x8xf32>
    %c5_370 = arith.constant 5 : index
    %c3_371 = arith.constant 3 : index
    %1108 = memref.load %arg5[%c5_370, %c3_371] : memref<8x8xf32, #tpu.memory_space<smem>>
    %1109 = vector.broadcast %1108 : f32 to vector<8x8xf32>
    %1110 = arith.mulf %1107, %1109 : vector<8x8xf32>
    %1111 = arith.addf %1105, %1110 : vector<8x8xf32>
    %1112 = vector.extract_strided_slice %838 {offsets = [4, 0, 0], sizes = [1, 8, 8], strides = [1, 1, 1]} : vector<8x8x8xf32> to vector<1x8x8xf32>
    %1113 = vector.shape_cast %1112 : vector<1x8x8xf32> to vector<8x8xf32>
    %c5_372 = arith.constant 5 : index
    %c4_373 = arith.constant 4 : index
    %1114 = memref.load %arg5[%c5_372, %c4_373] : memref<8x8xf32, #tpu.memory_space<smem>>
    %1115 = vector.broadcast %1114 : f32 to vector<8x8xf32>
    %1116 = arith.mulf %1113, %1115 : vector<8x8xf32>
    %1117 = arith.addf %1111, %1116 : vector<8x8xf32>
    %1118 = vector.extract_strided_slice %838 {offsets = [5, 0, 0], sizes = [1, 8, 8], strides = [1, 1, 1]} : vector<8x8x8xf32> to vector<1x8x8xf32>
    %1119 = vector.shape_cast %1118 : vector<1x8x8xf32> to vector<8x8xf32>
    %c5_374 = arith.constant 5 : index
    %c5_375 = arith.constant 5 : index
    %1120 = memref.load %arg5[%c5_374, %c5_375] : memref<8x8xf32, #tpu.memory_space<smem>>
    %1121 = vector.broadcast %1120 : f32 to vector<8x8xf32>
    %1122 = arith.mulf %1119, %1121 : vector<8x8xf32>
    %1123 = arith.addf %1117, %1122 : vector<8x8xf32>
    %1124 = vector.extract_strided_slice %838 {offsets = [6, 0, 0], sizes = [1, 8, 8], strides = [1, 1, 1]} : vector<8x8x8xf32> to vector<1x8x8xf32>
    %1125 = vector.shape_cast %1124 : vector<1x8x8xf32> to vector<8x8xf32>
    %c5_376 = arith.constant 5 : index
    %c6_377 = arith.constant 6 : index
    %1126 = memref.load %arg5[%c5_376, %c6_377] : memref<8x8xf32, #tpu.memory_space<smem>>
    %1127 = vector.broadcast %1126 : f32 to vector<8x8xf32>
    %1128 = arith.mulf %1125, %1127 : vector<8x8xf32>
    %1129 = arith.addf %1123, %1128 : vector<8x8xf32>
    %1130 = vector.extract_strided_slice %838 {offsets = [7, 0, 0], sizes = [1, 8, 8], strides = [1, 1, 1]} : vector<8x8x8xf32> to vector<1x8x8xf32>
    %1131 = vector.shape_cast %1130 : vector<1x8x8xf32> to vector<8x8xf32>
    %c5_378 = arith.constant 5 : index
    %c7_379 = arith.constant 7 : index
    %1132 = memref.load %arg5[%c5_378, %c7_379] : memref<8x8xf32, #tpu.memory_space<smem>>
    %1133 = vector.broadcast %1132 : f32 to vector<8x8xf32>
    %1134 = arith.mulf %1131, %1133 : vector<8x8xf32>
    %1135 = arith.addf %1129, %1134 : vector<8x8xf32>
    %c5_380 = arith.constant 5 : index
    %1136 = memref.load %arg6[%c5_380] : memref<8xf32, #tpu.memory_space<smem>>
    %1137 = vector.broadcast %1136 : f32 to vector<8x8xf32>
    %1138 = arith.addf %1135, %1137 : vector<8x8xf32>
    %1139 = vector.extract_strided_slice %838 {offsets = [0, 0, 0], sizes = [1, 8, 8], strides = [1, 1, 1]} : vector<8x8x8xf32> to vector<1x8x8xf32>
    %1140 = vector.shape_cast %1139 : vector<1x8x8xf32> to vector<8x8xf32>
    %c6_381 = arith.constant 6 : index
    %c0_382 = arith.constant 0 : index
    %1141 = memref.load %arg5[%c6_381, %c0_382] : memref<8x8xf32, #tpu.memory_space<smem>>
    %1142 = vector.broadcast %1141 : f32 to vector<8x8xf32>
    %1143 = arith.mulf %1140, %1142 : vector<8x8xf32>
    %1144 = vector.extract_strided_slice %838 {offsets = [1, 0, 0], sizes = [1, 8, 8], strides = [1, 1, 1]} : vector<8x8x8xf32> to vector<1x8x8xf32>
    %1145 = vector.shape_cast %1144 : vector<1x8x8xf32> to vector<8x8xf32>
    %c6_383 = arith.constant 6 : index
    %c1_384 = arith.constant 1 : index
    %1146 = memref.load %arg5[%c6_383, %c1_384] : memref<8x8xf32, #tpu.memory_space<smem>>
    %1147 = vector.broadcast %1146 : f32 to vector<8x8xf32>
    %1148 = arith.mulf %1145, %1147 : vector<8x8xf32>
    %1149 = arith.addf %1143, %1148 : vector<8x8xf32>
    %1150 = vector.extract_strided_slice %838 {offsets = [2, 0, 0], sizes = [1, 8, 8], strides = [1, 1, 1]} : vector<8x8x8xf32> to vector<1x8x8xf32>
    %1151 = vector.shape_cast %1150 : vector<1x8x8xf32> to vector<8x8xf32>
    %c6_385 = arith.constant 6 : index
    %c2_386 = arith.constant 2 : index
    %1152 = memref.load %arg5[%c6_385, %c2_386] : memref<8x8xf32, #tpu.memory_space<smem>>
    %1153 = vector.broadcast %1152 : f32 to vector<8x8xf32>
    %1154 = arith.mulf %1151, %1153 : vector<8x8xf32>
    %1155 = arith.addf %1149, %1154 : vector<8x8xf32>
    %1156 = vector.extract_strided_slice %838 {offsets = [3, 0, 0], sizes = [1, 8, 8], strides = [1, 1, 1]} : vector<8x8x8xf32> to vector<1x8x8xf32>
    %1157 = vector.shape_cast %1156 : vector<1x8x8xf32> to vector<8x8xf32>
    %c6_387 = arith.constant 6 : index
    %c3_388 = arith.constant 3 : index
    %1158 = memref.load %arg5[%c6_387, %c3_388] : memref<8x8xf32, #tpu.memory_space<smem>>
    %1159 = vector.broadcast %1158 : f32 to vector<8x8xf32>
    %1160 = arith.mulf %1157, %1159 : vector<8x8xf32>
    %1161 = arith.addf %1155, %1160 : vector<8x8xf32>
    %1162 = vector.extract_strided_slice %838 {offsets = [4, 0, 0], sizes = [1, 8, 8], strides = [1, 1, 1]} : vector<8x8x8xf32> to vector<1x8x8xf32>
    %1163 = vector.shape_cast %1162 : vector<1x8x8xf32> to vector<8x8xf32>
    %c6_389 = arith.constant 6 : index
    %c4_390 = arith.constant 4 : index
    %1164 = memref.load %arg5[%c6_389, %c4_390] : memref<8x8xf32, #tpu.memory_space<smem>>
    %1165 = vector.broadcast %1164 : f32 to vector<8x8xf32>
    %1166 = arith.mulf %1163, %1165 : vector<8x8xf32>
    %1167 = arith.addf %1161, %1166 : vector<8x8xf32>
    %1168 = vector.extract_strided_slice %838 {offsets = [5, 0, 0], sizes = [1, 8, 8], strides = [1, 1, 1]} : vector<8x8x8xf32> to vector<1x8x8xf32>
    %1169 = vector.shape_cast %1168 : vector<1x8x8xf32> to vector<8x8xf32>
    %c6_391 = arith.constant 6 : index
    %c5_392 = arith.constant 5 : index
    %1170 = memref.load %arg5[%c6_391, %c5_392] : memref<8x8xf32, #tpu.memory_space<smem>>
    %1171 = vector.broadcast %1170 : f32 to vector<8x8xf32>
    %1172 = arith.mulf %1169, %1171 : vector<8x8xf32>
    %1173 = arith.addf %1167, %1172 : vector<8x8xf32>
    %1174 = vector.extract_strided_slice %838 {offsets = [6, 0, 0], sizes = [1, 8, 8], strides = [1, 1, 1]} : vector<8x8x8xf32> to vector<1x8x8xf32>
    %1175 = vector.shape_cast %1174 : vector<1x8x8xf32> to vector<8x8xf32>
    %c6_393 = arith.constant 6 : index
    %c6_394 = arith.constant 6 : index
    %1176 = memref.load %arg5[%c6_393, %c6_394] : memref<8x8xf32, #tpu.memory_space<smem>>
    %1177 = vector.broadcast %1176 : f32 to vector<8x8xf32>
    %1178 = arith.mulf %1175, %1177 : vector<8x8xf32>
    %1179 = arith.addf %1173, %1178 : vector<8x8xf32>
    %1180 = vector.extract_strided_slice %838 {offsets = [7, 0, 0], sizes = [1, 8, 8], strides = [1, 1, 1]} : vector<8x8x8xf32> to vector<1x8x8xf32>
    %1181 = vector.shape_cast %1180 : vector<1x8x8xf32> to vector<8x8xf32>
    %c6_395 = arith.constant 6 : index
    %c7_396 = arith.constant 7 : index
    %1182 = memref.load %arg5[%c6_395, %c7_396] : memref<8x8xf32, #tpu.memory_space<smem>>
    %1183 = vector.broadcast %1182 : f32 to vector<8x8xf32>
    %1184 = arith.mulf %1181, %1183 : vector<8x8xf32>
    %1185 = arith.addf %1179, %1184 : vector<8x8xf32>
    %c6_397 = arith.constant 6 : index
    %1186 = memref.load %arg6[%c6_397] : memref<8xf32, #tpu.memory_space<smem>>
    %1187 = vector.broadcast %1186 : f32 to vector<8x8xf32>
    %1188 = arith.addf %1185, %1187 : vector<8x8xf32>
    %1189 = vector.extract_strided_slice %838 {offsets = [0, 0, 0], sizes = [1, 8, 8], strides = [1, 1, 1]} : vector<8x8x8xf32> to vector<1x8x8xf32>
    %1190 = vector.shape_cast %1189 : vector<1x8x8xf32> to vector<8x8xf32>
    %c7_398 = arith.constant 7 : index
    %c0_399 = arith.constant 0 : index
    %1191 = memref.load %arg5[%c7_398, %c0_399] : memref<8x8xf32, #tpu.memory_space<smem>>
    %1192 = vector.broadcast %1191 : f32 to vector<8x8xf32>
    %1193 = arith.mulf %1190, %1192 : vector<8x8xf32>
    %1194 = vector.extract_strided_slice %838 {offsets = [1, 0, 0], sizes = [1, 8, 8], strides = [1, 1, 1]} : vector<8x8x8xf32> to vector<1x8x8xf32>
    %1195 = vector.shape_cast %1194 : vector<1x8x8xf32> to vector<8x8xf32>
    %c7_400 = arith.constant 7 : index
    %c1_401 = arith.constant 1 : index
    %1196 = memref.load %arg5[%c7_400, %c1_401] : memref<8x8xf32, #tpu.memory_space<smem>>
    %1197 = vector.broadcast %1196 : f32 to vector<8x8xf32>
    %1198 = arith.mulf %1195, %1197 : vector<8x8xf32>
    %1199 = arith.addf %1193, %1198 : vector<8x8xf32>
    %1200 = vector.extract_strided_slice %838 {offsets = [2, 0, 0], sizes = [1, 8, 8], strides = [1, 1, 1]} : vector<8x8x8xf32> to vector<1x8x8xf32>
    %1201 = vector.shape_cast %1200 : vector<1x8x8xf32> to vector<8x8xf32>
    %c7_402 = arith.constant 7 : index
    %c2_403 = arith.constant 2 : index
    %1202 = memref.load %arg5[%c7_402, %c2_403] : memref<8x8xf32, #tpu.memory_space<smem>>
    %1203 = vector.broadcast %1202 : f32 to vector<8x8xf32>
    %1204 = arith.mulf %1201, %1203 : vector<8x8xf32>
    %1205 = arith.addf %1199, %1204 : vector<8x8xf32>
    %1206 = vector.extract_strided_slice %838 {offsets = [3, 0, 0], sizes = [1, 8, 8], strides = [1, 1, 1]} : vector<8x8x8xf32> to vector<1x8x8xf32>
    %1207 = vector.shape_cast %1206 : vector<1x8x8xf32> to vector<8x8xf32>
    %c7_404 = arith.constant 7 : index
    %c3_405 = arith.constant 3 : index
    %1208 = memref.load %arg5[%c7_404, %c3_405] : memref<8x8xf32, #tpu.memory_space<smem>>
    %1209 = vector.broadcast %1208 : f32 to vector<8x8xf32>
    %1210 = arith.mulf %1207, %1209 : vector<8x8xf32>
    %1211 = arith.addf %1205, %1210 : vector<8x8xf32>
    %1212 = vector.extract_strided_slice %838 {offsets = [4, 0, 0], sizes = [1, 8, 8], strides = [1, 1, 1]} : vector<8x8x8xf32> to vector<1x8x8xf32>
    %1213 = vector.shape_cast %1212 : vector<1x8x8xf32> to vector<8x8xf32>
    %c7_406 = arith.constant 7 : index
    %c4_407 = arith.constant 4 : index
    %1214 = memref.load %arg5[%c7_406, %c4_407] : memref<8x8xf32, #tpu.memory_space<smem>>
    %1215 = vector.broadcast %1214 : f32 to vector<8x8xf32>
    %1216 = arith.mulf %1213, %1215 : vector<8x8xf32>
    %1217 = arith.addf %1211, %1216 : vector<8x8xf32>
    %1218 = vector.extract_strided_slice %838 {offsets = [5, 0, 0], sizes = [1, 8, 8], strides = [1, 1, 1]} : vector<8x8x8xf32> to vector<1x8x8xf32>
    %1219 = vector.shape_cast %1218 : vector<1x8x8xf32> to vector<8x8xf32>
    %c7_408 = arith.constant 7 : index
    %c5_409 = arith.constant 5 : index
    %1220 = memref.load %arg5[%c7_408, %c5_409] : memref<8x8xf32, #tpu.memory_space<smem>>
    %1221 = vector.broadcast %1220 : f32 to vector<8x8xf32>
    %1222 = arith.mulf %1219, %1221 : vector<8x8xf32>
    %1223 = arith.addf %1217, %1222 : vector<8x8xf32>
    %1224 = vector.extract_strided_slice %838 {offsets = [6, 0, 0], sizes = [1, 8, 8], strides = [1, 1, 1]} : vector<8x8x8xf32> to vector<1x8x8xf32>
    %1225 = vector.shape_cast %1224 : vector<1x8x8xf32> to vector<8x8xf32>
    %c7_410 = arith.constant 7 : index
    %c6_411 = arith.constant 6 : index
    %1226 = memref.load %arg5[%c7_410, %c6_411] : memref<8x8xf32, #tpu.memory_space<smem>>
    %1227 = vector.broadcast %1226 : f32 to vector<8x8xf32>
    %1228 = arith.mulf %1225, %1227 : vector<8x8xf32>
    %1229 = arith.addf %1223, %1228 : vector<8x8xf32>
    %1230 = vector.extract_strided_slice %838 {offsets = [7, 0, 0], sizes = [1, 8, 8], strides = [1, 1, 1]} : vector<8x8x8xf32> to vector<1x8x8xf32>
    %1231 = vector.shape_cast %1230 : vector<1x8x8xf32> to vector<8x8xf32>
    %c7_412 = arith.constant 7 : index
    %c7_413 = arith.constant 7 : index
    %1232 = memref.load %arg5[%c7_412, %c7_413] : memref<8x8xf32, #tpu.memory_space<smem>>
    %1233 = vector.broadcast %1232 : f32 to vector<8x8xf32>
    %1234 = arith.mulf %1231, %1233 : vector<8x8xf32>
    %1235 = arith.addf %1229, %1234 : vector<8x8xf32>
    %c7_414 = arith.constant 7 : index
    %1236 = memref.load %arg6[%c7_414] : memref<8xf32, #tpu.memory_space<smem>>
    %1237 = vector.broadcast %1236 : f32 to vector<8x8xf32>
    %1238 = arith.addf %1235, %1237 : vector<8x8xf32>
    %1239 = vector.shape_cast %888 : vector<8x8xf32> to vector<1x8x8xf32>
    %1240 = vector.shape_cast %938 : vector<8x8xf32> to vector<1x8x8xf32>
    %1241 = vector.shape_cast %988 : vector<8x8xf32> to vector<1x8x8xf32>
    %1242 = vector.shape_cast %1038 : vector<8x8xf32> to vector<1x8x8xf32>
    %1243 = vector.shape_cast %1088 : vector<8x8xf32> to vector<1x8x8xf32>
    %1244 = vector.shape_cast %1138 : vector<8x8xf32> to vector<1x8x8xf32>
    %1245 = vector.shape_cast %1188 : vector<8x8xf32> to vector<1x8x8xf32>
    %1246 = vector.shape_cast %1238 : vector<8x8xf32> to vector<1x8x8xf32>
    %1247 = tpu.concatenate %1239, %1240, %1241, %1242, %1243, %1244, %1245, %1246 in 0 : vector<1x8x8xf32>, vector<1x8x8xf32>, vector<1x8x8xf32>, vector<1x8x8xf32>, vector<1x8x8xf32>, vector<1x8x8xf32>, vector<1x8x8xf32>, vector<1x8x8xf32> -> vector<8x8x8xf32>
    %c0_415 = arith.constant 0 : index
    %c0_416 = arith.constant 0 : index
    %c0_417 = arith.constant 0 : index
    %1248 = vector.load %arg7[%c0_415, %c0_416, %c0_417] : memref<8x8x8xf32, #tpu.memory_space<vmem>>, vector<8x8x8xf32>
    %1249 = arith.addf %834, %1248 : vector<8x8x8xf32>
    %cst_418 = arith.constant 0.000000e+00 : f32
    %1250 = vector.broadcast %cst_418 : f32 to vector<8x8x8xf32>
    %1251 = arith.maximumf %1249, %1250 : vector<8x8x8xf32>
    %1252 = arith.addf %1247, %1248 : vector<8x8x8xf32>
    %cst_419 = arith.constant 0.000000e+00 : f32
    %1253 = vector.broadcast %cst_419 : f32 to vector<8x8x8xf32>
    %1254 = arith.maximumf %1252, %1253 : vector<8x8x8xf32>
    %cst_420 = arith.constant dense<0.000000e+00> : vector<8x8xf32>
    %1255 = vector.multi_reduction <add>, %1251, %cst_420 [2] : vector<8x8x8xf32> to vector<8x8xf32>
    %1256 = vector.shape_cast %1255 : vector<8x8xf32> to vector<8x8x1xf32>
    %cst_421 = arith.constant dense<0.000000e+00> : vector<8x1xf32>
    %1257 = vector.multi_reduction <add>, %1256, %cst_421 [1] : vector<8x8x1xf32> to vector<8x1xf32>
    %1258 = vector.shape_cast %1257 : vector<8x1xf32> to vector<8x1x1xf32>
    %1259 = arith.mulf %1251, %1251 : vector<8x8x8xf32>
    %cst_422 = arith.constant dense<0.000000e+00> : vector<8x8xf32>
    %1260 = vector.multi_reduction <add>, %1259, %cst_422 [2] : vector<8x8x8xf32> to vector<8x8xf32>
    %1261 = vector.shape_cast %1260 : vector<8x8xf32> to vector<8x8x1xf32>
    %cst_423 = arith.constant dense<0.000000e+00> : vector<8x1xf32>
    %1262 = vector.multi_reduction <add>, %1261, %cst_423 [1] : vector<8x8x1xf32> to vector<8x1xf32>
    %1263 = vector.shape_cast %1262 : vector<8x1xf32> to vector<8x1x1xf32>
    %cst_424 = arith.constant dense<0.000000e+00> : vector<8x8xf32>
    %1264 = vector.multi_reduction <add>, %1254, %cst_424 [2] : vector<8x8x8xf32> to vector<8x8xf32>
    %1265 = vector.shape_cast %1264 : vector<8x8xf32> to vector<8x8x1xf32>
    %cst_425 = arith.constant dense<0.000000e+00> : vector<8x1xf32>
    %1266 = vector.multi_reduction <add>, %1265, %cst_425 [1] : vector<8x8x1xf32> to vector<8x1xf32>
    %1267 = vector.shape_cast %1266 : vector<8x1xf32> to vector<8x1x1xf32>
    %1268 = arith.addf %1258, %1267 : vector<8x1x1xf32>
    %1269 = arith.mulf %1254, %1254 : vector<8x8x8xf32>
    %cst_426 = arith.constant dense<0.000000e+00> : vector<8x8xf32>
    %1270 = vector.multi_reduction <add>, %1269, %cst_426 [2] : vector<8x8x8xf32> to vector<8x8xf32>
    %1271 = vector.shape_cast %1270 : vector<8x8xf32> to vector<8x8x1xf32>
    %cst_427 = arith.constant dense<0.000000e+00> : vector<8x1xf32>
    %1272 = vector.multi_reduction <add>, %1271, %cst_427 [1] : vector<8x8x1xf32> to vector<8x1xf32>
    %1273 = vector.shape_cast %1272 : vector<8x1xf32> to vector<8x1x1xf32>
    %1274 = arith.addf %1263, %1273 : vector<8x1x1xf32>
    %cst_428 = arith.constant 7.812500e-03 : f32
    %1275 = vector.broadcast %cst_428 : f32 to vector<8x1x1xf32>
    %1276 = arith.mulf %1268, %1275 : vector<8x1x1xf32>
    %cst_429 = arith.constant 7.812500e-03 : f32
    %1277 = vector.broadcast %cst_429 : f32 to vector<8x1x1xf32>
    %1278 = arith.mulf %1274, %1277 : vector<8x1x1xf32>
    %1279 = arith.mulf %1276, %1276 : vector<8x1x1xf32>
    %1280 = arith.subf %1278, %1279 : vector<8x1x1xf32>
    %cst_430 = arith.constant 9.99999974E-6 : f32
    %1281 = vector.broadcast %cst_430 : f32 to vector<8x1x1xf32>
    %1282 = arith.addf %1280, %1281 : vector<8x1x1xf32>
    %1283 = math.rsqrt %1282 : vector<8x1x1xf32>
    %1284 = vector.broadcast %1276 : vector<8x1x1xf32> to vector<8x8x8xf32>
    %1285 = arith.subf %1251, %1284 : vector<8x8x8xf32>
    %1286 = vector.broadcast %1283 : vector<8x1x1xf32> to vector<8x8x8xf32>
    %1287 = arith.mulf %1285, %1286 : vector<8x8x8xf32>
    %1288 = vector.extract_strided_slice %1287 {offsets = [0, 0, 0], sizes = [1, 8, 8], strides = [1, 1, 1]} : vector<8x8x8xf32> to vector<1x8x8xf32>
    %1289 = vector.shape_cast %1288 : vector<1x8x8xf32> to vector<8x8xf32>
    %c0_431 = arith.constant 0 : index
    %c0_432 = arith.constant 0 : index
    %1290 = memref.load %arg8[%c0_431, %c0_432] : memref<8x8xf32, #tpu.memory_space<smem>>
    %1291 = vector.broadcast %1290 : f32 to vector<8x8xf32>
    %1292 = arith.mulf %1289, %1291 : vector<8x8xf32>
    %1293 = vector.extract_strided_slice %1287 {offsets = [1, 0, 0], sizes = [1, 8, 8], strides = [1, 1, 1]} : vector<8x8x8xf32> to vector<1x8x8xf32>
    %1294 = vector.shape_cast %1293 : vector<1x8x8xf32> to vector<8x8xf32>
    %c0_433 = arith.constant 0 : index
    %c1_434 = arith.constant 1 : index
    %1295 = memref.load %arg8[%c0_433, %c1_434] : memref<8x8xf32, #tpu.memory_space<smem>>
    %1296 = vector.broadcast %1295 : f32 to vector<8x8xf32>
    %1297 = arith.mulf %1294, %1296 : vector<8x8xf32>
    %1298 = arith.addf %1292, %1297 : vector<8x8xf32>
    %1299 = vector.extract_strided_slice %1287 {offsets = [2, 0, 0], sizes = [1, 8, 8], strides = [1, 1, 1]} : vector<8x8x8xf32> to vector<1x8x8xf32>
    %1300 = vector.shape_cast %1299 : vector<1x8x8xf32> to vector<8x8xf32>
    %c0_435 = arith.constant 0 : index
    %c2_436 = arith.constant 2 : index
    %1301 = memref.load %arg8[%c0_435, %c2_436] : memref<8x8xf32, #tpu.memory_space<smem>>
    %1302 = vector.broadcast %1301 : f32 to vector<8x8xf32>
    %1303 = arith.mulf %1300, %1302 : vector<8x8xf32>
    %1304 = arith.addf %1298, %1303 : vector<8x8xf32>
    %1305 = vector.extract_strided_slice %1287 {offsets = [3, 0, 0], sizes = [1, 8, 8], strides = [1, 1, 1]} : vector<8x8x8xf32> to vector<1x8x8xf32>
    %1306 = vector.shape_cast %1305 : vector<1x8x8xf32> to vector<8x8xf32>
    %c0_437 = arith.constant 0 : index
    %c3_438 = arith.constant 3 : index
    %1307 = memref.load %arg8[%c0_437, %c3_438] : memref<8x8xf32, #tpu.memory_space<smem>>
    %1308 = vector.broadcast %1307 : f32 to vector<8x8xf32>
    %1309 = arith.mulf %1306, %1308 : vector<8x8xf32>
    %1310 = arith.addf %1304, %1309 : vector<8x8xf32>
    %1311 = vector.extract_strided_slice %1287 {offsets = [4, 0, 0], sizes = [1, 8, 8], strides = [1, 1, 1]} : vector<8x8x8xf32> to vector<1x8x8xf32>
    %1312 = vector.shape_cast %1311 : vector<1x8x8xf32> to vector<8x8xf32>
    %c0_439 = arith.constant 0 : index
    %c4_440 = arith.constant 4 : index
    %1313 = memref.load %arg8[%c0_439, %c4_440] : memref<8x8xf32, #tpu.memory_space<smem>>
    %1314 = vector.broadcast %1313 : f32 to vector<8x8xf32>
    %1315 = arith.mulf %1312, %1314 : vector<8x8xf32>
    %1316 = arith.addf %1310, %1315 : vector<8x8xf32>
    %1317 = vector.extract_strided_slice %1287 {offsets = [5, 0, 0], sizes = [1, 8, 8], strides = [1, 1, 1]} : vector<8x8x8xf32> to vector<1x8x8xf32>
    %1318 = vector.shape_cast %1317 : vector<1x8x8xf32> to vector<8x8xf32>
    %c0_441 = arith.constant 0 : index
    %c5_442 = arith.constant 5 : index
    %1319 = memref.load %arg8[%c0_441, %c5_442] : memref<8x8xf32, #tpu.memory_space<smem>>
    %1320 = vector.broadcast %1319 : f32 to vector<8x8xf32>
    %1321 = arith.mulf %1318, %1320 : vector<8x8xf32>
    %1322 = arith.addf %1316, %1321 : vector<8x8xf32>
    %1323 = vector.extract_strided_slice %1287 {offsets = [6, 0, 0], sizes = [1, 8, 8], strides = [1, 1, 1]} : vector<8x8x8xf32> to vector<1x8x8xf32>
    %1324 = vector.shape_cast %1323 : vector<1x8x8xf32> to vector<8x8xf32>
    %c0_443 = arith.constant 0 : index
    %c6_444 = arith.constant 6 : index
    %1325 = memref.load %arg8[%c0_443, %c6_444] : memref<8x8xf32, #tpu.memory_space<smem>>
    %1326 = vector.broadcast %1325 : f32 to vector<8x8xf32>
    %1327 = arith.mulf %1324, %1326 : vector<8x8xf32>
    %1328 = arith.addf %1322, %1327 : vector<8x8xf32>
    %1329 = vector.extract_strided_slice %1287 {offsets = [7, 0, 0], sizes = [1, 8, 8], strides = [1, 1, 1]} : vector<8x8x8xf32> to vector<1x8x8xf32>
    %1330 = vector.shape_cast %1329 : vector<1x8x8xf32> to vector<8x8xf32>
    %c0_445 = arith.constant 0 : index
    %c7_446 = arith.constant 7 : index
    %1331 = memref.load %arg8[%c0_445, %c7_446] : memref<8x8xf32, #tpu.memory_space<smem>>
    %1332 = vector.broadcast %1331 : f32 to vector<8x8xf32>
    %1333 = arith.mulf %1330, %1332 : vector<8x8xf32>
    %1334 = arith.addf %1328, %1333 : vector<8x8xf32>
    %c0_447 = arith.constant 0 : index
    %1335 = memref.load %arg9[%c0_447] : memref<8xf32, #tpu.memory_space<smem>>
    %1336 = vector.broadcast %1335 : f32 to vector<8x8xf32>
    %1337 = arith.addf %1334, %1336 : vector<8x8xf32>
    %1338 = vector.extract_strided_slice %1287 {offsets = [0, 0, 0], sizes = [1, 8, 8], strides = [1, 1, 1]} : vector<8x8x8xf32> to vector<1x8x8xf32>
    %1339 = vector.shape_cast %1338 : vector<1x8x8xf32> to vector<8x8xf32>
    %c1_448 = arith.constant 1 : index
    %c0_449 = arith.constant 0 : index
    %1340 = memref.load %arg8[%c1_448, %c0_449] : memref<8x8xf32, #tpu.memory_space<smem>>
    %1341 = vector.broadcast %1340 : f32 to vector<8x8xf32>
    %1342 = arith.mulf %1339, %1341 : vector<8x8xf32>
    %1343 = vector.extract_strided_slice %1287 {offsets = [1, 0, 0], sizes = [1, 8, 8], strides = [1, 1, 1]} : vector<8x8x8xf32> to vector<1x8x8xf32>
    %1344 = vector.shape_cast %1343 : vector<1x8x8xf32> to vector<8x8xf32>
    %c1_450 = arith.constant 1 : index
    %c1_451 = arith.constant 1 : index
    %1345 = memref.load %arg8[%c1_450, %c1_451] : memref<8x8xf32, #tpu.memory_space<smem>>
    %1346 = vector.broadcast %1345 : f32 to vector<8x8xf32>
    %1347 = arith.mulf %1344, %1346 : vector<8x8xf32>
    %1348 = arith.addf %1342, %1347 : vector<8x8xf32>
    %1349 = vector.extract_strided_slice %1287 {offsets = [2, 0, 0], sizes = [1, 8, 8], strides = [1, 1, 1]} : vector<8x8x8xf32> to vector<1x8x8xf32>
    %1350 = vector.shape_cast %1349 : vector<1x8x8xf32> to vector<8x8xf32>
    %c1_452 = arith.constant 1 : index
    %c2_453 = arith.constant 2 : index
    %1351 = memref.load %arg8[%c1_452, %c2_453] : memref<8x8xf32, #tpu.memory_space<smem>>
    %1352 = vector.broadcast %1351 : f32 to vector<8x8xf32>
    %1353 = arith.mulf %1350, %1352 : vector<8x8xf32>
    %1354 = arith.addf %1348, %1353 : vector<8x8xf32>
    %1355 = vector.extract_strided_slice %1287 {offsets = [3, 0, 0], sizes = [1, 8, 8], strides = [1, 1, 1]} : vector<8x8x8xf32> to vector<1x8x8xf32>
    %1356 = vector.shape_cast %1355 : vector<1x8x8xf32> to vector<8x8xf32>
    %c1_454 = arith.constant 1 : index
    %c3_455 = arith.constant 3 : index
    %1357 = memref.load %arg8[%c1_454, %c3_455] : memref<8x8xf32, #tpu.memory_space<smem>>
    %1358 = vector.broadcast %1357 : f32 to vector<8x8xf32>
    %1359 = arith.mulf %1356, %1358 : vector<8x8xf32>
    %1360 = arith.addf %1354, %1359 : vector<8x8xf32>
    %1361 = vector.extract_strided_slice %1287 {offsets = [4, 0, 0], sizes = [1, 8, 8], strides = [1, 1, 1]} : vector<8x8x8xf32> to vector<1x8x8xf32>
    %1362 = vector.shape_cast %1361 : vector<1x8x8xf32> to vector<8x8xf32>
    %c1_456 = arith.constant 1 : index
    %c4_457 = arith.constant 4 : index
    %1363 = memref.load %arg8[%c1_456, %c4_457] : memref<8x8xf32, #tpu.memory_space<smem>>
    %1364 = vector.broadcast %1363 : f32 to vector<8x8xf32>
    %1365 = arith.mulf %1362, %1364 : vector<8x8xf32>
    %1366 = arith.addf %1360, %1365 : vector<8x8xf32>
    %1367 = vector.extract_strided_slice %1287 {offsets = [5, 0, 0], sizes = [1, 8, 8], strides = [1, 1, 1]} : vector<8x8x8xf32> to vector<1x8x8xf32>
    %1368 = vector.shape_cast %1367 : vector<1x8x8xf32> to vector<8x8xf32>
    %c1_458 = arith.constant 1 : index
    %c5_459 = arith.constant 5 : index
    %1369 = memref.load %arg8[%c1_458, %c5_459] : memref<8x8xf32, #tpu.memory_space<smem>>
    %1370 = vector.broadcast %1369 : f32 to vector<8x8xf32>
    %1371 = arith.mulf %1368, %1370 : vector<8x8xf32>
    %1372 = arith.addf %1366, %1371 : vector<8x8xf32>
    %1373 = vector.extract_strided_slice %1287 {offsets = [6, 0, 0], sizes = [1, 8, 8], strides = [1, 1, 1]} : vector<8x8x8xf32> to vector<1x8x8xf32>
    %1374 = vector.shape_cast %1373 : vector<1x8x8xf32> to vector<8x8xf32>
    %c1_460 = arith.constant 1 : index
    %c6_461 = arith.constant 6 : index
    %1375 = memref.load %arg8[%c1_460, %c6_461] : memref<8x8xf32, #tpu.memory_space<smem>>
    %1376 = vector.broadcast %1375 : f32 to vector<8x8xf32>
    %1377 = arith.mulf %1374, %1376 : vector<8x8xf32>
    %1378 = arith.addf %1372, %1377 : vector<8x8xf32>
    %1379 = vector.extract_strided_slice %1287 {offsets = [7, 0, 0], sizes = [1, 8, 8], strides = [1, 1, 1]} : vector<8x8x8xf32> to vector<1x8x8xf32>
    %1380 = vector.shape_cast %1379 : vector<1x8x8xf32> to vector<8x8xf32>
    %c1_462 = arith.constant 1 : index
    %c7_463 = arith.constant 7 : index
    %1381 = memref.load %arg8[%c1_462, %c7_463] : memref<8x8xf32, #tpu.memory_space<smem>>
    %1382 = vector.broadcast %1381 : f32 to vector<8x8xf32>
    %1383 = arith.mulf %1380, %1382 : vector<8x8xf32>
    %1384 = arith.addf %1378, %1383 : vector<8x8xf32>
    %c1_464 = arith.constant 1 : index
    %1385 = memref.load %arg9[%c1_464] : memref<8xf32, #tpu.memory_space<smem>>
    %1386 = vector.broadcast %1385 : f32 to vector<8x8xf32>
    %1387 = arith.addf %1384, %1386 : vector<8x8xf32>
    %1388 = vector.extract_strided_slice %1287 {offsets = [0, 0, 0], sizes = [1, 8, 8], strides = [1, 1, 1]} : vector<8x8x8xf32> to vector<1x8x8xf32>
    %1389 = vector.shape_cast %1388 : vector<1x8x8xf32> to vector<8x8xf32>
    %c2_465 = arith.constant 2 : index
    %c0_466 = arith.constant 0 : index
    %1390 = memref.load %arg8[%c2_465, %c0_466] : memref<8x8xf32, #tpu.memory_space<smem>>
    %1391 = vector.broadcast %1390 : f32 to vector<8x8xf32>
    %1392 = arith.mulf %1389, %1391 : vector<8x8xf32>
    %1393 = vector.extract_strided_slice %1287 {offsets = [1, 0, 0], sizes = [1, 8, 8], strides = [1, 1, 1]} : vector<8x8x8xf32> to vector<1x8x8xf32>
    %1394 = vector.shape_cast %1393 : vector<1x8x8xf32> to vector<8x8xf32>
    %c2_467 = arith.constant 2 : index
    %c1_468 = arith.constant 1 : index
    %1395 = memref.load %arg8[%c2_467, %c1_468] : memref<8x8xf32, #tpu.memory_space<smem>>
    %1396 = vector.broadcast %1395 : f32 to vector<8x8xf32>
    %1397 = arith.mulf %1394, %1396 : vector<8x8xf32>
    %1398 = arith.addf %1392, %1397 : vector<8x8xf32>
    %1399 = vector.extract_strided_slice %1287 {offsets = [2, 0, 0], sizes = [1, 8, 8], strides = [1, 1, 1]} : vector<8x8x8xf32> to vector<1x8x8xf32>
    %1400 = vector.shape_cast %1399 : vector<1x8x8xf32> to vector<8x8xf32>
    %c2_469 = arith.constant 2 : index
    %c2_470 = arith.constant 2 : index
    %1401 = memref.load %arg8[%c2_469, %c2_470] : memref<8x8xf32, #tpu.memory_space<smem>>
    %1402 = vector.broadcast %1401 : f32 to vector<8x8xf32>
    %1403 = arith.mulf %1400, %1402 : vector<8x8xf32>
    %1404 = arith.addf %1398, %1403 : vector<8x8xf32>
    %1405 = vector.extract_strided_slice %1287 {offsets = [3, 0, 0], sizes = [1, 8, 8], strides = [1, 1, 1]} : vector<8x8x8xf32> to vector<1x8x8xf32>
    %1406 = vector.shape_cast %1405 : vector<1x8x8xf32> to vector<8x8xf32>
    %c2_471 = arith.constant 2 : index
    %c3_472 = arith.constant 3 : index
    %1407 = memref.load %arg8[%c2_471, %c3_472] : memref<8x8xf32, #tpu.memory_space<smem>>
    %1408 = vector.broadcast %1407 : f32 to vector<8x8xf32>
    %1409 = arith.mulf %1406, %1408 : vector<8x8xf32>
    %1410 = arith.addf %1404, %1409 : vector<8x8xf32>
    %1411 = vector.extract_strided_slice %1287 {offsets = [4, 0, 0], sizes = [1, 8, 8], strides = [1, 1, 1]} : vector<8x8x8xf32> to vector<1x8x8xf32>
    %1412 = vector.shape_cast %1411 : vector<1x8x8xf32> to vector<8x8xf32>
    %c2_473 = arith.constant 2 : index
    %c4_474 = arith.constant 4 : index
    %1413 = memref.load %arg8[%c2_473, %c4_474] : memref<8x8xf32, #tpu.memory_space<smem>>
    %1414 = vector.broadcast %1413 : f32 to vector<8x8xf32>
    %1415 = arith.mulf %1412, %1414 : vector<8x8xf32>
    %1416 = arith.addf %1410, %1415 : vector<8x8xf32>
    %1417 = vector.extract_strided_slice %1287 {offsets = [5, 0, 0], sizes = [1, 8, 8], strides = [1, 1, 1]} : vector<8x8x8xf32> to vector<1x8x8xf32>
    %1418 = vector.shape_cast %1417 : vector<1x8x8xf32> to vector<8x8xf32>
    %c2_475 = arith.constant 2 : index
    %c5_476 = arith.constant 5 : index
    %1419 = memref.load %arg8[%c2_475, %c5_476] : memref<8x8xf32, #tpu.memory_space<smem>>
    %1420 = vector.broadcast %1419 : f32 to vector<8x8xf32>
    %1421 = arith.mulf %1418, %1420 : vector<8x8xf32>
    %1422 = arith.addf %1416, %1421 : vector<8x8xf32>
    %1423 = vector.extract_strided_slice %1287 {offsets = [6, 0, 0], sizes = [1, 8, 8], strides = [1, 1, 1]} : vector<8x8x8xf32> to vector<1x8x8xf32>
    %1424 = vector.shape_cast %1423 : vector<1x8x8xf32> to vector<8x8xf32>
    %c2_477 = arith.constant 2 : index
    %c6_478 = arith.constant 6 : index
    %1425 = memref.load %arg8[%c2_477, %c6_478] : memref<8x8xf32, #tpu.memory_space<smem>>
    %1426 = vector.broadcast %1425 : f32 to vector<8x8xf32>
    %1427 = arith.mulf %1424, %1426 : vector<8x8xf32>
    %1428 = arith.addf %1422, %1427 : vector<8x8xf32>
    %1429 = vector.extract_strided_slice %1287 {offsets = [7, 0, 0], sizes = [1, 8, 8], strides = [1, 1, 1]} : vector<8x8x8xf32> to vector<1x8x8xf32>
    %1430 = vector.shape_cast %1429 : vector<1x8x8xf32> to vector<8x8xf32>
    %c2_479 = arith.constant 2 : index
    %c7_480 = arith.constant 7 : index
    %1431 = memref.load %arg8[%c2_479, %c7_480] : memref<8x8xf32, #tpu.memory_space<smem>>
    %1432 = vector.broadcast %1431 : f32 to vector<8x8xf32>
    %1433 = arith.mulf %1430, %1432 : vector<8x8xf32>
    %1434 = arith.addf %1428, %1433 : vector<8x8xf32>
    %c2_481 = arith.constant 2 : index
    %1435 = memref.load %arg9[%c2_481] : memref<8xf32, #tpu.memory_space<smem>>
    %1436 = vector.broadcast %1435 : f32 to vector<8x8xf32>
    %1437 = arith.addf %1434, %1436 : vector<8x8xf32>
    %1438 = vector.extract_strided_slice %1287 {offsets = [0, 0, 0], sizes = [1, 8, 8], strides = [1, 1, 1]} : vector<8x8x8xf32> to vector<1x8x8xf32>
    %1439 = vector.shape_cast %1438 : vector<1x8x8xf32> to vector<8x8xf32>
    %c3_482 = arith.constant 3 : index
    %c0_483 = arith.constant 0 : index
    %1440 = memref.load %arg8[%c3_482, %c0_483] : memref<8x8xf32, #tpu.memory_space<smem>>
    %1441 = vector.broadcast %1440 : f32 to vector<8x8xf32>
    %1442 = arith.mulf %1439, %1441 : vector<8x8xf32>
    %1443 = vector.extract_strided_slice %1287 {offsets = [1, 0, 0], sizes = [1, 8, 8], strides = [1, 1, 1]} : vector<8x8x8xf32> to vector<1x8x8xf32>
    %1444 = vector.shape_cast %1443 : vector<1x8x8xf32> to vector<8x8xf32>
    %c3_484 = arith.constant 3 : index
    %c1_485 = arith.constant 1 : index
    %1445 = memref.load %arg8[%c3_484, %c1_485] : memref<8x8xf32, #tpu.memory_space<smem>>
    %1446 = vector.broadcast %1445 : f32 to vector<8x8xf32>
    %1447 = arith.mulf %1444, %1446 : vector<8x8xf32>
    %1448 = arith.addf %1442, %1447 : vector<8x8xf32>
    %1449 = vector.extract_strided_slice %1287 {offsets = [2, 0, 0], sizes = [1, 8, 8], strides = [1, 1, 1]} : vector<8x8x8xf32> to vector<1x8x8xf32>
    %1450 = vector.shape_cast %1449 : vector<1x8x8xf32> to vector<8x8xf32>
    %c3_486 = arith.constant 3 : index
    %c2_487 = arith.constant 2 : index
    %1451 = memref.load %arg8[%c3_486, %c2_487] : memref<8x8xf32, #tpu.memory_space<smem>>
    %1452 = vector.broadcast %1451 : f32 to vector<8x8xf32>
    %1453 = arith.mulf %1450, %1452 : vector<8x8xf32>
    %1454 = arith.addf %1448, %1453 : vector<8x8xf32>
    %1455 = vector.extract_strided_slice %1287 {offsets = [3, 0, 0], sizes = [1, 8, 8], strides = [1, 1, 1]} : vector<8x8x8xf32> to vector<1x8x8xf32>
    %1456 = vector.shape_cast %1455 : vector<1x8x8xf32> to vector<8x8xf32>
    %c3_488 = arith.constant 3 : index
    %c3_489 = arith.constant 3 : index
    %1457 = memref.load %arg8[%c3_488, %c3_489] : memref<8x8xf32, #tpu.memory_space<smem>>
    %1458 = vector.broadcast %1457 : f32 to vector<8x8xf32>
    %1459 = arith.mulf %1456, %1458 : vector<8x8xf32>
    %1460 = arith.addf %1454, %1459 : vector<8x8xf32>
    %1461 = vector.extract_strided_slice %1287 {offsets = [4, 0, 0], sizes = [1, 8, 8], strides = [1, 1, 1]} : vector<8x8x8xf32> to vector<1x8x8xf32>
    %1462 = vector.shape_cast %1461 : vector<1x8x8xf32> to vector<8x8xf32>
    %c3_490 = arith.constant 3 : index
    %c4_491 = arith.constant 4 : index
    %1463 = memref.load %arg8[%c3_490, %c4_491] : memref<8x8xf32, #tpu.memory_space<smem>>
    %1464 = vector.broadcast %1463 : f32 to vector<8x8xf32>
    %1465 = arith.mulf %1462, %1464 : vector<8x8xf32>
    %1466 = arith.addf %1460, %1465 : vector<8x8xf32>
    %1467 = vector.extract_strided_slice %1287 {offsets = [5, 0, 0], sizes = [1, 8, 8], strides = [1, 1, 1]} : vector<8x8x8xf32> to vector<1x8x8xf32>
    %1468 = vector.shape_cast %1467 : vector<1x8x8xf32> to vector<8x8xf32>
    %c3_492 = arith.constant 3 : index
    %c5_493 = arith.constant 5 : index
    %1469 = memref.load %arg8[%c3_492, %c5_493] : memref<8x8xf32, #tpu.memory_space<smem>>
    %1470 = vector.broadcast %1469 : f32 to vector<8x8xf32>
    %1471 = arith.mulf %1468, %1470 : vector<8x8xf32>
    %1472 = arith.addf %1466, %1471 : vector<8x8xf32>
    %1473 = vector.extract_strided_slice %1287 {offsets = [6, 0, 0], sizes = [1, 8, 8], strides = [1, 1, 1]} : vector<8x8x8xf32> to vector<1x8x8xf32>
    %1474 = vector.shape_cast %1473 : vector<1x8x8xf32> to vector<8x8xf32>
    %c3_494 = arith.constant 3 : index
    %c6_495 = arith.constant 6 : index
    %1475 = memref.load %arg8[%c3_494, %c6_495] : memref<8x8xf32, #tpu.memory_space<smem>>
    %1476 = vector.broadcast %1475 : f32 to vector<8x8xf32>
    %1477 = arith.mulf %1474, %1476 : vector<8x8xf32>
    %1478 = arith.addf %1472, %1477 : vector<8x8xf32>
    %1479 = vector.extract_strided_slice %1287 {offsets = [7, 0, 0], sizes = [1, 8, 8], strides = [1, 1, 1]} : vector<8x8x8xf32> to vector<1x8x8xf32>
    %1480 = vector.shape_cast %1479 : vector<1x8x8xf32> to vector<8x8xf32>
    %c3_496 = arith.constant 3 : index
    %c7_497 = arith.constant 7 : index
    %1481 = memref.load %arg8[%c3_496, %c7_497] : memref<8x8xf32, #tpu.memory_space<smem>>
    %1482 = vector.broadcast %1481 : f32 to vector<8x8xf32>
    %1483 = arith.mulf %1480, %1482 : vector<8x8xf32>
    %1484 = arith.addf %1478, %1483 : vector<8x8xf32>
    %c3_498 = arith.constant 3 : index
    %1485 = memref.load %arg9[%c3_498] : memref<8xf32, #tpu.memory_space<smem>>
    %1486 = vector.broadcast %1485 : f32 to vector<8x8xf32>
    %1487 = arith.addf %1484, %1486 : vector<8x8xf32>
    %1488 = vector.extract_strided_slice %1287 {offsets = [0, 0, 0], sizes = [1, 8, 8], strides = [1, 1, 1]} : vector<8x8x8xf32> to vector<1x8x8xf32>
    %1489 = vector.shape_cast %1488 : vector<1x8x8xf32> to vector<8x8xf32>
    %c4_499 = arith.constant 4 : index
    %c0_500 = arith.constant 0 : index
    %1490 = memref.load %arg8[%c4_499, %c0_500] : memref<8x8xf32, #tpu.memory_space<smem>>
    %1491 = vector.broadcast %1490 : f32 to vector<8x8xf32>
    %1492 = arith.mulf %1489, %1491 : vector<8x8xf32>
    %1493 = vector.extract_strided_slice %1287 {offsets = [1, 0, 0], sizes = [1, 8, 8], strides = [1, 1, 1]} : vector<8x8x8xf32> to vector<1x8x8xf32>
    %1494 = vector.shape_cast %1493 : vector<1x8x8xf32> to vector<8x8xf32>
    %c4_501 = arith.constant 4 : index
    %c1_502 = arith.constant 1 : index
    %1495 = memref.load %arg8[%c4_501, %c1_502] : memref<8x8xf32, #tpu.memory_space<smem>>
    %1496 = vector.broadcast %1495 : f32 to vector<8x8xf32>
    %1497 = arith.mulf %1494, %1496 : vector<8x8xf32>
    %1498 = arith.addf %1492, %1497 : vector<8x8xf32>
    %1499 = vector.extract_strided_slice %1287 {offsets = [2, 0, 0], sizes = [1, 8, 8], strides = [1, 1, 1]} : vector<8x8x8xf32> to vector<1x8x8xf32>
    %1500 = vector.shape_cast %1499 : vector<1x8x8xf32> to vector<8x8xf32>
    %c4_503 = arith.constant 4 : index
    %c2_504 = arith.constant 2 : index
    %1501 = memref.load %arg8[%c4_503, %c2_504] : memref<8x8xf32, #tpu.memory_space<smem>>
    %1502 = vector.broadcast %1501 : f32 to vector<8x8xf32>
    %1503 = arith.mulf %1500, %1502 : vector<8x8xf32>
    %1504 = arith.addf %1498, %1503 : vector<8x8xf32>
    %1505 = vector.extract_strided_slice %1287 {offsets = [3, 0, 0], sizes = [1, 8, 8], strides = [1, 1, 1]} : vector<8x8x8xf32> to vector<1x8x8xf32>
    %1506 = vector.shape_cast %1505 : vector<1x8x8xf32> to vector<8x8xf32>
    %c4_505 = arith.constant 4 : index
    %c3_506 = arith.constant 3 : index
    %1507 = memref.load %arg8[%c4_505, %c3_506] : memref<8x8xf32, #tpu.memory_space<smem>>
    %1508 = vector.broadcast %1507 : f32 to vector<8x8xf32>
    %1509 = arith.mulf %1506, %1508 : vector<8x8xf32>
    %1510 = arith.addf %1504, %1509 : vector<8x8xf32>
    %1511 = vector.extract_strided_slice %1287 {offsets = [4, 0, 0], sizes = [1, 8, 8], strides = [1, 1, 1]} : vector<8x8x8xf32> to vector<1x8x8xf32>
    %1512 = vector.shape_cast %1511 : vector<1x8x8xf32> to vector<8x8xf32>
    %c4_507 = arith.constant 4 : index
    %c4_508 = arith.constant 4 : index
    %1513 = memref.load %arg8[%c4_507, %c4_508] : memref<8x8xf32, #tpu.memory_space<smem>>
    %1514 = vector.broadcast %1513 : f32 to vector<8x8xf32>
    %1515 = arith.mulf %1512, %1514 : vector<8x8xf32>
    %1516 = arith.addf %1510, %1515 : vector<8x8xf32>
    %1517 = vector.extract_strided_slice %1287 {offsets = [5, 0, 0], sizes = [1, 8, 8], strides = [1, 1, 1]} : vector<8x8x8xf32> to vector<1x8x8xf32>
    %1518 = vector.shape_cast %1517 : vector<1x8x8xf32> to vector<8x8xf32>
    %c4_509 = arith.constant 4 : index
    %c5_510 = arith.constant 5 : index
    %1519 = memref.load %arg8[%c4_509, %c5_510] : memref<8x8xf32, #tpu.memory_space<smem>>
    %1520 = vector.broadcast %1519 : f32 to vector<8x8xf32>
    %1521 = arith.mulf %1518, %1520 : vector<8x8xf32>
    %1522 = arith.addf %1516, %1521 : vector<8x8xf32>
    %1523 = vector.extract_strided_slice %1287 {offsets = [6, 0, 0], sizes = [1, 8, 8], strides = [1, 1, 1]} : vector<8x8x8xf32> to vector<1x8x8xf32>
    %1524 = vector.shape_cast %1523 : vector<1x8x8xf32> to vector<8x8xf32>
    %c4_511 = arith.constant 4 : index
    %c6_512 = arith.constant 6 : index
    %1525 = memref.load %arg8[%c4_511, %c6_512] : memref<8x8xf32, #tpu.memory_space<smem>>
    %1526 = vector.broadcast %1525 : f32 to vector<8x8xf32>
    %1527 = arith.mulf %1524, %1526 : vector<8x8xf32>
    %1528 = arith.addf %1522, %1527 : vector<8x8xf32>
    %1529 = vector.extract_strided_slice %1287 {offsets = [7, 0, 0], sizes = [1, 8, 8], strides = [1, 1, 1]} : vector<8x8x8xf32> to vector<1x8x8xf32>
    %1530 = vector.shape_cast %1529 : vector<1x8x8xf32> to vector<8x8xf32>
    %c4_513 = arith.constant 4 : index
    %c7_514 = arith.constant 7 : index
    %1531 = memref.load %arg8[%c4_513, %c7_514] : memref<8x8xf32, #tpu.memory_space<smem>>
    %1532 = vector.broadcast %1531 : f32 to vector<8x8xf32>
    %1533 = arith.mulf %1530, %1532 : vector<8x8xf32>
    %1534 = arith.addf %1528, %1533 : vector<8x8xf32>
    %c4_515 = arith.constant 4 : index
    %1535 = memref.load %arg9[%c4_515] : memref<8xf32, #tpu.memory_space<smem>>
    %1536 = vector.broadcast %1535 : f32 to vector<8x8xf32>
    %1537 = arith.addf %1534, %1536 : vector<8x8xf32>
    %1538 = vector.extract_strided_slice %1287 {offsets = [0, 0, 0], sizes = [1, 8, 8], strides = [1, 1, 1]} : vector<8x8x8xf32> to vector<1x8x8xf32>
    %1539 = vector.shape_cast %1538 : vector<1x8x8xf32> to vector<8x8xf32>
    %c5_516 = arith.constant 5 : index
    %c0_517 = arith.constant 0 : index
    %1540 = memref.load %arg8[%c5_516, %c0_517] : memref<8x8xf32, #tpu.memory_space<smem>>
    %1541 = vector.broadcast %1540 : f32 to vector<8x8xf32>
    %1542 = arith.mulf %1539, %1541 : vector<8x8xf32>
    %1543 = vector.extract_strided_slice %1287 {offsets = [1, 0, 0], sizes = [1, 8, 8], strides = [1, 1, 1]} : vector<8x8x8xf32> to vector<1x8x8xf32>
    %1544 = vector.shape_cast %1543 : vector<1x8x8xf32> to vector<8x8xf32>
    %c5_518 = arith.constant 5 : index
    %c1_519 = arith.constant 1 : index
    %1545 = memref.load %arg8[%c5_518, %c1_519] : memref<8x8xf32, #tpu.memory_space<smem>>
    %1546 = vector.broadcast %1545 : f32 to vector<8x8xf32>
    %1547 = arith.mulf %1544, %1546 : vector<8x8xf32>
    %1548 = arith.addf %1542, %1547 : vector<8x8xf32>
    %1549 = vector.extract_strided_slice %1287 {offsets = [2, 0, 0], sizes = [1, 8, 8], strides = [1, 1, 1]} : vector<8x8x8xf32> to vector<1x8x8xf32>
    %1550 = vector.shape_cast %1549 : vector<1x8x8xf32> to vector<8x8xf32>
    %c5_520 = arith.constant 5 : index
    %c2_521 = arith.constant 2 : index
    %1551 = memref.load %arg8[%c5_520, %c2_521] : memref<8x8xf32, #tpu.memory_space<smem>>
    %1552 = vector.broadcast %1551 : f32 to vector<8x8xf32>
    %1553 = arith.mulf %1550, %1552 : vector<8x8xf32>
    %1554 = arith.addf %1548, %1553 : vector<8x8xf32>
    %1555 = vector.extract_strided_slice %1287 {offsets = [3, 0, 0], sizes = [1, 8, 8], strides = [1, 1, 1]} : vector<8x8x8xf32> to vector<1x8x8xf32>
    %1556 = vector.shape_cast %1555 : vector<1x8x8xf32> to vector<8x8xf32>
    %c5_522 = arith.constant 5 : index
    %c3_523 = arith.constant 3 : index
    %1557 = memref.load %arg8[%c5_522, %c3_523] : memref<8x8xf32, #tpu.memory_space<smem>>
    %1558 = vector.broadcast %1557 : f32 to vector<8x8xf32>
    %1559 = arith.mulf %1556, %1558 : vector<8x8xf32>
    %1560 = arith.addf %1554, %1559 : vector<8x8xf32>
    %1561 = vector.extract_strided_slice %1287 {offsets = [4, 0, 0], sizes = [1, 8, 8], strides = [1, 1, 1]} : vector<8x8x8xf32> to vector<1x8x8xf32>
    %1562 = vector.shape_cast %1561 : vector<1x8x8xf32> to vector<8x8xf32>
    %c5_524 = arith.constant 5 : index
    %c4_525 = arith.constant 4 : index
    %1563 = memref.load %arg8[%c5_524, %c4_525] : memref<8x8xf32, #tpu.memory_space<smem>>
    %1564 = vector.broadcast %1563 : f32 to vector<8x8xf32>
    %1565 = arith.mulf %1562, %1564 : vector<8x8xf32>
    %1566 = arith.addf %1560, %1565 : vector<8x8xf32>
    %1567 = vector.extract_strided_slice %1287 {offsets = [5, 0, 0], sizes = [1, 8, 8], strides = [1, 1, 1]} : vector<8x8x8xf32> to vector<1x8x8xf32>
    %1568 = vector.shape_cast %1567 : vector<1x8x8xf32> to vector<8x8xf32>
    %c5_526 = arith.constant 5 : index
    %c5_527 = arith.constant 5 : index
    %1569 = memref.load %arg8[%c5_526, %c5_527] : memref<8x8xf32, #tpu.memory_space<smem>>
    %1570 = vector.broadcast %1569 : f32 to vector<8x8xf32>
    %1571 = arith.mulf %1568, %1570 : vector<8x8xf32>
    %1572 = arith.addf %1566, %1571 : vector<8x8xf32>
    %1573 = vector.extract_strided_slice %1287 {offsets = [6, 0, 0], sizes = [1, 8, 8], strides = [1, 1, 1]} : vector<8x8x8xf32> to vector<1x8x8xf32>
    %1574 = vector.shape_cast %1573 : vector<1x8x8xf32> to vector<8x8xf32>
    %c5_528 = arith.constant 5 : index
    %c6_529 = arith.constant 6 : index
    %1575 = memref.load %arg8[%c5_528, %c6_529] : memref<8x8xf32, #tpu.memory_space<smem>>
    %1576 = vector.broadcast %1575 : f32 to vector<8x8xf32>
    %1577 = arith.mulf %1574, %1576 : vector<8x8xf32>
    %1578 = arith.addf %1572, %1577 : vector<8x8xf32>
    %1579 = vector.extract_strided_slice %1287 {offsets = [7, 0, 0], sizes = [1, 8, 8], strides = [1, 1, 1]} : vector<8x8x8xf32> to vector<1x8x8xf32>
    %1580 = vector.shape_cast %1579 : vector<1x8x8xf32> to vector<8x8xf32>
    %c5_530 = arith.constant 5 : index
    %c7_531 = arith.constant 7 : index
    %1581 = memref.load %arg8[%c5_530, %c7_531] : memref<8x8xf32, #tpu.memory_space<smem>>
    %1582 = vector.broadcast %1581 : f32 to vector<8x8xf32>
    %1583 = arith.mulf %1580, %1582 : vector<8x8xf32>
    %1584 = arith.addf %1578, %1583 : vector<8x8xf32>
    %c5_532 = arith.constant 5 : index
    %1585 = memref.load %arg9[%c5_532] : memref<8xf32, #tpu.memory_space<smem>>
    %1586 = vector.broadcast %1585 : f32 to vector<8x8xf32>
    %1587 = arith.addf %1584, %1586 : vector<8x8xf32>
    %1588 = vector.extract_strided_slice %1287 {offsets = [0, 0, 0], sizes = [1, 8, 8], strides = [1, 1, 1]} : vector<8x8x8xf32> to vector<1x8x8xf32>
    %1589 = vector.shape_cast %1588 : vector<1x8x8xf32> to vector<8x8xf32>
    %c6_533 = arith.constant 6 : index
    %c0_534 = arith.constant 0 : index
    %1590 = memref.load %arg8[%c6_533, %c0_534] : memref<8x8xf32, #tpu.memory_space<smem>>
    %1591 = vector.broadcast %1590 : f32 to vector<8x8xf32>
    %1592 = arith.mulf %1589, %1591 : vector<8x8xf32>
    %1593 = vector.extract_strided_slice %1287 {offsets = [1, 0, 0], sizes = [1, 8, 8], strides = [1, 1, 1]} : vector<8x8x8xf32> to vector<1x8x8xf32>
    %1594 = vector.shape_cast %1593 : vector<1x8x8xf32> to vector<8x8xf32>
    %c6_535 = arith.constant 6 : index
    %c1_536 = arith.constant 1 : index
    %1595 = memref.load %arg8[%c6_535, %c1_536] : memref<8x8xf32, #tpu.memory_space<smem>>
    %1596 = vector.broadcast %1595 : f32 to vector<8x8xf32>
    %1597 = arith.mulf %1594, %1596 : vector<8x8xf32>
    %1598 = arith.addf %1592, %1597 : vector<8x8xf32>
    %1599 = vector.extract_strided_slice %1287 {offsets = [2, 0, 0], sizes = [1, 8, 8], strides = [1, 1, 1]} : vector<8x8x8xf32> to vector<1x8x8xf32>
    %1600 = vector.shape_cast %1599 : vector<1x8x8xf32> to vector<8x8xf32>
    %c6_537 = arith.constant 6 : index
    %c2_538 = arith.constant 2 : index
    %1601 = memref.load %arg8[%c6_537, %c2_538] : memref<8x8xf32, #tpu.memory_space<smem>>
    %1602 = vector.broadcast %1601 : f32 to vector<8x8xf32>
    %1603 = arith.mulf %1600, %1602 : vector<8x8xf32>
    %1604 = arith.addf %1598, %1603 : vector<8x8xf32>
    %1605 = vector.extract_strided_slice %1287 {offsets = [3, 0, 0], sizes = [1, 8, 8], strides = [1, 1, 1]} : vector<8x8x8xf32> to vector<1x8x8xf32>
    %1606 = vector.shape_cast %1605 : vector<1x8x8xf32> to vector<8x8xf32>
    %c6_539 = arith.constant 6 : index
    %c3_540 = arith.constant 3 : index
    %1607 = memref.load %arg8[%c6_539, %c3_540] : memref<8x8xf32, #tpu.memory_space<smem>>
    %1608 = vector.broadcast %1607 : f32 to vector<8x8xf32>
    %1609 = arith.mulf %1606, %1608 : vector<8x8xf32>
    %1610 = arith.addf %1604, %1609 : vector<8x8xf32>
    %1611 = vector.extract_strided_slice %1287 {offsets = [4, 0, 0], sizes = [1, 8, 8], strides = [1, 1, 1]} : vector<8x8x8xf32> to vector<1x8x8xf32>
    %1612 = vector.shape_cast %1611 : vector<1x8x8xf32> to vector<8x8xf32>
    %c6_541 = arith.constant 6 : index
    %c4_542 = arith.constant 4 : index
    %1613 = memref.load %arg8[%c6_541, %c4_542] : memref<8x8xf32, #tpu.memory_space<smem>>
    %1614 = vector.broadcast %1613 : f32 to vector<8x8xf32>
    %1615 = arith.mulf %1612, %1614 : vector<8x8xf32>
    %1616 = arith.addf %1610, %1615 : vector<8x8xf32>
    %1617 = vector.extract_strided_slice %1287 {offsets = [5, 0, 0], sizes = [1, 8, 8], strides = [1, 1, 1]} : vector<8x8x8xf32> to vector<1x8x8xf32>
    %1618 = vector.shape_cast %1617 : vector<1x8x8xf32> to vector<8x8xf32>
    %c6_543 = arith.constant 6 : index
    %c5_544 = arith.constant 5 : index
    %1619 = memref.load %arg8[%c6_543, %c5_544] : memref<8x8xf32, #tpu.memory_space<smem>>
    %1620 = vector.broadcast %1619 : f32 to vector<8x8xf32>
    %1621 = arith.mulf %1618, %1620 : vector<8x8xf32>
    %1622 = arith.addf %1616, %1621 : vector<8x8xf32>
    %1623 = vector.extract_strided_slice %1287 {offsets = [6, 0, 0], sizes = [1, 8, 8], strides = [1, 1, 1]} : vector<8x8x8xf32> to vector<1x8x8xf32>
    %1624 = vector.shape_cast %1623 : vector<1x8x8xf32> to vector<8x8xf32>
    %c6_545 = arith.constant 6 : index
    %c6_546 = arith.constant 6 : index
    %1625 = memref.load %arg8[%c6_545, %c6_546] : memref<8x8xf32, #tpu.memory_space<smem>>
    %1626 = vector.broadcast %1625 : f32 to vector<8x8xf32>
    %1627 = arith.mulf %1624, %1626 : vector<8x8xf32>
    %1628 = arith.addf %1622, %1627 : vector<8x8xf32>
    %1629 = vector.extract_strided_slice %1287 {offsets = [7, 0, 0], sizes = [1, 8, 8], strides = [1, 1, 1]} : vector<8x8x8xf32> to vector<1x8x8xf32>
    %1630 = vector.shape_cast %1629 : vector<1x8x8xf32> to vector<8x8xf32>
    %c6_547 = arith.constant 6 : index
    %c7_548 = arith.constant 7 : index
    %1631 = memref.load %arg8[%c6_547, %c7_548] : memref<8x8xf32, #tpu.memory_space<smem>>
    %1632 = vector.broadcast %1631 : f32 to vector<8x8xf32>
    %1633 = arith.mulf %1630, %1632 : vector<8x8xf32>
    %1634 = arith.addf %1628, %1633 : vector<8x8xf32>
    %c6_549 = arith.constant 6 : index
    %1635 = memref.load %arg9[%c6_549] : memref<8xf32, #tpu.memory_space<smem>>
    %1636 = vector.broadcast %1635 : f32 to vector<8x8xf32>
    %1637 = arith.addf %1634, %1636 : vector<8x8xf32>
    %1638 = vector.extract_strided_slice %1287 {offsets = [0, 0, 0], sizes = [1, 8, 8], strides = [1, 1, 1]} : vector<8x8x8xf32> to vector<1x8x8xf32>
    %1639 = vector.shape_cast %1638 : vector<1x8x8xf32> to vector<8x8xf32>
    %c7_550 = arith.constant 7 : index
    %c0_551 = arith.constant 0 : index
    %1640 = memref.load %arg8[%c7_550, %c0_551] : memref<8x8xf32, #tpu.memory_space<smem>>
    %1641 = vector.broadcast %1640 : f32 to vector<8x8xf32>
    %1642 = arith.mulf %1639, %1641 : vector<8x8xf32>
    %1643 = vector.extract_strided_slice %1287 {offsets = [1, 0, 0], sizes = [1, 8, 8], strides = [1, 1, 1]} : vector<8x8x8xf32> to vector<1x8x8xf32>
    %1644 = vector.shape_cast %1643 : vector<1x8x8xf32> to vector<8x8xf32>
    %c7_552 = arith.constant 7 : index
    %c1_553 = arith.constant 1 : index
    %1645 = memref.load %arg8[%c7_552, %c1_553] : memref<8x8xf32, #tpu.memory_space<smem>>
    %1646 = vector.broadcast %1645 : f32 to vector<8x8xf32>
    %1647 = arith.mulf %1644, %1646 : vector<8x8xf32>
    %1648 = arith.addf %1642, %1647 : vector<8x8xf32>
    %1649 = vector.extract_strided_slice %1287 {offsets = [2, 0, 0], sizes = [1, 8, 8], strides = [1, 1, 1]} : vector<8x8x8xf32> to vector<1x8x8xf32>
    %1650 = vector.shape_cast %1649 : vector<1x8x8xf32> to vector<8x8xf32>
    %c7_554 = arith.constant 7 : index
    %c2_555 = arith.constant 2 : index
    %1651 = memref.load %arg8[%c7_554, %c2_555] : memref<8x8xf32, #tpu.memory_space<smem>>
    %1652 = vector.broadcast %1651 : f32 to vector<8x8xf32>
    %1653 = arith.mulf %1650, %1652 : vector<8x8xf32>
    %1654 = arith.addf %1648, %1653 : vector<8x8xf32>
    %1655 = vector.extract_strided_slice %1287 {offsets = [3, 0, 0], sizes = [1, 8, 8], strides = [1, 1, 1]} : vector<8x8x8xf32> to vector<1x8x8xf32>
    %1656 = vector.shape_cast %1655 : vector<1x8x8xf32> to vector<8x8xf32>
    %c7_556 = arith.constant 7 : index
    %c3_557 = arith.constant 3 : index
    %1657 = memref.load %arg8[%c7_556, %c3_557] : memref<8x8xf32, #tpu.memory_space<smem>>
    %1658 = vector.broadcast %1657 : f32 to vector<8x8xf32>
    %1659 = arith.mulf %1656, %1658 : vector<8x8xf32>
    %1660 = arith.addf %1654, %1659 : vector<8x8xf32>
    %1661 = vector.extract_strided_slice %1287 {offsets = [4, 0, 0], sizes = [1, 8, 8], strides = [1, 1, 1]} : vector<8x8x8xf32> to vector<1x8x8xf32>
    %1662 = vector.shape_cast %1661 : vector<1x8x8xf32> to vector<8x8xf32>
    %c7_558 = arith.constant 7 : index
    %c4_559 = arith.constant 4 : index
    %1663 = memref.load %arg8[%c7_558, %c4_559] : memref<8x8xf32, #tpu.memory_space<smem>>
    %1664 = vector.broadcast %1663 : f32 to vector<8x8xf32>
    %1665 = arith.mulf %1662, %1664 : vector<8x8xf32>
    %1666 = arith.addf %1660, %1665 : vector<8x8xf32>
    %1667 = vector.extract_strided_slice %1287 {offsets = [5, 0, 0], sizes = [1, 8, 8], strides = [1, 1, 1]} : vector<8x8x8xf32> to vector<1x8x8xf32>
    %1668 = vector.shape_cast %1667 : vector<1x8x8xf32> to vector<8x8xf32>
    %c7_560 = arith.constant 7 : index
    %c5_561 = arith.constant 5 : index
    %1669 = memref.load %arg8[%c7_560, %c5_561] : memref<8x8xf32, #tpu.memory_space<smem>>
    %1670 = vector.broadcast %1669 : f32 to vector<8x8xf32>
    %1671 = arith.mulf %1668, %1670 : vector<8x8xf32>
    %1672 = arith.addf %1666, %1671 : vector<8x8xf32>
    %1673 = vector.extract_strided_slice %1287 {offsets = [6, 0, 0], sizes = [1, 8, 8], strides = [1, 1, 1]} : vector<8x8x8xf32> to vector<1x8x8xf32>
    %1674 = vector.shape_cast %1673 : vector<1x8x8xf32> to vector<8x8xf32>
    %c7_562 = arith.constant 7 : index
    %c6_563 = arith.constant 6 : index
    %1675 = memref.load %arg8[%c7_562, %c6_563] : memref<8x8xf32, #tpu.memory_space<smem>>
    %1676 = vector.broadcast %1675 : f32 to vector<8x8xf32>
    %1677 = arith.mulf %1674, %1676 : vector<8x8xf32>
    %1678 = arith.addf %1672, %1677 : vector<8x8xf32>
    %1679 = vector.extract_strided_slice %1287 {offsets = [7, 0, 0], sizes = [1, 8, 8], strides = [1, 1, 1]} : vector<8x8x8xf32> to vector<1x8x8xf32>
    %1680 = vector.shape_cast %1679 : vector<1x8x8xf32> to vector<8x8xf32>
    %c7_564 = arith.constant 7 : index
    %c7_565 = arith.constant 7 : index
    %1681 = memref.load %arg8[%c7_564, %c7_565] : memref<8x8xf32, #tpu.memory_space<smem>>
    %1682 = vector.broadcast %1681 : f32 to vector<8x8xf32>
    %1683 = arith.mulf %1680, %1682 : vector<8x8xf32>
    %1684 = arith.addf %1678, %1683 : vector<8x8xf32>
    %c7_566 = arith.constant 7 : index
    %1685 = memref.load %arg9[%c7_566] : memref<8xf32, #tpu.memory_space<smem>>
    %1686 = vector.broadcast %1685 : f32 to vector<8x8xf32>
    %1687 = arith.addf %1684, %1686 : vector<8x8xf32>
    %1688 = vector.shape_cast %1337 : vector<8x8xf32> to vector<1x8x8xf32>
    %1689 = vector.shape_cast %1387 : vector<8x8xf32> to vector<1x8x8xf32>
    %1690 = vector.shape_cast %1437 : vector<8x8xf32> to vector<1x8x8xf32>
    %1691 = vector.shape_cast %1487 : vector<8x8xf32> to vector<1x8x8xf32>
    %1692 = vector.shape_cast %1537 : vector<8x8xf32> to vector<1x8x8xf32>
    %1693 = vector.shape_cast %1587 : vector<8x8xf32> to vector<1x8x8xf32>
    %1694 = vector.shape_cast %1637 : vector<8x8xf32> to vector<1x8x8xf32>
    %1695 = vector.shape_cast %1687 : vector<8x8xf32> to vector<1x8x8xf32>
    %1696 = tpu.concatenate %1688, %1689, %1690, %1691, %1692, %1693, %1694, %1695 in 0 : vector<1x8x8xf32>, vector<1x8x8xf32>, vector<1x8x8xf32>, vector<1x8x8xf32>, vector<1x8x8xf32>, vector<1x8x8xf32>, vector<1x8x8xf32>, vector<1x8x8xf32> -> vector<8x8x8xf32>
    %1697 = vector.broadcast %1276 : vector<8x1x1xf32> to vector<8x8x8xf32>
    %1698 = arith.subf %1254, %1697 : vector<8x8x8xf32>
    %1699 = vector.broadcast %1283 : vector<8x1x1xf32> to vector<8x8x8xf32>
    %1700 = arith.mulf %1698, %1699 : vector<8x8x8xf32>
    %1701 = vector.extract_strided_slice %1700 {offsets = [0, 0, 0], sizes = [1, 8, 8], strides = [1, 1, 1]} : vector<8x8x8xf32> to vector<1x8x8xf32>
    %1702 = vector.shape_cast %1701 : vector<1x8x8xf32> to vector<8x8xf32>
    %c0_567 = arith.constant 0 : index
    %c0_568 = arith.constant 0 : index
    %1703 = memref.load %arg8[%c0_567, %c0_568] : memref<8x8xf32, #tpu.memory_space<smem>>
    %1704 = vector.broadcast %1703 : f32 to vector<8x8xf32>
    %1705 = arith.mulf %1702, %1704 : vector<8x8xf32>
    %1706 = vector.extract_strided_slice %1700 {offsets = [1, 0, 0], sizes = [1, 8, 8], strides = [1, 1, 1]} : vector<8x8x8xf32> to vector<1x8x8xf32>
    %1707 = vector.shape_cast %1706 : vector<1x8x8xf32> to vector<8x8xf32>
    %c0_569 = arith.constant 0 : index
    %c1_570 = arith.constant 1 : index
    %1708 = memref.load %arg8[%c0_569, %c1_570] : memref<8x8xf32, #tpu.memory_space<smem>>
    %1709 = vector.broadcast %1708 : f32 to vector<8x8xf32>
    %1710 = arith.mulf %1707, %1709 : vector<8x8xf32>
    %1711 = arith.addf %1705, %1710 : vector<8x8xf32>
    %1712 = vector.extract_strided_slice %1700 {offsets = [2, 0, 0], sizes = [1, 8, 8], strides = [1, 1, 1]} : vector<8x8x8xf32> to vector<1x8x8xf32>
    %1713 = vector.shape_cast %1712 : vector<1x8x8xf32> to vector<8x8xf32>
    %c0_571 = arith.constant 0 : index
    %c2_572 = arith.constant 2 : index
    %1714 = memref.load %arg8[%c0_571, %c2_572] : memref<8x8xf32, #tpu.memory_space<smem>>
    %1715 = vector.broadcast %1714 : f32 to vector<8x8xf32>
    %1716 = arith.mulf %1713, %1715 : vector<8x8xf32>
    %1717 = arith.addf %1711, %1716 : vector<8x8xf32>
    %1718 = vector.extract_strided_slice %1700 {offsets = [3, 0, 0], sizes = [1, 8, 8], strides = [1, 1, 1]} : vector<8x8x8xf32> to vector<1x8x8xf32>
    %1719 = vector.shape_cast %1718 : vector<1x8x8xf32> to vector<8x8xf32>
    %c0_573 = arith.constant 0 : index
    %c3_574 = arith.constant 3 : index
    %1720 = memref.load %arg8[%c0_573, %c3_574] : memref<8x8xf32, #tpu.memory_space<smem>>
    %1721 = vector.broadcast %1720 : f32 to vector<8x8xf32>
    %1722 = arith.mulf %1719, %1721 : vector<8x8xf32>
    %1723 = arith.addf %1717, %1722 : vector<8x8xf32>
    %1724 = vector.extract_strided_slice %1700 {offsets = [4, 0, 0], sizes = [1, 8, 8], strides = [1, 1, 1]} : vector<8x8x8xf32> to vector<1x8x8xf32>
    %1725 = vector.shape_cast %1724 : vector<1x8x8xf32> to vector<8x8xf32>
    %c0_575 = arith.constant 0 : index
    %c4_576 = arith.constant 4 : index
    %1726 = memref.load %arg8[%c0_575, %c4_576] : memref<8x8xf32, #tpu.memory_space<smem>>
    %1727 = vector.broadcast %1726 : f32 to vector<8x8xf32>
    %1728 = arith.mulf %1725, %1727 : vector<8x8xf32>
    %1729 = arith.addf %1723, %1728 : vector<8x8xf32>
    %1730 = vector.extract_strided_slice %1700 {offsets = [5, 0, 0], sizes = [1, 8, 8], strides = [1, 1, 1]} : vector<8x8x8xf32> to vector<1x8x8xf32>
    %1731 = vector.shape_cast %1730 : vector<1x8x8xf32> to vector<8x8xf32>
    %c0_577 = arith.constant 0 : index
    %c5_578 = arith.constant 5 : index
    %1732 = memref.load %arg8[%c0_577, %c5_578] : memref<8x8xf32, #tpu.memory_space<smem>>
    %1733 = vector.broadcast %1732 : f32 to vector<8x8xf32>
    %1734 = arith.mulf %1731, %1733 : vector<8x8xf32>
    %1735 = arith.addf %1729, %1734 : vector<8x8xf32>
    %1736 = vector.extract_strided_slice %1700 {offsets = [6, 0, 0], sizes = [1, 8, 8], strides = [1, 1, 1]} : vector<8x8x8xf32> to vector<1x8x8xf32>
    %1737 = vector.shape_cast %1736 : vector<1x8x8xf32> to vector<8x8xf32>
    %c0_579 = arith.constant 0 : index
    %c6_580 = arith.constant 6 : index
    %1738 = memref.load %arg8[%c0_579, %c6_580] : memref<8x8xf32, #tpu.memory_space<smem>>
    %1739 = vector.broadcast %1738 : f32 to vector<8x8xf32>
    %1740 = arith.mulf %1737, %1739 : vector<8x8xf32>
    %1741 = arith.addf %1735, %1740 : vector<8x8xf32>
    %1742 = vector.extract_strided_slice %1700 {offsets = [7, 0, 0], sizes = [1, 8, 8], strides = [1, 1, 1]} : vector<8x8x8xf32> to vector<1x8x8xf32>
    %1743 = vector.shape_cast %1742 : vector<1x8x8xf32> to vector<8x8xf32>
    %c0_581 = arith.constant 0 : index
    %c7_582 = arith.constant 7 : index
    %1744 = memref.load %arg8[%c0_581, %c7_582] : memref<8x8xf32, #tpu.memory_space<smem>>
    %1745 = vector.broadcast %1744 : f32 to vector<8x8xf32>
    %1746 = arith.mulf %1743, %1745 : vector<8x8xf32>
    %1747 = arith.addf %1741, %1746 : vector<8x8xf32>
    %c0_583 = arith.constant 0 : index
    %1748 = memref.load %arg9[%c0_583] : memref<8xf32, #tpu.memory_space<smem>>
    %1749 = vector.broadcast %1748 : f32 to vector<8x8xf32>
    %1750 = arith.addf %1747, %1749 : vector<8x8xf32>
    %1751 = vector.extract_strided_slice %1700 {offsets = [0, 0, 0], sizes = [1, 8, 8], strides = [1, 1, 1]} : vector<8x8x8xf32> to vector<1x8x8xf32>
    %1752 = vector.shape_cast %1751 : vector<1x8x8xf32> to vector<8x8xf32>
    %c1_584 = arith.constant 1 : index
    %c0_585 = arith.constant 0 : index
    %1753 = memref.load %arg8[%c1_584, %c0_585] : memref<8x8xf32, #tpu.memory_space<smem>>
    %1754 = vector.broadcast %1753 : f32 to vector<8x8xf32>
    %1755 = arith.mulf %1752, %1754 : vector<8x8xf32>
    %1756 = vector.extract_strided_slice %1700 {offsets = [1, 0, 0], sizes = [1, 8, 8], strides = [1, 1, 1]} : vector<8x8x8xf32> to vector<1x8x8xf32>
    %1757 = vector.shape_cast %1756 : vector<1x8x8xf32> to vector<8x8xf32>
    %c1_586 = arith.constant 1 : index
    %c1_587 = arith.constant 1 : index
    %1758 = memref.load %arg8[%c1_586, %c1_587] : memref<8x8xf32, #tpu.memory_space<smem>>
    %1759 = vector.broadcast %1758 : f32 to vector<8x8xf32>
    %1760 = arith.mulf %1757, %1759 : vector<8x8xf32>
    %1761 = arith.addf %1755, %1760 : vector<8x8xf32>
    %1762 = vector.extract_strided_slice %1700 {offsets = [2, 0, 0], sizes = [1, 8, 8], strides = [1, 1, 1]} : vector<8x8x8xf32> to vector<1x8x8xf32>
    %1763 = vector.shape_cast %1762 : vector<1x8x8xf32> to vector<8x8xf32>
    %c1_588 = arith.constant 1 : index
    %c2_589 = arith.constant 2 : index
    %1764 = memref.load %arg8[%c1_588, %c2_589] : memref<8x8xf32, #tpu.memory_space<smem>>
    %1765 = vector.broadcast %1764 : f32 to vector<8x8xf32>
    %1766 = arith.mulf %1763, %1765 : vector<8x8xf32>
    %1767 = arith.addf %1761, %1766 : vector<8x8xf32>
    %1768 = vector.extract_strided_slice %1700 {offsets = [3, 0, 0], sizes = [1, 8, 8], strides = [1, 1, 1]} : vector<8x8x8xf32> to vector<1x8x8xf32>
    %1769 = vector.shape_cast %1768 : vector<1x8x8xf32> to vector<8x8xf32>
    %c1_590 = arith.constant 1 : index
    %c3_591 = arith.constant 3 : index
    %1770 = memref.load %arg8[%c1_590, %c3_591] : memref<8x8xf32, #tpu.memory_space<smem>>
    %1771 = vector.broadcast %1770 : f32 to vector<8x8xf32>
    %1772 = arith.mulf %1769, %1771 : vector<8x8xf32>
    %1773 = arith.addf %1767, %1772 : vector<8x8xf32>
    %1774 = vector.extract_strided_slice %1700 {offsets = [4, 0, 0], sizes = [1, 8, 8], strides = [1, 1, 1]} : vector<8x8x8xf32> to vector<1x8x8xf32>
    %1775 = vector.shape_cast %1774 : vector<1x8x8xf32> to vector<8x8xf32>
    %c1_592 = arith.constant 1 : index
    %c4_593 = arith.constant 4 : index
    %1776 = memref.load %arg8[%c1_592, %c4_593] : memref<8x8xf32, #tpu.memory_space<smem>>
    %1777 = vector.broadcast %1776 : f32 to vector<8x8xf32>
    %1778 = arith.mulf %1775, %1777 : vector<8x8xf32>
    %1779 = arith.addf %1773, %1778 : vector<8x8xf32>
    %1780 = vector.extract_strided_slice %1700 {offsets = [5, 0, 0], sizes = [1, 8, 8], strides = [1, 1, 1]} : vector<8x8x8xf32> to vector<1x8x8xf32>
    %1781 = vector.shape_cast %1780 : vector<1x8x8xf32> to vector<8x8xf32>
    %c1_594 = arith.constant 1 : index
    %c5_595 = arith.constant 5 : index
    %1782 = memref.load %arg8[%c1_594, %c5_595] : memref<8x8xf32, #tpu.memory_space<smem>>
    %1783 = vector.broadcast %1782 : f32 to vector<8x8xf32>
    %1784 = arith.mulf %1781, %1783 : vector<8x8xf32>
    %1785 = arith.addf %1779, %1784 : vector<8x8xf32>
    %1786 = vector.extract_strided_slice %1700 {offsets = [6, 0, 0], sizes = [1, 8, 8], strides = [1, 1, 1]} : vector<8x8x8xf32> to vector<1x8x8xf32>
    %1787 = vector.shape_cast %1786 : vector<1x8x8xf32> to vector<8x8xf32>
    %c1_596 = arith.constant 1 : index
    %c6_597 = arith.constant 6 : index
    %1788 = memref.load %arg8[%c1_596, %c6_597] : memref<8x8xf32, #tpu.memory_space<smem>>
    %1789 = vector.broadcast %1788 : f32 to vector<8x8xf32>
    %1790 = arith.mulf %1787, %1789 : vector<8x8xf32>
    %1791 = arith.addf %1785, %1790 : vector<8x8xf32>
    %1792 = vector.extract_strided_slice %1700 {offsets = [7, 0, 0], sizes = [1, 8, 8], strides = [1, 1, 1]} : vector<8x8x8xf32> to vector<1x8x8xf32>
    %1793 = vector.shape_cast %1792 : vector<1x8x8xf32> to vector<8x8xf32>
    %c1_598 = arith.constant 1 : index
    %c7_599 = arith.constant 7 : index
    %1794 = memref.load %arg8[%c1_598, %c7_599] : memref<8x8xf32, #tpu.memory_space<smem>>
    %1795 = vector.broadcast %1794 : f32 to vector<8x8xf32>
    %1796 = arith.mulf %1793, %1795 : vector<8x8xf32>
    %1797 = arith.addf %1791, %1796 : vector<8x8xf32>
    %c1_600 = arith.constant 1 : index
    %1798 = memref.load %arg9[%c1_600] : memref<8xf32, #tpu.memory_space<smem>>
    %1799 = vector.broadcast %1798 : f32 to vector<8x8xf32>
    %1800 = arith.addf %1797, %1799 : vector<8x8xf32>
    %1801 = vector.extract_strided_slice %1700 {offsets = [0, 0, 0], sizes = [1, 8, 8], strides = [1, 1, 1]} : vector<8x8x8xf32> to vector<1x8x8xf32>
    %1802 = vector.shape_cast %1801 : vector<1x8x8xf32> to vector<8x8xf32>
    %c2_601 = arith.constant 2 : index
    %c0_602 = arith.constant 0 : index
    %1803 = memref.load %arg8[%c2_601, %c0_602] : memref<8x8xf32, #tpu.memory_space<smem>>
    %1804 = vector.broadcast %1803 : f32 to vector<8x8xf32>
    %1805 = arith.mulf %1802, %1804 : vector<8x8xf32>
    %1806 = vector.extract_strided_slice %1700 {offsets = [1, 0, 0], sizes = [1, 8, 8], strides = [1, 1, 1]} : vector<8x8x8xf32> to vector<1x8x8xf32>
    %1807 = vector.shape_cast %1806 : vector<1x8x8xf32> to vector<8x8xf32>
    %c2_603 = arith.constant 2 : index
    %c1_604 = arith.constant 1 : index
    %1808 = memref.load %arg8[%c2_603, %c1_604] : memref<8x8xf32, #tpu.memory_space<smem>>
    %1809 = vector.broadcast %1808 : f32 to vector<8x8xf32>
    %1810 = arith.mulf %1807, %1809 : vector<8x8xf32>
    %1811 = arith.addf %1805, %1810 : vector<8x8xf32>
    %1812 = vector.extract_strided_slice %1700 {offsets = [2, 0, 0], sizes = [1, 8, 8], strides = [1, 1, 1]} : vector<8x8x8xf32> to vector<1x8x8xf32>
    %1813 = vector.shape_cast %1812 : vector<1x8x8xf32> to vector<8x8xf32>
    %c2_605 = arith.constant 2 : index
    %c2_606 = arith.constant 2 : index
    %1814 = memref.load %arg8[%c2_605, %c2_606] : memref<8x8xf32, #tpu.memory_space<smem>>
    %1815 = vector.broadcast %1814 : f32 to vector<8x8xf32>
    %1816 = arith.mulf %1813, %1815 : vector<8x8xf32>
    %1817 = arith.addf %1811, %1816 : vector<8x8xf32>
    %1818 = vector.extract_strided_slice %1700 {offsets = [3, 0, 0], sizes = [1, 8, 8], strides = [1, 1, 1]} : vector<8x8x8xf32> to vector<1x8x8xf32>
    %1819 = vector.shape_cast %1818 : vector<1x8x8xf32> to vector<8x8xf32>
    %c2_607 = arith.constant 2 : index
    %c3_608 = arith.constant 3 : index
    %1820 = memref.load %arg8[%c2_607, %c3_608] : memref<8x8xf32, #tpu.memory_space<smem>>
    %1821 = vector.broadcast %1820 : f32 to vector<8x8xf32>
    %1822 = arith.mulf %1819, %1821 : vector<8x8xf32>
    %1823 = arith.addf %1817, %1822 : vector<8x8xf32>
    %1824 = vector.extract_strided_slice %1700 {offsets = [4, 0, 0], sizes = [1, 8, 8], strides = [1, 1, 1]} : vector<8x8x8xf32> to vector<1x8x8xf32>
    %1825 = vector.shape_cast %1824 : vector<1x8x8xf32> to vector<8x8xf32>
    %c2_609 = arith.constant 2 : index
    %c4_610 = arith.constant 4 : index
    %1826 = memref.load %arg8[%c2_609, %c4_610] : memref<8x8xf32, #tpu.memory_space<smem>>
    %1827 = vector.broadcast %1826 : f32 to vector<8x8xf32>
    %1828 = arith.mulf %1825, %1827 : vector<8x8xf32>
    %1829 = arith.addf %1823, %1828 : vector<8x8xf32>
    %1830 = vector.extract_strided_slice %1700 {offsets = [5, 0, 0], sizes = [1, 8, 8], strides = [1, 1, 1]} : vector<8x8x8xf32> to vector<1x8x8xf32>
    %1831 = vector.shape_cast %1830 : vector<1x8x8xf32> to vector<8x8xf32>
    %c2_611 = arith.constant 2 : index
    %c5_612 = arith.constant 5 : index
    %1832 = memref.load %arg8[%c2_611, %c5_612] : memref<8x8xf32, #tpu.memory_space<smem>>
    %1833 = vector.broadcast %1832 : f32 to vector<8x8xf32>
    %1834 = arith.mulf %1831, %1833 : vector<8x8xf32>
    %1835 = arith.addf %1829, %1834 : vector<8x8xf32>
    %1836 = vector.extract_strided_slice %1700 {offsets = [6, 0, 0], sizes = [1, 8, 8], strides = [1, 1, 1]} : vector<8x8x8xf32> to vector<1x8x8xf32>
    %1837 = vector.shape_cast %1836 : vector<1x8x8xf32> to vector<8x8xf32>
    %c2_613 = arith.constant 2 : index
    %c6_614 = arith.constant 6 : index
    %1838 = memref.load %arg8[%c2_613, %c6_614] : memref<8x8xf32, #tpu.memory_space<smem>>
    %1839 = vector.broadcast %1838 : f32 to vector<8x8xf32>
    %1840 = arith.mulf %1837, %1839 : vector<8x8xf32>
    %1841 = arith.addf %1835, %1840 : vector<8x8xf32>
    %1842 = vector.extract_strided_slice %1700 {offsets = [7, 0, 0], sizes = [1, 8, 8], strides = [1, 1, 1]} : vector<8x8x8xf32> to vector<1x8x8xf32>
    %1843 = vector.shape_cast %1842 : vector<1x8x8xf32> to vector<8x8xf32>
    %c2_615 = arith.constant 2 : index
    %c7_616 = arith.constant 7 : index
    %1844 = memref.load %arg8[%c2_615, %c7_616] : memref<8x8xf32, #tpu.memory_space<smem>>
    %1845 = vector.broadcast %1844 : f32 to vector<8x8xf32>
    %1846 = arith.mulf %1843, %1845 : vector<8x8xf32>
    %1847 = arith.addf %1841, %1846 : vector<8x8xf32>
    %c2_617 = arith.constant 2 : index
    %1848 = memref.load %arg9[%c2_617] : memref<8xf32, #tpu.memory_space<smem>>
    %1849 = vector.broadcast %1848 : f32 to vector<8x8xf32>
    %1850 = arith.addf %1847, %1849 : vector<8x8xf32>
    %1851 = vector.extract_strided_slice %1700 {offsets = [0, 0, 0], sizes = [1, 8, 8], strides = [1, 1, 1]} : vector<8x8x8xf32> to vector<1x8x8xf32>
    %1852 = vector.shape_cast %1851 : vector<1x8x8xf32> to vector<8x8xf32>
    %c3_618 = arith.constant 3 : index
    %c0_619 = arith.constant 0 : index
    %1853 = memref.load %arg8[%c3_618, %c0_619] : memref<8x8xf32, #tpu.memory_space<smem>>
    %1854 = vector.broadcast %1853 : f32 to vector<8x8xf32>
    %1855 = arith.mulf %1852, %1854 : vector<8x8xf32>
    %1856 = vector.extract_strided_slice %1700 {offsets = [1, 0, 0], sizes = [1, 8, 8], strides = [1, 1, 1]} : vector<8x8x8xf32> to vector<1x8x8xf32>
    %1857 = vector.shape_cast %1856 : vector<1x8x8xf32> to vector<8x8xf32>
    %c3_620 = arith.constant 3 : index
    %c1_621 = arith.constant 1 : index
    %1858 = memref.load %arg8[%c3_620, %c1_621] : memref<8x8xf32, #tpu.memory_space<smem>>
    %1859 = vector.broadcast %1858 : f32 to vector<8x8xf32>
    %1860 = arith.mulf %1857, %1859 : vector<8x8xf32>
    %1861 = arith.addf %1855, %1860 : vector<8x8xf32>
    %1862 = vector.extract_strided_slice %1700 {offsets = [2, 0, 0], sizes = [1, 8, 8], strides = [1, 1, 1]} : vector<8x8x8xf32> to vector<1x8x8xf32>
    %1863 = vector.shape_cast %1862 : vector<1x8x8xf32> to vector<8x8xf32>
    %c3_622 = arith.constant 3 : index
    %c2_623 = arith.constant 2 : index
    %1864 = memref.load %arg8[%c3_622, %c2_623] : memref<8x8xf32, #tpu.memory_space<smem>>
    %1865 = vector.broadcast %1864 : f32 to vector<8x8xf32>
    %1866 = arith.mulf %1863, %1865 : vector<8x8xf32>
    %1867 = arith.addf %1861, %1866 : vector<8x8xf32>
    %1868 = vector.extract_strided_slice %1700 {offsets = [3, 0, 0], sizes = [1, 8, 8], strides = [1, 1, 1]} : vector<8x8x8xf32> to vector<1x8x8xf32>
    %1869 = vector.shape_cast %1868 : vector<1x8x8xf32> to vector<8x8xf32>
    %c3_624 = arith.constant 3 : index
    %c3_625 = arith.constant 3 : index
    %1870 = memref.load %arg8[%c3_624, %c3_625] : memref<8x8xf32, #tpu.memory_space<smem>>
    %1871 = vector.broadcast %1870 : f32 to vector<8x8xf32>
    %1872 = arith.mulf %1869, %1871 : vector<8x8xf32>
    %1873 = arith.addf %1867, %1872 : vector<8x8xf32>
    %1874 = vector.extract_strided_slice %1700 {offsets = [4, 0, 0], sizes = [1, 8, 8], strides = [1, 1, 1]} : vector<8x8x8xf32> to vector<1x8x8xf32>
    %1875 = vector.shape_cast %1874 : vector<1x8x8xf32> to vector<8x8xf32>
    %c3_626 = arith.constant 3 : index
    %c4_627 = arith.constant 4 : index
    %1876 = memref.load %arg8[%c3_626, %c4_627] : memref<8x8xf32, #tpu.memory_space<smem>>
    %1877 = vector.broadcast %1876 : f32 to vector<8x8xf32>
    %1878 = arith.mulf %1875, %1877 : vector<8x8xf32>
    %1879 = arith.addf %1873, %1878 : vector<8x8xf32>
    %1880 = vector.extract_strided_slice %1700 {offsets = [5, 0, 0], sizes = [1, 8, 8], strides = [1, 1, 1]} : vector<8x8x8xf32> to vector<1x8x8xf32>
    %1881 = vector.shape_cast %1880 : vector<1x8x8xf32> to vector<8x8xf32>
    %c3_628 = arith.constant 3 : index
    %c5_629 = arith.constant 5 : index
    %1882 = memref.load %arg8[%c3_628, %c5_629] : memref<8x8xf32, #tpu.memory_space<smem>>
    %1883 = vector.broadcast %1882 : f32 to vector<8x8xf32>
    %1884 = arith.mulf %1881, %1883 : vector<8x8xf32>
    %1885 = arith.addf %1879, %1884 : vector<8x8xf32>
    %1886 = vector.extract_strided_slice %1700 {offsets = [6, 0, 0], sizes = [1, 8, 8], strides = [1, 1, 1]} : vector<8x8x8xf32> to vector<1x8x8xf32>
    %1887 = vector.shape_cast %1886 : vector<1x8x8xf32> to vector<8x8xf32>
    %c3_630 = arith.constant 3 : index
    %c6_631 = arith.constant 6 : index
    %1888 = memref.load %arg8[%c3_630, %c6_631] : memref<8x8xf32, #tpu.memory_space<smem>>
    %1889 = vector.broadcast %1888 : f32 to vector<8x8xf32>
    %1890 = arith.mulf %1887, %1889 : vector<8x8xf32>
    %1891 = arith.addf %1885, %1890 : vector<8x8xf32>
    %1892 = vector.extract_strided_slice %1700 {offsets = [7, 0, 0], sizes = [1, 8, 8], strides = [1, 1, 1]} : vector<8x8x8xf32> to vector<1x8x8xf32>
    %1893 = vector.shape_cast %1892 : vector<1x8x8xf32> to vector<8x8xf32>
    %c3_632 = arith.constant 3 : index
    %c7_633 = arith.constant 7 : index
    %1894 = memref.load %arg8[%c3_632, %c7_633] : memref<8x8xf32, #tpu.memory_space<smem>>
    %1895 = vector.broadcast %1894 : f32 to vector<8x8xf32>
    %1896 = arith.mulf %1893, %1895 : vector<8x8xf32>
    %1897 = arith.addf %1891, %1896 : vector<8x8xf32>
    %c3_634 = arith.constant 3 : index
    %1898 = memref.load %arg9[%c3_634] : memref<8xf32, #tpu.memory_space<smem>>
    %1899 = vector.broadcast %1898 : f32 to vector<8x8xf32>
    %1900 = arith.addf %1897, %1899 : vector<8x8xf32>
    %1901 = vector.extract_strided_slice %1700 {offsets = [0, 0, 0], sizes = [1, 8, 8], strides = [1, 1, 1]} : vector<8x8x8xf32> to vector<1x8x8xf32>
    %1902 = vector.shape_cast %1901 : vector<1x8x8xf32> to vector<8x8xf32>
    %c4_635 = arith.constant 4 : index
    %c0_636 = arith.constant 0 : index
    %1903 = memref.load %arg8[%c4_635, %c0_636] : memref<8x8xf32, #tpu.memory_space<smem>>
    %1904 = vector.broadcast %1903 : f32 to vector<8x8xf32>
    %1905 = arith.mulf %1902, %1904 : vector<8x8xf32>
    %1906 = vector.extract_strided_slice %1700 {offsets = [1, 0, 0], sizes = [1, 8, 8], strides = [1, 1, 1]} : vector<8x8x8xf32> to vector<1x8x8xf32>
    %1907 = vector.shape_cast %1906 : vector<1x8x8xf32> to vector<8x8xf32>
    %c4_637 = arith.constant 4 : index
    %c1_638 = arith.constant 1 : index
    %1908 = memref.load %arg8[%c4_637, %c1_638] : memref<8x8xf32, #tpu.memory_space<smem>>
    %1909 = vector.broadcast %1908 : f32 to vector<8x8xf32>
    %1910 = arith.mulf %1907, %1909 : vector<8x8xf32>
    %1911 = arith.addf %1905, %1910 : vector<8x8xf32>
    %1912 = vector.extract_strided_slice %1700 {offsets = [2, 0, 0], sizes = [1, 8, 8], strides = [1, 1, 1]} : vector<8x8x8xf32> to vector<1x8x8xf32>
    %1913 = vector.shape_cast %1912 : vector<1x8x8xf32> to vector<8x8xf32>
    %c4_639 = arith.constant 4 : index
    %c2_640 = arith.constant 2 : index
    %1914 = memref.load %arg8[%c4_639, %c2_640] : memref<8x8xf32, #tpu.memory_space<smem>>
    %1915 = vector.broadcast %1914 : f32 to vector<8x8xf32>
    %1916 = arith.mulf %1913, %1915 : vector<8x8xf32>
    %1917 = arith.addf %1911, %1916 : vector<8x8xf32>
    %1918 = vector.extract_strided_slice %1700 {offsets = [3, 0, 0], sizes = [1, 8, 8], strides = [1, 1, 1]} : vector<8x8x8xf32> to vector<1x8x8xf32>
    %1919 = vector.shape_cast %1918 : vector<1x8x8xf32> to vector<8x8xf32>
    %c4_641 = arith.constant 4 : index
    %c3_642 = arith.constant 3 : index
    %1920 = memref.load %arg8[%c4_641, %c3_642] : memref<8x8xf32, #tpu.memory_space<smem>>
    %1921 = vector.broadcast %1920 : f32 to vector<8x8xf32>
    %1922 = arith.mulf %1919, %1921 : vector<8x8xf32>
    %1923 = arith.addf %1917, %1922 : vector<8x8xf32>
    %1924 = vector.extract_strided_slice %1700 {offsets = [4, 0, 0], sizes = [1, 8, 8], strides = [1, 1, 1]} : vector<8x8x8xf32> to vector<1x8x8xf32>
    %1925 = vector.shape_cast %1924 : vector<1x8x8xf32> to vector<8x8xf32>
    %c4_643 = arith.constant 4 : index
    %c4_644 = arith.constant 4 : index
    %1926 = memref.load %arg8[%c4_643, %c4_644] : memref<8x8xf32, #tpu.memory_space<smem>>
    %1927 = vector.broadcast %1926 : f32 to vector<8x8xf32>
    %1928 = arith.mulf %1925, %1927 : vector<8x8xf32>
    %1929 = arith.addf %1923, %1928 : vector<8x8xf32>
    %1930 = vector.extract_strided_slice %1700 {offsets = [5, 0, 0], sizes = [1, 8, 8], strides = [1, 1, 1]} : vector<8x8x8xf32> to vector<1x8x8xf32>
    %1931 = vector.shape_cast %1930 : vector<1x8x8xf32> to vector<8x8xf32>
    %c4_645 = arith.constant 4 : index
    %c5_646 = arith.constant 5 : index
    %1932 = memref.load %arg8[%c4_645, %c5_646] : memref<8x8xf32, #tpu.memory_space<smem>>
    %1933 = vector.broadcast %1932 : f32 to vector<8x8xf32>
    %1934 = arith.mulf %1931, %1933 : vector<8x8xf32>
    %1935 = arith.addf %1929, %1934 : vector<8x8xf32>
    %1936 = vector.extract_strided_slice %1700 {offsets = [6, 0, 0], sizes = [1, 8, 8], strides = [1, 1, 1]} : vector<8x8x8xf32> to vector<1x8x8xf32>
    %1937 = vector.shape_cast %1936 : vector<1x8x8xf32> to vector<8x8xf32>
    %c4_647 = arith.constant 4 : index
    %c6_648 = arith.constant 6 : index
    %1938 = memref.load %arg8[%c4_647, %c6_648] : memref<8x8xf32, #tpu.memory_space<smem>>
    %1939 = vector.broadcast %1938 : f32 to vector<8x8xf32>
    %1940 = arith.mulf %1937, %1939 : vector<8x8xf32>
    %1941 = arith.addf %1935, %1940 : vector<8x8xf32>
    %1942 = vector.extract_strided_slice %1700 {offsets = [7, 0, 0], sizes = [1, 8, 8], strides = [1, 1, 1]} : vector<8x8x8xf32> to vector<1x8x8xf32>
    %1943 = vector.shape_cast %1942 : vector<1x8x8xf32> to vector<8x8xf32>
    %c4_649 = arith.constant 4 : index
    %c7_650 = arith.constant 7 : index
    %1944 = memref.load %arg8[%c4_649, %c7_650] : memref<8x8xf32, #tpu.memory_space<smem>>
    %1945 = vector.broadcast %1944 : f32 to vector<8x8xf32>
    %1946 = arith.mulf %1943, %1945 : vector<8x8xf32>
    %1947 = arith.addf %1941, %1946 : vector<8x8xf32>
    %c4_651 = arith.constant 4 : index
    %1948 = memref.load %arg9[%c4_651] : memref<8xf32, #tpu.memory_space<smem>>
    %1949 = vector.broadcast %1948 : f32 to vector<8x8xf32>
    %1950 = arith.addf %1947, %1949 : vector<8x8xf32>
    %1951 = vector.extract_strided_slice %1700 {offsets = [0, 0, 0], sizes = [1, 8, 8], strides = [1, 1, 1]} : vector<8x8x8xf32> to vector<1x8x8xf32>
    %1952 = vector.shape_cast %1951 : vector<1x8x8xf32> to vector<8x8xf32>
    %c5_652 = arith.constant 5 : index
    %c0_653 = arith.constant 0 : index
    %1953 = memref.load %arg8[%c5_652, %c0_653] : memref<8x8xf32, #tpu.memory_space<smem>>
    %1954 = vector.broadcast %1953 : f32 to vector<8x8xf32>
    %1955 = arith.mulf %1952, %1954 : vector<8x8xf32>
    %1956 = vector.extract_strided_slice %1700 {offsets = [1, 0, 0], sizes = [1, 8, 8], strides = [1, 1, 1]} : vector<8x8x8xf32> to vector<1x8x8xf32>
    %1957 = vector.shape_cast %1956 : vector<1x8x8xf32> to vector<8x8xf32>
    %c5_654 = arith.constant 5 : index
    %c1_655 = arith.constant 1 : index
    %1958 = memref.load %arg8[%c5_654, %c1_655] : memref<8x8xf32, #tpu.memory_space<smem>>
    %1959 = vector.broadcast %1958 : f32 to vector<8x8xf32>
    %1960 = arith.mulf %1957, %1959 : vector<8x8xf32>
    %1961 = arith.addf %1955, %1960 : vector<8x8xf32>
    %1962 = vector.extract_strided_slice %1700 {offsets = [2, 0, 0], sizes = [1, 8, 8], strides = [1, 1, 1]} : vector<8x8x8xf32> to vector<1x8x8xf32>
    %1963 = vector.shape_cast %1962 : vector<1x8x8xf32> to vector<8x8xf32>
    %c5_656 = arith.constant 5 : index
    %c2_657 = arith.constant 2 : index
    %1964 = memref.load %arg8[%c5_656, %c2_657] : memref<8x8xf32, #tpu.memory_space<smem>>
    %1965 = vector.broadcast %1964 : f32 to vector<8x8xf32>
    %1966 = arith.mulf %1963, %1965 : vector<8x8xf32>
    %1967 = arith.addf %1961, %1966 : vector<8x8xf32>
    %1968 = vector.extract_strided_slice %1700 {offsets = [3, 0, 0], sizes = [1, 8, 8], strides = [1, 1, 1]} : vector<8x8x8xf32> to vector<1x8x8xf32>
    %1969 = vector.shape_cast %1968 : vector<1x8x8xf32> to vector<8x8xf32>
    %c5_658 = arith.constant 5 : index
    %c3_659 = arith.constant 3 : index
    %1970 = memref.load %arg8[%c5_658, %c3_659] : memref<8x8xf32, #tpu.memory_space<smem>>
    %1971 = vector.broadcast %1970 : f32 to vector<8x8xf32>
    %1972 = arith.mulf %1969, %1971 : vector<8x8xf32>
    %1973 = arith.addf %1967, %1972 : vector<8x8xf32>
    %1974 = vector.extract_strided_slice %1700 {offsets = [4, 0, 0], sizes = [1, 8, 8], strides = [1, 1, 1]} : vector<8x8x8xf32> to vector<1x8x8xf32>
    %1975 = vector.shape_cast %1974 : vector<1x8x8xf32> to vector<8x8xf32>
    %c5_660 = arith.constant 5 : index
    %c4_661 = arith.constant 4 : index
    %1976 = memref.load %arg8[%c5_660, %c4_661] : memref<8x8xf32, #tpu.memory_space<smem>>
    %1977 = vector.broadcast %1976 : f32 to vector<8x8xf32>
    %1978 = arith.mulf %1975, %1977 : vector<8x8xf32>
    %1979 = arith.addf %1973, %1978 : vector<8x8xf32>
    %1980 = vector.extract_strided_slice %1700 {offsets = [5, 0, 0], sizes = [1, 8, 8], strides = [1, 1, 1]} : vector<8x8x8xf32> to vector<1x8x8xf32>
    %1981 = vector.shape_cast %1980 : vector<1x8x8xf32> to vector<8x8xf32>
    %c5_662 = arith.constant 5 : index
    %c5_663 = arith.constant 5 : index
    %1982 = memref.load %arg8[%c5_662, %c5_663] : memref<8x8xf32, #tpu.memory_space<smem>>
    %1983 = vector.broadcast %1982 : f32 to vector<8x8xf32>
    %1984 = arith.mulf %1981, %1983 : vector<8x8xf32>
    %1985 = arith.addf %1979, %1984 : vector<8x8xf32>
    %1986 = vector.extract_strided_slice %1700 {offsets = [6, 0, 0], sizes = [1, 8, 8], strides = [1, 1, 1]} : vector<8x8x8xf32> to vector<1x8x8xf32>
    %1987 = vector.shape_cast %1986 : vector<1x8x8xf32> to vector<8x8xf32>
    %c5_664 = arith.constant 5 : index
    %c6_665 = arith.constant 6 : index
    %1988 = memref.load %arg8[%c5_664, %c6_665] : memref<8x8xf32, #tpu.memory_space<smem>>
    %1989 = vector.broadcast %1988 : f32 to vector<8x8xf32>
    %1990 = arith.mulf %1987, %1989 : vector<8x8xf32>
    %1991 = arith.addf %1985, %1990 : vector<8x8xf32>
    %1992 = vector.extract_strided_slice %1700 {offsets = [7, 0, 0], sizes = [1, 8, 8], strides = [1, 1, 1]} : vector<8x8x8xf32> to vector<1x8x8xf32>
    %1993 = vector.shape_cast %1992 : vector<1x8x8xf32> to vector<8x8xf32>
    %c5_666 = arith.constant 5 : index
    %c7_667 = arith.constant 7 : index
    %1994 = memref.load %arg8[%c5_666, %c7_667] : memref<8x8xf32, #tpu.memory_space<smem>>
    %1995 = vector.broadcast %1994 : f32 to vector<8x8xf32>
    %1996 = arith.mulf %1993, %1995 : vector<8x8xf32>
    %1997 = arith.addf %1991, %1996 : vector<8x8xf32>
    %c5_668 = arith.constant 5 : index
    %1998 = memref.load %arg9[%c5_668] : memref<8xf32, #tpu.memory_space<smem>>
    %1999 = vector.broadcast %1998 : f32 to vector<8x8xf32>
    %2000 = arith.addf %1997, %1999 : vector<8x8xf32>
    %2001 = vector.extract_strided_slice %1700 {offsets = [0, 0, 0], sizes = [1, 8, 8], strides = [1, 1, 1]} : vector<8x8x8xf32> to vector<1x8x8xf32>
    %2002 = vector.shape_cast %2001 : vector<1x8x8xf32> to vector<8x8xf32>
    %c6_669 = arith.constant 6 : index
    %c0_670 = arith.constant 0 : index
    %2003 = memref.load %arg8[%c6_669, %c0_670] : memref<8x8xf32, #tpu.memory_space<smem>>
    %2004 = vector.broadcast %2003 : f32 to vector<8x8xf32>
    %2005 = arith.mulf %2002, %2004 : vector<8x8xf32>
    %2006 = vector.extract_strided_slice %1700 {offsets = [1, 0, 0], sizes = [1, 8, 8], strides = [1, 1, 1]} : vector<8x8x8xf32> to vector<1x8x8xf32>
    %2007 = vector.shape_cast %2006 : vector<1x8x8xf32> to vector<8x8xf32>
    %c6_671 = arith.constant 6 : index
    %c1_672 = arith.constant 1 : index
    %2008 = memref.load %arg8[%c6_671, %c1_672] : memref<8x8xf32, #tpu.memory_space<smem>>
    %2009 = vector.broadcast %2008 : f32 to vector<8x8xf32>
    %2010 = arith.mulf %2007, %2009 : vector<8x8xf32>
    %2011 = arith.addf %2005, %2010 : vector<8x8xf32>
    %2012 = vector.extract_strided_slice %1700 {offsets = [2, 0, 0], sizes = [1, 8, 8], strides = [1, 1, 1]} : vector<8x8x8xf32> to vector<1x8x8xf32>
    %2013 = vector.shape_cast %2012 : vector<1x8x8xf32> to vector<8x8xf32>
    %c6_673 = arith.constant 6 : index
    %c2_674 = arith.constant 2 : index
    %2014 = memref.load %arg8[%c6_673, %c2_674] : memref<8x8xf32, #tpu.memory_space<smem>>
    %2015 = vector.broadcast %2014 : f32 to vector<8x8xf32>
    %2016 = arith.mulf %2013, %2015 : vector<8x8xf32>
    %2017 = arith.addf %2011, %2016 : vector<8x8xf32>
    %2018 = vector.extract_strided_slice %1700 {offsets = [3, 0, 0], sizes = [1, 8, 8], strides = [1, 1, 1]} : vector<8x8x8xf32> to vector<1x8x8xf32>
    %2019 = vector.shape_cast %2018 : vector<1x8x8xf32> to vector<8x8xf32>
    %c6_675 = arith.constant 6 : index
    %c3_676 = arith.constant 3 : index
    %2020 = memref.load %arg8[%c6_675, %c3_676] : memref<8x8xf32, #tpu.memory_space<smem>>
    %2021 = vector.broadcast %2020 : f32 to vector<8x8xf32>
    %2022 = arith.mulf %2019, %2021 : vector<8x8xf32>
    %2023 = arith.addf %2017, %2022 : vector<8x8xf32>
    %2024 = vector.extract_strided_slice %1700 {offsets = [4, 0, 0], sizes = [1, 8, 8], strides = [1, 1, 1]} : vector<8x8x8xf32> to vector<1x8x8xf32>
    %2025 = vector.shape_cast %2024 : vector<1x8x8xf32> to vector<8x8xf32>
    %c6_677 = arith.constant 6 : index
    %c4_678 = arith.constant 4 : index
    %2026 = memref.load %arg8[%c6_677, %c4_678] : memref<8x8xf32, #tpu.memory_space<smem>>
    %2027 = vector.broadcast %2026 : f32 to vector<8x8xf32>
    %2028 = arith.mulf %2025, %2027 : vector<8x8xf32>
    %2029 = arith.addf %2023, %2028 : vector<8x8xf32>
    %2030 = vector.extract_strided_slice %1700 {offsets = [5, 0, 0], sizes = [1, 8, 8], strides = [1, 1, 1]} : vector<8x8x8xf32> to vector<1x8x8xf32>
    %2031 = vector.shape_cast %2030 : vector<1x8x8xf32> to vector<8x8xf32>
    %c6_679 = arith.constant 6 : index
    %c5_680 = arith.constant 5 : index
    %2032 = memref.load %arg8[%c6_679, %c5_680] : memref<8x8xf32, #tpu.memory_space<smem>>
    %2033 = vector.broadcast %2032 : f32 to vector<8x8xf32>
    %2034 = arith.mulf %2031, %2033 : vector<8x8xf32>
    %2035 = arith.addf %2029, %2034 : vector<8x8xf32>
    %2036 = vector.extract_strided_slice %1700 {offsets = [6, 0, 0], sizes = [1, 8, 8], strides = [1, 1, 1]} : vector<8x8x8xf32> to vector<1x8x8xf32>
    %2037 = vector.shape_cast %2036 : vector<1x8x8xf32> to vector<8x8xf32>
    %c6_681 = arith.constant 6 : index
    %c6_682 = arith.constant 6 : index
    %2038 = memref.load %arg8[%c6_681, %c6_682] : memref<8x8xf32, #tpu.memory_space<smem>>
    %2039 = vector.broadcast %2038 : f32 to vector<8x8xf32>
    %2040 = arith.mulf %2037, %2039 : vector<8x8xf32>
    %2041 = arith.addf %2035, %2040 : vector<8x8xf32>
    %2042 = vector.extract_strided_slice %1700 {offsets = [7, 0, 0], sizes = [1, 8, 8], strides = [1, 1, 1]} : vector<8x8x8xf32> to vector<1x8x8xf32>
    %2043 = vector.shape_cast %2042 : vector<1x8x8xf32> to vector<8x8xf32>
    %c6_683 = arith.constant 6 : index
    %c7_684 = arith.constant 7 : index
    %2044 = memref.load %arg8[%c6_683, %c7_684] : memref<8x8xf32, #tpu.memory_space<smem>>
    %2045 = vector.broadcast %2044 : f32 to vector<8x8xf32>
    %2046 = arith.mulf %2043, %2045 : vector<8x8xf32>
    %2047 = arith.addf %2041, %2046 : vector<8x8xf32>
    %c6_685 = arith.constant 6 : index
    %2048 = memref.load %arg9[%c6_685] : memref<8xf32, #tpu.memory_space<smem>>
    %2049 = vector.broadcast %2048 : f32 to vector<8x8xf32>
    %2050 = arith.addf %2047, %2049 : vector<8x8xf32>
    %2051 = vector.extract_strided_slice %1700 {offsets = [0, 0, 0], sizes = [1, 8, 8], strides = [1, 1, 1]} : vector<8x8x8xf32> to vector<1x8x8xf32>
    %2052 = vector.shape_cast %2051 : vector<1x8x8xf32> to vector<8x8xf32>
    %c7_686 = arith.constant 7 : index
    %c0_687 = arith.constant 0 : index
    %2053 = memref.load %arg8[%c7_686, %c0_687] : memref<8x8xf32, #tpu.memory_space<smem>>
    %2054 = vector.broadcast %2053 : f32 to vector<8x8xf32>
    %2055 = arith.mulf %2052, %2054 : vector<8x8xf32>
    %2056 = vector.extract_strided_slice %1700 {offsets = [1, 0, 0], sizes = [1, 8, 8], strides = [1, 1, 1]} : vector<8x8x8xf32> to vector<1x8x8xf32>
    %2057 = vector.shape_cast %2056 : vector<1x8x8xf32> to vector<8x8xf32>
    %c7_688 = arith.constant 7 : index
    %c1_689 = arith.constant 1 : index
    %2058 = memref.load %arg8[%c7_688, %c1_689] : memref<8x8xf32, #tpu.memory_space<smem>>
    %2059 = vector.broadcast %2058 : f32 to vector<8x8xf32>
    %2060 = arith.mulf %2057, %2059 : vector<8x8xf32>
    %2061 = arith.addf %2055, %2060 : vector<8x8xf32>
    %2062 = vector.extract_strided_slice %1700 {offsets = [2, 0, 0], sizes = [1, 8, 8], strides = [1, 1, 1]} : vector<8x8x8xf32> to vector<1x8x8xf32>
    %2063 = vector.shape_cast %2062 : vector<1x8x8xf32> to vector<8x8xf32>
    %c7_690 = arith.constant 7 : index
    %c2_691 = arith.constant 2 : index
    %2064 = memref.load %arg8[%c7_690, %c2_691] : memref<8x8xf32, #tpu.memory_space<smem>>
    %2065 = vector.broadcast %2064 : f32 to vector<8x8xf32>
    %2066 = arith.mulf %2063, %2065 : vector<8x8xf32>
    %2067 = arith.addf %2061, %2066 : vector<8x8xf32>
    %2068 = vector.extract_strided_slice %1700 {offsets = [3, 0, 0], sizes = [1, 8, 8], strides = [1, 1, 1]} : vector<8x8x8xf32> to vector<1x8x8xf32>
    %2069 = vector.shape_cast %2068 : vector<1x8x8xf32> to vector<8x8xf32>
    %c7_692 = arith.constant 7 : index
    %c3_693 = arith.constant 3 : index
    %2070 = memref.load %arg8[%c7_692, %c3_693] : memref<8x8xf32, #tpu.memory_space<smem>>
    %2071 = vector.broadcast %2070 : f32 to vector<8x8xf32>
    %2072 = arith.mulf %2069, %2071 : vector<8x8xf32>
    %2073 = arith.addf %2067, %2072 : vector<8x8xf32>
    %2074 = vector.extract_strided_slice %1700 {offsets = [4, 0, 0], sizes = [1, 8, 8], strides = [1, 1, 1]} : vector<8x8x8xf32> to vector<1x8x8xf32>
    %2075 = vector.shape_cast %2074 : vector<1x8x8xf32> to vector<8x8xf32>
    %c7_694 = arith.constant 7 : index
    %c4_695 = arith.constant 4 : index
    %2076 = memref.load %arg8[%c7_694, %c4_695] : memref<8x8xf32, #tpu.memory_space<smem>>
    %2077 = vector.broadcast %2076 : f32 to vector<8x8xf32>
    %2078 = arith.mulf %2075, %2077 : vector<8x8xf32>
    %2079 = arith.addf %2073, %2078 : vector<8x8xf32>
    %2080 = vector.extract_strided_slice %1700 {offsets = [5, 0, 0], sizes = [1, 8, 8], strides = [1, 1, 1]} : vector<8x8x8xf32> to vector<1x8x8xf32>
    %2081 = vector.shape_cast %2080 : vector<1x8x8xf32> to vector<8x8xf32>
    %c7_696 = arith.constant 7 : index
    %c5_697 = arith.constant 5 : index
    %2082 = memref.load %arg8[%c7_696, %c5_697] : memref<8x8xf32, #tpu.memory_space<smem>>
    %2083 = vector.broadcast %2082 : f32 to vector<8x8xf32>
    %2084 = arith.mulf %2081, %2083 : vector<8x8xf32>
    %2085 = arith.addf %2079, %2084 : vector<8x8xf32>
    %2086 = vector.extract_strided_slice %1700 {offsets = [6, 0, 0], sizes = [1, 8, 8], strides = [1, 1, 1]} : vector<8x8x8xf32> to vector<1x8x8xf32>
    %2087 = vector.shape_cast %2086 : vector<1x8x8xf32> to vector<8x8xf32>
    %c7_698 = arith.constant 7 : index
    %c6_699 = arith.constant 6 : index
    %2088 = memref.load %arg8[%c7_698, %c6_699] : memref<8x8xf32, #tpu.memory_space<smem>>
    %2089 = vector.broadcast %2088 : f32 to vector<8x8xf32>
    %2090 = arith.mulf %2087, %2089 : vector<8x8xf32>
    %2091 = arith.addf %2085, %2090 : vector<8x8xf32>
    %2092 = vector.extract_strided_slice %1700 {offsets = [7, 0, 0], sizes = [1, 8, 8], strides = [1, 1, 1]} : vector<8x8x8xf32> to vector<1x8x8xf32>
    %2093 = vector.shape_cast %2092 : vector<1x8x8xf32> to vector<8x8xf32>
    %c7_700 = arith.constant 7 : index
    %c7_701 = arith.constant 7 : index
    %2094 = memref.load %arg8[%c7_700, %c7_701] : memref<8x8xf32, #tpu.memory_space<smem>>
    %2095 = vector.broadcast %2094 : f32 to vector<8x8xf32>
    %2096 = arith.mulf %2093, %2095 : vector<8x8xf32>
    %2097 = arith.addf %2091, %2096 : vector<8x8xf32>
    %c7_702 = arith.constant 7 : index
    %2098 = memref.load %arg9[%c7_702] : memref<8xf32, #tpu.memory_space<smem>>
    %2099 = vector.broadcast %2098 : f32 to vector<8x8xf32>
    %2100 = arith.addf %2097, %2099 : vector<8x8xf32>
    %2101 = vector.shape_cast %1750 : vector<8x8xf32> to vector<1x8x8xf32>
    %2102 = vector.shape_cast %1800 : vector<8x8xf32> to vector<1x8x8xf32>
    %2103 = vector.shape_cast %1850 : vector<8x8xf32> to vector<1x8x8xf32>
    %2104 = vector.shape_cast %1900 : vector<8x8xf32> to vector<1x8x8xf32>
    %2105 = vector.shape_cast %1950 : vector<8x8xf32> to vector<1x8x8xf32>
    %2106 = vector.shape_cast %2000 : vector<8x8xf32> to vector<1x8x8xf32>
    %2107 = vector.shape_cast %2050 : vector<8x8xf32> to vector<1x8x8xf32>
    %2108 = vector.shape_cast %2100 : vector<8x8xf32> to vector<1x8x8xf32>
    %2109 = tpu.concatenate %2101, %2102, %2103, %2104, %2105, %2106, %2107, %2108 in 0 : vector<1x8x8xf32>, vector<1x8x8xf32>, vector<1x8x8xf32>, vector<1x8x8xf32>, vector<1x8x8xf32>, vector<1x8x8xf32>, vector<1x8x8xf32>, vector<1x8x8xf32> -> vector<8x8x8xf32>
    %2110 = vector.extract_strided_slice %1696 {offsets = [0, 0, 0], sizes = [8, 1, 8], strides = [1, 1, 1]} : vector<8x8x8xf32> to vector<8x1x8xf32>
    %2111 = vector.extract_strided_slice %1696 {offsets = [0, 1, 0], sizes = [8, 1, 8], strides = [1, 1, 1]} : vector<8x8x8xf32> to vector<8x1x8xf32>
    %2112 = arith.maximumf %2110, %2111 : vector<8x1x8xf32>
    %2113 = vector.extract_strided_slice %2112 {offsets = [0, 0, 0], sizes = [8, 1, 1], strides = [1, 1, 1]} : vector<8x1x8xf32> to vector<8x1x1xf32>
    %2114 = vector.extract_strided_slice %2112 {offsets = [0, 0, 1], sizes = [8, 1, 1], strides = [1, 1, 1]} : vector<8x1x8xf32> to vector<8x1x1xf32>
    %2115 = arith.maximumf %2113, %2114 : vector<8x1x1xf32>
    %2116 = vector.extract_strided_slice %2112 {offsets = [0, 0, 2], sizes = [8, 1, 1], strides = [1, 1, 1]} : vector<8x1x8xf32> to vector<8x1x1xf32>
    %2117 = vector.extract_strided_slice %2112 {offsets = [0, 0, 3], sizes = [8, 1, 1], strides = [1, 1, 1]} : vector<8x1x8xf32> to vector<8x1x1xf32>
    %2118 = arith.maximumf %2116, %2117 : vector<8x1x1xf32>
    %2119 = vector.extract_strided_slice %2112 {offsets = [0, 0, 4], sizes = [8, 1, 1], strides = [1, 1, 1]} : vector<8x1x8xf32> to vector<8x1x1xf32>
    %2120 = vector.extract_strided_slice %2112 {offsets = [0, 0, 5], sizes = [8, 1, 1], strides = [1, 1, 1]} : vector<8x1x8xf32> to vector<8x1x1xf32>
    %2121 = arith.maximumf %2119, %2120 : vector<8x1x1xf32>
    %2122 = vector.extract_strided_slice %2112 {offsets = [0, 0, 6], sizes = [8, 1, 1], strides = [1, 1, 1]} : vector<8x1x8xf32> to vector<8x1x1xf32>
    %2123 = vector.extract_strided_slice %2112 {offsets = [0, 0, 7], sizes = [8, 1, 1], strides = [1, 1, 1]} : vector<8x1x8xf32> to vector<8x1x1xf32>
    %2124 = arith.maximumf %2122, %2123 : vector<8x1x1xf32>
    %2125 = tpu.concatenate %2115, %2118, %2121, %2124 in 2 : vector<8x1x1xf32>, vector<8x1x1xf32>, vector<8x1x1xf32>, vector<8x1x1xf32> -> vector<8x1x4xf32>
    %2126 = vector.extract_strided_slice %1696 {offsets = [0, 2, 0], sizes = [8, 1, 8], strides = [1, 1, 1]} : vector<8x8x8xf32> to vector<8x1x8xf32>
    %2127 = vector.extract_strided_slice %1696 {offsets = [0, 3, 0], sizes = [8, 1, 8], strides = [1, 1, 1]} : vector<8x8x8xf32> to vector<8x1x8xf32>
    %2128 = arith.maximumf %2126, %2127 : vector<8x1x8xf32>
    %2129 = vector.extract_strided_slice %2128 {offsets = [0, 0, 0], sizes = [8, 1, 1], strides = [1, 1, 1]} : vector<8x1x8xf32> to vector<8x1x1xf32>
    %2130 = vector.extract_strided_slice %2128 {offsets = [0, 0, 1], sizes = [8, 1, 1], strides = [1, 1, 1]} : vector<8x1x8xf32> to vector<8x1x1xf32>
    %2131 = arith.maximumf %2129, %2130 : vector<8x1x1xf32>
    %2132 = vector.extract_strided_slice %2128 {offsets = [0, 0, 2], sizes = [8, 1, 1], strides = [1, 1, 1]} : vector<8x1x8xf32> to vector<8x1x1xf32>
    %2133 = vector.extract_strided_slice %2128 {offsets = [0, 0, 3], sizes = [8, 1, 1], strides = [1, 1, 1]} : vector<8x1x8xf32> to vector<8x1x1xf32>
    %2134 = arith.maximumf %2132, %2133 : vector<8x1x1xf32>
    %2135 = vector.extract_strided_slice %2128 {offsets = [0, 0, 4], sizes = [8, 1, 1], strides = [1, 1, 1]} : vector<8x1x8xf32> to vector<8x1x1xf32>
    %2136 = vector.extract_strided_slice %2128 {offsets = [0, 0, 5], sizes = [8, 1, 1], strides = [1, 1, 1]} : vector<8x1x8xf32> to vector<8x1x1xf32>
    %2137 = arith.maximumf %2135, %2136 : vector<8x1x1xf32>
    %2138 = vector.extract_strided_slice %2128 {offsets = [0, 0, 6], sizes = [8, 1, 1], strides = [1, 1, 1]} : vector<8x1x8xf32> to vector<8x1x1xf32>
    %2139 = vector.extract_strided_slice %2128 {offsets = [0, 0, 7], sizes = [8, 1, 1], strides = [1, 1, 1]} : vector<8x1x8xf32> to vector<8x1x1xf32>
    %2140 = arith.maximumf %2138, %2139 : vector<8x1x1xf32>
    %2141 = tpu.concatenate %2131, %2134, %2137, %2140 in 2 : vector<8x1x1xf32>, vector<8x1x1xf32>, vector<8x1x1xf32>, vector<8x1x1xf32> -> vector<8x1x4xf32>
    %2142 = vector.extract_strided_slice %1696 {offsets = [0, 4, 0], sizes = [8, 1, 8], strides = [1, 1, 1]} : vector<8x8x8xf32> to vector<8x1x8xf32>
    %2143 = vector.extract_strided_slice %1696 {offsets = [0, 5, 0], sizes = [8, 1, 8], strides = [1, 1, 1]} : vector<8x8x8xf32> to vector<8x1x8xf32>
    %2144 = arith.maximumf %2142, %2143 : vector<8x1x8xf32>
    %2145 = vector.extract_strided_slice %2144 {offsets = [0, 0, 0], sizes = [8, 1, 1], strides = [1, 1, 1]} : vector<8x1x8xf32> to vector<8x1x1xf32>
    %2146 = vector.extract_strided_slice %2144 {offsets = [0, 0, 1], sizes = [8, 1, 1], strides = [1, 1, 1]} : vector<8x1x8xf32> to vector<8x1x1xf32>
    %2147 = arith.maximumf %2145, %2146 : vector<8x1x1xf32>
    %2148 = vector.extract_strided_slice %2144 {offsets = [0, 0, 2], sizes = [8, 1, 1], strides = [1, 1, 1]} : vector<8x1x8xf32> to vector<8x1x1xf32>
    %2149 = vector.extract_strided_slice %2144 {offsets = [0, 0, 3], sizes = [8, 1, 1], strides = [1, 1, 1]} : vector<8x1x8xf32> to vector<8x1x1xf32>
    %2150 = arith.maximumf %2148, %2149 : vector<8x1x1xf32>
    %2151 = vector.extract_strided_slice %2144 {offsets = [0, 0, 4], sizes = [8, 1, 1], strides = [1, 1, 1]} : vector<8x1x8xf32> to vector<8x1x1xf32>
    %2152 = vector.extract_strided_slice %2144 {offsets = [0, 0, 5], sizes = [8, 1, 1], strides = [1, 1, 1]} : vector<8x1x8xf32> to vector<8x1x1xf32>
    %2153 = arith.maximumf %2151, %2152 : vector<8x1x1xf32>
    %2154 = vector.extract_strided_slice %2144 {offsets = [0, 0, 6], sizes = [8, 1, 1], strides = [1, 1, 1]} : vector<8x1x8xf32> to vector<8x1x1xf32>
    %2155 = vector.extract_strided_slice %2144 {offsets = [0, 0, 7], sizes = [8, 1, 1], strides = [1, 1, 1]} : vector<8x1x8xf32> to vector<8x1x1xf32>
    %2156 = arith.maximumf %2154, %2155 : vector<8x1x1xf32>
    %2157 = tpu.concatenate %2147, %2150, %2153, %2156 in 2 : vector<8x1x1xf32>, vector<8x1x1xf32>, vector<8x1x1xf32>, vector<8x1x1xf32> -> vector<8x1x4xf32>
    %2158 = vector.extract_strided_slice %1696 {offsets = [0, 6, 0], sizes = [8, 1, 8], strides = [1, 1, 1]} : vector<8x8x8xf32> to vector<8x1x8xf32>
    %2159 = vector.extract_strided_slice %1696 {offsets = [0, 7, 0], sizes = [8, 1, 8], strides = [1, 1, 1]} : vector<8x8x8xf32> to vector<8x1x8xf32>
    %2160 = arith.maximumf %2158, %2159 : vector<8x1x8xf32>
    %2161 = vector.extract_strided_slice %2160 {offsets = [0, 0, 0], sizes = [8, 1, 1], strides = [1, 1, 1]} : vector<8x1x8xf32> to vector<8x1x1xf32>
    %2162 = vector.extract_strided_slice %2160 {offsets = [0, 0, 1], sizes = [8, 1, 1], strides = [1, 1, 1]} : vector<8x1x8xf32> to vector<8x1x1xf32>
    %2163 = arith.maximumf %2161, %2162 : vector<8x1x1xf32>
    %2164 = vector.extract_strided_slice %2160 {offsets = [0, 0, 2], sizes = [8, 1, 1], strides = [1, 1, 1]} : vector<8x1x8xf32> to vector<8x1x1xf32>
    %2165 = vector.extract_strided_slice %2160 {offsets = [0, 0, 3], sizes = [8, 1, 1], strides = [1, 1, 1]} : vector<8x1x8xf32> to vector<8x1x1xf32>
    %2166 = arith.maximumf %2164, %2165 : vector<8x1x1xf32>
    %2167 = vector.extract_strided_slice %2160 {offsets = [0, 0, 4], sizes = [8, 1, 1], strides = [1, 1, 1]} : vector<8x1x8xf32> to vector<8x1x1xf32>
    %2168 = vector.extract_strided_slice %2160 {offsets = [0, 0, 5], sizes = [8, 1, 1], strides = [1, 1, 1]} : vector<8x1x8xf32> to vector<8x1x1xf32>
    %2169 = arith.maximumf %2167, %2168 : vector<8x1x1xf32>
    %2170 = vector.extract_strided_slice %2160 {offsets = [0, 0, 6], sizes = [8, 1, 1], strides = [1, 1, 1]} : vector<8x1x8xf32> to vector<8x1x1xf32>
    %2171 = vector.extract_strided_slice %2160 {offsets = [0, 0, 7], sizes = [8, 1, 1], strides = [1, 1, 1]} : vector<8x1x8xf32> to vector<8x1x1xf32>
    %2172 = arith.maximumf %2170, %2171 : vector<8x1x1xf32>
    %2173 = tpu.concatenate %2163, %2166, %2169, %2172 in 2 : vector<8x1x1xf32>, vector<8x1x1xf32>, vector<8x1x1xf32>, vector<8x1x1xf32> -> vector<8x1x4xf32>
    %2174 = tpu.concatenate %2125, %2141, %2157, %2173 in 1 : vector<8x1x4xf32>, vector<8x1x4xf32>, vector<8x1x4xf32>, vector<8x1x4xf32> -> vector<8x4x4xf32>
    %2175 = vector.extract_strided_slice %2109 {offsets = [0, 0, 0], sizes = [8, 1, 8], strides = [1, 1, 1]} : vector<8x8x8xf32> to vector<8x1x8xf32>
    %2176 = vector.extract_strided_slice %2109 {offsets = [0, 1, 0], sizes = [8, 1, 8], strides = [1, 1, 1]} : vector<8x8x8xf32> to vector<8x1x8xf32>
    %2177 = arith.maximumf %2175, %2176 : vector<8x1x8xf32>
    %2178 = vector.extract_strided_slice %2177 {offsets = [0, 0, 0], sizes = [8, 1, 1], strides = [1, 1, 1]} : vector<8x1x8xf32> to vector<8x1x1xf32>
    %2179 = vector.extract_strided_slice %2177 {offsets = [0, 0, 1], sizes = [8, 1, 1], strides = [1, 1, 1]} : vector<8x1x8xf32> to vector<8x1x1xf32>
    %2180 = arith.maximumf %2178, %2179 : vector<8x1x1xf32>
    %2181 = vector.extract_strided_slice %2177 {offsets = [0, 0, 2], sizes = [8, 1, 1], strides = [1, 1, 1]} : vector<8x1x8xf32> to vector<8x1x1xf32>
    %2182 = vector.extract_strided_slice %2177 {offsets = [0, 0, 3], sizes = [8, 1, 1], strides = [1, 1, 1]} : vector<8x1x8xf32> to vector<8x1x1xf32>
    %2183 = arith.maximumf %2181, %2182 : vector<8x1x1xf32>
    %2184 = vector.extract_strided_slice %2177 {offsets = [0, 0, 4], sizes = [8, 1, 1], strides = [1, 1, 1]} : vector<8x1x8xf32> to vector<8x1x1xf32>
    %2185 = vector.extract_strided_slice %2177 {offsets = [0, 0, 5], sizes = [8, 1, 1], strides = [1, 1, 1]} : vector<8x1x8xf32> to vector<8x1x1xf32>
    %2186 = arith.maximumf %2184, %2185 : vector<8x1x1xf32>
    %2187 = vector.extract_strided_slice %2177 {offsets = [0, 0, 6], sizes = [8, 1, 1], strides = [1, 1, 1]} : vector<8x1x8xf32> to vector<8x1x1xf32>
    %2188 = vector.extract_strided_slice %2177 {offsets = [0, 0, 7], sizes = [8, 1, 1], strides = [1, 1, 1]} : vector<8x1x8xf32> to vector<8x1x1xf32>
    %2189 = arith.maximumf %2187, %2188 : vector<8x1x1xf32>
    %2190 = tpu.concatenate %2180, %2183, %2186, %2189 in 2 : vector<8x1x1xf32>, vector<8x1x1xf32>, vector<8x1x1xf32>, vector<8x1x1xf32> -> vector<8x1x4xf32>
    %2191 = vector.extract_strided_slice %2109 {offsets = [0, 2, 0], sizes = [8, 1, 8], strides = [1, 1, 1]} : vector<8x8x8xf32> to vector<8x1x8xf32>
    %2192 = vector.extract_strided_slice %2109 {offsets = [0, 3, 0], sizes = [8, 1, 8], strides = [1, 1, 1]} : vector<8x8x8xf32> to vector<8x1x8xf32>
    %2193 = arith.maximumf %2191, %2192 : vector<8x1x8xf32>
    %2194 = vector.extract_strided_slice %2193 {offsets = [0, 0, 0], sizes = [8, 1, 1], strides = [1, 1, 1]} : vector<8x1x8xf32> to vector<8x1x1xf32>
    %2195 = vector.extract_strided_slice %2193 {offsets = [0, 0, 1], sizes = [8, 1, 1], strides = [1, 1, 1]} : vector<8x1x8xf32> to vector<8x1x1xf32>
    %2196 = arith.maximumf %2194, %2195 : vector<8x1x1xf32>
    %2197 = vector.extract_strided_slice %2193 {offsets = [0, 0, 2], sizes = [8, 1, 1], strides = [1, 1, 1]} : vector<8x1x8xf32> to vector<8x1x1xf32>
    %2198 = vector.extract_strided_slice %2193 {offsets = [0, 0, 3], sizes = [8, 1, 1], strides = [1, 1, 1]} : vector<8x1x8xf32> to vector<8x1x1xf32>
    %2199 = arith.maximumf %2197, %2198 : vector<8x1x1xf32>
    %2200 = vector.extract_strided_slice %2193 {offsets = [0, 0, 4], sizes = [8, 1, 1], strides = [1, 1, 1]} : vector<8x1x8xf32> to vector<8x1x1xf32>
    %2201 = vector.extract_strided_slice %2193 {offsets = [0, 0, 5], sizes = [8, 1, 1], strides = [1, 1, 1]} : vector<8x1x8xf32> to vector<8x1x1xf32>
    %2202 = arith.maximumf %2200, %2201 : vector<8x1x1xf32>
    %2203 = vector.extract_strided_slice %2193 {offsets = [0, 0, 6], sizes = [8, 1, 1], strides = [1, 1, 1]} : vector<8x1x8xf32> to vector<8x1x1xf32>
    %2204 = vector.extract_strided_slice %2193 {offsets = [0, 0, 7], sizes = [8, 1, 1], strides = [1, 1, 1]} : vector<8x1x8xf32> to vector<8x1x1xf32>
    %2205 = arith.maximumf %2203, %2204 : vector<8x1x1xf32>
    %2206 = tpu.concatenate %2196, %2199, %2202, %2205 in 2 : vector<8x1x1xf32>, vector<8x1x1xf32>, vector<8x1x1xf32>, vector<8x1x1xf32> -> vector<8x1x4xf32>
    %2207 = vector.extract_strided_slice %2109 {offsets = [0, 4, 0], sizes = [8, 1, 8], strides = [1, 1, 1]} : vector<8x8x8xf32> to vector<8x1x8xf32>
    %2208 = vector.extract_strided_slice %2109 {offsets = [0, 5, 0], sizes = [8, 1, 8], strides = [1, 1, 1]} : vector<8x8x8xf32> to vector<8x1x8xf32>
    %2209 = arith.maximumf %2207, %2208 : vector<8x1x8xf32>
    %2210 = vector.extract_strided_slice %2209 {offsets = [0, 0, 0], sizes = [8, 1, 1], strides = [1, 1, 1]} : vector<8x1x8xf32> to vector<8x1x1xf32>
    %2211 = vector.extract_strided_slice %2209 {offsets = [0, 0, 1], sizes = [8, 1, 1], strides = [1, 1, 1]} : vector<8x1x8xf32> to vector<8x1x1xf32>
    %2212 = arith.maximumf %2210, %2211 : vector<8x1x1xf32>
    %2213 = vector.extract_strided_slice %2209 {offsets = [0, 0, 2], sizes = [8, 1, 1], strides = [1, 1, 1]} : vector<8x1x8xf32> to vector<8x1x1xf32>
    %2214 = vector.extract_strided_slice %2209 {offsets = [0, 0, 3], sizes = [8, 1, 1], strides = [1, 1, 1]} : vector<8x1x8xf32> to vector<8x1x1xf32>
    %2215 = arith.maximumf %2213, %2214 : vector<8x1x1xf32>
    %2216 = vector.extract_strided_slice %2209 {offsets = [0, 0, 4], sizes = [8, 1, 1], strides = [1, 1, 1]} : vector<8x1x8xf32> to vector<8x1x1xf32>
    %2217 = vector.extract_strided_slice %2209 {offsets = [0, 0, 5], sizes = [8, 1, 1], strides = [1, 1, 1]} : vector<8x1x8xf32> to vector<8x1x1xf32>
    %2218 = arith.maximumf %2216, %2217 : vector<8x1x1xf32>
    %2219 = vector.extract_strided_slice %2209 {offsets = [0, 0, 6], sizes = [8, 1, 1], strides = [1, 1, 1]} : vector<8x1x8xf32> to vector<8x1x1xf32>
    %2220 = vector.extract_strided_slice %2209 {offsets = [0, 0, 7], sizes = [8, 1, 1], strides = [1, 1, 1]} : vector<8x1x8xf32> to vector<8x1x1xf32>
    %2221 = arith.maximumf %2219, %2220 : vector<8x1x1xf32>
    %2222 = tpu.concatenate %2212, %2215, %2218, %2221 in 2 : vector<8x1x1xf32>, vector<8x1x1xf32>, vector<8x1x1xf32>, vector<8x1x1xf32> -> vector<8x1x4xf32>
    %2223 = vector.extract_strided_slice %2109 {offsets = [0, 6, 0], sizes = [8, 1, 8], strides = [1, 1, 1]} : vector<8x8x8xf32> to vector<8x1x8xf32>
    %2224 = vector.extract_strided_slice %2109 {offsets = [0, 7, 0], sizes = [8, 1, 8], strides = [1, 1, 1]} : vector<8x8x8xf32> to vector<8x1x8xf32>
    %2225 = arith.maximumf %2223, %2224 : vector<8x1x8xf32>
    %2226 = vector.extract_strided_slice %2225 {offsets = [0, 0, 0], sizes = [8, 1, 1], strides = [1, 1, 1]} : vector<8x1x8xf32> to vector<8x1x1xf32>
    %2227 = vector.extract_strided_slice %2225 {offsets = [0, 0, 1], sizes = [8, 1, 1], strides = [1, 1, 1]} : vector<8x1x8xf32> to vector<8x1x1xf32>
    %2228 = arith.maximumf %2226, %2227 : vector<8x1x1xf32>
    %2229 = vector.extract_strided_slice %2225 {offsets = [0, 0, 2], sizes = [8, 1, 1], strides = [1, 1, 1]} : vector<8x1x8xf32> to vector<8x1x1xf32>
    %2230 = vector.extract_strided_slice %2225 {offsets = [0, 0, 3], sizes = [8, 1, 1], strides = [1, 1, 1]} : vector<8x1x8xf32> to vector<8x1x1xf32>
    %2231 = arith.maximumf %2229, %2230 : vector<8x1x1xf32>
    %2232 = vector.extract_strided_slice %2225 {offsets = [0, 0, 4], sizes = [8, 1, 1], strides = [1, 1, 1]} : vector<8x1x8xf32> to vector<8x1x1xf32>
    %2233 = vector.extract_strided_slice %2225 {offsets = [0, 0, 5], sizes = [8, 1, 1], strides = [1, 1, 1]} : vector<8x1x8xf32> to vector<8x1x1xf32>
    %2234 = arith.maximumf %2232, %2233 : vector<8x1x1xf32>
    %2235 = vector.extract_strided_slice %2225 {offsets = [0, 0, 6], sizes = [8, 1, 1], strides = [1, 1, 1]} : vector<8x1x8xf32> to vector<8x1x1xf32>
    %2236 = vector.extract_strided_slice %2225 {offsets = [0, 0, 7], sizes = [8, 1, 1], strides = [1, 1, 1]} : vector<8x1x8xf32> to vector<8x1x1xf32>
    %2237 = arith.maximumf %2235, %2236 : vector<8x1x1xf32>
    %2238 = tpu.concatenate %2228, %2231, %2234, %2237 in 2 : vector<8x1x1xf32>, vector<8x1x1xf32>, vector<8x1x1xf32>, vector<8x1x1xf32> -> vector<8x1x4xf32>
    %2239 = tpu.concatenate %2190, %2206, %2222, %2238 in 1 : vector<8x1x4xf32>, vector<8x1x4xf32>, vector<8x1x4xf32>, vector<8x1x4xf32> -> vector<8x4x4xf32>
    %2240 = vector.extract_strided_slice %2174 {offsets = [0, 0, 0], sizes = [1, 1, 4], strides = [1, 1, 1]} : vector<8x4x4xf32> to vector<1x1x4xf32>
    %2241 = vector.shape_cast %2240 : vector<1x1x4xf32> to vector<1x4xf32>
    %2242 = vector.extract_strided_slice %2174 {offsets = [0, 1, 0], sizes = [1, 1, 4], strides = [1, 1, 1]} : vector<8x4x4xf32> to vector<1x1x4xf32>
    %2243 = vector.shape_cast %2242 : vector<1x1x4xf32> to vector<1x4xf32>
    %2244 = vector.extract_strided_slice %2174 {offsets = [0, 2, 0], sizes = [1, 1, 4], strides = [1, 1, 1]} : vector<8x4x4xf32> to vector<1x1x4xf32>
    %2245 = vector.shape_cast %2244 : vector<1x1x4xf32> to vector<1x4xf32>
    %2246 = vector.extract_strided_slice %2174 {offsets = [0, 3, 0], sizes = [1, 1, 4], strides = [1, 1, 1]} : vector<8x4x4xf32> to vector<1x1x4xf32>
    %2247 = vector.shape_cast %2246 : vector<1x1x4xf32> to vector<1x4xf32>
    %2248 = tpu.concatenate %2241, %2243, %2245, %2247 in 1 : vector<1x4xf32>, vector<1x4xf32>, vector<1x4xf32>, vector<1x4xf32> -> vector<1x16xf32>
    %2249 = vector.extract_strided_slice %2174 {offsets = [1, 0, 0], sizes = [1, 1, 4], strides = [1, 1, 1]} : vector<8x4x4xf32> to vector<1x1x4xf32>
    %2250 = vector.shape_cast %2249 : vector<1x1x4xf32> to vector<1x4xf32>
    %2251 = vector.extract_strided_slice %2174 {offsets = [1, 1, 0], sizes = [1, 1, 4], strides = [1, 1, 1]} : vector<8x4x4xf32> to vector<1x1x4xf32>
    %2252 = vector.shape_cast %2251 : vector<1x1x4xf32> to vector<1x4xf32>
    %2253 = vector.extract_strided_slice %2174 {offsets = [1, 2, 0], sizes = [1, 1, 4], strides = [1, 1, 1]} : vector<8x4x4xf32> to vector<1x1x4xf32>
    %2254 = vector.shape_cast %2253 : vector<1x1x4xf32> to vector<1x4xf32>
    %2255 = vector.extract_strided_slice %2174 {offsets = [1, 3, 0], sizes = [1, 1, 4], strides = [1, 1, 1]} : vector<8x4x4xf32> to vector<1x1x4xf32>
    %2256 = vector.shape_cast %2255 : vector<1x1x4xf32> to vector<1x4xf32>
    %2257 = tpu.concatenate %2250, %2252, %2254, %2256 in 1 : vector<1x4xf32>, vector<1x4xf32>, vector<1x4xf32>, vector<1x4xf32> -> vector<1x16xf32>
    %2258 = vector.extract_strided_slice %2174 {offsets = [2, 0, 0], sizes = [1, 1, 4], strides = [1, 1, 1]} : vector<8x4x4xf32> to vector<1x1x4xf32>
    %2259 = vector.shape_cast %2258 : vector<1x1x4xf32> to vector<1x4xf32>
    %2260 = vector.extract_strided_slice %2174 {offsets = [2, 1, 0], sizes = [1, 1, 4], strides = [1, 1, 1]} : vector<8x4x4xf32> to vector<1x1x4xf32>
    %2261 = vector.shape_cast %2260 : vector<1x1x4xf32> to vector<1x4xf32>
    %2262 = vector.extract_strided_slice %2174 {offsets = [2, 2, 0], sizes = [1, 1, 4], strides = [1, 1, 1]} : vector<8x4x4xf32> to vector<1x1x4xf32>
    %2263 = vector.shape_cast %2262 : vector<1x1x4xf32> to vector<1x4xf32>
    %2264 = vector.extract_strided_slice %2174 {offsets = [2, 3, 0], sizes = [1, 1, 4], strides = [1, 1, 1]} : vector<8x4x4xf32> to vector<1x1x4xf32>
    %2265 = vector.shape_cast %2264 : vector<1x1x4xf32> to vector<1x4xf32>
    %2266 = tpu.concatenate %2259, %2261, %2263, %2265 in 1 : vector<1x4xf32>, vector<1x4xf32>, vector<1x4xf32>, vector<1x4xf32> -> vector<1x16xf32>
    %2267 = vector.extract_strided_slice %2174 {offsets = [3, 0, 0], sizes = [1, 1, 4], strides = [1, 1, 1]} : vector<8x4x4xf32> to vector<1x1x4xf32>
    %2268 = vector.shape_cast %2267 : vector<1x1x4xf32> to vector<1x4xf32>
    %2269 = vector.extract_strided_slice %2174 {offsets = [3, 1, 0], sizes = [1, 1, 4], strides = [1, 1, 1]} : vector<8x4x4xf32> to vector<1x1x4xf32>
    %2270 = vector.shape_cast %2269 : vector<1x1x4xf32> to vector<1x4xf32>
    %2271 = vector.extract_strided_slice %2174 {offsets = [3, 2, 0], sizes = [1, 1, 4], strides = [1, 1, 1]} : vector<8x4x4xf32> to vector<1x1x4xf32>
    %2272 = vector.shape_cast %2271 : vector<1x1x4xf32> to vector<1x4xf32>
    %2273 = vector.extract_strided_slice %2174 {offsets = [3, 3, 0], sizes = [1, 1, 4], strides = [1, 1, 1]} : vector<8x4x4xf32> to vector<1x1x4xf32>
    %2274 = vector.shape_cast %2273 : vector<1x1x4xf32> to vector<1x4xf32>
    %2275 = tpu.concatenate %2268, %2270, %2272, %2274 in 1 : vector<1x4xf32>, vector<1x4xf32>, vector<1x4xf32>, vector<1x4xf32> -> vector<1x16xf32>
    %2276 = vector.extract_strided_slice %2174 {offsets = [4, 0, 0], sizes = [1, 1, 4], strides = [1, 1, 1]} : vector<8x4x4xf32> to vector<1x1x4xf32>
    %2277 = vector.shape_cast %2276 : vector<1x1x4xf32> to vector<1x4xf32>
    %2278 = vector.extract_strided_slice %2174 {offsets = [4, 1, 0], sizes = [1, 1, 4], strides = [1, 1, 1]} : vector<8x4x4xf32> to vector<1x1x4xf32>
    %2279 = vector.shape_cast %2278 : vector<1x1x4xf32> to vector<1x4xf32>
    %2280 = vector.extract_strided_slice %2174 {offsets = [4, 2, 0], sizes = [1, 1, 4], strides = [1, 1, 1]} : vector<8x4x4xf32> to vector<1x1x4xf32>
    %2281 = vector.shape_cast %2280 : vector<1x1x4xf32> to vector<1x4xf32>
    %2282 = vector.extract_strided_slice %2174 {offsets = [4, 3, 0], sizes = [1, 1, 4], strides = [1, 1, 1]} : vector<8x4x4xf32> to vector<1x1x4xf32>
    %2283 = vector.shape_cast %2282 : vector<1x1x4xf32> to vector<1x4xf32>
    %2284 = tpu.concatenate %2277, %2279, %2281, %2283 in 1 : vector<1x4xf32>, vector<1x4xf32>, vector<1x4xf32>, vector<1x4xf32> -> vector<1x16xf32>
    %2285 = vector.extract_strided_slice %2174 {offsets = [5, 0, 0], sizes = [1, 1, 4], strides = [1, 1, 1]} : vector<8x4x4xf32> to vector<1x1x4xf32>
    %2286 = vector.shape_cast %2285 : vector<1x1x4xf32> to vector<1x4xf32>
    %2287 = vector.extract_strided_slice %2174 {offsets = [5, 1, 0], sizes = [1, 1, 4], strides = [1, 1, 1]} : vector<8x4x4xf32> to vector<1x1x4xf32>
    %2288 = vector.shape_cast %2287 : vector<1x1x4xf32> to vector<1x4xf32>
    %2289 = vector.extract_strided_slice %2174 {offsets = [5, 2, 0], sizes = [1, 1, 4], strides = [1, 1, 1]} : vector<8x4x4xf32> to vector<1x1x4xf32>
    %2290 = vector.shape_cast %2289 : vector<1x1x4xf32> to vector<1x4xf32>
    %2291 = vector.extract_strided_slice %2174 {offsets = [5, 3, 0], sizes = [1, 1, 4], strides = [1, 1, 1]} : vector<8x4x4xf32> to vector<1x1x4xf32>
    %2292 = vector.shape_cast %2291 : vector<1x1x4xf32> to vector<1x4xf32>
    %2293 = tpu.concatenate %2286, %2288, %2290, %2292 in 1 : vector<1x4xf32>, vector<1x4xf32>, vector<1x4xf32>, vector<1x4xf32> -> vector<1x16xf32>
    %2294 = vector.extract_strided_slice %2174 {offsets = [6, 0, 0], sizes = [1, 1, 4], strides = [1, 1, 1]} : vector<8x4x4xf32> to vector<1x1x4xf32>
    %2295 = vector.shape_cast %2294 : vector<1x1x4xf32> to vector<1x4xf32>
    %2296 = vector.extract_strided_slice %2174 {offsets = [6, 1, 0], sizes = [1, 1, 4], strides = [1, 1, 1]} : vector<8x4x4xf32> to vector<1x1x4xf32>
    %2297 = vector.shape_cast %2296 : vector<1x1x4xf32> to vector<1x4xf32>
    %2298 = vector.extract_strided_slice %2174 {offsets = [6, 2, 0], sizes = [1, 1, 4], strides = [1, 1, 1]} : vector<8x4x4xf32> to vector<1x1x4xf32>
    %2299 = vector.shape_cast %2298 : vector<1x1x4xf32> to vector<1x4xf32>
    %2300 = vector.extract_strided_slice %2174 {offsets = [6, 3, 0], sizes = [1, 1, 4], strides = [1, 1, 1]} : vector<8x4x4xf32> to vector<1x1x4xf32>
    %2301 = vector.shape_cast %2300 : vector<1x1x4xf32> to vector<1x4xf32>
    %2302 = tpu.concatenate %2295, %2297, %2299, %2301 in 1 : vector<1x4xf32>, vector<1x4xf32>, vector<1x4xf32>, vector<1x4xf32> -> vector<1x16xf32>
    %2303 = vector.extract_strided_slice %2174 {offsets = [7, 0, 0], sizes = [1, 1, 4], strides = [1, 1, 1]} : vector<8x4x4xf32> to vector<1x1x4xf32>
    %2304 = vector.shape_cast %2303 : vector<1x1x4xf32> to vector<1x4xf32>
    %2305 = vector.extract_strided_slice %2174 {offsets = [7, 1, 0], sizes = [1, 1, 4], strides = [1, 1, 1]} : vector<8x4x4xf32> to vector<1x1x4xf32>
    %2306 = vector.shape_cast %2305 : vector<1x1x4xf32> to vector<1x4xf32>
    %2307 = vector.extract_strided_slice %2174 {offsets = [7, 2, 0], sizes = [1, 1, 4], strides = [1, 1, 1]} : vector<8x4x4xf32> to vector<1x1x4xf32>
    %2308 = vector.shape_cast %2307 : vector<1x1x4xf32> to vector<1x4xf32>
    %2309 = vector.extract_strided_slice %2174 {offsets = [7, 3, 0], sizes = [1, 1, 4], strides = [1, 1, 1]} : vector<8x4x4xf32> to vector<1x1x4xf32>
    %2310 = vector.shape_cast %2309 : vector<1x1x4xf32> to vector<1x4xf32>
    %2311 = tpu.concatenate %2304, %2306, %2308, %2310 in 1 : vector<1x4xf32>, vector<1x4xf32>, vector<1x4xf32>, vector<1x4xf32> -> vector<1x16xf32>
    %2312 = vector.extract_strided_slice %2239 {offsets = [0, 0, 0], sizes = [1, 1, 4], strides = [1, 1, 1]} : vector<8x4x4xf32> to vector<1x1x4xf32>
    %2313 = vector.shape_cast %2312 : vector<1x1x4xf32> to vector<1x4xf32>
    %2314 = vector.extract_strided_slice %2239 {offsets = [0, 1, 0], sizes = [1, 1, 4], strides = [1, 1, 1]} : vector<8x4x4xf32> to vector<1x1x4xf32>
    %2315 = vector.shape_cast %2314 : vector<1x1x4xf32> to vector<1x4xf32>
    %2316 = vector.extract_strided_slice %2239 {offsets = [0, 2, 0], sizes = [1, 1, 4], strides = [1, 1, 1]} : vector<8x4x4xf32> to vector<1x1x4xf32>
    %2317 = vector.shape_cast %2316 : vector<1x1x4xf32> to vector<1x4xf32>
    %2318 = vector.extract_strided_slice %2239 {offsets = [0, 3, 0], sizes = [1, 1, 4], strides = [1, 1, 1]} : vector<8x4x4xf32> to vector<1x1x4xf32>
    %2319 = vector.shape_cast %2318 : vector<1x1x4xf32> to vector<1x4xf32>
    %2320 = tpu.concatenate %2313, %2315, %2317, %2319 in 1 : vector<1x4xf32>, vector<1x4xf32>, vector<1x4xf32>, vector<1x4xf32> -> vector<1x16xf32>
    %2321 = vector.extract_strided_slice %2239 {offsets = [1, 0, 0], sizes = [1, 1, 4], strides = [1, 1, 1]} : vector<8x4x4xf32> to vector<1x1x4xf32>
    %2322 = vector.shape_cast %2321 : vector<1x1x4xf32> to vector<1x4xf32>
    %2323 = vector.extract_strided_slice %2239 {offsets = [1, 1, 0], sizes = [1, 1, 4], strides = [1, 1, 1]} : vector<8x4x4xf32> to vector<1x1x4xf32>
    %2324 = vector.shape_cast %2323 : vector<1x1x4xf32> to vector<1x4xf32>
    %2325 = vector.extract_strided_slice %2239 {offsets = [1, 2, 0], sizes = [1, 1, 4], strides = [1, 1, 1]} : vector<8x4x4xf32> to vector<1x1x4xf32>
    %2326 = vector.shape_cast %2325 : vector<1x1x4xf32> to vector<1x4xf32>
    %2327 = vector.extract_strided_slice %2239 {offsets = [1, 3, 0], sizes = [1, 1, 4], strides = [1, 1, 1]} : vector<8x4x4xf32> to vector<1x1x4xf32>
    %2328 = vector.shape_cast %2327 : vector<1x1x4xf32> to vector<1x4xf32>
    %2329 = tpu.concatenate %2322, %2324, %2326, %2328 in 1 : vector<1x4xf32>, vector<1x4xf32>, vector<1x4xf32>, vector<1x4xf32> -> vector<1x16xf32>
    %2330 = vector.extract_strided_slice %2239 {offsets = [2, 0, 0], sizes = [1, 1, 4], strides = [1, 1, 1]} : vector<8x4x4xf32> to vector<1x1x4xf32>
    %2331 = vector.shape_cast %2330 : vector<1x1x4xf32> to vector<1x4xf32>
    %2332 = vector.extract_strided_slice %2239 {offsets = [2, 1, 0], sizes = [1, 1, 4], strides = [1, 1, 1]} : vector<8x4x4xf32> to vector<1x1x4xf32>
    %2333 = vector.shape_cast %2332 : vector<1x1x4xf32> to vector<1x4xf32>
    %2334 = vector.extract_strided_slice %2239 {offsets = [2, 2, 0], sizes = [1, 1, 4], strides = [1, 1, 1]} : vector<8x4x4xf32> to vector<1x1x4xf32>
    %2335 = vector.shape_cast %2334 : vector<1x1x4xf32> to vector<1x4xf32>
    %2336 = vector.extract_strided_slice %2239 {offsets = [2, 3, 0], sizes = [1, 1, 4], strides = [1, 1, 1]} : vector<8x4x4xf32> to vector<1x1x4xf32>
    %2337 = vector.shape_cast %2336 : vector<1x1x4xf32> to vector<1x4xf32>
    %2338 = tpu.concatenate %2331, %2333, %2335, %2337 in 1 : vector<1x4xf32>, vector<1x4xf32>, vector<1x4xf32>, vector<1x4xf32> -> vector<1x16xf32>
    %2339 = vector.extract_strided_slice %2239 {offsets = [3, 0, 0], sizes = [1, 1, 4], strides = [1, 1, 1]} : vector<8x4x4xf32> to vector<1x1x4xf32>
    %2340 = vector.shape_cast %2339 : vector<1x1x4xf32> to vector<1x4xf32>
    %2341 = vector.extract_strided_slice %2239 {offsets = [3, 1, 0], sizes = [1, 1, 4], strides = [1, 1, 1]} : vector<8x4x4xf32> to vector<1x1x4xf32>
    %2342 = vector.shape_cast %2341 : vector<1x1x4xf32> to vector<1x4xf32>
    %2343 = vector.extract_strided_slice %2239 {offsets = [3, 2, 0], sizes = [1, 1, 4], strides = [1, 1, 1]} : vector<8x4x4xf32> to vector<1x1x4xf32>
    %2344 = vector.shape_cast %2343 : vector<1x1x4xf32> to vector<1x4xf32>
    %2345 = vector.extract_strided_slice %2239 {offsets = [3, 3, 0], sizes = [1, 1, 4], strides = [1, 1, 1]} : vector<8x4x4xf32> to vector<1x1x4xf32>
    %2346 = vector.shape_cast %2345 : vector<1x1x4xf32> to vector<1x4xf32>
    %2347 = tpu.concatenate %2340, %2342, %2344, %2346 in 1 : vector<1x4xf32>, vector<1x4xf32>, vector<1x4xf32>, vector<1x4xf32> -> vector<1x16xf32>
    %2348 = vector.extract_strided_slice %2239 {offsets = [4, 0, 0], sizes = [1, 1, 4], strides = [1, 1, 1]} : vector<8x4x4xf32> to vector<1x1x4xf32>
    %2349 = vector.shape_cast %2348 : vector<1x1x4xf32> to vector<1x4xf32>
    %2350 = vector.extract_strided_slice %2239 {offsets = [4, 1, 0], sizes = [1, 1, 4], strides = [1, 1, 1]} : vector<8x4x4xf32> to vector<1x1x4xf32>
    %2351 = vector.shape_cast %2350 : vector<1x1x4xf32> to vector<1x4xf32>
    %2352 = vector.extract_strided_slice %2239 {offsets = [4, 2, 0], sizes = [1, 1, 4], strides = [1, 1, 1]} : vector<8x4x4xf32> to vector<1x1x4xf32>
    %2353 = vector.shape_cast %2352 : vector<1x1x4xf32> to vector<1x4xf32>
    %2354 = vector.extract_strided_slice %2239 {offsets = [4, 3, 0], sizes = [1, 1, 4], strides = [1, 1, 1]} : vector<8x4x4xf32> to vector<1x1x4xf32>
    %2355 = vector.shape_cast %2354 : vector<1x1x4xf32> to vector<1x4xf32>
    %2356 = tpu.concatenate %2349, %2351, %2353, %2355 in 1 : vector<1x4xf32>, vector<1x4xf32>, vector<1x4xf32>, vector<1x4xf32> -> vector<1x16xf32>
    %2357 = vector.extract_strided_slice %2239 {offsets = [5, 0, 0], sizes = [1, 1, 4], strides = [1, 1, 1]} : vector<8x4x4xf32> to vector<1x1x4xf32>
    %2358 = vector.shape_cast %2357 : vector<1x1x4xf32> to vector<1x4xf32>
    %2359 = vector.extract_strided_slice %2239 {offsets = [5, 1, 0], sizes = [1, 1, 4], strides = [1, 1, 1]} : vector<8x4x4xf32> to vector<1x1x4xf32>
    %2360 = vector.shape_cast %2359 : vector<1x1x4xf32> to vector<1x4xf32>
    %2361 = vector.extract_strided_slice %2239 {offsets = [5, 2, 0], sizes = [1, 1, 4], strides = [1, 1, 1]} : vector<8x4x4xf32> to vector<1x1x4xf32>
    %2362 = vector.shape_cast %2361 : vector<1x1x4xf32> to vector<1x4xf32>
    %2363 = vector.extract_strided_slice %2239 {offsets = [5, 3, 0], sizes = [1, 1, 4], strides = [1, 1, 1]} : vector<8x4x4xf32> to vector<1x1x4xf32>
    %2364 = vector.shape_cast %2363 : vector<1x1x4xf32> to vector<1x4xf32>
    %2365 = tpu.concatenate %2358, %2360, %2362, %2364 in 1 : vector<1x4xf32>, vector<1x4xf32>, vector<1x4xf32>, vector<1x4xf32> -> vector<1x16xf32>
    %2366 = vector.extract_strided_slice %2239 {offsets = [6, 0, 0], sizes = [1, 1, 4], strides = [1, 1, 1]} : vector<8x4x4xf32> to vector<1x1x4xf32>
    %2367 = vector.shape_cast %2366 : vector<1x1x4xf32> to vector<1x4xf32>
    %2368 = vector.extract_strided_slice %2239 {offsets = [6, 1, 0], sizes = [1, 1, 4], strides = [1, 1, 1]} : vector<8x4x4xf32> to vector<1x1x4xf32>
    %2369 = vector.shape_cast %2368 : vector<1x1x4xf32> to vector<1x4xf32>
    %2370 = vector.extract_strided_slice %2239 {offsets = [6, 2, 0], sizes = [1, 1, 4], strides = [1, 1, 1]} : vector<8x4x4xf32> to vector<1x1x4xf32>
    %2371 = vector.shape_cast %2370 : vector<1x1x4xf32> to vector<1x4xf32>
    %2372 = vector.extract_strided_slice %2239 {offsets = [6, 3, 0], sizes = [1, 1, 4], strides = [1, 1, 1]} : vector<8x4x4xf32> to vector<1x1x4xf32>
    %2373 = vector.shape_cast %2372 : vector<1x1x4xf32> to vector<1x4xf32>
    %2374 = tpu.concatenate %2367, %2369, %2371, %2373 in 1 : vector<1x4xf32>, vector<1x4xf32>, vector<1x4xf32>, vector<1x4xf32> -> vector<1x16xf32>
    %2375 = vector.extract_strided_slice %2239 {offsets = [7, 0, 0], sizes = [1, 1, 4], strides = [1, 1, 1]} : vector<8x4x4xf32> to vector<1x1x4xf32>
    %2376 = vector.shape_cast %2375 : vector<1x1x4xf32> to vector<1x4xf32>
    %2377 = vector.extract_strided_slice %2239 {offsets = [7, 1, 0], sizes = [1, 1, 4], strides = [1, 1, 1]} : vector<8x4x4xf32> to vector<1x1x4xf32>
    %2378 = vector.shape_cast %2377 : vector<1x1x4xf32> to vector<1x4xf32>
    %2379 = vector.extract_strided_slice %2239 {offsets = [7, 2, 0], sizes = [1, 1, 4], strides = [1, 1, 1]} : vector<8x4x4xf32> to vector<1x1x4xf32>
    %2380 = vector.shape_cast %2379 : vector<1x1x4xf32> to vector<1x4xf32>
    %2381 = vector.extract_strided_slice %2239 {offsets = [7, 3, 0], sizes = [1, 1, 4], strides = [1, 1, 1]} : vector<8x4x4xf32> to vector<1x1x4xf32>
    %2382 = vector.shape_cast %2381 : vector<1x1x4xf32> to vector<1x4xf32>
    %2383 = tpu.concatenate %2376, %2378, %2380, %2382 in 1 : vector<1x4xf32>, vector<1x4xf32>, vector<1x4xf32>, vector<1x4xf32> -> vector<1x16xf32>
    %2384 = tpu.concatenate %2248, %2257, %2266, %2275, %2284, %2293, %2302, %2311, %2320, %2329, %2338, %2347, %2356, %2365, %2374, %2383 in 1 : vector<1x16xf32>, vector<1x16xf32>, vector<1x16xf32>, vector<1x16xf32>, vector<1x16xf32>, vector<1x16xf32>, vector<1x16xf32>, vector<1x16xf32>, vector<1x16xf32>, vector<1x16xf32>, vector<1x16xf32>, vector<1x16xf32>, vector<1x16xf32>, vector<1x16xf32>, vector<1x16xf32>, vector<1x16xf32> -> vector<1x256xf32>
    %2385 = vector.extract_strided_slice %2384 {offsets = [0, 0], sizes = [1, 8], strides = [1, 1]} : vector<1x256xf32> to vector<1x8xf32>
    %2386 = vector.extract_strided_slice %2384 {offsets = [0, 8], sizes = [1, 8], strides = [1, 1]} : vector<1x256xf32> to vector<1x8xf32>
    %2387 = vector.extract_strided_slice %2384 {offsets = [0, 16], sizes = [1, 8], strides = [1, 1]} : vector<1x256xf32> to vector<1x8xf32>
    %2388 = vector.extract_strided_slice %2384 {offsets = [0, 24], sizes = [1, 8], strides = [1, 1]} : vector<1x256xf32> to vector<1x8xf32>
    %2389 = vector.extract_strided_slice %2384 {offsets = [0, 32], sizes = [1, 8], strides = [1, 1]} : vector<1x256xf32> to vector<1x8xf32>
    %2390 = vector.extract_strided_slice %2384 {offsets = [0, 40], sizes = [1, 8], strides = [1, 1]} : vector<1x256xf32> to vector<1x8xf32>
    %2391 = vector.extract_strided_slice %2384 {offsets = [0, 48], sizes = [1, 8], strides = [1, 1]} : vector<1x256xf32> to vector<1x8xf32>
    %2392 = vector.extract_strided_slice %2384 {offsets = [0, 56], sizes = [1, 8], strides = [1, 1]} : vector<1x256xf32> to vector<1x8xf32>
    %2393 = vector.extract_strided_slice %2384 {offsets = [0, 64], sizes = [1, 8], strides = [1, 1]} : vector<1x256xf32> to vector<1x8xf32>
    %2394 = vector.extract_strided_slice %2384 {offsets = [0, 72], sizes = [1, 8], strides = [1, 1]} : vector<1x256xf32> to vector<1x8xf32>
    %2395 = vector.extract_strided_slice %2384 {offsets = [0, 80], sizes = [1, 8], strides = [1, 1]} : vector<1x256xf32> to vector<1x8xf32>
    %2396 = vector.extract_strided_slice %2384 {offsets = [0, 88], sizes = [1, 8], strides = [1, 1]} : vector<1x256xf32> to vector<1x8xf32>
    %2397 = vector.extract_strided_slice %2384 {offsets = [0, 96], sizes = [1, 8], strides = [1, 1]} : vector<1x256xf32> to vector<1x8xf32>
    %2398 = vector.extract_strided_slice %2384 {offsets = [0, 104], sizes = [1, 8], strides = [1, 1]} : vector<1x256xf32> to vector<1x8xf32>
    %2399 = vector.extract_strided_slice %2384 {offsets = [0, 112], sizes = [1, 8], strides = [1, 1]} : vector<1x256xf32> to vector<1x8xf32>
    %2400 = vector.extract_strided_slice %2384 {offsets = [0, 120], sizes = [1, 8], strides = [1, 1]} : vector<1x256xf32> to vector<1x8xf32>
    %2401 = vector.extract_strided_slice %2384 {offsets = [0, 128], sizes = [1, 8], strides = [1, 1]} : vector<1x256xf32> to vector<1x8xf32>
    %2402 = vector.extract_strided_slice %2384 {offsets = [0, 136], sizes = [1, 8], strides = [1, 1]} : vector<1x256xf32> to vector<1x8xf32>
    %2403 = vector.extract_strided_slice %2384 {offsets = [0, 144], sizes = [1, 8], strides = [1, 1]} : vector<1x256xf32> to vector<1x8xf32>
    %2404 = vector.extract_strided_slice %2384 {offsets = [0, 152], sizes = [1, 8], strides = [1, 1]} : vector<1x256xf32> to vector<1x8xf32>
    %2405 = vector.extract_strided_slice %2384 {offsets = [0, 160], sizes = [1, 8], strides = [1, 1]} : vector<1x256xf32> to vector<1x8xf32>
    %2406 = vector.extract_strided_slice %2384 {offsets = [0, 168], sizes = [1, 8], strides = [1, 1]} : vector<1x256xf32> to vector<1x8xf32>
    %2407 = vector.extract_strided_slice %2384 {offsets = [0, 176], sizes = [1, 8], strides = [1, 1]} : vector<1x256xf32> to vector<1x8xf32>
    %2408 = vector.extract_strided_slice %2384 {offsets = [0, 184], sizes = [1, 8], strides = [1, 1]} : vector<1x256xf32> to vector<1x8xf32>
    %2409 = vector.extract_strided_slice %2384 {offsets = [0, 192], sizes = [1, 8], strides = [1, 1]} : vector<1x256xf32> to vector<1x8xf32>
    %2410 = vector.extract_strided_slice %2384 {offsets = [0, 200], sizes = [1, 8], strides = [1, 1]} : vector<1x256xf32> to vector<1x8xf32>
    %2411 = vector.extract_strided_slice %2384 {offsets = [0, 208], sizes = [1, 8], strides = [1, 1]} : vector<1x256xf32> to vector<1x8xf32>
    %2412 = vector.extract_strided_slice %2384 {offsets = [0, 216], sizes = [1, 8], strides = [1, 1]} : vector<1x256xf32> to vector<1x8xf32>
    %2413 = vector.extract_strided_slice %2384 {offsets = [0, 224], sizes = [1, 8], strides = [1, 1]} : vector<1x256xf32> to vector<1x8xf32>
    %2414 = vector.extract_strided_slice %2384 {offsets = [0, 232], sizes = [1, 8], strides = [1, 1]} : vector<1x256xf32> to vector<1x8xf32>
    %2415 = vector.extract_strided_slice %2384 {offsets = [0, 240], sizes = [1, 8], strides = [1, 1]} : vector<1x256xf32> to vector<1x8xf32>
    %2416 = vector.extract_strided_slice %2384 {offsets = [0, 248], sizes = [1, 8], strides = [1, 1]} : vector<1x256xf32> to vector<1x8xf32>
    %2417 = tpu.concatenate %2385, %2386, %2387, %2388, %2389, %2390, %2391, %2392, %2393, %2394, %2395, %2396, %2397, %2398, %2399, %2400 in 0 : vector<1x8xf32>, vector<1x8xf32>, vector<1x8xf32>, vector<1x8xf32>, vector<1x8xf32>, vector<1x8xf32>, vector<1x8xf32>, vector<1x8xf32>, vector<1x8xf32>, vector<1x8xf32>, vector<1x8xf32>, vector<1x8xf32>, vector<1x8xf32>, vector<1x8xf32>, vector<1x8xf32>, vector<1x8xf32> -> vector<16x8xf32>
    %2418 = tpu.concatenate %2401, %2402, %2403, %2404, %2405, %2406, %2407, %2408, %2409, %2410, %2411, %2412, %2413, %2414, %2415, %2416 in 0 : vector<1x8xf32>, vector<1x8xf32>, vector<1x8xf32>, vector<1x8xf32>, vector<1x8xf32>, vector<1x8xf32>, vector<1x8xf32>, vector<1x8xf32>, vector<1x8xf32>, vector<1x8xf32>, vector<1x8xf32>, vector<1x8xf32>, vector<1x8xf32>, vector<1x8xf32>, vector<1x8xf32>, vector<1x8xf32> -> vector<16x8xf32>
    %2419 = tpu.concatenate %2417, %2418 in 0 : vector<16x8xf32>, vector<16x8xf32> -> vector<32x8xf32>
    %c0_703 = arith.constant 0 : index
    %c0_704 = arith.constant 0 : index
    %2420 = vector.load %arg10[%c0_703, %c0_704] : memref<8x10xf32, #tpu.memory_space<vmem>>, vector<8x10xf32>
    %2421 = vector.extract_strided_slice %2419 {offsets = [0, 0], sizes = [32, 1], strides = [1, 1]} : vector<32x8xf32> to vector<32x1xf32>
    %2422 = vector.extract_strided_slice %2420 {offsets = [0, 0], sizes = [1, 10], strides = [1, 1]} : vector<8x10xf32> to vector<1x10xf32>
    %2423 = vector.broadcast %2421 : vector<32x1xf32> to vector<32x10xf32>
    %2424 = vector.broadcast %2422 : vector<1x10xf32> to vector<32x10xf32>
    %2425 = arith.mulf %2423, %2424 : vector<32x10xf32>
    %2426 = vector.extract_strided_slice %2419 {offsets = [0, 1], sizes = [32, 1], strides = [1, 1]} : vector<32x8xf32> to vector<32x1xf32>
    %2427 = vector.extract_strided_slice %2420 {offsets = [1, 0], sizes = [1, 10], strides = [1, 1]} : vector<8x10xf32> to vector<1x10xf32>
    %2428 = vector.broadcast %2426 : vector<32x1xf32> to vector<32x10xf32>
    %2429 = vector.broadcast %2427 : vector<1x10xf32> to vector<32x10xf32>
    %2430 = arith.mulf %2428, %2429 : vector<32x10xf32>
    %2431 = arith.addf %2425, %2430 : vector<32x10xf32>
    %2432 = vector.extract_strided_slice %2419 {offsets = [0, 2], sizes = [32, 1], strides = [1, 1]} : vector<32x8xf32> to vector<32x1xf32>
    %2433 = vector.extract_strided_slice %2420 {offsets = [2, 0], sizes = [1, 10], strides = [1, 1]} : vector<8x10xf32> to vector<1x10xf32>
    %2434 = vector.broadcast %2432 : vector<32x1xf32> to vector<32x10xf32>
    %2435 = vector.broadcast %2433 : vector<1x10xf32> to vector<32x10xf32>
    %2436 = arith.mulf %2434, %2435 : vector<32x10xf32>
    %2437 = arith.addf %2431, %2436 : vector<32x10xf32>
    %2438 = vector.extract_strided_slice %2419 {offsets = [0, 3], sizes = [32, 1], strides = [1, 1]} : vector<32x8xf32> to vector<32x1xf32>
    %2439 = vector.extract_strided_slice %2420 {offsets = [3, 0], sizes = [1, 10], strides = [1, 1]} : vector<8x10xf32> to vector<1x10xf32>
    %2440 = vector.broadcast %2438 : vector<32x1xf32> to vector<32x10xf32>
    %2441 = vector.broadcast %2439 : vector<1x10xf32> to vector<32x10xf32>
    %2442 = arith.mulf %2440, %2441 : vector<32x10xf32>
    %2443 = arith.addf %2437, %2442 : vector<32x10xf32>
    %2444 = vector.extract_strided_slice %2419 {offsets = [0, 4], sizes = [32, 1], strides = [1, 1]} : vector<32x8xf32> to vector<32x1xf32>
    %2445 = vector.extract_strided_slice %2420 {offsets = [4, 0], sizes = [1, 10], strides = [1, 1]} : vector<8x10xf32> to vector<1x10xf32>
    %2446 = vector.broadcast %2444 : vector<32x1xf32> to vector<32x10xf32>
    %2447 = vector.broadcast %2445 : vector<1x10xf32> to vector<32x10xf32>
    %2448 = arith.mulf %2446, %2447 : vector<32x10xf32>
    %2449 = arith.addf %2443, %2448 : vector<32x10xf32>
    %2450 = vector.extract_strided_slice %2419 {offsets = [0, 5], sizes = [32, 1], strides = [1, 1]} : vector<32x8xf32> to vector<32x1xf32>
    %2451 = vector.extract_strided_slice %2420 {offsets = [5, 0], sizes = [1, 10], strides = [1, 1]} : vector<8x10xf32> to vector<1x10xf32>
    %2452 = vector.broadcast %2450 : vector<32x1xf32> to vector<32x10xf32>
    %2453 = vector.broadcast %2451 : vector<1x10xf32> to vector<32x10xf32>
    %2454 = arith.mulf %2452, %2453 : vector<32x10xf32>
    %2455 = arith.addf %2449, %2454 : vector<32x10xf32>
    %2456 = vector.extract_strided_slice %2419 {offsets = [0, 6], sizes = [32, 1], strides = [1, 1]} : vector<32x8xf32> to vector<32x1xf32>
    %2457 = vector.extract_strided_slice %2420 {offsets = [6, 0], sizes = [1, 10], strides = [1, 1]} : vector<8x10xf32> to vector<1x10xf32>
    %2458 = vector.broadcast %2456 : vector<32x1xf32> to vector<32x10xf32>
    %2459 = vector.broadcast %2457 : vector<1x10xf32> to vector<32x10xf32>
    %2460 = arith.mulf %2458, %2459 : vector<32x10xf32>
    %2461 = arith.addf %2455, %2460 : vector<32x10xf32>
    %2462 = vector.extract_strided_slice %2419 {offsets = [0, 7], sizes = [32, 1], strides = [1, 1]} : vector<32x8xf32> to vector<32x1xf32>
    %2463 = vector.extract_strided_slice %2420 {offsets = [7, 0], sizes = [1, 10], strides = [1, 1]} : vector<8x10xf32> to vector<1x10xf32>
    %2464 = vector.broadcast %2462 : vector<32x1xf32> to vector<32x10xf32>
    %2465 = vector.broadcast %2463 : vector<1x10xf32> to vector<32x10xf32>
    %2466 = arith.mulf %2464, %2465 : vector<32x10xf32>
    %2467 = arith.addf %2461, %2466 : vector<32x10xf32>
    %c0_705 = arith.constant 0 : index
    %c0_706 = arith.constant 0 : index
    %2468 = vector.load %arg11[%c0_705, %c0_706] : memref<1x10xf32, #tpu.memory_space<vmem>>, vector<1x10xf32>
    %2469 = vector.broadcast %2468 : vector<1x10xf32> to vector<32x10xf32>
    %2470 = arith.addf %2467, %2469 : vector<32x10xf32>
    %c0_707 = arith.constant 0 : index
    %c0_708 = arith.constant 0 : index
    %2471 = vector.load %arg12[%c0_707, %c0_708] : memref<32x10xf32, #tpu.memory_space<vmem>>, vector<32x10xf32>
    tpu.vector_store %arg12[%c0_707, %c0_708], %2470 {strides = array<i32>} : memref<32x10xf32, #tpu.memory_space<vmem>>, vector<32x10xf32>,
    return
  }
}

</mosaic_0001>

<llo_original>
// kernel: tpu_custom_call.1
$region0: #{tpu_custom_call.1}
  #allocation0 [shape = 'u32[]', space=smem, size = 0x4, offset = 0x4, fixed_abs, tag = 'smem constant byte address 0x4 - core index']
  #allocation1 [shape = 'u32[144,128]{1,0:T(1,128)}', space=vmem, size = 0x12000, scoped, tag = 'internal scratch']
  %s0 = inlined_call_operand.hbm [shape: f32[2,3,8,8], index: 0, kind: input, shape index: {}]
  %s1 = inlined_call_operand.hbm [shape: f32[3,8,8], index: 1, kind: input, shape index: {}]
  %s2 = inlined_call_operand.vmem [shape: f32[8,3], index: 2, kind: input, shape index: {}]
  %s3 = inlined_call_operand.vmem [shape: f32[8], index: 3, kind: input, shape index: {}]
  %s4 = inlined_call_operand.hbm [shape: f32[8,8,8], index: 4, kind: input, shape index: {}]
  %s5 = inlined_call_operand.vmem [shape: f32[8,8], index: 5, kind: input, shape index: {}]
  %s6 = inlined_call_operand.vmem [shape: f32[8], index: 6, kind: input, shape index: {}]
  %s7 = inlined_call_operand.hbm [shape: f32[8,8,8], index: 7, kind: input, shape index: {}]
  %s8 = inlined_call_operand.vmem [shape: f32[8,8], index: 8, kind: input, shape index: {}]
  %s9 = inlined_call_operand.vmem [shape: f32[8], index: 9, kind: input, shape index: {}]
  %s10 = inlined_call_operand.vmem [shape: f32[8,10], index: 10, kind: input, shape index: {}]
  %s11 = inlined_call_operand.vmem [shape: f32[1,10], index: 11, kind: input, shape index: {}]
  %s12 = inlined_call_operand.vmem [shape: f32[32,10], index: 12, kind: output, shape index: {}]
  %s13 = sld [smem:[#allocation0]]
  $region98: #{tpu_custom_call.1} parent=0
    _
  %s15 = ssub.s32 1, %s13
  %s16 = scalar_select 0, %s15, %s13
  $region1: #{tpu_custom_call.1} parent=0
    #allocation2 [shape = 'u8[24576]{0}', space=vmem, size = 0x6000, scoped, tag = 'input window, operand 0, single buffered']
    #allocation3 [shape = 's32[1]{0}', space=sflag, size = 0x4, scoped, tag = 'scoped memory for tpu_custom_call.1']
    #allocation4 [shape = 's32[1]{0}', space=sflag, size = 0x4, scoped, tag = 'scoped memory for tpu_custom_call.1']
    #allocation5 [shape = 'u8[12288]{0}', space=vmem, size = 0x3000, scoped, tag = 'input window, operand 1, single buffered']
    #allocation6 [shape = 's32[1]{0}', space=sflag, size = 0x4, scoped, tag = 'scoped memory for tpu_custom_call.1']
    #allocation7 [shape = 'u8[4096]{0}', space=smem, size = 0x1000, scoped, tag = 'input window, operand 2, single buffered']
    #allocation8 [shape = 'u8[512]{0}', space=smem, size = 0x200, scoped, tag = 'input window, operand 3, single buffered']
    #allocation9 [shape = 's32[1]{0}', space=sflag, size = 0x4, scoped, tag = 'scoped memory for tpu_custom_call.1']
    #allocation10 [shape = 'u8[32768]{0}', space=vmem, size = 0x8000, scoped, tag = 'input window, operand 4, single buffered']
    #allocation11 [shape = 'u8[4096]{0}', space=smem, size = 0x1000, scoped, tag = 'input window, operand 5, single buffered']
    #allocation12 [shape = 'u8[512]{0}', space=smem, size = 0x200, scoped, tag = 'input window, operand 6, single buffered']
    #allocation13 [shape = 's32[1]{0}', space=sflag, size = 0x4, scoped, tag = 'scoped memory for tpu_custom_call.1']
    #allocation14 [shape = 'u8[32768]{0}', space=vmem, size = 0x8000, scoped, tag = 'input window, operand 7, single buffered']
    #allocation15 [shape = 's32[1]{0}', space=sflag, size = 0x4, scoped, tag = 'scoped memory for tpu_custom_call.1']
    #allocation16 [shape = 'u8[4096]{0}', space=smem, size = 0x1000, scoped, tag = 'input window, operand 8, single buffered']
    #allocation17 [shape = 'u8[512]{0}', space=smem, size = 0x200, scoped, tag = 'input window, operand 9, single buffered']
    #allocation18 [shape = 's32[1]{0}', space=sflag, size = 0x4, scoped, tag = 'scoped memory for tpu_custom_call.1']
    %17 = vsyncpa [#allocation3], 0
    %18 = vsyncpa [#allocation6], 0
    %19 = vsyncpa [#allocation4], 0
    %20 = vsyncpa [#allocation9], 0
    %21 = vsyncpa [#allocation13], 0
    %22 = vsyncpa [#allocation15], 0
    %23 = vsyncpa [#allocation18], 0
    // Predicated region
    $region2: #{tpu_custom_call.1} parent=1 // pred_check
      _
    $region3: #{tpu_custom_call.1} parent=1 // pred_check_branch
      %25 = sbr.rel (0) target = $region5
    $region4: #{tpu_custom_call.1} parent=1 // pred_region
      %s27 = ssub.s32 768, 768
      %28 = vsyncadd [#allocation3], %s27
      %s29 = sshll.u32 [#allocation2], 4
      %s30 = int_to_ptr.vmem [resolvable:$true] %s29
      %35 = dma.hbm_to_vmem [thread:$0]  %s0, 768, %s30, [#allocation3], 128, 128, 8
    $region5: #{tpu_custom_call.1} parent=1 // pred_fallthru
      _
    // Predicated region
    $region6: #{tpu_custom_call.1} parent=1 // pred_check
      _
    $region7: #{tpu_custom_call.1} parent=1 // pred_check_branch
      %37 = sbr.rel (0) target = $region9
    $region8: #{tpu_custom_call.1} parent=1 // pred_region
      %s39 = ssub.s32 384, 384
      %40 = vsyncadd [#allocation6], %s39
      %s41 = sshll.u32 [#allocation5], 4
      %s42 = int_to_ptr.vmem [resolvable:$true] %s41
      %47 = dma.hbm_to_vmem [thread:$0]  %s1, 384, %s42, [#allocation6], 128, 128, 8
    $region9: #{tpu_custom_call.1} parent=1 // pred_fallthru
      _
    // Predicated region
    $region10: #{tpu_custom_call.1} parent=1 // pred_check
      _
    $region11: #{tpu_custom_call.1} parent=1 // pred_check_branch
      %49 = sbr.rel (0) target = $region13
    $region12: #{tpu_custom_call.1} parent=1 // pred_region
      %s51 = ssub.s32 128, 128
      %52 = vsyncadd [#allocation4], %s51
      %s54 = sshll.u32 %s2, 4
      %s55 = int_to_ptr.vmem [resolvable:$true] %s54
      %57 = dma.vmem_to_smem %s55, 128, [#allocation7], [#allocation4]
    $region13: #{tpu_custom_call.1} parent=1 // pred_fallthru
      _
    // Predicated region
    $region14: #{tpu_custom_call.1} parent=1 // pred_check
      _
    $region15: #{tpu_custom_call.1} parent=1 // pred_check_branch
      %59 = sbr.rel (0) target = $region17
    $region16: #{tpu_custom_call.1} parent=1 // pred_region
      %s61 = ssub.s32 16, 16
      %62 = vsyncadd [#allocation9], %s61
      %s64 = sshll.u32 %s3, 4
      %s65 = int_to_ptr.vmem [resolvable:$true] %s64
      %67 = dma.vmem_to_smem %s65, 16, [#allocation8], [#allocation9]
    $region17: #{tpu_custom_call.1} parent=1 // pred_fallthru
      _
    // Predicated region
    $region18: #{tpu_custom_call.1} parent=1 // pred_check
      _
    $region19: #{tpu_custom_call.1} parent=1 // pred_check_branch
      %69 = sbr.rel (0) target = $region21
    $region20: #{tpu_custom_call.1} parent=1 // pred_region
      %s71 = ssub.s32 1024, 1024
      %72 = vsyncadd [#allocation6], %s71
      %s73 = sshll.u32 [#allocation10], 4
      %s74 = int_to_ptr.vmem [resolvable:$true] %s73
      %79 = dma.hbm_to_vmem [thread:$0]  %s4, 1024, %s74, [#allocation6], 128, 128, 8
    $region21: #{tpu_custom_call.1} parent=1 // pred_fallthru
      _
    // Predicated region
    $region22: #{tpu_custom_call.1} parent=1 // pred_check
      _
    $region23: #{tpu_custom_call.1} parent=1 // pred_check_branch
      %81 = sbr.rel (0) target = $region25
    $region24: #{tpu_custom_call.1} parent=1 // pred_region
      %s83 = ssub.s32 128, 128
      %84 = vsyncadd [#allocation9], %s83
      %s86 = sshll.u32 %s5, 4
      %s87 = int_to_ptr.vmem [resolvable:$true] %s86
      %89 = dma.vmem_to_smem %s87, 128, [#allocation11], [#allocation9]
    $region25: #{tpu_custom_call.1} parent=1 // pred_fallthru
      _
    // Predicated region
    $region26: #{tpu_custom_call.1} parent=1 // pred_check
      _
    $region27: #{tpu_custom_call.1} parent=1 // pred_check_branch
      %91 = sbr.rel (0) target = $region29
    $region28: #{tpu_custom_call.1} parent=1 // pred_region
      %s93 = ssub.s32 16, 16
      %94 = vsyncadd [#allocation13], %s93
      %s96 = sshll.u32 %s6, 4
      %s97 = int_to_ptr.vmem [resolvable:$true] %s96
      %99 = dma.vmem_to_smem %s97, 16, [#allocation12], [#allocation13]
    $region29: #{tpu_custom_call.1} parent=1 // pred_fallthru
      _
    // Predicated region
    $region30: #{tpu_custom_call.1} parent=1 // pred_check
      _
    $region31: #{tpu_custom_call.1} parent=1 // pred_check_branch
      %101 = sbr.rel (0) target = $region33
    $region32: #{tpu_custom_call.1} parent=1 // pred_region
      %s103 = ssub.s32 1024, 1024
      %104 = vsyncadd [#allocation15], %s103
      %s105 = sshll.u32 [#allocation14], 4
      %s106 = int_to_ptr.vmem [resolvable:$true] %s105
      %111 = dma.hbm_to_vmem [thread:$0]  %s7, 1024, %s106, [#allocation15], 128, 128, 8
    $region33: #{tpu_custom_call.1} parent=1 // pred_fallthru
      _
    // Predicated region
    $region34: #{tpu_custom_call.1} parent=1 // pred_check
      _
    $region35: #{tpu_custom_call.1} parent=1 // pred_check_branch
      %113 = sbr.rel (0) target = $region37
    $region36: #{tpu_custom_call.1} parent=1 // pred_region
      %s115 = ssub.s32 128, 128
      %116 = vsyncadd [#allocation13], %s115
      %s118 = sshll.u32 %s8, 4
      %s119 = int_to_ptr.vmem [resolvable:$true] %s118
      %121 = dma.vmem_to_smem %s119, 128, [#allocation16], [#allocation13]
    $region37: #{tpu_custom_call.1} parent=1 // pred_fallthru
      _
    // Predicated region
    $region38: #{tpu_custom_call.1} parent=1 // pred_check
      _
    $region39: #{tpu_custom_call.1} parent=1 // pred_check_branch
      %123 = sbr.rel (0) target = $region41
    $region40: #{tpu_custom_call.1} parent=1 // pred_region
      %s125 = ssub.s32 16, 16
      %126 = vsyncadd [#allocation18], %s125
      %s128 = sshll.u32 %s9, 4
      %s129 = int_to_ptr.vmem [resolvable:$true] %s128
      %131 = dma.vmem_to_smem %s129, 16, [#allocation17], [#allocation18]
    $region41: #{tpu_custom_call.1} parent=1 // pred_fallthru
      _
    // Predicated region
    $region42: #{tpu_custom_call.1} parent=1 // pred_check
      _
    $region43: #{tpu_custom_call.1} parent=1 // pred_check_branch
      %133 = sbr.rel (0) target = $region45
    $region44: #{tpu_custom_call.1} parent=1 // pred_region
      _
    $region45: #{tpu_custom_call.1} parent=1 // pred_fallthru
      _
    // Predicated region
    $region46: #{tpu_custom_call.1} parent=1 // pred_check
      _
    $region47: #{tpu_custom_call.1} parent=1 // pred_check_branch
      %135 = sbr.rel (0) target = $region49
    $region48: #{tpu_custom_call.1} parent=1 // pred_region
      _
    $region49: #{tpu_custom_call.1} parent=1 // pred_fallthru
      _
    // Predicated region
    $region50: #{tpu_custom_call.1} parent=1 // pred_check
      _
    $region51: #{tpu_custom_call.1} parent=1 // pred_check_branch
      %137 = sbr.rel (0) target = $region53
    $region52: #{tpu_custom_call.1} parent=1 // pred_region
      %138 = dma.done [#allocation3], 768
    $region53: #{tpu_custom_call.1} parent=1 // pred_fallthru
      _
    // Predicated region
    $region54: #{tpu_custom_call.1} parent=1 // pred_check
      _
    $region55: #{tpu_custom_call.1} parent=1 // pred_check_branch
      %140 = sbr.rel (0) target = $region57
    $region56: #{tpu_custom_call.1} parent=1 // pred_region
      %141 = dma.done [#allocation6], 384
    $region57: #{tpu_custom_call.1} parent=1 // pred_fallthru
      _
    // Predicated region
    $region58: #{tpu_custom_call.1} parent=1 // pred_check
      _
    $region59: #{tpu_custom_call.1} parent=1 // pred_check_branch
      %143 = sbr.rel (0) target = $region61
    $region60: #{tpu_custom_call.1} parent=1 // pred_region
      %144 = dma.done [#allocation4], 128
    $region61: #{tpu_custom_call.1} parent=1 // pred_fallthru
      _
    // Predicated region
    $region62: #{tpu_custom_call.1} parent=1 // pred_check
      _
    $region63: #{tpu_custom_call.1} parent=1 // pred_check_branch
      %146 = sbr.rel (0) target = $region65
    $region64: #{tpu_custom_call.1} parent=1 // pred_region
      %147 = dma.done [#allocation9], 16
    $region65: #{tpu_custom_call.1} parent=1 // pred_fallthru
      _
    // Predicated region
    $region66: #{tpu_custom_call.1} parent=1 // pred_check
      _
    $region67: #{tpu_custom_call.1} parent=1 // pred_check_branch
      %149 = sbr.rel (0) target = $region69
    $region68: #{tpu_custom_call.1} parent=1 // pred_region
      %150 = dma.done [#allocation6], 1024
    $region69: #{tpu_custom_call.1} parent=1 // pred_fallthru
      _
    // Predicated region
    $region70: #{tpu_custom_call.1} parent=1 // pred_check
      _
    $region71: #{tpu_custom_call.1} parent=1 // pred_check_branch
      %152 = sbr.rel (0) target = $region73
    $region72: #{tpu_custom_call.1} parent=1 // pred_region
      %153 = dma.done [#allocation9], 128
    $region73: #{tpu_custom_call.1} parent=1 // pred_fallthru
      _
    // Predicated region
    $region74: #{tpu_custom_call.1} parent=1 // pred_check
      _
    $region75: #{tpu_custom_call.1} parent=1 // pred_check_branch
      %155 = sbr.rel (0) target = $region77
    $region76: #{tpu_custom_call.1} parent=1 // pred_region
      %156 = dma.done [#allocation13], 16
    $region77: #{tpu_custom_call.1} parent=1 // pred_fallthru
      _
    // Predicated region
    $region78: #{tpu_custom_call.1} parent=1 // pred_check
      _
    $region79: #{tpu_custom_call.1} parent=1 // pred_check_branch
      %158 = sbr.rel (0) target = $region81
    $region80: #{tpu_custom_call.1} parent=1 // pred_region
      %159 = dma.done [#allocation15], 1024
    $region81: #{tpu_custom_call.1} parent=1 // pred_fallthru
      _
    // Predicated region
    $region82: #{tpu_custom_call.1} parent=1 // pred_check
      _
    $region83: #{tpu_custom_call.1} parent=1 // pred_check_branch
      %161 = sbr.rel (0) target = $region85
    $region84: #{tpu_custom_call.1} parent=1 // pred_region
      %162 = dma.done [#allocation13], 128
    $region85: #{tpu_custom_call.1} parent=1 // pred_fallthru
      _
    // Predicated region
    $region86: #{tpu_custom_call.1} parent=1 // pred_check
      _
    $region87: #{tpu_custom_call.1} parent=1 // pred_check_branch
      %164 = sbr.rel (0) target = $region89
    $region88: #{tpu_custom_call.1} parent=1 // pred_region
      %165 = dma.done [#allocation18], 16
    $region89: #{tpu_custom_call.1} parent=1 // pred_fallthru
      _
    %166 = sfence
    %v167 = vld [vmem:[#allocation2] sm:$0xff]
    %v168 = vld [vmem:[#allocation2 + $0x8] sm:$0xff]
    %v169 = vld [vmem:[#allocation2 + $0x10] sm:$0xff]
    %s170 = scalar_lea.vmem [#allocation2], 24
    %v171 = vld [vmem:[%s170] sm:$0xff]
    %v172 = vld [vmem:[%s170 + $0x8] sm:$0xff]
    %v173 = vld [vmem:[%s170 + $0x10] sm:$0xff]
    %v174 = vld [vmem:[#allocation5] sm:$0xff]
    %v175 = vld [vmem:[#allocation5 + $0x8] sm:$0xff]
    %v176 = vld [vmem:[#allocation5 + $0x10] sm:$0xff]
    %v177 = vadd.f32 %v167, %v174
    %v178 = vadd.f32 %v168, %v175
    %v179 = vadd.f32 %v169, %v176
    %v180 = vmax.f32 %v177, 0.0
    %v181 = vmax.f32 %v178, 0.0
    %v182 = vmax.f32 %v179, 0.0
    %v183 = vadd.f32 %v171, %v174
    %v184 = vadd.f32 %v172, %v175
    %v185 = vadd.f32 %v173, %v176
    %v186 = vmax.f32 %v183, 0.0
    %v187 = vmax.f32 %v184, 0.0
    %v188 = vmax.f32 %v185, 0.0
    %vm189 = vcmask 64512
    %v190 = vsel %vm189, %v180, 0.0
    %191 = vadd.xlane.f32.xlu0 %v190
    %v192 = vpop.xlane.xlu0 %191
    %v193 = vsel %vm189, %v181, 0.0
    %194 = vadd.xlane.f32.xlu0 %v193
    %v195 = vpop.xlane.xlu0 %194
    %v196 = vsel %vm189, %v182, 0.0
    %197 = vadd.xlane.f32.xlu0 %v196
    %v198 = vpop.xlane.xlu0 %197
    %v199 = vrot.slane %v192, 4
    %v200 = vadd.f32 %v192, %v199
    %v201 = vrot.slane %v200, 2
    %v202 = vadd.f32 %v200, %v201
    %v203 = vrot.slane %v202, 1
    %v204 = vadd.f32 %v202, %v203
    %v205 = vrot.slane %v195, 4
    %v206 = vadd.f32 %v195, %v205
    %v207 = vrot.slane %v206, 2
    %v208 = vadd.f32 %v206, %v207
    %v209 = vrot.slane %v208, 1
    %v210 = vadd.f32 %v208, %v209
    %v211 = vrot.slane %v198, 4
    %v212 = vadd.f32 %v198, %v211
    %v213 = vrot.slane %v212, 2
    %v214 = vadd.f32 %v212, %v213
    %v215 = vrot.slane %v214, 1
    %v216 = vadd.f32 %v214, %v215
    %v217 = vmul.f32 %v180, %v180
    %v218 = vmul.f32 %v181, %v181
    %v219 = vmul.f32 %v182, %v182
    %v220 = vsel %vm189, %v217, 0.0
    %221 = vadd.xlane.f32.xlu0 %v220
    %v222 = vpop.xlane.xlu0 %221
    %v223 = vsel %vm189, %v218, 0.0
    %224 = vadd.xlane.f32.xlu0 %v223
    %v225 = vpop.xlane.xlu0 %224
    %v226 = vsel %vm189, %v219, 0.0
    %227 = vadd.xlane.f32.xlu0 %v226
    %v228 = vpop.xlane.xlu0 %227
    %v229 = vrot.slane %v222, 4
    %v230 = vadd.f32 %v222, %v229
    %v231 = vrot.slane %v230, 2
    %v232 = vadd.f32 %v230, %v231
    %v233 = vrot.slane %v232, 1
    %v234 = vadd.f32 %v232, %v233
    %v235 = vrot.slane %v225, 4
    %v236 = vadd.f32 %v225, %v235
    %v237 = vrot.slane %v236, 2
    %v238 = vadd.f32 %v236, %v237
    %v239 = vrot.slane %v238, 1
    %v240 = vadd.f32 %v238, %v239
    %v241 = vrot.slane %v228, 4
    %v242 = vadd.f32 %v228, %v241
    %v243 = vrot.slane %v242, 2
    %v244 = vadd.f32 %v242, %v243
    %v245 = vrot.slane %v244, 1
    %v246 = vadd.f32 %v244, %v245
    %v247 = vsel %vm189, %v186, 0.0
    %248 = vadd.xlane.f32.xlu0 %v247
    %v249 = vpop.xlane.xlu0 %248
    %v250 = vsel %vm189, %v187, 0.0
    %251 = vadd.xlane.f32.xlu0 %v250
    %v252 = vpop.xlane.xlu0 %251
    %v253 = vsel %vm189, %v188, 0.0
    %254 = vadd.xlane.f32.xlu0 %v253
    %v255 = vpop.xlane.xlu0 %254
    %v256 = vrot.slane %v249, 4
    %v257 = vadd.f32 %v249, %v256
    %v258 = vrot.slane %v257, 2
    %v259 = vadd.f32 %v257, %v258
    %v260 = vrot.slane %v259, 1
    %v261 = vadd.f32 %v259, %v260
    %v262 = vrot.slane %v252, 4
    %v263 = vadd.f32 %v252, %v262
    %v264 = vrot.slane %v263, 2
    %v265 = vadd.f32 %v263, %v264
    %v266 = vrot.slane %v265, 1
    %v267 = vadd.f32 %v265, %v266
    %v268 = vrot.slane %v255, 4
    %v269 = vadd.f32 %v255, %v268
    %v270 = vrot.slane %v269, 2
    %v271 = vadd.f32 %v269, %v270
    %v272 = vrot.slane %v271, 1
    %v273 = vadd.f32 %v271, %v272
    %v274 = vadd.f32 %v204, %v261
    %v275 = vadd.f32 %v210, %v267
    %v276 = vadd.f32 %v216, %v273
    %v277 = vmul.f32 %v186, %v186
    %v278 = vmul.f32 %v187, %v187
    %v279 = vmul.f32 %v188, %v188
    %v280 = vsel %vm189, %v277, 0.0
    %281 = vadd.xlane.f32.xlu0 %v280
    %v282 = vpop.xlane.xlu0 %281
    %v283 = vsel %vm189, %v278, 0.0
    %284 = vadd.xlane.f32.xlu0 %v283
    %v285 = vpop.xlane.xlu0 %284
    %v286 = vsel %vm189, %v279, 0.0
    %287 = vadd.xlane.f32.xlu0 %v286
    %v288 = vpop.xlane.xlu0 %287
    %v289 = vrot.slane %v282, 4
    %v290 = vadd.f32 %v282, %v289
    %v291 = vrot.slane %v290, 2
    %v292 = vadd.f32 %v290, %v291
    %v293 = vrot.slane %v292, 1
    %v294 = vadd.f32 %v292, %v293
    %v295 = vrot.slane %v285, 4
    %v296 = vadd.f32 %v285, %v295
    %v297 = vrot.slane %v296, 2
    %v298 = vadd.f32 %v296, %v297
    %v299 = vrot.slane %v298, 1
    %v300 = vadd.f32 %v298, %v299
    %v301 = vrot.slane %v288, 4
    %v302 = vadd.f32 %v288, %v301
    %v303 = vrot.slane %v302, 2
    %v304 = vadd.f32 %v302, %v303
    %v305 = vrot.slane %v304, 1
    %v306 = vadd.f32 %v304, %v305
    %v307 = vadd.f32 %v234, %v294
    %v308 = vadd.f32 %v240, %v300
    %v309 = vadd.f32 %v246, %v306
    %v310 = vmul.f32 %v274, 0.0078125
    %v311 = vmul.f32 %v275, 0.0078125
    %v312 = vmul.f32 %v276, 0.0078125
    %v313 = vmul.f32 %v307, 0.0078125
    %v314 = vmul.f32 %v308, 0.0078125
    %v315 = vmul.f32 %v309, 0.0078125
    %v316 = vmul.f32 %v310, %v310
    %v317 = vmul.f32 %v311, %v311
    %v318 = vmul.f32 %v312, %v312
    %v319 = vsub.f32 %v313, %v316
    %v320 = vsub.f32 %v314, %v317
    %v321 = vsub.f32 %v315, %v318
    %v322 = vadd.f32 %v319, 1e-05
    %v323 = vadd.f32 %v320, 1e-05
    %v324 = vadd.f32 %v321, 1e-05
    %v325 = vrsqrt.pop %v322
    %v326 = vrsqrt.pop %v323
    %v327 = vrsqrt.pop %v324
    %v328 = vsub.f32 %v180, %v310
    %v329 = vsub.f32 %v181, %v311
    %v330 = vsub.f32 %v182, %v312
    %v331 = vmul.f32 %v328, %v325
    %v332 = vmul.f32 %v329, %v326
    %v333 = vmul.f32 %v330, %v327
    %s334 = sld [smem:[#allocation7]]
    %v335 = vstv %s334
    %v336 = vmul.f32 %v331, %v335
    %s337 = sld [smem:[#allocation7 + $0x1]]
    %v338 = vstv %s337
    %v339 = vmul.f32 %v332, %v338
    %v340 = vadd.f32 %v336, %v339
    %s341 = sld [smem:[#allocation7 + $0x2]]
    %v342 = vstv %s341
    %v343 = vmul.f32 %v333, %v342
    %v344 = vadd.f32 %v340, %v343
    %s345 = sld [smem:[#allocation8]]
    %v346 = vstv %s345
    %v347 = vadd.f32 %v344, %v346
    %s348 = sld [smem:[#allocation7 + $0x80]]
    %v349 = vstv %s348
    %v350 = vmul.f32 %v331, %v349
    %s351 = sld [smem:[#allocation7 + $0x81]]
    %v352 = vstv %s351
    %v353 = vmul.f32 %v332, %v352
    %v354 = vadd.f32 %v350, %v353
    %s355 = sld [smem:[#allocation7 + $0x82]]
    %v356 = vstv %s355
    %v357 = vmul.f32 %v333, %v356
    %v358 = vadd.f32 %v354, %v357
    %s359 = sld [smem:[#allocation8 + $0x1]]
    %v360 = vstv %s359
    %v361 = vadd.f32 %v358, %v360
    %s362 = sld [smem:[#allocation7 + $0x100]]
    %v363 = vstv %s362
    %v364 = vmul.f32 %v331, %v363
    %s365 = sld [smem:[#allocation7 + $0x101]]
    %v366 = vstv %s365
    %v367 = vmul.f32 %v332, %v366
    %v368 = vadd.f32 %v364, %v367
    %s369 = sld [smem:[#allocation7 + $0x102]]
    %v370 = vstv %s369
    %v371 = vmul.f32 %v333, %v370
    %v372 = vadd.f32 %v368, %v371
    %s373 = sld [smem:[#allocation8 + $0x2]]
    %v374 = vstv %s373
    %v375 = vadd.f32 %v372, %v374
    %s376 = sld [smem:[#allocation7 + $0x180]]
    %v377 = vstv %s376
    %v378 = vmul.f32 %v331, %v377
    %s379 = sld [smem:[#allocation7 + $0x181]]
    %v380 = vstv %s379
    %v381 = vmul.f32 %v332, %v380
    %v382 = vadd.f32 %v378, %v381
    %s383 = sld [smem:[#allocation7 + $0x182]]
    %v384 = vstv %s383
    %v385 = vmul.f32 %v333, %v384
    %v386 = vadd.f32 %v382, %v385
    %s387 = sld [smem:[#allocation8 + $0x3]]
    %v388 = vstv %s387
    %v389 = vadd.f32 %v386, %v388
    %s390 = sld [smem:[#allocation7 + $0x200]]
    %v391 = vstv %s390
    %v392 = vmul.f32 %v331, %v391
    %s393 = sld [smem:[#allocation7 + $0x201]]
    %v394 = vstv %s393
    %v395 = vmul.f32 %v332, %v394
    %v396 = vadd.f32 %v392, %v395
    %s397 = sld [smem:[#allocation7 + $0x202]]
    %v398 = vstv %s397
    %v399 = vmul.f32 %v333, %v398
    %v400 = vadd.f32 %v396, %v399
    %s401 = sld [smem:[#allocation8 + $0x4]]
    %v402 = vstv %s401
    %v403 = vadd.f32 %v400, %v402
    %s404 = sld [smem:[#allocation7 + $0x280]]
    %v405 = vstv %s404
    %v406 = vmul.f32 %v331, %v405
    %s407 = sld [smem:[#allocation7 + $0x281]]
    %v408 = vstv %s407
    %v409 = vmul.f32 %v332, %v408
    %v410 = vadd.f32 %v406, %v409
    %s411 = sld [smem:[#allocation7 + $0x282]]
    %v412 = vstv %s411
    %v413 = vmul.f32 %v333, %v412
    %v414 = vadd.f32 %v410, %v413
    %s415 = sld [smem:[#allocation8 + $0x5]]
    %v416 = vstv %s415
    %v417 = vadd.f32 %v414, %v416
    %s418 = sld [smem:[#allocation7 + $0x300]]
    %v419 = vstv %s418
    %v420 = vmul.f32 %v331, %v419
    %s421 = sld [smem:[#allocation7 + $0x301]]
    %v422 = vstv %s421
    %v423 = vmul.f32 %v332, %v422
    %v424 = vadd.f32 %v420, %v423
    %s425 = sld [smem:[#allocation7 + $0x302]]
    %v426 = vstv %s425
    %v427 = vmul.f32 %v333, %v426
    %v428 = vadd.f32 %v424, %v427
    %s429 = sld [smem:[#allocation8 + $0x6]]
    %v430 = vstv %s429
    %v431 = vadd.f32 %v428, %v430
    %s432 = sld [smem:[#allocation7 + $0x380]]
    %v433 = vstv %s432
    %v434 = vmul.f32 %v331, %v433
    %s435 = sld [smem:[#allocation7 + $0x381]]
    %v436 = vstv %s435
    %v437 = vmul.f32 %v332, %v436
    %v438 = vadd.f32 %v434, %v437
    %s439 = sld [smem:[#allocation7 + $0x382]]
    %v440 = vstv %s439
    %v441 = vmul.f32 %v333, %v440
    %v442 = vadd.f32 %v438, %v441
    %s443 = sld [smem:[#allocation8 + $0x7]]
    %v444 = vstv %s443
    %v445 = vadd.f32 %v442, %v444
    %v446 = vsub.f32 %v186, %v310
    %v447 = vsub.f32 %v187, %v311
    %v448 = vsub.f32 %v188, %v312
    %v449 = vmul.f32 %v446, %v325
    %v450 = vmul.f32 %v447, %v326
    %v451 = vmul.f32 %v448, %v327
    %v452 = vmul.f32 %v449, %v335
    %v453 = vmul.f32 %v450, %v338
    %v454 = vadd.f32 %v452, %v453
    %v455 = vmul.f32 %v451, %v342
    %v456 = vadd.f32 %v454, %v455
    %v457 = vadd.f32 %v456, %v346
    %v458 = vmul.f32 %v449, %v349
    %v459 = vmul.f32 %v450, %v352
    %v460 = vadd.f32 %v458, %v459
    %v461 = vmul.f32 %v451, %v356
    %v462 = vadd.f32 %v460, %v461
    %v463 = vadd.f32 %v462, %v360
    %v464 = vmul.f32 %v449, %v363
    %v465 = vmul.f32 %v450, %v366
    %v466 = vadd.f32 %v464, %v465
    %v467 = vmul.f32 %v451, %v370
    %v468 = vadd.f32 %v466, %v467
    %v469 = vadd.f32 %v468, %v374
    %v470 = vmul.f32 %v449, %v377
    %v471 = vmul.f32 %v450, %v380
    %v472 = vadd.f32 %v470, %v471
    %v473 = vmul.f32 %v451, %v384
    %v474 = vadd.f32 %v472, %v473
    %v475 = vadd.f32 %v474, %v388
    %v476 = vmul.f32 %v449, %v391
    %v477 = vmul.f32 %v450, %v394
    %v478 = vadd.f32 %v476, %v477
    %v479 = vmul.f32 %v451, %v398
    %v480 = vadd.f32 %v478, %v479
    %v481 = vadd.f32 %v480, %v402
    %v482 = vmul.f32 %v449, %v405
    %v483 = vmul.f32 %v450, %v408
    %v484 = vadd.f32 %v482, %v483
    %v485 = vmul.f32 %v451, %v412
    %v486 = vadd.f32 %v484, %v485
    %v487 = vadd.f32 %v486, %v416
    %v488 = vmul.f32 %v449, %v419
    %v489 = vmul.f32 %v450, %v422
    %v490 = vadd.f32 %v488, %v489
    %v491 = vmul.f32 %v451, %v426
    %v492 = vadd.f32 %v490, %v491
    %v493 = vadd.f32 %v492, %v430
    %v494 = vmul.f32 %v449, %v433
    %v495 = vmul.f32 %v450, %v436
    %v496 = vadd.f32 %v494, %v495
    %v497 = vmul.f32 %v451, %v440
    %v498 = vadd.f32 %v496, %v497
    %v499 = vadd.f32 %v498, %v444
    %v500 = vld [vmem:[#allocation10] sm:$0xff]
    %v501 = vld [vmem:[#allocation10 + $0x8] sm:$0xff]
    %v502 = vld [vmem:[#allocation10 + $0x10] sm:$0xff]
    %v503 = vld [vmem:[#allocation10 + $0x18] sm:$0xff]
    %v504 = vld [vmem:[#allocation10 + $0x20] sm:$0xff]
    %v505 = vld [vmem:[#allocation10 + $0x28] sm:$0xff]
    %v506 = vld [vmem:[#allocation10 + $0x30] sm:$0xff]
    %v507 = vld [vmem:[#allocation10 + $0x38] sm:$0xff]
    %v508 = vadd.f32 %v347, %v500
    %v509 = vadd.f32 %v361, %v501
    %v510 = vadd.f32 %v375, %v502
    %v511 = vadd.f32 %v389, %v503
    %v512 = vadd.f32 %v403, %v504
    %v513 = vadd.f32 %v417, %v505
    %v514 = vadd.f32 %v431, %v506
    %v515 = vadd.f32 %v445, %v507
    %v516 = vmax.f32 %v508, 0.0
    %v517 = vmax.f32 %v509, 0.0
    %v518 = vmax.f32 %v510, 0.0
    %v519 = vmax.f32 %v511, 0.0
    %v520 = vmax.f32 %v512, 0.0
    %v521 = vmax.f32 %v513, 0.0
    %v522 = vmax.f32 %v514, 0.0
    %v523 = vmax.f32 %v515, 0.0
    %v524 = vadd.f32 %v457, %v500
    %v525 = vadd.f32 %v463, %v501
    %v526 = vadd.f32 %v469, %v502
    %v527 = vadd.f32 %v475, %v503
    %v528 = vadd.f32 %v481, %v504
    %v529 = vadd.f32 %v487, %v505
    %v530 = vadd.f32 %v493, %v506
    %v531 = vadd.f32 %v499, %v507
    %v532 = vmax.f32 %v524, 0.0
    %v533 = vmax.f32 %v525, 0.0
    %v534 = vmax.f32 %v526, 0.0
    %v535 = vmax.f32 %v527, 0.0
    %v536 = vmax.f32 %v528, 0.0
    %v537 = vmax.f32 %v529, 0.0
    %v538 = vmax.f32 %v530, 0.0
    %v539 = vmax.f32 %v531, 0.0
    %v540 = vsel %vm189, %v516, 0.0
    %541 = vadd.xlane.f32.xlu0 %v540
    %v542 = vpop.xlane.xlu0 %541
    %v543 = vsel %vm189, %v517, 0.0
    %544 = vadd.xlane.f32.xlu0 %v543
    %v545 = vpop.xlane.xlu0 %544
    %v546 = vsel %vm189, %v518, 0.0
    %547 = vadd.xlane.f32.xlu0 %v546
    %v548 = vpop.xlane.xlu0 %547
    %v549 = vsel %vm189, %v519, 0.0
    %550 = vadd.xlane.f32.xlu0 %v549
    %v551 = vpop.xlane.xlu0 %550
    %v552 = vsel %vm189, %v520, 0.0
    %553 = vadd.xlane.f32.xlu0 %v552
    %v554 = vpop.xlane.xlu0 %553
    %v555 = vsel %vm189, %v521, 0.0
    %556 = vadd.xlane.f32.xlu0 %v555
    %v557 = vpop.xlane.xlu0 %556
    %v558 = vsel %vm189, %v522, 0.0
    %559 = vadd.xlane.f32.xlu0 %v558
    %v560 = vpop.xlane.xlu0 %559
    %v561 = vsel %vm189, %v523, 0.0
    %562 = vadd.xlane.f32.xlu0 %v561
    %v563 = vpop.xlane.xlu0 %562
    %v564 = vrot.slane %v542, 4
    %v565 = vadd.f32 %v542, %v564
    %v566 = vrot.slane %v565, 2
    %v567 = vadd.f32 %v565, %v566
    %v568 = vrot.slane %v567, 1
    %v569 = vadd.f32 %v567, %v568
    %v570 = vrot.slane %v545, 4
    %v571 = vadd.f32 %v545, %v570
    %v572 = vrot.slane %v571, 2
    %v573 = vadd.f32 %v571, %v572
    %v574 = vrot.slane %v573, 1
    %v575 = vadd.f32 %v573, %v574
    %v576 = vrot.slane %v548, 4
    %v577 = vadd.f32 %v548, %v576
    %v578 = vrot.slane %v577, 2
    %v579 = vadd.f32 %v577, %v578
    %v580 = vrot.slane %v579, 1
    %v581 = vadd.f32 %v579, %v580
    %v582 = vrot.slane %v551, 4
    %v583 = vadd.f32 %v551, %v582
    %v584 = vrot.slane %v583, 2
    %v585 = vadd.f32 %v583, %v584
    %v586 = vrot.slane %v585, 1
    %v587 = vadd.f32 %v585, %v586
    %v588 = vrot.slane %v554, 4
    %v589 = vadd.f32 %v554, %v588
    %v590 = vrot.slane %v589, 2
    %v591 = vadd.f32 %v589, %v590
    %v592 = vrot.slane %v591, 1
    %v593 = vadd.f32 %v591, %v592
    %v594 = vrot.slane %v557, 4
    %v595 = vadd.f32 %v557, %v594
    %v596 = vrot.slane %v595, 2
    %v597 = vadd.f32 %v595, %v596
    %v598 = vrot.slane %v597, 1
    %v599 = vadd.f32 %v597, %v598
    %v600 = vrot.slane %v560, 4
    %v601 = vadd.f32 %v560, %v600
    %v602 = vrot.slane %v601, 2
    %v603 = vadd.f32 %v601, %v602
    %v604 = vrot.slane %v603, 1
    %v605 = vadd.f32 %v603, %v604
    %v606 = vrot.slane %v563, 4
    %v607 = vadd.f32 %v563, %v606
    %v608 = vrot.slane %v607, 2
    %v609 = vadd.f32 %v607, %v608
    %v610 = vrot.slane %v609, 1
    %v611 = vadd.f32 %v609, %v610
    %v612 = vmul.f32 %v516, %v516
    %v613 = vmul.f32 %v517, %v517
    %v614 = vmul.f32 %v518, %v518
    %v615 = vmul.f32 %v519, %v519
    %v616 = vmul.f32 %v520, %v520
    %v617 = vmul.f32 %v521, %v521
    %v618 = vmul.f32 %v522, %v522
    %v619 = vmul.f32 %v523, %v523
    %v620 = vsel %vm189, %v612, 0.0
    %621 = vadd.xlane.f32.xlu0 %v620
    %v622 = vpop.xlane.xlu0 %621
    %v623 = vsel %vm189, %v613, 0.0
    %624 = vadd.xlane.f32.xlu0 %v623
    %v625 = vpop.xlane.xlu0 %624
    %v626 = vsel %vm189, %v614, 0.0
    %627 = vadd.xlane.f32.xlu0 %v626
    %v628 = vpop.xlane.xlu0 %627
    %v629 = vsel %vm189, %v615, 0.0
    %630 = vadd.xlane.f32.xlu0 %v629
    %v631 = vpop.xlane.xlu0 %630
    %v632 = vsel %vm189, %v616, 0.0
    %633 = vadd.xlane.f32.xlu0 %v632
    %v634 = vpop.xlane.xlu0 %633
    %v635 = vsel %vm189, %v617, 0.0
    %636 = vadd.xlane.f32.xlu0 %v635
    %v637 = vpop.xlane.xlu0 %636
    %v638 = vsel %vm189, %v618, 0.0
    %639 = vadd.xlane.f32.xlu0 %v638
    %v640 = vpop.xlane.xlu0 %639
    %v641 = vsel %vm189, %v619, 0.0
    %642 = vadd.xlane.f32.xlu0 %v641
    %v643 = vpop.xlane.xlu0 %642
    %v644 = vrot.slane %v622, 4
    %v645 = vadd.f32 %v622, %v644
    %v646 = vrot.slane %v645, 2
    %v647 = vadd.f32 %v645, %v646
    %v648 = vrot.slane %v647, 1
    %v649 = vadd.f32 %v647, %v648
    %v650 = vrot.slane %v625, 4
    %v651 = vadd.f32 %v625, %v650
    %v652 = vrot.slane %v651, 2
    %v653 = vadd.f32 %v651, %v652
    %v654 = vrot.slane %v653, 1
    %v655 = vadd.f32 %v653, %v654
    %v656 = vrot.slane %v628, 4
    %v657 = vadd.f32 %v628, %v656
    %v658 = vrot.slane %v657, 2
    %v659 = vadd.f32 %v657, %v658
    %v660 = vrot.slane %v659, 1
    %v661 = vadd.f32 %v659, %v660
    %v662 = vrot.slane %v631, 4
    %v663 = vadd.f32 %v631, %v662
    %v664 = vrot.slane %v663, 2
    %v665 = vadd.f32 %v663, %v664
    %v666 = vrot.slane %v665, 1
    %v667 = vadd.f32 %v665, %v666
    %v668 = vrot.slane %v634, 4
    %v669 = vadd.f32 %v634, %v668
    %v670 = vrot.slane %v669, 2
    %v671 = vadd.f32 %v669, %v670
    %v672 = vrot.slane %v671, 1
    %v673 = vadd.f32 %v671, %v672
    %v674 = vrot.slane %v637, 4
    %v675 = vadd.f32 %v637, %v674
    %v676 = vrot.slane %v675, 2
    %v677 = vadd.f32 %v675, %v676
    %v678 = vrot.slane %v677, 1
    %v679 = vadd.f32 %v677, %v678
    %v680 = vrot.slane %v640, 4
    %v681 = vadd.f32 %v640, %v680
    %v682 = vrot.slane %v681, 2
    %v683 = vadd.f32 %v681, %v682
    %v684 = vrot.slane %v683, 1
    %v685 = vadd.f32 %v683, %v684
    %v686 = vrot.slane %v643, 4
    %v687 = vadd.f32 %v643, %v686
    %v688 = vrot.slane %v687, 2
    %v689 = vadd.f32 %v687, %v688
    %v690 = vrot.slane %v689, 1
    %v691 = vadd.f32 %v689, %v690
    %v692 = vsel %vm189, %v532, 0.0
    %693 = vadd.xlane.f32.xlu0 %v692
    %v694 = vpop.xlane.xlu0 %693
    %v695 = vsel %vm189, %v533, 0.0
    %696 = vadd.xlane.f32.xlu0 %v695
    %v697 = vpop.xlane.xlu0 %696
    %v698 = vsel %vm189, %v534, 0.0
    %699 = vadd.xlane.f32.xlu0 %v698
    %v700 = vpop.xlane.xlu0 %699
    %v701 = vsel %vm189, %v535, 0.0
    %702 = vadd.xlane.f32.xlu0 %v701
    %v703 = vpop.xlane.xlu0 %702
    %v704 = vsel %vm189, %v536, 0.0
    %705 = vadd.xlane.f32.xlu0 %v704
    %v706 = vpop.xlane.xlu0 %705
    %v707 = vsel %vm189, %v537, 0.0
    %708 = vadd.xlane.f32.xlu0 %v707
    %v709 = vpop.xlane.xlu0 %708
    %v710 = vsel %vm189, %v538, 0.0
    %711 = vadd.xlane.f32.xlu0 %v710
    %v712 = vpop.xlane.xlu0 %711
    %v713 = vsel %vm189, %v539, 0.0
    %714 = vadd.xlane.f32.xlu0 %v713
    %v715 = vpop.xlane.xlu0 %714
    %v716 = vrot.slane %v694, 4
    %v717 = vadd.f32 %v694, %v716
    %v718 = vrot.slane %v717, 2
    %v719 = vadd.f32 %v717, %v718
    %v720 = vrot.slane %v719, 1
    %v721 = vadd.f32 %v719, %v720
    %v722 = vrot.slane %v697, 4
    %v723 = vadd.f32 %v697, %v722
    %v724 = vrot.slane %v723, 2
    %v725 = vadd.f32 %v723, %v724
    %v726 = vrot.slane %v725, 1
    %v727 = vadd.f32 %v725, %v726
    %v728 = vrot.slane %v700, 4
    %v729 = vadd.f32 %v700, %v728
    %v730 = vrot.slane %v729, 2
    %v731 = vadd.f32 %v729, %v730
    %v732 = vrot.slane %v731, 1
    %v733 = vadd.f32 %v731, %v732
    %v734 = vrot.slane %v703, 4
    %v735 = vadd.f32 %v703, %v734
    %v736 = vrot.slane %v735, 2
    %v737 = vadd.f32 %v735, %v736
    %v738 = vrot.slane %v737, 1
    %v739 = vadd.f32 %v737, %v738
    %v740 = vrot.slane %v706, 4
    %v741 = vadd.f32 %v706, %v740
    %v742 = vrot.slane %v741, 2
    %v743 = vadd.f32 %v741, %v742
    %v744 = vrot.slane %v743, 1
    %v745 = vadd.f32 %v743, %v744
    %v746 = vrot.slane %v709, 4
    %v747 = vadd.f32 %v709, %v746
    %v748 = vrot.slane %v747, 2
    %v749 = vadd.f32 %v747, %v748
    %v750 = vrot.slane %v749, 1
    %v751 = vadd.f32 %v749, %v750
    %v752 = vrot.slane %v712, 4
    %v753 = vadd.f32 %v712, %v752
    %v754 = vrot.slane %v753, 2
    %v755 = vadd.f32 %v753, %v754
    %v756 = vrot.slane %v755, 1
    %v757 = vadd.f32 %v755, %v756
    %v758 = vrot.slane %v715, 4
    %v759 = vadd.f32 %v715, %v758
    %v760 = vrot.slane %v759, 2
    %v761 = vadd.f32 %v759, %v760
    %v762 = vrot.slane %v761, 1
    %v763 = vadd.f32 %v761, %v762
    %v764 = vadd.f32 %v569, %v721
    %v765 = vadd.f32 %v575, %v727
    %v766 = vadd.f32 %v581, %v733
    %v767 = vadd.f32 %v587, %v739
    %v768 = vadd.f32 %v593, %v745
    %v769 = vadd.f32 %v599, %v751
    %v770 = vadd.f32 %v605, %v757
    %v771 = vadd.f32 %v611, %v763
    %v772 = vmul.f32 %v532, %v532
    %v773 = vmul.f32 %v533, %v533
    %v774 = vmul.f32 %v534, %v534
    %v775 = vmul.f32 %v535, %v535
    %v776 = vmul.f32 %v536, %v536
    %v777 = vmul.f32 %v537, %v537
    %v778 = vmul.f32 %v538, %v538
    %v779 = vmul.f32 %v539, %v539
    %v780 = vsel %vm189, %v772, 0.0
    %781 = vadd.xlane.f32.xlu0 %v780
    %v782 = vpop.xlane.xlu0 %781
    %v783 = vsel %vm189, %v773, 0.0
    %784 = vadd.xlane.f32.xlu0 %v783
    %v785 = vpop.xlane.xlu0 %784
    %v786 = vsel %vm189, %v774, 0.0
    %787 = vadd.xlane.f32.xlu0 %v786
    %v788 = vpop.xlane.xlu0 %787
    %v789 = vsel %vm189, %v775, 0.0
    %790 = vadd.xlane.f32.xlu0 %v789
    %v791 = vpop.xlane.xlu0 %790
    %v792 = vsel %vm189, %v776, 0.0
    %793 = vadd.xlane.f32.xlu0 %v792
    %v794 = vpop.xlane.xlu0 %793
    %v795 = vsel %vm189, %v777, 0.0
    %796 = vadd.xlane.f32.xlu0 %v795
    %v797 = vpop.xlane.xlu0 %796
    %v798 = vsel %vm189, %v778, 0.0
    %799 = vadd.xlane.f32.xlu0 %v798
    %v800 = vpop.xlane.xlu0 %799
    %v801 = vsel %vm189, %v779, 0.0
    %802 = vadd.xlane.f32.xlu0 %v801
    %v803 = vpop.xlane.xlu0 %802
    %v804 = vrot.slane %v782, 4
    %v805 = vadd.f32 %v782, %v804
    %v806 = vrot.slane %v805, 2
    %v807 = vadd.f32 %v805, %v806
    %v808 = vrot.slane %v807, 1
    %v809 = vadd.f32 %v807, %v808
    %v810 = vrot.slane %v785, 4
    %v811 = vadd.f32 %v785, %v810
    %v812 = vrot.slane %v811, 2
    %v813 = vadd.f32 %v811, %v812
    %v814 = vrot.slane %v813, 1
    %v815 = vadd.f32 %v813, %v814
    %v816 = vrot.slane %v788, 4
    %v817 = vadd.f32 %v788, %v816
    %v818 = vrot.slane %v817, 2
    %v819 = vadd.f32 %v817, %v818
    %v820 = vrot.slane %v819, 1
    %v821 = vadd.f32 %v819, %v820
    %v822 = vrot.slane %v791, 4
    %v823 = vadd.f32 %v791, %v822
    %v824 = vrot.slane %v823, 2
    %v825 = vadd.f32 %v823, %v824
    %v826 = vrot.slane %v825, 1
    %v827 = vadd.f32 %v825, %v826
    %v828 = vrot.slane %v794, 4
    %v829 = vadd.f32 %v794, %v828
    %v830 = vrot.slane %v829, 2
    %v831 = vadd.f32 %v829, %v830
    %v832 = vrot.slane %v831, 1
    %v833 = vadd.f32 %v831, %v832
    %v834 = vrot.slane %v797, 4
    %v835 = vadd.f32 %v797, %v834
    %v836 = vrot.slane %v835, 2
    %v837 = vadd.f32 %v835, %v836
    %v838 = vrot.slane %v837, 1
    %v839 = vadd.f32 %v837, %v838
    %v840 = vrot.slane %v800, 4
    %v841 = vadd.f32 %v800, %v840
    %v842 = vrot.slane %v841, 2
    %v843 = vadd.f32 %v841, %v842
    %v844 = vrot.slane %v843, 1
    %v845 = vadd.f32 %v843, %v844
    %v846 = vrot.slane %v803, 4
    %v847 = vadd.f32 %v803, %v846
    %v848 = vrot.slane %v847, 2
    %v849 = vadd.f32 %v847, %v848
    %v850 = vrot.slane %v849, 1
    %v851 = vadd.f32 %v849, %v850
    %v852 = vadd.f32 %v649, %v809
    %v853 = vadd.f32 %v655, %v815
    %v854 = vadd.f32 %v661, %v821
    %v855 = vadd.f32 %v667, %v827
    %v856 = vadd.f32 %v673, %v833
    %v857 = vadd.f32 %v679, %v839
    %v858 = vadd.f32 %v685, %v845
    %v859 = vadd.f32 %v691, %v851
    %v860 = vmul.f32 %v764, 0.0078125
    %v861 = vmul.f32 %v765, 0.0078125
    %v862 = vmul.f32 %v766, 0.0078125
    %v863 = vmul.f32 %v767, 0.0078125
    %v864 = vmul.f32 %v768, 0.0078125
    %v865 = vmul.f32 %v769, 0.0078125
    %v866 = vmul.f32 %v770, 0.0078125
    %v867 = vmul.f32 %v771, 0.0078125
    %v868 = vmul.f32 %v852, 0.0078125
    %v869 = vmul.f32 %v853, 0.0078125
    %v870 = vmul.f32 %v854, 0.0078125
    %v871 = vmul.f32 %v855, 0.0078125
    %v872 = vmul.f32 %v856, 0.0078125
    %v873 = vmul.f32 %v857, 0.0078125
    %v874 = vmul.f32 %v858, 0.0078125
    %v875 = vmul.f32 %v859, 0.0078125
    %v876 = vmul.f32 %v860, %v860
    %v877 = vmul.f32 %v861, %v861
    %v878 = vmul.f32 %v862, %v862
    %v879 = vmul.f32 %v863, %v863
    %v880 = vmul.f32 %v864, %v864
    %v881 = vmul.f32 %v865, %v865
    %v882 = vmul.f32 %v866, %v866
    %v883 = vmul.f32 %v867, %v867
    %v884 = vsub.f32 %v868, %v876
    %v885 = vsub.f32 %v869, %v877
    %v886 = vsub.f32 %v870, %v878
    %v887 = vsub.f32 %v871, %v879
    %v888 = vsub.f32 %v872, %v880
    %v889 = vsub.f32 %v873, %v881
    %v890 = vsub.f32 %v874, %v882
    %v891 = vsub.f32 %v875, %v883
    %v892 = vadd.f32 %v884, 1e-05
    %v893 = vadd.f32 %v885, 1e-05
    %v894 = vadd.f32 %v886, 1e-05
    %v895 = vadd.f32 %v887, 1e-05
    %v896 = vadd.f32 %v888, 1e-05
    %v897 = vadd.f32 %v889, 1e-05
    %v898 = vadd.f32 %v890, 1e-05
    %v899 = vadd.f32 %v891, 1e-05
    %v900 = vrsqrt.pop %v892
    %v901 = vrsqrt.pop %v893
    %v902 = vrsqrt.pop %v894
    %v903 = vrsqrt.pop %v895
    %v904 = vrsqrt.pop %v896
    %v905 = vrsqrt.pop %v897
    %v906 = vrsqrt.pop %v898
    %v907 = vrsqrt.pop %v899
    %v908 = vsub.f32 %v516, %v860
    %v909 = vsub.f32 %v517, %v861
    %v910 = vsub.f32 %v518, %v862
    %v911 = vsub.f32 %v519, %v863
    %v912 = vsub.f32 %v520, %v864
    %v913 = vsub.f32 %v521, %v865
    %v914 = vsub.f32 %v522, %v866
    %v915 = vsub.f32 %v523, %v867
    %v916 = vmul.f32 %v908, %v900
    %v917 = vmul.f32 %v909, %v901
    %v918 = vmul.f32 %v910, %v902
    %v919 = vmul.f32 %v911, %v903
    %v920 = vmul.f32 %v912, %v904
    %v921 = vmul.f32 %v913, %v905
    %v922 = vmul.f32 %v914, %v906
    %v923 = vmul.f32 %v915, %v907
    %s924 = sld [smem:[#allocation11]]
    %v925 = vstv %s924
    %v926 = vmul.f32 %v916, %v925
    %s927 = sld [smem:[#allocation11 + $0x1]]
    %v928 = vstv %s927
    %v929 = vmul.f32 %v917, %v928
    %v930 = vadd.f32 %v926, %v929
    %s931 = sld [smem:[#allocation11 + $0x2]]
    %v932 = vstv %s931
    %v933 = vmul.f32 %v918, %v932
    %v934 = vadd.f32 %v930, %v933
    %s935 = sld [smem:[#allocation11 + $0x3]]
    %v936 = vstv %s935
    %v937 = vmul.f32 %v919, %v936
    %v938 = vadd.f32 %v934, %v937
    %s939 = sld [smem:[#allocation11 + $0x4]]
    %v940 = vstv %s939
    %v941 = vmul.f32 %v920, %v940
    %v942 = vadd.f32 %v938, %v941
    %s943 = sld [smem:[#allocation11 + $0x5]]
    %v944 = vstv %s943
    %v945 = vmul.f32 %v921, %v944
    %v946 = vadd.f32 %v942, %v945
    %s947 = sld [smem:[#allocation11 + $0x6]]
    %v948 = vstv %s947
    %v949 = vmul.f32 %v922, %v948
    %v950 = vadd.f32 %v946, %v949
    %s951 = sld [smem:[#allocation11 + $0x7]]
    %v952 = vstv %s951
    %v953 = vmul.f32 %v923, %v952
    %v954 = vadd.f32 %v950, %v953
    %s955 = sld [smem:[#allocation12]]
    %v956 = vstv %s955
    %v957 = vadd.f32 %v954, %v956
    %s958 = sld [smem:[#allocation11 + $0x80]]
    %v959 = vstv %s958
    %v960 = vmul.f32 %v916, %v959
    %s961 = sld [smem:[#allocation11 + $0x81]]
    %v962 = vstv %s961
    %v963 = vmul.f32 %v917, %v962
    %v964 = vadd.f32 %v960, %v963
    %s965 = sld [smem:[#allocation11 + $0x82]]
    %v966 = vstv %s965
    %v967 = vmul.f32 %v918, %v966
    %v968 = vadd.f32 %v964, %v967
    %s969 = sld [smem:[#allocation11 + $0x83]]
    %v970 = vstv %s969
    %v971 = vmul.f32 %v919, %v970
    %v972 = vadd.f32 %v968, %v971
    %s973 = sld [smem:[#allocation11 + $0x84]]
    %v974 = vstv %s973
    %v975 = vmul.f32 %v920, %v974
    %v976 = vadd.f32 %v972, %v975
    %s977 = sld [smem:[#allocation11 + $0x85]]
    %v978 = vstv %s977
    %v979 = vmul.f32 %v921, %v978
    %v980 = vadd.f32 %v976, %v979
    %s981 = sld [smem:[#allocation11 + $0x86]]
    %v982 = vstv %s981
    %v983 = vmul.f32 %v922, %v982
    %v984 = vadd.f32 %v980, %v983
    %s985 = sld [smem:[#allocation11 + $0x87]]
    %v986 = vstv %s985
    %v987 = vmul.f32 %v923, %v986
    %v988 = vadd.f32 %v984, %v987
    %s989 = sld [smem:[#allocation12 + $0x1]]
    %v990 = vstv %s989
    %v991 = vadd.f32 %v988, %v990
    %s992 = sld [smem:[#allocation11 + $0x100]]
    %v993 = vstv %s992
    %v994 = vmul.f32 %v916, %v993
    %s995 = sld [smem:[#allocation11 + $0x101]]
    %v996 = vstv %s995
    %v997 = vmul.f32 %v917, %v996
    %v998 = vadd.f32 %v994, %v997
    %s999 = sld [smem:[#allocation11 + $0x102]]
    %v1000 = vstv %s999
    %v1001 = vmul.f32 %v918, %v1000
    %v1002 = vadd.f32 %v998, %v1001
    %s1003 = sld [smem:[#allocation11 + $0x103]]
    %v1004 = vstv %s1003
    %v1005 = vmul.f32 %v919, %v1004
    %v1006 = vadd.f32 %v1002, %v1005
    %s1007 = sld [smem:[#allocation11 + $0x104]]
    %v1008 = vstv %s1007
    %v1009 = vmul.f32 %v920, %v1008
    %v1010 = vadd.f32 %v1006, %v1009
    %s1011 = sld [smem:[#allocation11 + $0x105]]
    %v1012 = vstv %s1011
    %v1013 = vmul.f32 %v921, %v1012
    %v1014 = vadd.f32 %v1010, %v1013
    %s1015 = sld [smem:[#allocation11 + $0x106]]
    %v1016 = vstv %s1015
    %v1017 = vmul.f32 %v922, %v1016
    %v1018 = vadd.f32 %v1014, %v1017
    %s1019 = sld [smem:[#allocation11 + $0x107]]
    %v1020 = vstv %s1019
    %v1021 = vmul.f32 %v923, %v1020
    %v1022 = vadd.f32 %v1018, %v1021
    %s1023 = sld [smem:[#allocation12 + $0x2]]
    %v1024 = vstv %s1023
    %v1025 = vadd.f32 %v1022, %v1024
    %s1026 = sld [smem:[#allocation11 + $0x180]]
    %v1027 = vstv %s1026
    %v1028 = vmul.f32 %v916, %v1027
    %s1029 = sld [smem:[#allocation11 + $0x181]]
    %v1030 = vstv %s1029
    %v1031 = vmul.f32 %v917, %v1030
    %v1032 = vadd.f32 %v1028, %v1031
    %s1033 = sld [smem:[#allocation11 + $0x182]]
    %v1034 = vstv %s1033
    %v1035 = vmul.f32 %v918, %v1034
    %v1036 = vadd.f32 %v1032, %v1035
    %s1037 = sld [smem:[#allocation11 + $0x183]]
    %v1038 = vstv %s1037
    %v1039 = vmul.f32 %v919, %v1038
    %v1040 = vadd.f32 %v1036, %v1039
    %s1041 = sld [smem:[#allocation11 + $0x184]]
    %v1042 = vstv %s1041
    %v1043 = vmul.f32 %v920, %v1042
    %v1044 = vadd.f32 %v1040, %v1043
    %s1045 = sld [smem:[#allocation11 + $0x185]]
    %v1046 = vstv %s1045
    %v1047 = vmul.f32 %v921, %v1046
    %v1048 = vadd.f32 %v1044, %v1047
    %s1049 = sld [smem:[#allocation11 + $0x186]]
    %v1050 = vstv %s1049
    %v1051 = vmul.f32 %v922, %v1050
    %v1052 = vadd.f32 %v1048, %v1051
    %s1053 = sld [smem:[#allocation11 + $0x187]]
    %v1054 = vstv %s1053
    %v1055 = vmul.f32 %v923, %v1054
    %v1056 = vadd.f32 %v1052, %v1055
    %s1057 = sld [smem:[#allocation12 + $0x3]]
    %v1058 = vstv %s1057
    %v1059 = vadd.f32 %v1056, %v1058
    %s1060 = sld [smem:[#allocation11 + $0x200]]
    %v1061 = vstv %s1060
    %v1062 = vmul.f32 %v916, %v1061
    %s1063 = sld [smem:[#allocation11 + $0x201]]
    %v1064 = vstv %s1063
    %v1065 = vmul.f32 %v917, %v1064
    %v1066 = vadd.f32 %v1062, %v1065
    %s1067 = sld [smem:[#allocation11 + $0x202]]
    %v1068 = vstv %s1067
    %v1069 = vmul.f32 %v918, %v1068
    %v1070 = vadd.f32 %v1066, %v1069
    %s1071 = sld [smem:[#allocation11 + $0x203]]
    %v1072 = vstv %s1071
    %v1073 = vmul.f32 %v919, %v1072
    %v1074 = vadd.f32 %v1070, %v1073
    %s1075 = sld [smem:[#allocation11 + $0x204]]
    %v1076 = vstv %s1075
    %v1077 = vmul.f32 %v920, %v1076
    %v1078 = vadd.f32 %v1074, %v1077
    %s1079 = sld [smem:[#allocation11 + $0x205]]
    %v1080 = vstv %s1079
    %v1081 = vmul.f32 %v921, %v1080
    %v1082 = vadd.f32 %v1078, %v1081
    %s1083 = sld [smem:[#allocation11 + $0x206]]
    %v1084 = vstv %s1083
    %v1085 = vmul.f32 %v922, %v1084
    %v1086 = vadd.f32 %v1082, %v1085
    %s1087 = sld [smem:[#allocation11 + $0x207]]
    %v1088 = vstv %s1087
    %v1089 = vmul.f32 %v923, %v1088
    %v1090 = vadd.f32 %v1086, %v1089
    %s1091 = sld [smem:[#allocation12 + $0x4]]
    %v1092 = vstv %s1091
    %v1093 = vadd.f32 %v1090, %v1092
    %s1094 = sld [smem:[#allocation11 + $0x280]]
    %v1095 = vstv %s1094
    %v1096 = vmul.f32 %v916, %v1095
    %s1097 = sld [smem:[#allocation11 + $0x281]]
    %v1098 = vstv %s1097
    %v1099 = vmul.f32 %v917, %v1098
    %v1100 = vadd.f32 %v1096, %v1099
    %s1101 = sld [smem:[#allocation11 + $0x282]]
    %v1102 = vstv %s1101
    %v1103 = vmul.f32 %v918, %v1102
    %v1104 = vadd.f32 %v1100, %v1103
    %s1105 = sld [smem:[#allocation11 + $0x283]]
    %v1106 = vstv %s1105
    %v1107 = vmul.f32 %v919, %v1106
    %v1108 = vadd.f32 %v1104, %v1107
    %s1109 = sld [smem:[#allocation11 + $0x284]]
    %v1110 = vstv %s1109
    %v1111 = vmul.f32 %v920, %v1110
    %v1112 = vadd.f32 %v1108, %v1111
    %s1113 = sld [smem:[#allocation11 + $0x285]]
    %v1114 = vstv %s1113
    %v1115 = vmul.f32 %v921, %v1114
    %v1116 = vadd.f32 %v1112, %v1115
    %s1117 = sld [smem:[#allocation11 + $0x286]]
    %v1118 = vstv %s1117
    %v1119 = vmul.f32 %v922, %v1118
    %v1120 = vadd.f32 %v1116, %v1119
    %s1121 = sld [smem:[#allocation11 + $0x287]]
    %v1122 = vstv %s1121
    %v1123 = vmul.f32 %v923, %v1122
    %v1124 = vadd.f32 %v1120, %v1123
    %s1125 = sld [smem:[#allocation12 + $0x5]]
    %v1126 = vstv %s1125
    %v1127 = vadd.f32 %v1124, %v1126
    %s1128 = sld [smem:[#allocation11 + $0x300]]
    %v1129 = vstv %s1128
    %v1130 = vmul.f32 %v916, %v1129
    %s1131 = sld [smem:[#allocation11 + $0x301]]
    %v1132 = vstv %s1131
    %v1133 = vmul.f32 %v917, %v1132
    %v1134 = vadd.f32 %v1130, %v1133
    %s1135 = sld [smem:[#allocation11 + $0x302]]
    %v1136 = vstv %s1135
    %v1137 = vmul.f32 %v918, %v1136
    %v1138 = vadd.f32 %v1134, %v1137
    %s1139 = sld [smem:[#allocation11 + $0x303]]
    %v1140 = vstv %s1139
    %v1141 = vmul.f32 %v919, %v1140
    %v1142 = vadd.f32 %v1138, %v1141
    %s1143 = sld [smem:[#allocation11 + $0x304]]
    %v1144 = vstv %s1143
    %v1145 = vmul.f32 %v920, %v1144
    %v1146 = vadd.f32 %v1142, %v1145
    %s1147 = sld [smem:[#allocation11 + $0x305]]
    %v1148 = vstv %s1147
    %v1149 = vmul.f32 %v921, %v1148
    %v1150 = vadd.f32 %v1146, %v1149
    %s1151 = sld [smem:[#allocation11 + $0x306]]
    %v1152 = vstv %s1151
    %v1153 = vmul.f32 %v922, %v1152
    %v1154 = vadd.f32 %v1150, %v1153
    %s1155 = sld [smem:[#allocation11 + $0x307]]
    %v1156 = vstv %s1155
    %v1157 = vmul.f32 %v923, %v1156
    %v1158 = vadd.f32 %v1154, %v1157
    %s1159 = sld [smem:[#allocation12 + $0x6]]
    %v1160 = vstv %s1159
    %v1161 = vadd.f32 %v1158, %v1160
    %s1162 = sld [smem:[#allocation11 + $0x380]]
    %v1163 = vstv %s1162
    %v1164 = vmul.f32 %v916, %v1163
    %s1165 = sld [smem:[#allocation11 + $0x381]]
    %v1166 = vstv %s1165
    %v1167 = vmul.f32 %v917, %v1166
    %v1168 = vadd.f32 %v1164, %v1167
    %s1169 = sld [smem:[#allocation11 + $0x382]]
    %v1170 = vstv %s1169
    %v1171 = vmul.f32 %v918, %v1170
    %v1172 = vadd.f32 %v1168, %v1171
    %s1173 = sld [smem:[#allocation11 + $0x383]]
    %v1174 = vstv %s1173
    %v1175 = vmul.f32 %v919, %v1174
    %v1176 = vadd.f32 %v1172, %v1175
    %s1177 = sld [smem:[#allocation11 + $0x384]]
    %v1178 = vstv %s1177
    %v1179 = vmul.f32 %v920, %v1178
    %v1180 = vadd.f32 %v1176, %v1179
    %s1181 = sld [smem:[#allocation11 + $0x385]]
    %v1182 = vstv %s1181
    %v1183 = vmul.f32 %v921, %v1182
    %v1184 = vadd.f32 %v1180, %v1183
    %s1185 = sld [smem:[#allocation11 + $0x386]]
    %v1186 = vstv %s1185
    %v1187 = vmul.f32 %v922, %v1186
    %v1188 = vadd.f32 %v1184, %v1187
    %s1189 = sld [smem:[#allocation11 + $0x387]]
    %v1190 = vstv %s1189
    %v1191 = vmul.f32 %v923, %v1190
    %v1192 = vadd.f32 %v1188, %v1191
    %s1193 = sld [smem:[#allocation12 + $0x7]]
    %v1194 = vstv %s1193
    %v1195 = vadd.f32 %v1192, %v1194
    %v1196 = vsub.f32 %v532, %v860
    %v1197 = vsub.f32 %v533, %v861
    %v1198 = vsub.f32 %v534, %v862
    %v1199 = vsub.f32 %v535, %v863
    %v1200 = vsub.f32 %v536, %v864
    %v1201 = vsub.f32 %v537, %v865
    %v1202 = vsub.f32 %v538, %v866
    %v1203 = vsub.f32 %v539, %v867
    %v1204 = vmul.f32 %v1196, %v900
    %v1205 = vmul.f32 %v1197, %v901
    %v1206 = vmul.f32 %v1198, %v902
    %v1207 = vmul.f32 %v1199, %v903
    %v1208 = vmul.f32 %v1200, %v904
    %v1209 = vmul.f32 %v1201, %v905
    %v1210 = vmul.f32 %v1202, %v906
    %v1211 = vmul.f32 %v1203, %v907
    %v1212 = vmul.f32 %v1204, %v925
    %v1213 = vmul.f32 %v1205, %v928
    %v1214 = vadd.f32 %v1212, %v1213
    %v1215 = vmul.f32 %v1206, %v932
    %v1216 = vadd.f32 %v1214, %v1215
    %v1217 = vmul.f32 %v1207, %v936
    %v1218 = vadd.f32 %v1216, %v1217
    %v1219 = vmul.f32 %v1208, %v940
    %v1220 = vadd.f32 %v1218, %v1219
    %v1221 = vmul.f32 %v1209, %v944
    %v1222 = vadd.f32 %v1220, %v1221
    %v1223 = vmul.f32 %v1210, %v948
    %v1224 = vadd.f32 %v1222, %v1223
    %v1225 = vmul.f32 %v1211, %v952
    %v1226 = vadd.f32 %v1224, %v1225
    %v1227 = vadd.f32 %v1226, %v956
    %v1228 = vmul.f32 %v1204, %v959
    %v1229 = vmul.f32 %v1205, %v962
    %v1230 = vadd.f32 %v1228, %v1229
    %v1231 = vmul.f32 %v1206, %v966
    %v1232 = vadd.f32 %v1230, %v1231
    %v1233 = vmul.f32 %v1207, %v970
    %v1234 = vadd.f32 %v1232, %v1233
    %v1235 = vmul.f32 %v1208, %v974
    %v1236 = vadd.f32 %v1234, %v1235
    %v1237 = vmul.f32 %v1209, %v978
    %v1238 = vadd.f32 %v1236, %v1237
    %v1239 = vmul.f32 %v1210, %v982
    %v1240 = vadd.f32 %v1238, %v1239
    %v1241 = vmul.f32 %v1211, %v986
    %v1242 = vadd.f32 %v1240, %v1241
    %v1243 = vadd.f32 %v1242, %v990
    %v1244 = vmul.f32 %v1204, %v993
    %v1245 = vmul.f32 %v1205, %v996
    %v1246 = vadd.f32 %v1244, %v1245
    %v1247 = vmul.f32 %v1206, %v1000
    %v1248 = vadd.f32 %v1246, %v1247
    %v1249 = vmul.f32 %v1207, %v1004
    %v1250 = vadd.f32 %v1248, %v1249
    %v1251 = vmul.f32 %v1208, %v1008
    %v1252 = vadd.f32 %v1250, %v1251
    %v1253 = vmul.f32 %v1209, %v1012
    %v1254 = vadd.f32 %v1252, %v1253
    %v1255 = vmul.f32 %v1210, %v1016
    %v1256 = vadd.f32 %v1254, %v1255
    %v1257 = vmul.f32 %v1211, %v1020
    %v1258 = vadd.f32 %v1256, %v1257
    %v1259 = vadd.f32 %v1258, %v1024
    %v1260 = vmul.f32 %v1204, %v1027
    %v1261 = vmul.f32 %v1205, %v1030
    %v1262 = vadd.f32 %v1260, %v1261
    %v1263 = vmul.f32 %v1206, %v1034
    %v1264 = vadd.f32 %v1262, %v1263
    %v1265 = vmul.f32 %v1207, %v1038
    %v1266 = vadd.f32 %v1264, %v1265
    %v1267 = vmul.f32 %v1208, %v1042
    %v1268 = vadd.f32 %v1266, %v1267
    %v1269 = vmul.f32 %v1209, %v1046
    %v1270 = vadd.f32 %v1268, %v1269
    %v1271 = vmul.f32 %v1210, %v1050
    %v1272 = vadd.f32 %v1270, %v1271
    %v1273 = vmul.f32 %v1211, %v1054
    %v1274 = vadd.f32 %v1272, %v1273
    %v1275 = vadd.f32 %v1274, %v1058
    %v1276 = vmul.f32 %v1204, %v1061
    %v1277 = vmul.f32 %v1205, %v1064
    %v1278 = vadd.f32 %v1276, %v1277
    %v1279 = vmul.f32 %v1206, %v1068
    %v1280 = vadd.f32 %v1278, %v1279
    %v1281 = vmul.f32 %v1207, %v1072
    %v1282 = vadd.f32 %v1280, %v1281
    %v1283 = vmul.f32 %v1208, %v1076
    %v1284 = vadd.f32 %v1282, %v1283
    %v1285 = vmul.f32 %v1209, %v1080
    %v1286 = vadd.f32 %v1284, %v1285
    %v1287 = vmul.f32 %v1210, %v1084
    %v1288 = vadd.f32 %v1286, %v1287
    %v1289 = vmul.f32 %v1211, %v1088
    %v1290 = vadd.f32 %v1288, %v1289
    %v1291 = vadd.f32 %v1290, %v1092
    %v1292 = vmul.f32 %v1204, %v1095
    %v1293 = vmul.f32 %v1205, %v1098
    %v1294 = vadd.f32 %v1292, %v1293
    %v1295 = vmul.f32 %v1206, %v1102
    %v1296 = vadd.f32 %v1294, %v1295
    %v1297 = vmul.f32 %v1207, %v1106
    %v1298 = vadd.f32 %v1296, %v1297
    %v1299 = vmul.f32 %v1208, %v1110
    %v1300 = vadd.f32 %v1298, %v1299
    %v1301 = vmul.f32 %v1209, %v1114
    %v1302 = vadd.f32 %v1300, %v1301
    %v1303 = vmul.f32 %v1210, %v1118
    %v1304 = vadd.f32 %v1302, %v1303
    %v1305 = vmul.f32 %v1211, %v1122
    %v1306 = vadd.f32 %v1304, %v1305
    %v1307 = vadd.f32 %v1306, %v1126
    %v1308 = vmul.f32 %v1204, %v1129
    %v1309 = vmul.f32 %v1205, %v1132
    %v1310 = vadd.f32 %v1308, %v1309
    %v1311 = vmul.f32 %v1206, %v1136
    %v1312 = vadd.f32 %v1310, %v1311
    %v1313 = vmul.f32 %v1207, %v1140
    %v1314 = vadd.f32 %v1312, %v1313
    %v1315 = vmul.f32 %v1208, %v1144
    %v1316 = vadd.f32 %v1314, %v1315
    %v1317 = vmul.f32 %v1209, %v1148
    %v1318 = vadd.f32 %v1316, %v1317
    %v1319 = vmul.f32 %v1210, %v1152
    %v1320 = vadd.f32 %v1318, %v1319
    %v1321 = vmul.f32 %v1211, %v1156
    %v1322 = vadd.f32 %v1320, %v1321
    %v1323 = vadd.f32 %v1322, %v1160
    %v1324 = vmul.f32 %v1204, %v1163
    %v1325 = vmul.f32 %v1205, %v1166
    %v1326 = vadd.f32 %v1324, %v1325
    %v1327 = vmul.f32 %v1206, %v1170
    %v1328 = vadd.f32 %v1326, %v1327
    %v1329 = vmul.f32 %v1207, %v1174
    %v1330 = vadd.f32 %v1328, %v1329
    %v1331 = vmul.f32 %v1208, %v1178
    %v1332 = vadd.f32 %v1330, %v1331
    %v1333 = vmul.f32 %v1209, %v1182
    %v1334 = vadd.f32 %v1332, %v1333
    %v1335 = vmul.f32 %v1210, %v1186
    %v1336 = vadd.f32 %v1334, %v1335
    %v1337 = vmul.f32 %v1211, %v1190
    %v1338 = vadd.f32 %v1336, %v1337
    %v1339 = vadd.f32 %v1338, %v1194
    %v1340 = vld [vmem:[#allocation14] sm:$0xff]
    %v1341 = vld [vmem:[#allocation14 + $0x8] sm:$0xff]
    %v1342 = vld [vmem:[#allocation14 + $0x10] sm:$0xff]
    %v1343 = vld [vmem:[#allocation14 + $0x18] sm:$0xff]
    %v1344 = vld [vmem:[#allocation14 + $0x20] sm:$0xff]
    %v1345 = vld [vmem:[#allocation14 + $0x28] sm:$0xff]
    %v1346 = vld [vmem:[#allocation14 + $0x30] sm:$0xff]
    %v1347 = vld [vmem:[#allocation14 + $0x38] sm:$0xff]
    %v1348 = vadd.f32 %v957, %v1340
    %v1349 = vadd.f32 %v991, %v1341
    %v1350 = vadd.f32 %v1025, %v1342
    %v1351 = vadd.f32 %v1059, %v1343
    %v1352 = vadd.f32 %v1093, %v1344
    %v1353 = vadd.f32 %v1127, %v1345
    %v1354 = vadd.f32 %v1161, %v1346
    %v1355 = vadd.f32 %v1195, %v1347
    %v1356 = vmax.f32 %v1348, 0.0
    %v1357 = vmax.f32 %v1349, 0.0
    %v1358 = vmax.f32 %v1350, 0.0
    %v1359 = vmax.f32 %v1351, 0.0
    %v1360 = vmax.f32 %v1352, 0.0
    %v1361 = vmax.f32 %v1353, 0.0
    %v1362 = vmax.f32 %v1354, 0.0
    %v1363 = vmax.f32 %v1355, 0.0
    %v1364 = vadd.f32 %v1227, %v1340
    %v1365 = vadd.f32 %v1243, %v1341
    %v1366 = vadd.f32 %v1259, %v1342
    %v1367 = vadd.f32 %v1275, %v1343
    %v1368 = vadd.f32 %v1291, %v1344
    %v1369 = vadd.f32 %v1307, %v1345
    %v1370 = vadd.f32 %v1323, %v1346
    %v1371 = vadd.f32 %v1339, %v1347
    %v1372 = vmax.f32 %v1364, 0.0
    %v1373 = vmax.f32 %v1365, 0.0
    %v1374 = vmax.f32 %v1366, 0.0
    %v1375 = vmax.f32 %v1367, 0.0
    %v1376 = vmax.f32 %v1368, 0.0
    %v1377 = vmax.f32 %v1369, 0.0
    %v1378 = vmax.f32 %v1370, 0.0
    %v1379 = vmax.f32 %v1371, 0.0
    %v1380 = vsel %vm189, %v1356, 0.0
    %1381 = vadd.xlane.f32.xlu0 %v1380
    %v1382 = vpop.xlane.xlu0 %1381
    %v1383 = vsel %vm189, %v1357, 0.0
    %1384 = vadd.xlane.f32.xlu0 %v1383
    %v1385 = vpop.xlane.xlu0 %1384
    %v1386 = vsel %vm189, %v1358, 0.0
    %1387 = vadd.xlane.f32.xlu0 %v1386
    %v1388 = vpop.xlane.xlu0 %1387
    %v1389 = vsel %vm189, %v1359, 0.0
    %1390 = vadd.xlane.f32.xlu0 %v1389
    %v1391 = vpop.xlane.xlu0 %1390
    %v1392 = vsel %vm189, %v1360, 0.0
    %1393 = vadd.xlane.f32.xlu0 %v1392
    %v1394 = vpop.xlane.xlu0 %1393
    %v1395 = vsel %vm189, %v1361, 0.0
    %1396 = vadd.xlane.f32.xlu0 %v1395
    %v1397 = vpop.xlane.xlu0 %1396
    %v1398 = vsel %vm189, %v1362, 0.0
    %1399 = vadd.xlane.f32.xlu0 %v1398
    %v1400 = vpop.xlane.xlu0 %1399
    %v1401 = vsel %vm189, %v1363, 0.0
    %1402 = vadd.xlane.f32.xlu0 %v1401
    %v1403 = vpop.xlane.xlu0 %1402
    %v1404 = vrot.slane %v1382, 4
    %v1405 = vadd.f32 %v1382, %v1404
    %v1406 = vrot.slane %v1405, 2
    %v1407 = vadd.f32 %v1405, %v1406
    %v1408 = vrot.slane %v1407, 1
    %v1409 = vadd.f32 %v1407, %v1408
    %v1410 = vrot.slane %v1385, 4
    %v1411 = vadd.f32 %v1385, %v1410
    %v1412 = vrot.slane %v1411, 2
    %v1413 = vadd.f32 %v1411, %v1412
    %v1414 = vrot.slane %v1413, 1
    %v1415 = vadd.f32 %v1413, %v1414
    %v1416 = vrot.slane %v1388, 4
    %v1417 = vadd.f32 %v1388, %v1416
    %v1418 = vrot.slane %v1417, 2
    %v1419 = vadd.f32 %v1417, %v1418
    %v1420 = vrot.slane %v1419, 1
    %v1421 = vadd.f32 %v1419, %v1420
    %v1422 = vrot.slane %v1391, 4
    %v1423 = vadd.f32 %v1391, %v1422
    %v1424 = vrot.slane %v1423, 2
    %v1425 = vadd.f32 %v1423, %v1424
    %v1426 = vrot.slane %v1425, 1
    %v1427 = vadd.f32 %v1425, %v1426
    %v1428 = vrot.slane %v1394, 4
    %v1429 = vadd.f32 %v1394, %v1428
    %v1430 = vrot.slane %v1429, 2
    %v1431 = vadd.f32 %v1429, %v1430
    %v1432 = vrot.slane %v1431, 1
    %v1433 = vadd.f32 %v1431, %v1432
    %v1434 = vrot.slane %v1397, 4
    %v1435 = vadd.f32 %v1397, %v1434
    %v1436 = vrot.slane %v1435, 2
    %v1437 = vadd.f32 %v1435, %v1436
    %v1438 = vrot.slane %v1437, 1
    %v1439 = vadd.f32 %v1437, %v1438
    %v1440 = vrot.slane %v1400, 4
    %v1441 = vadd.f32 %v1400, %v1440
    %v1442 = vrot.slane %v1441, 2
    %v1443 = vadd.f32 %v1441, %v1442
    %v1444 = vrot.slane %v1443, 1
    %v1445 = vadd.f32 %v1443, %v1444
    %v1446 = vrot.slane %v1403, 4
    %v1447 = vadd.f32 %v1403, %v1446
    %v1448 = vrot.slane %v1447, 2
    %v1449 = vadd.f32 %v1447, %v1448
    %v1450 = vrot.slane %v1449, 1
    %v1451 = vadd.f32 %v1449, %v1450
    %v1452 = vmul.f32 %v1356, %v1356
    %v1453 = vmul.f32 %v1357, %v1357
    %v1454 = vmul.f32 %v1358, %v1358
    %v1455 = vmul.f32 %v1359, %v1359
    %v1456 = vmul.f32 %v1360, %v1360
    %v1457 = vmul.f32 %v1361, %v1361
    %v1458 = vmul.f32 %v1362, %v1362
    %v1459 = vmul.f32 %v1363, %v1363
    %v1460 = vsel %vm189, %v1452, 0.0
    %1461 = vadd.xlane.f32.xlu0 %v1460
    %v1462 = vpop.xlane.xlu0 %1461
    %v1463 = vsel %vm189, %v1453, 0.0
    %1464 = vadd.xlane.f32.xlu0 %v1463
    %v1465 = vpop.xlane.xlu0 %1464
    %v1466 = vsel %vm189, %v1454, 0.0
    %1467 = vadd.xlane.f32.xlu0 %v1466
    %v1468 = vpop.xlane.xlu0 %1467
    %v1469 = vsel %vm189, %v1455, 0.0
    %1470 = vadd.xlane.f32.xlu0 %v1469
    %v1471 = vpop.xlane.xlu0 %1470
    %v1472 = vsel %vm189, %v1456, 0.0
    %1473 = vadd.xlane.f32.xlu0 %v1472
    %v1474 = vpop.xlane.xlu0 %1473
    %v1475 = vsel %vm189, %v1457, 0.0
    %1476 = vadd.xlane.f32.xlu0 %v1475
    %v1477 = vpop.xlane.xlu0 %1476
    %v1478 = vsel %vm189, %v1458, 0.0
    %1479 = vadd.xlane.f32.xlu0 %v1478
    %v1480 = vpop.xlane.xlu0 %1479
    %v1481 = vsel %vm189, %v1459, 0.0
    %1482 = vadd.xlane.f32.xlu0 %v1481
    %v1483 = vpop.xlane.xlu0 %1482
    %v1484 = vrot.slane %v1462, 4
    %v1485 = vadd.f32 %v1462, %v1484
    %v1486 = vrot.slane %v1485, 2
    %v1487 = vadd.f32 %v1485, %v1486
    %v1488 = vrot.slane %v1487, 1
    %v1489 = vadd.f32 %v1487, %v1488
    %v1490 = vrot.slane %v1465, 4
    %v1491 = vadd.f32 %v1465, %v1490
    %v1492 = vrot.slane %v1491, 2
    %v1493 = vadd.f32 %v1491, %v1492
    %v1494 = vrot.slane %v1493, 1
    %v1495 = vadd.f32 %v1493, %v1494
    %v1496 = vrot.slane %v1468, 4
    %v1497 = vadd.f32 %v1468, %v1496
    %v1498 = vrot.slane %v1497, 2
    %v1499 = vadd.f32 %v1497, %v1498
    %v1500 = vrot.slane %v1499, 1
    %v1501 = vadd.f32 %v1499, %v1500
    %v1502 = vrot.slane %v1471, 4
    %v1503 = vadd.f32 %v1471, %v1502
    %v1504 = vrot.slane %v1503, 2
    %v1505 = vadd.f32 %v1503, %v1504
    %v1506 = vrot.slane %v1505, 1
    %v1507 = vadd.f32 %v1505, %v1506
    %v1508 = vrot.slane %v1474, 4
    %v1509 = vadd.f32 %v1474, %v1508
    %v1510 = vrot.slane %v1509, 2
    %v1511 = vadd.f32 %v1509, %v1510
    %v1512 = vrot.slane %v1511, 1
    %v1513 = vadd.f32 %v1511, %v1512
    %v1514 = vrot.slane %v1477, 4
    %v1515 = vadd.f32 %v1477, %v1514
    %v1516 = vrot.slane %v1515, 2
    %v1517 = vadd.f32 %v1515, %v1516
    %v1518 = vrot.slane %v1517, 1
    %v1519 = vadd.f32 %v1517, %v1518
    %v1520 = vrot.slane %v1480, 4
    %v1521 = vadd.f32 %v1480, %v1520
    %v1522 = vrot.slane %v1521, 2
    %v1523 = vadd.f32 %v1521, %v1522
    %v1524 = vrot.slane %v1523, 1
    %v1525 = vadd.f32 %v1523, %v1524
    %v1526 = vrot.slane %v1483, 4
    %v1527 = vadd.f32 %v1483, %v1526
    %v1528 = vrot.slane %v1527, 2
    %v1529 = vadd.f32 %v1527, %v1528
    %v1530 = vrot.slane %v1529, 1
    %v1531 = vadd.f32 %v1529, %v1530
    %v1532 = vsel %vm189, %v1372, 0.0
    %1533 = vadd.xlane.f32.xlu0 %v1532
    %v1534 = vpop.xlane.xlu0 %1533
    %v1535 = vsel %vm189, %v1373, 0.0
    %1536 = vadd.xlane.f32.xlu0 %v1535
    %v1537 = vpop.xlane.xlu0 %1536
    %v1538 = vsel %vm189, %v1374, 0.0
    %1539 = vadd.xlane.f32.xlu0 %v1538
    %v1540 = vpop.xlane.xlu0 %1539
    %v1541 = vsel %vm189, %v1375, 0.0
    %1542 = vadd.xlane.f32.xlu0 %v1541
    %v1543 = vpop.xlane.xlu0 %1542
    %v1544 = vsel %vm189, %v1376, 0.0
    %1545 = vadd.xlane.f32.xlu0 %v1544
    %v1546 = vpop.xlane.xlu0 %1545
    %v1547 = vsel %vm189, %v1377, 0.0
    %1548 = vadd.xlane.f32.xlu0 %v1547
    %v1549 = vpop.xlane.xlu0 %1548
    %v1550 = vsel %vm189, %v1378, 0.0
    %1551 = vadd.xlane.f32.xlu0 %v1550
    %v1552 = vpop.xlane.xlu0 %1551
    %v1553 = vsel %vm189, %v1379, 0.0
    %1554 = vadd.xlane.f32.xlu0 %v1553
    %v1555 = vpop.xlane.xlu0 %1554
    %v1556 = vrot.slane %v1534, 4
    %v1557 = vadd.f32 %v1534, %v1556
    %v1558 = vrot.slane %v1557, 2
    %v1559 = vadd.f32 %v1557, %v1558
    %v1560 = vrot.slane %v1559, 1
    %v1561 = vadd.f32 %v1559, %v1560
    %v1562 = vrot.slane %v1537, 4
    %v1563 = vadd.f32 %v1537, %v1562
    %v1564 = vrot.slane %v1563, 2
    %v1565 = vadd.f32 %v1563, %v1564
    %v1566 = vrot.slane %v1565, 1
    %v1567 = vadd.f32 %v1565, %v1566
    %v1568 = vrot.slane %v1540, 4
    %v1569 = vadd.f32 %v1540, %v1568
    %v1570 = vrot.slane %v1569, 2
    %v1571 = vadd.f32 %v1569, %v1570
    %v1572 = vrot.slane %v1571, 1
    %v1573 = vadd.f32 %v1571, %v1572
    %v1574 = vrot.slane %v1543, 4
    %v1575 = vadd.f32 %v1543, %v1574
    %v1576 = vrot.slane %v1575, 2
    %v1577 = vadd.f32 %v1575, %v1576
    %v1578 = vrot.slane %v1577, 1
    %v1579 = vadd.f32 %v1577, %v1578
    %v1580 = vrot.slane %v1546, 4
    %v1581 = vadd.f32 %v1546, %v1580
    %v1582 = vrot.slane %v1581, 2
    %v1583 = vadd.f32 %v1581, %v1582
    %v1584 = vrot.slane %v1583, 1
    %v1585 = vadd.f32 %v1583, %v1584
    %v1586 = vrot.slane %v1549, 4
    %v1587 = vadd.f32 %v1549, %v1586
    %v1588 = vrot.slane %v1587, 2
    %v1589 = vadd.f32 %v1587, %v1588
    %v1590 = vrot.slane %v1589, 1
    %v1591 = vadd.f32 %v1589, %v1590
    %v1592 = vrot.slane %v1552, 4
    %v1593 = vadd.f32 %v1552, %v1592
    %v1594 = vrot.slane %v1593, 2
    %v1595 = vadd.f32 %v1593, %v1594
    %v1596 = vrot.slane %v1595, 1
    %v1597 = vadd.f32 %v1595, %v1596
    %v1598 = vrot.slane %v1555, 4
    %v1599 = vadd.f32 %v1555, %v1598
    %v1600 = vrot.slane %v1599, 2
    %v1601 = vadd.f32 %v1599, %v1600
    %v1602 = vrot.slane %v1601, 1
    %v1603 = vadd.f32 %v1601, %v1602
    %v1604 = vadd.f32 %v1409, %v1561
    %v1605 = vadd.f32 %v1415, %v1567
    %v1606 = vadd.f32 %v1421, %v1573
    %v1607 = vadd.f32 %v1427, %v1579
    %v1608 = vadd.f32 %v1433, %v1585
    %v1609 = vadd.f32 %v1439, %v1591
    %v1610 = vadd.f32 %v1445, %v1597
    %v1611 = vadd.f32 %v1451, %v1603
    %v1612 = vmul.f32 %v1372, %v1372
    %v1613 = vmul.f32 %v1373, %v1373
    %v1614 = vmul.f32 %v1374, %v1374
    %v1615 = vmul.f32 %v1375, %v1375
    %v1616 = vmul.f32 %v1376, %v1376
    %v1617 = vmul.f32 %v1377, %v1377
    %v1618 = vmul.f32 %v1378, %v1378
    %v1619 = vmul.f32 %v1379, %v1379
    %v1620 = vsel %vm189, %v1612, 0.0
    %1621 = vadd.xlane.f32.xlu0 %v1620
    %v1622 = vpop.xlane.xlu0 %1621
    %v1623 = vsel %vm189, %v1613, 0.0
    %1624 = vadd.xlane.f32.xlu0 %v1623
    %v1625 = vpop.xlane.xlu0 %1624
    %v1626 = vsel %vm189, %v1614, 0.0
    %1627 = vadd.xlane.f32.xlu0 %v1626
    %v1628 = vpop.xlane.xlu0 %1627
    %v1629 = vsel %vm189, %v1615, 0.0
    %1630 = vadd.xlane.f32.xlu0 %v1629
    %v1631 = vpop.xlane.xlu0 %1630
    %v1632 = vsel %vm189, %v1616, 0.0
    %1633 = vadd.xlane.f32.xlu0 %v1632
    %v1634 = vpop.xlane.xlu0 %1633
    %v1635 = vsel %vm189, %v1617, 0.0
    %1636 = vadd.xlane.f32.xlu0 %v1635
    %v1637 = vpop.xlane.xlu0 %1636
    %v1638 = vsel %vm189, %v1618, 0.0
    %1639 = vadd.xlane.f32.xlu0 %v1638
    %v1640 = vpop.xlane.xlu0 %1639
    %v1641 = vsel %vm189, %v1619, 0.0
    %1642 = vadd.xlane.f32.xlu0 %v1641
    %v1643 = vpop.xlane.xlu0 %1642
    %v1644 = vrot.slane %v1622, 4
    %v1645 = vadd.f32 %v1622, %v1644
    %v1646 = vrot.slane %v1645, 2
    %v1647 = vadd.f32 %v1645, %v1646
    %v1648 = vrot.slane %v1647, 1
    %v1649 = vadd.f32 %v1647, %v1648
    %v1650 = vrot.slane %v1625, 4
    %v1651 = vadd.f32 %v1625, %v1650
    %v1652 = vrot.slane %v1651, 2
    %v1653 = vadd.f32 %v1651, %v1652
    %v1654 = vrot.slane %v1653, 1
    %v1655 = vadd.f32 %v1653, %v1654
    %v1656 = vrot.slane %v1628, 4
    %v1657 = vadd.f32 %v1628, %v1656
    %v1658 = vrot.slane %v1657, 2
    %v1659 = vadd.f32 %v1657, %v1658
    %v1660 = vrot.slane %v1659, 1
    %v1661 = vadd.f32 %v1659, %v1660
    %v1662 = vrot.slane %v1631, 4
    %v1663 = vadd.f32 %v1631, %v1662
    %v1664 = vrot.slane %v1663, 2
    %v1665 = vadd.f32 %v1663, %v1664
    %v1666 = vrot.slane %v1665, 1
    %v1667 = vadd.f32 %v1665, %v1666
    %v1668 = vrot.slane %v1634, 4
    %v1669 = vadd.f32 %v1634, %v1668
    %v1670 = vrot.slane %v1669, 2
    %v1671 = vadd.f32 %v1669, %v1670
    %v1672 = vrot.slane %v1671, 1
    %v1673 = vadd.f32 %v1671, %v1672
    %v1674 = vrot.slane %v1637, 4
    %v1675 = vadd.f32 %v1637, %v1674
    %v1676 = vrot.slane %v1675, 2
    %v1677 = vadd.f32 %v1675, %v1676
    %v1678 = vrot.slane %v1677, 1
    %v1679 = vadd.f32 %v1677, %v1678
    %v1680 = vrot.slane %v1640, 4
    %v1681 = vadd.f32 %v1640, %v1680
    %v1682 = vrot.slane %v1681, 2
    %v1683 = vadd.f32 %v1681, %v1682
    %v1684 = vrot.slane %v1683, 1
    %v1685 = vadd.f32 %v1683, %v1684
    %v1686 = vrot.slane %v1643, 4
    %v1687 = vadd.f32 %v1643, %v1686
    %v1688 = vrot.slane %v1687, 2
    %v1689 = vadd.f32 %v1687, %v1688
    %v1690 = vrot.slane %v1689, 1
    %v1691 = vadd.f32 %v1689, %v1690
    %v1692 = vadd.f32 %v1489, %v1649
    %v1693 = vadd.f32 %v1495, %v1655
    %v1694 = vadd.f32 %v1501, %v1661
    %v1695 = vadd.f32 %v1507, %v1667
    %v1696 = vadd.f32 %v1513, %v1673
    %v1697 = vadd.f32 %v1519, %v1679
    %v1698 = vadd.f32 %v1525, %v1685
    %v1699 = vadd.f32 %v1531, %v1691
    %v1700 = vmul.f32 %v1604, 0.0078125
    %v1701 = vmul.f32 %v1605, 0.0078125
    %v1702 = vmul.f32 %v1606, 0.0078125
    %v1703 = vmul.f32 %v1607, 0.0078125
    %v1704 = vmul.f32 %v1608, 0.0078125
    %v1705 = vmul.f32 %v1609, 0.0078125
    %v1706 = vmul.f32 %v1610, 0.0078125
    %v1707 = vmul.f32 %v1611, 0.0078125
    %v1708 = vmul.f32 %v1692, 0.0078125
    %v1709 = vmul.f32 %v1693, 0.0078125
    %v1710 = vmul.f32 %v1694, 0.0078125
    %v1711 = vmul.f32 %v1695, 0.0078125
    %v1712 = vmul.f32 %v1696, 0.0078125
    %v1713 = vmul.f32 %v1697, 0.0078125
    %v1714 = vmul.f32 %v1698, 0.0078125
    %v1715 = vmul.f32 %v1699, 0.0078125
    %v1716 = vmul.f32 %v1700, %v1700
    %v1717 = vmul.f32 %v1701, %v1701
    %v1718 = vmul.f32 %v1702, %v1702
    %v1719 = vmul.f32 %v1703, %v1703
    %v1720 = vmul.f32 %v1704, %v1704
    %v1721 = vmul.f32 %v1705, %v1705
    %v1722 = vmul.f32 %v1706, %v1706
    %v1723 = vmul.f32 %v1707, %v1707
    %v1724 = vsub.f32 %v1708, %v1716
    %v1725 = vsub.f32 %v1709, %v1717
    %v1726 = vsub.f32 %v1710, %v1718
    %v1727 = vsub.f32 %v1711, %v1719
    %v1728 = vsub.f32 %v1712, %v1720
    %v1729 = vsub.f32 %v1713, %v1721
    %v1730 = vsub.f32 %v1714, %v1722
    %v1731 = vsub.f32 %v1715, %v1723
    %v1732 = vadd.f32 %v1724, 1e-05
    %v1733 = vadd.f32 %v1725, 1e-05
    %v1734 = vadd.f32 %v1726, 1e-05
    %v1735 = vadd.f32 %v1727, 1e-05
    %v1736 = vadd.f32 %v1728, 1e-05
    %v1737 = vadd.f32 %v1729, 1e-05
    %v1738 = vadd.f32 %v1730, 1e-05
    %v1739 = vadd.f32 %v1731, 1e-05
    %v1740 = vrsqrt.pop %v1732
    %v1741 = vrsqrt.pop %v1733
    %v1742 = vrsqrt.pop %v1734
    %v1743 = vrsqrt.pop %v1735
    %v1744 = vrsqrt.pop %v1736
    %v1745 = vrsqrt.pop %v1737
    %v1746 = vrsqrt.pop %v1738
    %v1747 = vrsqrt.pop %v1739
    %v1748 = vsub.f32 %v1356, %v1700
    %v1749 = vsub.f32 %v1357, %v1701
    %v1750 = vsub.f32 %v1358, %v1702
    %v1751 = vsub.f32 %v1359, %v1703
    %v1752 = vsub.f32 %v1360, %v1704
    %v1753 = vsub.f32 %v1361, %v1705
    %v1754 = vsub.f32 %v1362, %v1706
    %v1755 = vsub.f32 %v1363, %v1707
    %v1756 = vmul.f32 %v1748, %v1740
    %v1757 = vmul.f32 %v1749, %v1741
    %v1758 = vmul.f32 %v1750, %v1742
    %v1759 = vmul.f32 %v1751, %v1743
    %v1760 = vmul.f32 %v1752, %v1744
    %v1761 = vmul.f32 %v1753, %v1745
    %v1762 = vmul.f32 %v1754, %v1746
    %v1763 = vmul.f32 %v1755, %v1747
    %s1764 = sld [smem:[#allocation16]]
    %v1765 = vstv %s1764
    %v1766 = vmul.f32 %v1756, %v1765
    %s1767 = sld [smem:[#allocation16 + $0x1]]
    %v1768 = vstv %s1767
    %v1769 = vmul.f32 %v1757, %v1768
    %v1770 = vadd.f32 %v1766, %v1769
    %s1771 = sld [smem:[#allocation16 + $0x2]]
    %v1772 = vstv %s1771
    %v1773 = vmul.f32 %v1758, %v1772
    %v1774 = vadd.f32 %v1770, %v1773
    %s1775 = sld [smem:[#allocation16 + $0x3]]
    %v1776 = vstv %s1775
    %v1777 = vmul.f32 %v1759, %v1776
    %v1778 = vadd.f32 %v1774, %v1777
    %s1779 = sld [smem:[#allocation16 + $0x4]]
    %v1780 = vstv %s1779
    %v1781 = vmul.f32 %v1760, %v1780
    %v1782 = vadd.f32 %v1778, %v1781
    %s1783 = sld [smem:[#allocation16 + $0x5]]
    %v1784 = vstv %s1783
    %v1785 = vmul.f32 %v1761, %v1784
    %v1786 = vadd.f32 %v1782, %v1785
    %s1787 = sld [smem:[#allocation16 + $0x6]]
    %v1788 = vstv %s1787
    %v1789 = vmul.f32 %v1762, %v1788
    %v1790 = vadd.f32 %v1786, %v1789
    %s1791 = sld [smem:[#allocation16 + $0x7]]
    %v1792 = vstv %s1791
    %v1793 = vmul.f32 %v1763, %v1792
    %v1794 = vadd.f32 %v1790, %v1793
    %s1795 = sld [smem:[#allocation17]]
    %v1796 = vstv %s1795
    %v1797 = vadd.f32 %v1794, %v1796
    %s1798 = sld [smem:[#allocation16 + $0x80]]
    %v1799 = vstv %s1798
    %v1800 = vmul.f32 %v1756, %v1799
    %s1801 = sld [smem:[#allocation16 + $0x81]]
    %v1802 = vstv %s1801
    %v1803 = vmul.f32 %v1757, %v1802
    %v1804 = vadd.f32 %v1800, %v1803
    %s1805 = sld [smem:[#allocation16 + $0x82]]
    %v1806 = vstv %s1805
    %v1807 = vmul.f32 %v1758, %v1806
    %v1808 = vadd.f32 %v1804, %v1807
    %s1809 = sld [smem:[#allocation16 + $0x83]]
    %v1810 = vstv %s1809
    %v1811 = vmul.f32 %v1759, %v1810
    %v1812 = vadd.f32 %v1808, %v1811
    %s1813 = sld [smem:[#allocation16 + $0x84]]
    %v1814 = vstv %s1813
    %v1815 = vmul.f32 %v1760, %v1814
    %v1816 = vadd.f32 %v1812, %v1815
    %s1817 = sld [smem:[#allocation16 + $0x85]]
    %v1818 = vstv %s1817
    %v1819 = vmul.f32 %v1761, %v1818
    %v1820 = vadd.f32 %v1816, %v1819
    %s1821 = sld [smem:[#allocation16 + $0x86]]
    %v1822 = vstv %s1821
    %v1823 = vmul.f32 %v1762, %v1822
    %v1824 = vadd.f32 %v1820, %v1823
    %s1825 = sld [smem:[#allocation16 + $0x87]]
    %v1826 = vstv %s1825
    %v1827 = vmul.f32 %v1763, %v1826
    %v1828 = vadd.f32 %v1824, %v1827
    %s1829 = sld [smem:[#allocation17 + $0x1]]
    %v1830 = vstv %s1829
    %v1831 = vadd.f32 %v1828, %v1830
    %s1832 = sld [smem:[#allocation16 + $0x100]]
    %v1833 = vstv %s1832
    %v1834 = vmul.f32 %v1756, %v1833
    %s1835 = sld [smem:[#allocation16 + $0x101]]
    %v1836 = vstv %s1835
    %v1837 = vmul.f32 %v1757, %v1836
    %v1838 = vadd.f32 %v1834, %v1837
    %s1839 = sld [smem:[#allocation16 + $0x102]]
    %v1840 = vstv %s1839
    %v1841 = vmul.f32 %v1758, %v1840
    %v1842 = vadd.f32 %v1838, %v1841
    %s1843 = sld [smem:[#allocation16 + $0x103]]
    %v1844 = vstv %s1843
    %v1845 = vmul.f32 %v1759, %v1844
    %v1846 = vadd.f32 %v1842, %v1845
    %s1847 = sld [smem:[#allocation16 + $0x104]]
    %v1848 = vstv %s1847
    %v1849 = vmul.f32 %v1760, %v1848
    %v1850 = vadd.f32 %v1846, %v1849
    %s1851 = sld [smem:[#allocation16 + $0x105]]
    %v1852 = vstv %s1851
    %v1853 = vmul.f32 %v1761, %v1852
    %v1854 = vadd.f32 %v1850, %v1853
    %s1855 = sld [smem:[#allocation16 + $0x106]]
    %v1856 = vstv %s1855
    %v1857 = vmul.f32 %v1762, %v1856
    %v1858 = vadd.f32 %v1854, %v1857
    %s1859 = sld [smem:[#allocation16 + $0x107]]
    %v1860 = vstv %s1859
    %v1861 = vmul.f32 %v1763, %v1860
    %v1862 = vadd.f32 %v1858, %v1861
    %s1863 = sld [smem:[#allocation17 + $0x2]]
    %v1864 = vstv %s1863
    %v1865 = vadd.f32 %v1862, %v1864
    %s1866 = sld [smem:[#allocation16 + $0x180]]
    %v1867 = vstv %s1866
    %v1868 = vmul.f32 %v1756, %v1867
    %s1869 = sld [smem:[#allocation16 + $0x181]]
    %v1870 = vstv %s1869
    %v1871 = vmul.f32 %v1757, %v1870
    %v1872 = vadd.f32 %v1868, %v1871
    %s1873 = sld [smem:[#allocation16 + $0x182]]
    %v1874 = vstv %s1873
    %v1875 = vmul.f32 %v1758, %v1874
    %v1876 = vadd.f32 %v1872, %v1875
    %s1877 = sld [smem:[#allocation16 + $0x183]]
    %v1878 = vstv %s1877
    %v1879 = vmul.f32 %v1759, %v1878
    %v1880 = vadd.f32 %v1876, %v1879
    %s1881 = sld [smem:[#allocation16 + $0x184]]
    %v1882 = vstv %s1881
    %v1883 = vmul.f32 %v1760, %v1882
    %v1884 = vadd.f32 %v1880, %v1883
    %s1885 = sld [smem:[#allocation16 + $0x185]]
    %v1886 = vstv %s1885
    %v1887 = vmul.f32 %v1761, %v1886
    %v1888 = vadd.f32 %v1884, %v1887
    %s1889 = sld [smem:[#allocation16 + $0x186]]
    %v1890 = vstv %s1889
    %v1891 = vmul.f32 %v1762, %v1890
    %v1892 = vadd.f32 %v1888, %v1891
    %s1893 = sld [smem:[#allocation16 + $0x187]]
    %v1894 = vstv %s1893
    %v1895 = vmul.f32 %v1763, %v1894
    %v1896 = vadd.f32 %v1892, %v1895
    %s1897 = sld [smem:[#allocation17 + $0x3]]
    %v1898 = vstv %s1897
    %v1899 = vadd.f32 %v1896, %v1898
    %s1900 = sld [smem:[#allocation16 + $0x200]]
    %v1901 = vstv %s1900
    %v1902 = vmul.f32 %v1756, %v1901
    %s1903 = sld [smem:[#allocation16 + $0x201]]
    %v1904 = vstv %s1903
    %v1905 = vmul.f32 %v1757, %v1904
    %v1906 = vadd.f32 %v1902, %v1905
    %s1907 = sld [smem:[#allocation16 + $0x202]]
    %v1908 = vstv %s1907
    %v1909 = vmul.f32 %v1758, %v1908
    %v1910 = vadd.f32 %v1906, %v1909
    %s1911 = sld [smem:[#allocation16 + $0x203]]
    %v1912 = vstv %s1911
    %v1913 = vmul.f32 %v1759, %v1912
    %v1914 = vadd.f32 %v1910, %v1913
    %s1915 = sld [smem:[#allocation16 + $0x204]]
    %v1916 = vstv %s1915
    %v1917 = vmul.f32 %v1760, %v1916
    %v1918 = vadd.f32 %v1914, %v1917
    %s1919 = sld [smem:[#allocation16 + $0x205]]
    %v1920 = vstv %s1919
    %v1921 = vmul.f32 %v1761, %v1920
    %v1922 = vadd.f32 %v1918, %v1921
    %s1923 = sld [smem:[#allocation16 + $0x206]]
    %v1924 = vstv %s1923
    %v1925 = vmul.f32 %v1762, %v1924
    %v1926 = vadd.f32 %v1922, %v1925
    %s1927 = sld [smem:[#allocation16 + $0x207]]
    %v1928 = vstv %s1927
    %v1929 = vmul.f32 %v1763, %v1928
    %v1930 = vadd.f32 %v1926, %v1929
    %s1931 = sld [smem:[#allocation17 + $0x4]]
    %v1932 = vstv %s1931
    %v1933 = vadd.f32 %v1930, %v1932
    %s1934 = sld [smem:[#allocation16 + $0x280]]
    %v1935 = vstv %s1934
    %v1936 = vmul.f32 %v1756, %v1935
    %s1937 = sld [smem:[#allocation16 + $0x281]]
    %v1938 = vstv %s1937
    %v1939 = vmul.f32 %v1757, %v1938
    %v1940 = vadd.f32 %v1936, %v1939
    %s1941 = sld [smem:[#allocation16 + $0x282]]
    %v1942 = vstv %s1941
    %v1943 = vmul.f32 %v1758, %v1942
    %v1944 = vadd.f32 %v1940, %v1943
    %s1945 = sld [smem:[#allocation16 + $0x283]]
    %v1946 = vstv %s1945
    %v1947 = vmul.f32 %v1759, %v1946
    %v1948 = vadd.f32 %v1944, %v1947
    %s1949 = sld [smem:[#allocation16 + $0x284]]
    %v1950 = vstv %s1949
    %v1951 = vmul.f32 %v1760, %v1950
    %v1952 = vadd.f32 %v1948, %v1951
    %s1953 = sld [smem:[#allocation16 + $0x285]]
    %v1954 = vstv %s1953
    %v1955 = vmul.f32 %v1761, %v1954
    %v1956 = vadd.f32 %v1952, %v1955
    %s1957 = sld [smem:[#allocation16 + $0x286]]
    %v1958 = vstv %s1957
    %v1959 = vmul.f32 %v1762, %v1958
    %v1960 = vadd.f32 %v1956, %v1959
    %s1961 = sld [smem:[#allocation16 + $0x287]]
    %v1962 = vstv %s1961
    %v1963 = vmul.f32 %v1763, %v1962
    %v1964 = vadd.f32 %v1960, %v1963
    %s1965 = sld [smem:[#allocation17 + $0x5]]
    %v1966 = vstv %s1965
    %v1967 = vadd.f32 %v1964, %v1966
    %s1968 = sld [smem:[#allocation16 + $0x300]]
    %v1969 = vstv %s1968
    %v1970 = vmul.f32 %v1756, %v1969
    %s1971 = sld [smem:[#allocation16 + $0x301]]
    %v1972 = vstv %s1971
    %v1973 = vmul.f32 %v1757, %v1972
    %v1974 = vadd.f32 %v1970, %v1973
    %s1975 = sld [smem:[#allocation16 + $0x302]]
    %v1976 = vstv %s1975
    %v1977 = vmul.f32 %v1758, %v1976
    %v1978 = vadd.f32 %v1974, %v1977
    %s1979 = sld [smem:[#allocation16 + $0x303]]
    %v1980 = vstv %s1979
    %v1981 = vmul.f32 %v1759, %v1980
    %v1982 = vadd.f32 %v1978, %v1981
    %s1983 = sld [smem:[#allocation16 + $0x304]]
    %v1984 = vstv %s1983
    %v1985 = vmul.f32 %v1760, %v1984
    %v1986 = vadd.f32 %v1982, %v1985
    %s1987 = sld [smem:[#allocation16 + $0x305]]
    %v1988 = vstv %s1987
    %v1989 = vmul.f32 %v1761, %v1988
    %v1990 = vadd.f32 %v1986, %v1989
    %s1991 = sld [smem:[#allocation16 + $0x306]]
    %v1992 = vstv %s1991
    %v1993 = vmul.f32 %v1762, %v1992
    %v1994 = vadd.f32 %v1990, %v1993
    %s1995 = sld [smem:[#allocation16 + $0x307]]
    %v1996 = vstv %s1995
    %v1997 = vmul.f32 %v1763, %v1996
    %v1998 = vadd.f32 %v1994, %v1997
    %s1999 = sld [smem:[#allocation17 + $0x6]]
    %v2000 = vstv %s1999
    %v2001 = vadd.f32 %v1998, %v2000
    %s2002 = sld [smem:[#allocation16 + $0x380]]
    %v2003 = vstv %s2002
    %v2004 = vmul.f32 %v1756, %v2003
    %s2005 = sld [smem:[#allocation16 + $0x381]]
    %v2006 = vstv %s2005
    %v2007 = vmul.f32 %v1757, %v2006
    %v2008 = vadd.f32 %v2004, %v2007
    %s2009 = sld [smem:[#allocation16 + $0x382]]
    %v2010 = vstv %s2009
    %v2011 = vmul.f32 %v1758, %v2010
    %v2012 = vadd.f32 %v2008, %v2011
    %s2013 = sld [smem:[#allocation16 + $0x383]]
    %v2014 = vstv %s2013
    %v2015 = vmul.f32 %v1759, %v2014
    %v2016 = vadd.f32 %v2012, %v2015
    %s2017 = sld [smem:[#allocation16 + $0x384]]
    %v2018 = vstv %s2017
    %v2019 = vmul.f32 %v1760, %v2018
    %v2020 = vadd.f32 %v2016, %v2019
    %s2021 = sld [smem:[#allocation16 + $0x385]]
    %v2022 = vstv %s2021
    %v2023 = vmul.f32 %v1761, %v2022
    %v2024 = vadd.f32 %v2020, %v2023
    %s2025 = sld [smem:[#allocation16 + $0x386]]
    %v2026 = vstv %s2025
    %v2027 = vmul.f32 %v1762, %v2026
    %v2028 = vadd.f32 %v2024, %v2027
    %s2029 = sld [smem:[#allocation16 + $0x387]]
    %v2030 = vstv %s2029
    %v2031 = vmul.f32 %v1763, %v2030
    %v2032 = vadd.f32 %v2028, %v2031
    %s2033 = sld [smem:[#allocation17 + $0x7]]
    %v2034 = vstv %s2033
    %v2035 = vadd.f32 %v2032, %v2034
    %v2036 = vsub.f32 %v1372, %v1700
    %v2037 = vsub.f32 %v1373, %v1701
    %v2038 = vsub.f32 %v1374, %v1702
    %v2039 = vsub.f32 %v1375, %v1703
    %v2040 = vsub.f32 %v1376, %v1704
    %v2041 = vsub.f32 %v1377, %v1705
    %v2042 = vsub.f32 %v1378, %v1706
    %v2043 = vsub.f32 %v1379, %v1707
    %v2044 = vmul.f32 %v2036, %v1740
    %v2045 = vmul.f32 %v2037, %v1741
    %v2046 = vmul.f32 %v2038, %v1742
    %v2047 = vmul.f32 %v2039, %v1743
    %v2048 = vmul.f32 %v2040, %v1744
    %v2049 = vmul.f32 %v2041, %v1745
    %v2050 = vmul.f32 %v2042, %v1746
    %v2051 = vmul.f32 %v2043, %v1747
    %v2052 = vmul.f32 %v2044, %v1765
    %v2053 = vmul.f32 %v2045, %v1768
    %v2054 = vadd.f32 %v2052, %v2053
    %v2055 = vmul.f32 %v2046, %v1772
    %v2056 = vadd.f32 %v2054, %v2055
    %v2057 = vmul.f32 %v2047, %v1776
    %v2058 = vadd.f32 %v2056, %v2057
    %v2059 = vmul.f32 %v2048, %v1780
    %v2060 = vadd.f32 %v2058, %v2059
    %v2061 = vmul.f32 %v2049, %v1784
    %v2062 = vadd.f32 %v2060, %v2061
    %v2063 = vmul.f32 %v2050, %v1788
    %v2064 = vadd.f32 %v2062, %v2063
    %v2065 = vmul.f32 %v2051, %v1792
    %v2066 = vadd.f32 %v2064, %v2065
    %v2067 = vadd.f32 %v2066, %v1796
    %v2068 = vmul.f32 %v2044, %v1799
    %v2069 = vmul.f32 %v2045, %v1802
    %v2070 = vadd.f32 %v2068, %v2069
    %v2071 = vmul.f32 %v2046, %v1806
    %v2072 = vadd.f32 %v2070, %v2071
    %v2073 = vmul.f32 %v2047, %v1810
    %v2074 = vadd.f32 %v2072, %v2073
    %v2075 = vmul.f32 %v2048, %v1814
    %v2076 = vadd.f32 %v2074, %v2075
    %v2077 = vmul.f32 %v2049, %v1818
    %v2078 = vadd.f32 %v2076, %v2077
    %v2079 = vmul.f32 %v2050, %v1822
    %v2080 = vadd.f32 %v2078, %v2079
    %v2081 = vmul.f32 %v2051, %v1826
    %v2082 = vadd.f32 %v2080, %v2081
    %v2083 = vadd.f32 %v2082, %v1830
    %v2084 = vmul.f32 %v2044, %v1833
    %v2085 = vmul.f32 %v2045, %v1836
    %v2086 = vadd.f32 %v2084, %v2085
    %v2087 = vmul.f32 %v2046, %v1840
    %v2088 = vadd.f32 %v2086, %v2087
    %v2089 = vmul.f32 %v2047, %v1844
    %v2090 = vadd.f32 %v2088, %v2089
    %v2091 = vmul.f32 %v2048, %v1848
    %v2092 = vadd.f32 %v2090, %v2091
    %v2093 = vmul.f32 %v2049, %v1852
    %v2094 = vadd.f32 %v2092, %v2093
    %v2095 = vmul.f32 %v2050, %v1856
    %v2096 = vadd.f32 %v2094, %v2095
    %v2097 = vmul.f32 %v2051, %v1860
    %v2098 = vadd.f32 %v2096, %v2097
    %v2099 = vadd.f32 %v2098, %v1864
    %v2100 = vmul.f32 %v2044, %v1867
    %v2101 = vmul.f32 %v2045, %v1870
    %v2102 = vadd.f32 %v2100, %v2101
    %v2103 = vmul.f32 %v2046, %v1874
    %v2104 = vadd.f32 %v2102, %v2103
    %v2105 = vmul.f32 %v2047, %v1878
    %v2106 = vadd.f32 %v2104, %v2105
    %v2107 = vmul.f32 %v2048, %v1882
    %v2108 = vadd.f32 %v2106, %v2107
    %v2109 = vmul.f32 %v2049, %v1886
    %v2110 = vadd.f32 %v2108, %v2109
    %v2111 = vmul.f32 %v2050, %v1890
    %v2112 = vadd.f32 %v2110, %v2111
    %v2113 = vmul.f32 %v2051, %v1894
    %v2114 = vadd.f32 %v2112, %v2113
    %v2115 = vadd.f32 %v2114, %v1898
    %v2116 = vmul.f32 %v2044, %v1901
    %v2117 = vmul.f32 %v2045, %v1904
    %v2118 = vadd.f32 %v2116, %v2117
    %v2119 = vmul.f32 %v2046, %v1908
    %v2120 = vadd.f32 %v2118, %v2119
    %v2121 = vmul.f32 %v2047, %v1912
    %v2122 = vadd.f32 %v2120, %v2121
    %v2123 = vmul.f32 %v2048, %v1916
    %v2124 = vadd.f32 %v2122, %v2123
    %v2125 = vmul.f32 %v2049, %v1920
    %v2126 = vadd.f32 %v2124, %v2125
    %v2127 = vmul.f32 %v2050, %v1924
    %v2128 = vadd.f32 %v2126, %v2127
    %v2129 = vmul.f32 %v2051, %v1928
    %v2130 = vadd.f32 %v2128, %v2129
    %v2131 = vadd.f32 %v2130, %v1932
    %v2132 = vmul.f32 %v2044, %v1935
    %v2133 = vmul.f32 %v2045, %v1938
    %v2134 = vadd.f32 %v2132, %v2133
    %v2135 = vmul.f32 %v2046, %v1942
    %v2136 = vadd.f32 %v2134, %v2135
    %v2137 = vmul.f32 %v2047, %v1946
    %v2138 = vadd.f32 %v2136, %v2137
    %v2139 = vmul.f32 %v2048, %v1950
    %v2140 = vadd.f32 %v2138, %v2139
    %v2141 = vmul.f32 %v2049, %v1954
    %v2142 = vadd.f32 %v2140, %v2141
    %v2143 = vmul.f32 %v2050, %v1958
    %v2144 = vadd.f32 %v2142, %v2143
    %v2145 = vmul.f32 %v2051, %v1962
    %v2146 = vadd.f32 %v2144, %v2145
    %v2147 = vadd.f32 %v2146, %v1966
    %v2148 = vmul.f32 %v2044, %v1969
    %v2149 = vmul.f32 %v2045, %v1972
    %v2150 = vadd.f32 %v2148, %v2149
    %v2151 = vmul.f32 %v2046, %v1976
    %v2152 = vadd.f32 %v2150, %v2151
    %v2153 = vmul.f32 %v2047, %v1980
    %v2154 = vadd.f32 %v2152, %v2153
    %v2155 = vmul.f32 %v2048, %v1984
    %v2156 = vadd.f32 %v2154, %v2155
    %v2157 = vmul.f32 %v2049, %v1988
    %v2158 = vadd.f32 %v2156, %v2157
    %v2159 = vmul.f32 %v2050, %v1992
    %v2160 = vadd.f32 %v2158, %v2159
    %v2161 = vmul.f32 %v2051, %v1996
    %v2162 = vadd.f32 %v2160, %v2161
    %v2163 = vadd.f32 %v2162, %v2000
    %v2164 = vmul.f32 %v2044, %v2003
    %v2165 = vmul.f32 %v2045, %v2006
    %v2166 = vadd.f32 %v2164, %v2165
    %v2167 = vmul.f32 %v2046, %v2010
    %v2168 = vadd.f32 %v2166, %v2167
    %v2169 = vmul.f32 %v2047, %v2014
    %v2170 = vadd.f32 %v2168, %v2169
    %v2171 = vmul.f32 %v2048, %v2018
    %v2172 = vadd.f32 %v2170, %v2171
    %v2173 = vmul.f32 %v2049, %v2022
    %v2174 = vadd.f32 %v2172, %v2173
    %v2175 = vmul.f32 %v2050, %v2026
    %v2176 = vadd.f32 %v2174, %v2175
    %v2177 = vmul.f32 %v2051, %v2030
    %v2178 = vadd.f32 %v2176, %v2177
    %v2179 = vadd.f32 %v2178, %v2034
    %v2188 = vrot.slane %v1797, 1
    %v2189 = vrot.slane %v1831, 1
    %v2190 = vrot.slane %v1865, 1
    %v2191 = vrot.slane %v1899, 1
    %v2192 = vrot.slane %v1933, 1
    %v2193 = vrot.slane %v1967, 1
    %v2194 = vrot.slane %v2001, 1
    %v2195 = vrot.slane %v2035, 1
    %v2204 = vmax.f32 %v1797, %v2188
    %v2205 = vmax.f32 %v1831, %v2189
    %v2206 = vmax.f32 %v1865, %v2190
    %v2207 = vmax.f32 %v1899, %v2191
    %v2208 = vmax.f32 %v1933, %v2192
    %v2209 = vmax.f32 %v1967, %v2193
    %v2210 = vmax.f32 %v2001, %v2194
    %v2211 = vmax.f32 %v2035, %v2195
    %2220 = vrot.lane.b32.xlu0 %v2204, 127
    %v2221 = vpop.permute.xlu0 %2220
    %2222 = vrot.lane.b32.xlu0 %v2205, 127
    %v2223 = vpop.permute.xlu0 %2222
    %2224 = vrot.lane.b32.xlu0 %v2206, 127
    %v2225 = vpop.permute.xlu0 %2224
    %2226 = vrot.lane.b32.xlu0 %v2207, 127
    %v2227 = vpop.permute.xlu0 %2226
    %2228 = vrot.lane.b32.xlu0 %v2208, 127
    %v2229 = vpop.permute.xlu0 %2228
    %2230 = vrot.lane.b32.xlu0 %v2209, 127
    %v2231 = vpop.permute.xlu0 %2230
    %2232 = vrot.lane.b32.xlu0 %v2210, 127
    %v2233 = vpop.permute.xlu0 %2232
    %2234 = vrot.lane.b32.xlu0 %v2211, 127
    %v2235 = vpop.permute.xlu0 %2234
    %v2244 = vmax.f32 %v2204, %v2221
    %v2245 = vmax.f32 %v2205, %v2223
    %v2246 = vmax.f32 %v2206, %v2225
    %v2247 = vmax.f32 %v2207, %v2227
    %v2248 = vmax.f32 %v2208, %v2229
    %v2249 = vmax.f32 %v2209, %v2231
    %v2250 = vmax.f32 %v2210, %v2233
    %v2251 = vmax.f32 %v2211, %v2235
    %2260 = vrot.lane.b32.xlu0 %v2244, 127
    %v2261 = vpop.permute.xlu0 %2260
    %2262 = vrot.lane.b32.xlu0 %v2245, 127
    %v2263 = vpop.permute.xlu0 %2262
    %2264 = vrot.lane.b32.xlu0 %v2246, 127
    %v2265 = vpop.permute.xlu0 %2264
    %2266 = vrot.lane.b32.xlu0 %v2247, 127
    %v2267 = vpop.permute.xlu0 %2266
    %2268 = vrot.lane.b32.xlu0 %v2248, 127
    %v2269 = vpop.permute.xlu0 %2268
    %2270 = vrot.lane.b32.xlu0 %v2249, 127
    %v2271 = vpop.permute.xlu0 %2270
    %2272 = vrot.lane.b32.xlu0 %v2250, 127
    %v2273 = vpop.permute.xlu0 %2272
    %2274 = vrot.lane.b32.xlu0 %v2251, 127
    %v2275 = vpop.permute.xlu0 %2274
    %2284 = vrot.lane.b32.xlu0 %v2244, 126
    %v2285 = vpop.permute.xlu0 %2284
    %2286 = vrot.lane.b32.xlu0 %v2245, 126
    %v2287 = vpop.permute.xlu0 %2286
    %2288 = vrot.lane.b32.xlu0 %v2246, 126
    %v2289 = vpop.permute.xlu0 %2288
    %2290 = vrot.lane.b32.xlu0 %v2247, 126
    %v2291 = vpop.permute.xlu0 %2290
    %2292 = vrot.lane.b32.xlu0 %v2248, 126
    %v2293 = vpop.permute.xlu0 %2292
    %2294 = vrot.lane.b32.xlu0 %v2249, 126
    %v2295 = vpop.permute.xlu0 %2294
    %2296 = vrot.lane.b32.xlu0 %v2250, 126
    %v2297 = vpop.permute.xlu0 %2296
    %2298 = vrot.lane.b32.xlu0 %v2251, 126
    %v2299 = vpop.permute.xlu0 %2298
    %2308 = vrot.lane.b32.xlu0 %v2244, 125
    %v2309 = vpop.permute.xlu0 %2308
    %2310 = vrot.lane.b32.xlu0 %v2245, 125
    %v2311 = vpop.permute.xlu0 %2310
    %2312 = vrot.lane.b32.xlu0 %v2246, 125
    %v2313 = vpop.permute.xlu0 %2312
    %2314 = vrot.lane.b32.xlu0 %v2247, 125
    %v2315 = vpop.permute.xlu0 %2314
    %2316 = vrot.lane.b32.xlu0 %v2248, 125
    %v2317 = vpop.permute.xlu0 %2316
    %2318 = vrot.lane.b32.xlu0 %v2249, 125
    %v2319 = vpop.permute.xlu0 %2318
    %2320 = vrot.lane.b32.xlu0 %v2250, 125
    %v2321 = vpop.permute.xlu0 %2320
    %2322 = vrot.lane.b32.xlu0 %v2251, 125
    %v2323 = vpop.permute.xlu0 %2322
    %vm2332 = vcmask 7168
    %v2333 = vsel %vm2332, %v2244, %v2261
    %v2334 = vsel %vm2332, %v2245, %v2263
    %v2335 = vsel %vm2332, %v2246, %v2265
    %v2336 = vsel %vm2332, %v2247, %v2267
    %v2337 = vsel %vm2332, %v2248, %v2269
    %v2338 = vsel %vm2332, %v2249, %v2271
    %v2339 = vsel %vm2332, %v2250, %v2273
    %v2340 = vsel %vm2332, %v2251, %v2275
    %vm2341 = vcmask 15360
    %v2342 = vsel %vm2341, %v2333, %v2285
    %v2343 = vsel %vm2341, %v2334, %v2287
    %v2344 = vsel %vm2341, %v2335, %v2289
    %v2345 = vsel %vm2341, %v2336, %v2291
    %v2346 = vsel %vm2341, %v2337, %v2293
    %v2347 = vsel %vm2341, %v2338, %v2295
    %v2348 = vsel %vm2341, %v2339, %v2297
    %v2349 = vsel %vm2341, %v2340, %v2299
    %vm2350 = vcmask 23552
    %v2351 = vsel %vm2350, %v2342, %v2309
    %v2352 = vsel %vm2350, %v2343, %v2311
    %v2353 = vsel %vm2350, %v2344, %v2313
    %v2354 = vsel %vm2350, %v2345, %v2315
    %v2355 = vsel %vm2350, %v2346, %v2317
    %v2356 = vsel %vm2350, %v2347, %v2319
    %v2357 = vsel %vm2350, %v2348, %v2321
    %v2358 = vsel %vm2350, %v2349, %v2323
    %v2367 = vrot.slane %v2351, 1
    %v2368 = vrot.slane %v2352, 1
    %v2369 = vrot.slane %v2353, 1
    %v2370 = vrot.slane %v2354, 1
    %v2371 = vrot.slane %v2355, 1
    %v2372 = vrot.slane %v2356, 1
    %v2373 = vrot.slane %v2357, 1
    %v2374 = vrot.slane %v2358, 1
    %v2383 = vrot.slane %v2351, 2
    %v2384 = vrot.slane %v2352, 2
    %v2385 = vrot.slane %v2353, 2
    %v2386 = vrot.slane %v2354, 2
    %v2387 = vrot.slane %v2355, 2
    %v2388 = vrot.slane %v2356, 2
    %v2389 = vrot.slane %v2357, 2
    %v2390 = vrot.slane %v2358, 2
    %v2399 = vrot.slane %v2351, 3
    %v2400 = vrot.slane %v2352, 3
    %v2401 = vrot.slane %v2353, 3
    %v2402 = vrot.slane %v2354, 3
    %v2403 = vrot.slane %v2355, 3
    %v2404 = vrot.slane %v2356, 3
    %v2405 = vrot.slane %v2357, 3
    %v2406 = vrot.slane %v2358, 3
    %vm2415 = vcmask 1040384
    %v2416 = vsel %vm2415, %v2351, %v2367
    %v2417 = vsel %vm2415, %v2352, %v2368
    %v2418 = vsel %vm2415, %v2353, %v2369
    %v2419 = vsel %vm2415, %v2354, %v2370
    %v2420 = vsel %vm2415, %v2355, %v2371
    %v2421 = vsel %vm2415, %v2356, %v2372
    %v2422 = vsel %vm2415, %v2357, %v2373
    %v2423 = vsel %vm2415, %v2358, %v2374
    %vm2424 = vcmask 1041408
    %v2425 = vsel %vm2424, %v2416, %v2383
    %v2426 = vsel %vm2424, %v2417, %v2384
    %v2427 = vsel %vm2424, %v2418, %v2385
    %v2428 = vsel %vm2424, %v2419, %v2386
    %v2429 = vsel %vm2424, %v2420, %v2387
    %v2430 = vsel %vm2424, %v2421, %v2388
    %v2431 = vsel %vm2424, %v2422, %v2389
    %v2432 = vsel %vm2424, %v2423, %v2390
    %vm2433 = vcmask 1042432
    %v2434 = vsel %vm2433, %v2425, %v2399
    %v2435 = vsel %vm2433, %v2426, %v2400
    %v2436 = vsel %vm2433, %v2427, %v2401
    %v2437 = vsel %vm2433, %v2428, %v2402
    %v2438 = vsel %vm2433, %v2429, %v2403
    %v2439 = vsel %vm2433, %v2430, %v2404
    %v2440 = vsel %vm2433, %v2431, %v2405
    %v2441 = vsel %vm2433, %v2432, %v2406
    %v2450 = vrot.slane %v2067, 1
    %v2451 = vrot.slane %v2083, 1
    %v2452 = vrot.slane %v2099, 1
    %v2453 = vrot.slane %v2115, 1
    %v2454 = vrot.slane %v2131, 1
    %v2455 = vrot.slane %v2147, 1
    %v2456 = vrot.slane %v2163, 1
    %v2457 = vrot.slane %v2179, 1
    %v2466 = vmax.f32 %v2067, %v2450
    %v2467 = vmax.f32 %v2083, %v2451
    %v2468 = vmax.f32 %v2099, %v2452
    %v2469 = vmax.f32 %v2115, %v2453
    %v2470 = vmax.f32 %v2131, %v2454
    %v2471 = vmax.f32 %v2147, %v2455
    %v2472 = vmax.f32 %v2163, %v2456
    %v2473 = vmax.f32 %v2179, %v2457
    %2482 = vrot.lane.b32.xlu0 %v2466, 127
    %v2483 = vpop.permute.xlu0 %2482
    %2484 = vrot.lane.b32.xlu0 %v2467, 127
    %v2485 = vpop.permute.xlu0 %2484
    %2486 = vrot.lane.b32.xlu0 %v2468, 127
    %v2487 = vpop.permute.xlu0 %2486
    %2488 = vrot.lane.b32.xlu0 %v2469, 127
    %v2489 = vpop.permute.xlu0 %2488
    %2490 = vrot.lane.b32.xlu0 %v2470, 127
    %v2491 = vpop.permute.xlu0 %2490
    %2492 = vrot.lane.b32.xlu0 %v2471, 127
    %v2493 = vpop.permute.xlu0 %2492
    %2494 = vrot.lane.b32.xlu0 %v2472, 127
    %v2495 = vpop.permute.xlu0 %2494
    %2496 = vrot.lane.b32.xlu0 %v2473, 127
    %v2497 = vpop.permute.xlu0 %2496
    %v2506 = vmax.f32 %v2466, %v2483
    %v2507 = vmax.f32 %v2467, %v2485
    %v2508 = vmax.f32 %v2468, %v2487
    %v2509 = vmax.f32 %v2469, %v2489
    %v2510 = vmax.f32 %v2470, %v2491
    %v2511 = vmax.f32 %v2471, %v2493
    %v2512 = vmax.f32 %v2472, %v2495
    %v2513 = vmax.f32 %v2473, %v2497
    %2522 = vrot.lane.b32.xlu0 %v2506, 127
    %v2523 = vpop.permute.xlu0 %2522
    %2524 = vrot.lane.b32.xlu0 %v2507, 127
    %v2525 = vpop.permute.xlu0 %2524
    %2526 = vrot.lane.b32.xlu0 %v2508, 127
    %v2527 = vpop.permute.xlu0 %2526
    %2528 = vrot.lane.b32.xlu0 %v2509, 127
    %v2529 = vpop.permute.xlu0 %2528
    %2530 = vrot.lane.b32.xlu0 %v2510, 127
    %v2531 = vpop.permute.xlu0 %2530
    %2532 = vrot.lane.b32.xlu0 %v2511, 127
    %v2533 = vpop.permute.xlu0 %2532
    %2534 = vrot.lane.b32.xlu0 %v2512, 127
    %v2535 = vpop.permute.xlu0 %2534
    %2536 = vrot.lane.b32.xlu0 %v2513, 127
    %v2537 = vpop.permute.xlu0 %2536
    %2546 = vrot.lane.b32.xlu0 %v2506, 126
    %v2547 = vpop.permute.xlu0 %2546
    %2548 = vrot.lane.b32.xlu0 %v2507, 126
    %v2549 = vpop.permute.xlu0 %2548
    %2550 = vrot.lane.b32.xlu0 %v2508, 126
    %v2551 = vpop.permute.xlu0 %2550
    %2552 = vrot.lane.b32.xlu0 %v2509, 126
    %v2553 = vpop.permute.xlu0 %2552
    %2554 = vrot.lane.b32.xlu0 %v2510, 126
    %v2555 = vpop.permute.xlu0 %2554
    %2556 = vrot.lane.b32.xlu0 %v2511, 126
    %v2557 = vpop.permute.xlu0 %2556
    %2558 = vrot.lane.b32.xlu0 %v2512, 126
    %v2559 = vpop.permute.xlu0 %2558
    %2560 = vrot.lane.b32.xlu0 %v2513, 126
    %v2561 = vpop.permute.xlu0 %2560
    %2570 = vrot.lane.b32.xlu0 %v2506, 125
    %v2571 = vpop.permute.xlu0 %2570
    %2572 = vrot.lane.b32.xlu0 %v2507, 125
    %v2573 = vpop.permute.xlu0 %2572
    %2574 = vrot.lane.b32.xlu0 %v2508, 125
    %v2575 = vpop.permute.xlu0 %2574
    %2576 = vrot.lane.b32.xlu0 %v2509, 125
    %v2577 = vpop.permute.xlu0 %2576
    %2578 = vrot.lane.b32.xlu0 %v2510, 125
    %v2579 = vpop.permute.xlu0 %2578
    %2580 = vrot.lane.b32.xlu0 %v2511, 125
    %v2581 = vpop.permute.xlu0 %2580
    %2582 = vrot.lane.b32.xlu0 %v2512, 125
    %v2583 = vpop.permute.xlu0 %2582
    %2584 = vrot.lane.b32.xlu0 %v2513, 125
    %v2585 = vpop.permute.xlu0 %2584
    %v2594 = vsel %vm2332, %v2506, %v2523
    %v2595 = vsel %vm2332, %v2507, %v2525
    %v2596 = vsel %vm2332, %v2508, %v2527
    %v2597 = vsel %vm2332, %v2509, %v2529
    %v2598 = vsel %vm2332, %v2510, %v2531
    %v2599 = vsel %vm2332, %v2511, %v2533
    %v2600 = vsel %vm2332, %v2512, %v2535
    %v2601 = vsel %vm2332, %v2513, %v2537
    %v2602 = vsel %vm2341, %v2594, %v2547
    %v2603 = vsel %vm2341, %v2595, %v2549
    %v2604 = vsel %vm2341, %v2596, %v2551
    %v2605 = vsel %vm2341, %v2597, %v2553
    %v2606 = vsel %vm2341, %v2598, %v2555
    %v2607 = vsel %vm2341, %v2599, %v2557
    %v2608 = vsel %vm2341, %v2600, %v2559
    %v2609 = vsel %vm2341, %v2601, %v2561
    %v2610 = vsel %vm2350, %v2602, %v2571
    %v2611 = vsel %vm2350, %v2603, %v2573
    %v2612 = vsel %vm2350, %v2604, %v2575
    %v2613 = vsel %vm2350, %v2605, %v2577
    %v2614 = vsel %vm2350, %v2606, %v2579
    %v2615 = vsel %vm2350, %v2607, %v2581
    %v2616 = vsel %vm2350, %v2608, %v2583
    %v2617 = vsel %vm2350, %v2609, %v2585
    %v2626 = vrot.slane %v2610, 1
    %v2627 = vrot.slane %v2611, 1
    %v2628 = vrot.slane %v2612, 1
    %v2629 = vrot.slane %v2613, 1
    %v2630 = vrot.slane %v2614, 1
    %v2631 = vrot.slane %v2615, 1
    %v2632 = vrot.slane %v2616, 1
    %v2633 = vrot.slane %v2617, 1
    %v2642 = vrot.slane %v2610, 2
    %v2643 = vrot.slane %v2611, 2
    %v2644 = vrot.slane %v2612, 2
    %v2645 = vrot.slane %v2613, 2
    %v2646 = vrot.slane %v2614, 2
    %v2647 = vrot.slane %v2615, 2
    %v2648 = vrot.slane %v2616, 2
    %v2649 = vrot.slane %v2617, 2
    %v2658 = vrot.slane %v2610, 3
    %v2659 = vrot.slane %v2611, 3
    %v2660 = vrot.slane %v2612, 3
    %v2661 = vrot.slane %v2613, 3
    %v2662 = vrot.slane %v2614, 3
    %v2663 = vrot.slane %v2615, 3
    %v2664 = vrot.slane %v2616, 3
    %v2665 = vrot.slane %v2617, 3
    %v2674 = vsel %vm2415, %v2610, %v2626
    %v2675 = vsel %vm2415, %v2611, %v2627
    %v2676 = vsel %vm2415, %v2612, %v2628
    %v2677 = vsel %vm2415, %v2613, %v2629
    %v2678 = vsel %vm2415, %v2614, %v2630
    %v2679 = vsel %vm2415, %v2615, %v2631
    %v2680 = vsel %vm2415, %v2616, %v2632
    %v2681 = vsel %vm2415, %v2617, %v2633
    %v2682 = vsel %vm2424, %v2674, %v2642
    %v2683 = vsel %vm2424, %v2675, %v2643
    %v2684 = vsel %vm2424, %v2676, %v2644
    %v2685 = vsel %vm2424, %v2677, %v2645
    %v2686 = vsel %vm2424, %v2678, %v2646
    %v2687 = vsel %vm2424, %v2679, %v2647
    %v2688 = vsel %vm2424, %v2680, %v2648
    %v2689 = vsel %vm2424, %v2681, %v2649
    %v2690 = vsel %vm2433, %v2682, %v2658
    %v2691 = vsel %vm2433, %v2683, %v2659
    %v2692 = vsel %vm2433, %v2684, %v2660
    %v2693 = vsel %vm2433, %v2685, %v2661
    %v2694 = vsel %vm2433, %v2686, %v2662
    %v2695 = vsel %vm2433, %v2687, %v2663
    %v2696 = vsel %vm2433, %v2688, %v2664
    %v2697 = vsel %vm2433, %v2689, %v2665
    %v2699 = vrot.slane %v2434, 1
    %2700 = vrot.lane.b32.xlu0 %v2699, 4
    %v2701 = vpop.permute.xlu0 %2700
    %v2703 = vrot.slane %v2434, 2
    %2704 = vrot.lane.b32.xlu0 %v2703, 8
    %v2705 = vpop.permute.xlu0 %2704
    %v2707 = vrot.slane %v2434, 3
    %2708 = vrot.lane.b32.xlu0 %v2707, 12
    %v2709 = vpop.permute.xlu0 %2708
    %vm2711 = vcmask 31744
    %v2712 = vsel %vm2711, %v2434, %v2701
    %v2713 = vsel %vm189, %v2712, %v2705
    %vm2714 = vcmask 97280
    %v2715 = vsel %vm2714, %v2713, %v2709
    %v2717 = vrot.slane %v2435, 1
    %2718 = vrot.lane.b32.xlu0 %v2717, 4
    %v2719 = vpop.permute.xlu0 %2718
    %v2721 = vrot.slane %v2435, 2
    %2722 = vrot.lane.b32.xlu0 %v2721, 8
    %v2723 = vpop.permute.xlu0 %2722
    %v2725 = vrot.slane %v2435, 3
    %2726 = vrot.lane.b32.xlu0 %v2725, 12
    %v2727 = vpop.permute.xlu0 %2726
    %v2729 = vsel %vm2711, %v2435, %v2719
    %v2730 = vsel %vm189, %v2729, %v2723
    %v2731 = vsel %vm2714, %v2730, %v2727
    %v2733 = vrot.slane %v2436, 1
    %2734 = vrot.lane.b32.xlu0 %v2733, 4
    %v2735 = vpop.permute.xlu0 %2734
    %v2737 = vrot.slane %v2436, 2
    %2738 = vrot.lane.b32.xlu0 %v2737, 8
    %v2739 = vpop.permute.xlu0 %2738
    %v2741 = vrot.slane %v2436, 3
    %2742 = vrot.lane.b32.xlu0 %v2741, 12
    %v2743 = vpop.permute.xlu0 %2742
    %v2745 = vsel %vm2711, %v2436, %v2735
    %v2746 = vsel %vm189, %v2745, %v2739
    %v2747 = vsel %vm2714, %v2746, %v2743
    %v2749 = vrot.slane %v2437, 1
    %2750 = vrot.lane.b32.xlu0 %v2749, 4
    %v2751 = vpop.permute.xlu0 %2750
    %v2753 = vrot.slane %v2437, 2
    %2754 = vrot.lane.b32.xlu0 %v2753, 8
    %v2755 = vpop.permute.xlu0 %2754
    %v2757 = vrot.slane %v2437, 3
    %2758 = vrot.lane.b32.xlu0 %v2757, 12
    %v2759 = vpop.permute.xlu0 %2758
    %v2761 = vsel %vm2711, %v2437, %v2751
    %v2762 = vsel %vm189, %v2761, %v2755
    %v2763 = vsel %vm2714, %v2762, %v2759
    %v2765 = vrot.slane %v2438, 1
    %2766 = vrot.lane.b32.xlu0 %v2765, 4
    %v2767 = vpop.permute.xlu0 %2766
    %v2769 = vrot.slane %v2438, 2
    %2770 = vrot.lane.b32.xlu0 %v2769, 8
    %v2771 = vpop.permute.xlu0 %2770
    %v2773 = vrot.slane %v2438, 3
    %2774 = vrot.lane.b32.xlu0 %v2773, 12
    %v2775 = vpop.permute.xlu0 %2774
    %v2777 = vsel %vm2711, %v2438, %v2767
    %v2778 = vsel %vm189, %v2777, %v2771
    %v2779 = vsel %vm2714, %v2778, %v2775
    %v2781 = vrot.slane %v2439, 1
    %2782 = vrot.lane.b32.xlu0 %v2781, 4
    %v2783 = vpop.permute.xlu0 %2782
    %v2785 = vrot.slane %v2439, 2
    %2786 = vrot.lane.b32.xlu0 %v2785, 8
    %v2787 = vpop.permute.xlu0 %2786
    %v2789 = vrot.slane %v2439, 3
    %2790 = vrot.lane.b32.xlu0 %v2789, 12
    %v2791 = vpop.permute.xlu0 %2790
    %v2793 = vsel %vm2711, %v2439, %v2783
    %v2794 = vsel %vm189, %v2793, %v2787
    %v2795 = vsel %vm2714, %v2794, %v2791
    %v2797 = vrot.slane %v2440, 1
    %2798 = vrot.lane.b32.xlu0 %v2797, 4
    %v2799 = vpop.permute.xlu0 %2798
    %v2801 = vrot.slane %v2440, 2
    %2802 = vrot.lane.b32.xlu0 %v2801, 8
    %v2803 = vpop.permute.xlu0 %2802
    %v2805 = vrot.slane %v2440, 3
    %2806 = vrot.lane.b32.xlu0 %v2805, 12
    %v2807 = vpop.permute.xlu0 %2806
    %v2809 = vsel %vm2711, %v2440, %v2799
    %v2810 = vsel %vm189, %v2809, %v2803
    %v2811 = vsel %vm2714, %v2810, %v2807
    %v2813 = vrot.slane %v2441, 1
    %2814 = vrot.lane.b32.xlu0 %v2813, 4
    %v2815 = vpop.permute.xlu0 %2814
    %v2817 = vrot.slane %v2441, 2
    %2818 = vrot.lane.b32.xlu0 %v2817, 8
    %v2819 = vpop.permute.xlu0 %2818
    %v2821 = vrot.slane %v2441, 3
    %2822 = vrot.lane.b32.xlu0 %v2821, 12
    %v2823 = vpop.permute.xlu0 %2822
    %v2825 = vsel %vm2711, %v2441, %v2815
    %v2826 = vsel %vm189, %v2825, %v2819
    %v2827 = vsel %vm2714, %v2826, %v2823
    %v2829 = vrot.slane %v2690, 1
    %2830 = vrot.lane.b32.xlu0 %v2829, 4
    %v2831 = vpop.permute.xlu0 %2830
    %v2833 = vrot.slane %v2690, 2
    %2834 = vrot.lane.b32.xlu0 %v2833, 8
    %v2835 = vpop.permute.xlu0 %2834
    %v2837 = vrot.slane %v2690, 3
    %2838 = vrot.lane.b32.xlu0 %v2837, 12
    %v2839 = vpop.permute.xlu0 %2838
    %v2841 = vsel %vm2711, %v2690, %v2831
    %v2842 = vsel %vm189, %v2841, %v2835
    %v2843 = vsel %vm2714, %v2842, %v2839
    %v2845 = vrot.slane %v2691, 1
    %2846 = vrot.lane.b32.xlu0 %v2845, 4
    %v2847 = vpop.permute.xlu0 %2846
    %v2849 = vrot.slane %v2691, 2
    %2850 = vrot.lane.b32.xlu0 %v2849, 8
    %v2851 = vpop.permute.xlu0 %2850
    %v2853 = vrot.slane %v2691, 3
    %2854 = vrot.lane.b32.xlu0 %v2853, 12
    %v2855 = vpop.permute.xlu0 %2854
    %v2857 = vsel %vm2711, %v2691, %v2847
    %v2858 = vsel %vm189, %v2857, %v2851
    %v2859 = vsel %vm2714, %v2858, %v2855
    %v2861 = vrot.slane %v2692, 1
    %2862 = vrot.lane.b32.xlu0 %v2861, 4
    %v2863 = vpop.permute.xlu0 %2862
    %v2865 = vrot.slane %v2692, 2
    %2866 = vrot.lane.b32.xlu0 %v2865, 8
    %v2867 = vpop.permute.xlu0 %2866
    %v2869 = vrot.slane %v2692, 3
    %2870 = vrot.lane.b32.xlu0 %v2869, 12
    %v2871 = vpop.permute.xlu0 %2870
    %v2873 = vsel %vm2711, %v2692, %v2863
    %v2874 = vsel %vm189, %v2873, %v2867
    %v2875 = vsel %vm2714, %v2874, %v2871
    %v2877 = vrot.slane %v2693, 1
    %2878 = vrot.lane.b32.xlu0 %v2877, 4
    %v2879 = vpop.permute.xlu0 %2878
    %v2881 = vrot.slane %v2693, 2
    %2882 = vrot.lane.b32.xlu0 %v2881, 8
    %v2883 = vpop.permute.xlu0 %2882
    %v2885 = vrot.slane %v2693, 3
    %2886 = vrot.lane.b32.xlu0 %v2885, 12
    %v2887 = vpop.permute.xlu0 %2886
    %v2889 = vsel %vm2711, %v2693, %v2879
    %v2890 = vsel %vm189, %v2889, %v2883
    %v2891 = vsel %vm2714, %v2890, %v2887
    %v2893 = vrot.slane %v2694, 1
    %2894 = vrot.lane.b32.xlu0 %v2893, 4
    %v2895 = vpop.permute.xlu0 %2894
    %v2897 = vrot.slane %v2694, 2
    %2898 = vrot.lane.b32.xlu0 %v2897, 8
    %v2899 = vpop.permute.xlu0 %2898
    %v2901 = vrot.slane %v2694, 3
    %2902 = vrot.lane.b32.xlu0 %v2901, 12
    %v2903 = vpop.permute.xlu0 %2902
    %v2905 = vsel %vm2711, %v2694, %v2895
    %v2906 = vsel %vm189, %v2905, %v2899
    %v2907 = vsel %vm2714, %v2906, %v2903
    %v2909 = vrot.slane %v2695, 1
    %2910 = vrot.lane.b32.xlu0 %v2909, 4
    %v2911 = vpop.permute.xlu0 %2910
    %v2913 = vrot.slane %v2695, 2
    %2914 = vrot.lane.b32.xlu0 %v2913, 8
    %v2915 = vpop.permute.xlu0 %2914
    %v2917 = vrot.slane %v2695, 3
    %2918 = vrot.lane.b32.xlu0 %v2917, 12
    %v2919 = vpop.permute.xlu0 %2918
    %v2921 = vsel %vm2711, %v2695, %v2911
    %v2922 = vsel %vm189, %v2921, %v2915
    %v2923 = vsel %vm2714, %v2922, %v2919
    %v2925 = vrot.slane %v2696, 1
    %2926 = vrot.lane.b32.xlu0 %v2925, 4
    %v2927 = vpop.permute.xlu0 %2926
    %v2929 = vrot.slane %v2696, 2
    %2930 = vrot.lane.b32.xlu0 %v2929, 8
    %v2931 = vpop.permute.xlu0 %2930
    %v2933 = vrot.slane %v2696, 3
    %2934 = vrot.lane.b32.xlu0 %v2933, 12
    %v2935 = vpop.permute.xlu0 %2934
    %v2937 = vsel %vm2711, %v2696, %v2927
    %v2938 = vsel %vm189, %v2937, %v2931
    %v2939 = vsel %vm2714, %v2938, %v2935
    %v2941 = vrot.slane %v2697, 1
    %2942 = vrot.lane.b32.xlu0 %v2941, 4
    %v2943 = vpop.permute.xlu0 %2942
    %v2945 = vrot.slane %v2697, 2
    %2946 = vrot.lane.b32.xlu0 %v2945, 8
    %v2947 = vpop.permute.xlu0 %2946
    %v2949 = vrot.slane %v2697, 3
    %2950 = vrot.lane.b32.xlu0 %v2949, 12
    %v2951 = vpop.permute.xlu0 %2950
    %v2953 = vsel %vm2711, %v2697, %v2943
    %v2954 = vsel %vm189, %v2953, %v2947
    %v2955 = vsel %vm2714, %v2954, %v2951
    %2957 = vrot.lane.b32.xlu0 %v2731, 16
    %v2958 = vpop.permute.xlu0 %2957
    %2961 = vrot.lane.b32.xlu0 %v2747, 32
    %v2962 = vpop.permute.xlu0 %2961
    %2965 = vrot.lane.b32.xlu0 %v2763, 48
    %v2966 = vpop.permute.xlu0 %2965
    %2969 = vrot.lane.b32.xlu0 %v2779, 64
    %v2970 = vpop.permute.xlu0 %2969
    %2973 = vrot.lane.b32.xlu0 %v2795, 80
    %v2974 = vpop.permute.xlu0 %2973
    %2977 = vrot.lane.b32.xlu0 %v2811, 96
    %v2978 = vpop.permute.xlu0 %2977
    %2981 = vrot.lane.b32.xlu0 %v2827, 112
    %v2982 = vpop.permute.xlu0 %2981
    %2985 = vrot.lane.b32.xlu0 %v2859, 16
    %v2986 = vpop.permute.xlu0 %2985
    %2989 = vrot.lane.b32.xlu0 %v2875, 32
    %v2990 = vpop.permute.xlu0 %2989
    %2993 = vrot.lane.b32.xlu0 %v2891, 48
    %v2994 = vpop.permute.xlu0 %2993
    %2997 = vrot.lane.b32.xlu0 %v2907, 64
    %v2998 = vpop.permute.xlu0 %2997
    %3001 = vrot.lane.b32.xlu0 %v2923, 80
    %v3002 = vpop.permute.xlu0 %3001
    %3005 = vrot.lane.b32.xlu0 %v2939, 96
    %v3006 = vpop.permute.xlu0 %3005
    %3009 = vrot.lane.b32.xlu0 %v2955, 112
    %v3010 = vpop.permute.xlu0 %3009
    %vm3012 = vcmask 130048
    %v3013 = vsel %vm3012, %v2715, %v2958
    %vm3014 = vcmask 261120
    %v3015 = vsel %vm3014, %v3013, %v2962
    %vm3016 = vcmask 392192
    %v3017 = vsel %vm3016, %v3015, %v2966
    %vm3018 = vcmask 523264
    %v3019 = vsel %vm3018, %v3017, %v2970
    %vm3020 = vcmask 654336
    %v3021 = vsel %vm3020, %v3019, %v2974
    %vm3022 = vcmask 785408
    %v3023 = vsel %vm3022, %v3021, %v2978
    %vm3024 = vcmask 916480
    %v3025 = vsel %vm3024, %v3023, %v2982
    %v3026 = vsel %vm3012, %v2843, %v2986
    %v3027 = vsel %vm3014, %v3026, %v2990
    %v3028 = vsel %vm3016, %v3027, %v2994
    %v3029 = vsel %vm3018, %v3028, %v2998
    %v3030 = vsel %vm3020, %v3029, %v3002
    %v3031 = vsel %vm3022, %v3030, %v3006
    %v3032 = vsel %vm3024, %v3031, %v3010
    %v3034 = vrot.slane %v3025, 7
    %3035 = vrot.lane.b32.xlu0 %v3034, 120
    %v3036 = vpop.permute.xlu0 %3035
    %v3038 = vrot.slane %v3025, 6
    %3039 = vrot.lane.b32.xlu0 %v3038, 112
    %v3040 = vpop.permute.xlu0 %3039
    %v3042 = vrot.slane %v3025, 5
    %3043 = vrot.lane.b32.xlu0 %v3042, 104
    %v3044 = vpop.permute.xlu0 %3043
    %v3046 = vrot.slane %v3025, 4
    %3047 = vrot.lane.b32.xlu0 %v3046, 96
    %v3048 = vpop.permute.xlu0 %3047
    %v3050 = vrot.slane %v3025, 3
    %3051 = vrot.lane.b32.xlu0 %v3050, 88
    %v3052 = vpop.permute.xlu0 %3051
    %v3054 = vrot.slane %v3025, 2
    %3055 = vrot.lane.b32.xlu0 %v3054, 80
    %v3056 = vpop.permute.xlu0 %3055
    %v3058 = vrot.slane %v3025, 1
    %3059 = vrot.lane.b32.xlu0 %v3058, 72
    %v3060 = vpop.permute.xlu0 %3059
    %3062 = vrot.lane.b32.xlu0 %v3025, 64
    %v3063 = vpop.permute.xlu0 %3062
    %3065 = vrot.lane.b32.xlu0 %v3034, 56
    %v3066 = vpop.permute.xlu0 %3065
    %3068 = vrot.lane.b32.xlu0 %v3038, 48
    %v3069 = vpop.permute.xlu0 %3068
    %3071 = vrot.lane.b32.xlu0 %v3042, 40
    %v3072 = vpop.permute.xlu0 %3071
    %3074 = vrot.lane.b32.xlu0 %v3046, 32
    %v3075 = vpop.permute.xlu0 %3074
    %3077 = vrot.lane.b32.xlu0 %v3050, 24
    %v3078 = vpop.permute.xlu0 %3077
    %3080 = vrot.lane.b32.xlu0 %v3054, 16
    %v3081 = vpop.permute.xlu0 %3080
    %3083 = vrot.lane.b32.xlu0 %v3058, 8
    %v3084 = vpop.permute.xlu0 %3083
    %v3086 = vsel %vm2415, %v3025, %v3036
    %v3087 = vsel %vm2424, %v3086, %v3040
    %v3088 = vsel %vm2433, %v3087, %v3044
    %vm3089 = vcmask 1043456
    %v3090 = vsel %vm3089, %v3088, %v3048
    %vm3091 = vcmask 1044480
    %v3092 = vsel %vm3091, %v3090, %v3052
    %vm3093 = vcmask 1045504
    %v3094 = vsel %vm3093, %v3092, %v3056
    %vm3095 = vcmask 1046528
    %v3096 = vsel %vm3095, %v3094, %v3060
    %v3097 = vsel %vm2415, %v3063, %v3066
    %v3098 = vsel %vm2424, %v3097, %v3069
    %v3099 = vsel %vm2433, %v3098, %v3072
    %v3100 = vsel %vm3089, %v3099, %v3075
    %v3101 = vsel %vm3091, %v3100, %v3078
    %v3102 = vsel %vm3093, %v3101, %v3081
    %v3103 = vsel %vm3095, %v3102, %v3084
    %v3105 = vrot.slane %v3032, 7
    %3106 = vrot.lane.b32.xlu0 %v3105, 120
    %v3107 = vpop.permute.xlu0 %3106
    %v3109 = vrot.slane %v3032, 6
    %3110 = vrot.lane.b32.xlu0 %v3109, 112
    %v3111 = vpop.permute.xlu0 %3110
    %v3113 = vrot.slane %v3032, 5
    %3114 = vrot.lane.b32.xlu0 %v3113, 104
    %v3115 = vpop.permute.xlu0 %3114
    %v3117 = vrot.slane %v3032, 4
    %3118 = vrot.lane.b32.xlu0 %v3117, 96
    %v3119 = vpop.permute.xlu0 %3118
    %v3121 = vrot.slane %v3032, 3
    %3122 = vrot.lane.b32.xlu0 %v3121, 88
    %v3123 = vpop.permute.xlu0 %3122
    %v3125 = vrot.slane %v3032, 2
    %3126 = vrot.lane.b32.xlu0 %v3125, 80
    %v3127 = vpop.permute.xlu0 %3126
    %v3129 = vrot.slane %v3032, 1
    %3130 = vrot.lane.b32.xlu0 %v3129, 72
    %v3131 = vpop.permute.xlu0 %3130
    %3133 = vrot.lane.b32.xlu0 %v3032, 64
    %v3134 = vpop.permute.xlu0 %3133
    %3136 = vrot.lane.b32.xlu0 %v3105, 56
    %v3137 = vpop.permute.xlu0 %3136
    %3139 = vrot.lane.b32.xlu0 %v3109, 48
    %v3140 = vpop.permute.xlu0 %3139
    %3142 = vrot.lane.b32.xlu0 %v3113, 40
    %v3143 = vpop.permute.xlu0 %3142
    %3145 = vrot.lane.b32.xlu0 %v3117, 32
    %v3146 = vpop.permute.xlu0 %3145
    %3148 = vrot.lane.b32.xlu0 %v3121, 24
    %v3149 = vpop.permute.xlu0 %3148
    %3151 = vrot.lane.b32.xlu0 %v3125, 16
    %v3152 = vpop.permute.xlu0 %3151
    %3154 = vrot.lane.b32.xlu0 %v3129, 8
    %v3155 = vpop.permute.xlu0 %3154
    %v3157 = vsel %vm2415, %v3032, %v3107
    %v3158 = vsel %vm2424, %v3157, %v3111
    %v3159 = vsel %vm2433, %v3158, %v3115
    %v3160 = vsel %vm3089, %v3159, %v3119
    %v3161 = vsel %vm3091, %v3160, %v3123
    %v3162 = vsel %vm3093, %v3161, %v3127
    %v3163 = vsel %vm3095, %v3162, %v3131
    %v3164 = vsel %vm2415, %v3134, %v3137
    %v3165 = vsel %vm2424, %v3164, %v3140
    %v3166 = vsel %vm2433, %v3165, %v3143
    %v3167 = vsel %vm3089, %v3166, %v3146
    %v3168 = vsel %vm3091, %v3167, %v3149
    %v3169 = vsel %vm3093, %v3168, %v3152
    %v3170 = vsel %vm3095, %v3169, %v3155
    %v3171 = vld [vmem:[%s10] sm:$0xff]
    %3173 = vset.pattern.permute.xlu0 0
    %3174 = vperm.xlu0 %3173, %v3096
    %v3175 = vpop.permute.xlu0 %3174
    %3178 = vset.pattern.permute.xlu0 0
    %3179 = vperm.xlu0 %3178, %v3103
    %v3180 = vpop.permute.xlu0 %3179
    %3183 = vset.pattern.permute.xlu0 0
    %3184 = vperm.xlu0 %3183, %v3163
    %v3185 = vpop.permute.xlu0 %3184
    %3188 = vset.pattern.permute.xlu0 0
    %3189 = vperm.xlu0 %3188, %v3170
    %v3190 = vpop.permute.xlu0 %3189
    %v3192 = vlaneseq
    %v3193 = vshrl.u32 %v3192, 7
    %v3194 = vsub.s32 0, %v3193
    %v3195 = vrot.slane %v3171, %v3194
    %v3196 = vmul.f32 %v3175, %v3195
    %v3197 = vmul.f32 %v3180, %v3195
    %v3198 = vmul.f32 %v3185, %v3195
    %v3199 = vmul.f32 %v3190, %v3195
    %3200 = vset.pattern.permute.xlu0 1
    %3201 = vperm.xlu0 %3200, %v3096
    %v3202 = vpop.permute.xlu0 %3201
    %3204 = vset.pattern.permute.xlu0 1
    %3205 = vperm.xlu0 %3204, %v3103
    %v3206 = vpop.permute.xlu0 %3205
    %3208 = vset.pattern.permute.xlu0 1
    %3209 = vperm.xlu0 %3208, %v3163
    %v3210 = vpop.permute.xlu0 %3209
    %3212 = vset.pattern.permute.xlu0 1
    %3213 = vperm.xlu0 %3212, %v3170
    %v3214 = vpop.permute.xlu0 %3213
    %v3216 = vlaneseq
    %v3217 = vshrl.u32 %v3216, 7
    %v3218 = vsub.s32 1, %v3217
    %v3219 = vrot.slane %v3171, %v3218
    %v3220 = vmul.f32 %v3202, %v3219
    %v3221 = vmul.f32 %v3206, %v3219
    %v3222 = vmul.f32 %v3210, %v3219
    %v3223 = vmul.f32 %v3214, %v3219
    %v3224 = vadd.f32 %v3196, %v3220
    %v3225 = vadd.f32 %v3197, %v3221
    %v3226 = vadd.f32 %v3198, %v3222
    %v3227 = vadd.f32 %v3199, %v3223
    %3228 = vset.pattern.permute.xlu0 2
    %3229 = vperm.xlu0 %3228, %v3096
    %v3230 = vpop.permute.xlu0 %3229
    %3232 = vset.pattern.permute.xlu0 2
    %3233 = vperm.xlu0 %3232, %v3103
    %v3234 = vpop.permute.xlu0 %3233
    %3236 = vset.pattern.permute.xlu0 2
    %3237 = vperm.xlu0 %3236, %v3163
    %v3238 = vpop.permute.xlu0 %3237
    %3240 = vset.pattern.permute.xlu0 2
    %3241 = vperm.xlu0 %3240, %v3170
    %v3242 = vpop.permute.xlu0 %3241
    %v3244 = vlaneseq
    %v3245 = vshrl.u32 %v3244, 7
    %v3246 = vsub.s32 2, %v3245
    %v3247 = vrot.slane %v3171, %v3246
    %v3248 = vmul.f32 %v3230, %v3247
    %v3249 = vmul.f32 %v3234, %v3247
    %v3250 = vmul.f32 %v3238, %v3247
    %v3251 = vmul.f32 %v3242, %v3247
    %v3252 = vadd.f32 %v3224, %v3248
    %v3253 = vadd.f32 %v3225, %v3249
    %v3254 = vadd.f32 %v3226, %v3250
    %v3255 = vadd.f32 %v3227, %v3251
    %3256 = vset.pattern.permute.xlu0 3
    %3257 = vperm.xlu0 %3256, %v3096
    %v3258 = vpop.permute.xlu0 %3257
    %3260 = vset.pattern.permute.xlu0 3
    %3261 = vperm.xlu0 %3260, %v3103
    %v3262 = vpop.permute.xlu0 %3261
    %3264 = vset.pattern.permute.xlu0 3
    %3265 = vperm.xlu0 %3264, %v3163
    %v3266 = vpop.permute.xlu0 %3265
    %3268 = vset.pattern.permute.xlu0 3
    %3269 = vperm.xlu0 %3268, %v3170
    %v3270 = vpop.permute.xlu0 %3269
    %v3272 = vlaneseq
    %v3273 = vshrl.u32 %v3272, 7
    %v3274 = vsub.s32 3, %v3273
    %v3275 = vrot.slane %v3171, %v3274
    %v3276 = vmul.f32 %v3258, %v3275
    %v3277 = vmul.f32 %v3262, %v3275
    %v3278 = vmul.f32 %v3266, %v3275
    %v3279 = vmul.f32 %v3270, %v3275
    %v3280 = vadd.f32 %v3252, %v3276
    %v3281 = vadd.f32 %v3253, %v3277
    %v3282 = vadd.f32 %v3254, %v3278
    %v3283 = vadd.f32 %v3255, %v3279
    %3284 = vset.pattern.permute.xlu0 4
    %3285 = vperm.xlu0 %3284, %v3096
    %v3286 = vpop.permute.xlu0 %3285
    %3288 = vset.pattern.permute.xlu0 4
    %3289 = vperm.xlu0 %3288, %v3103
    %v3290 = vpop.permute.xlu0 %3289
    %3292 = vset.pattern.permute.xlu0 4
    %3293 = vperm.xlu0 %3292, %v3163
    %v3294 = vpop.permute.xlu0 %3293
    %3296 = vset.pattern.permute.xlu0 4
    %3297 = vperm.xlu0 %3296, %v3170
    %v3298 = vpop.permute.xlu0 %3297
    %v3300 = vlaneseq
    %v3301 = vshrl.u32 %v3300, 7
    %v3302 = vsub.s32 4, %v3301
    %v3303 = vrot.slane %v3171, %v3302
    %v3304 = vmul.f32 %v3286, %v3303
    %v3305 = vmul.f32 %v3290, %v3303
    %v3306 = vmul.f32 %v3294, %v3303
    %v3307 = vmul.f32 %v3298, %v3303
    %v3308 = vadd.f32 %v3280, %v3304
    %v3309 = vadd.f32 %v3281, %v3305
    %v3310 = vadd.f32 %v3282, %v3306
    %v3311 = vadd.f32 %v3283, %v3307
    %3312 = vset.pattern.permute.xlu0 5
    %3313 = vperm.xlu0 %3312, %v3096
    %v3314 = vpop.permute.xlu0 %3313
    %3316 = vset.pattern.permute.xlu0 5
    %3317 = vperm.xlu0 %3316, %v3103
    %v3318 = vpop.permute.xlu0 %3317
    %3320 = vset.pattern.permute.xlu0 5
    %3321 = vperm.xlu0 %3320, %v3163
    %v3322 = vpop.permute.xlu0 %3321
    %3324 = vset.pattern.permute.xlu0 5
    %3325 = vperm.xlu0 %3324, %v3170
    %v3326 = vpop.permute.xlu0 %3325
    %v3328 = vlaneseq
    %v3329 = vshrl.u32 %v3328, 7
    %v3330 = vsub.s32 5, %v3329
    %v3331 = vrot.slane %v3171, %v3330
    %v3332 = vmul.f32 %v3314, %v3331
    %v3333 = vmul.f32 %v3318, %v3331
    %v3334 = vmul.f32 %v3322, %v3331
    %v3335 = vmul.f32 %v3326, %v3331
    %v3336 = vadd.f32 %v3308, %v3332
    %v3337 = vadd.f32 %v3309, %v3333
    %v3338 = vadd.f32 %v3310, %v3334
    %v3339 = vadd.f32 %v3311, %v3335
    %3340 = vset.pattern.permute.xlu0 6
    %3341 = vperm.xlu0 %3340, %v3096
    %v3342 = vpop.permute.xlu0 %3341
    %3344 = vset.pattern.permute.xlu0 6
    %3345 = vperm.xlu0 %3344, %v3103
    %v3346 = vpop.permute.xlu0 %3345
    %3348 = vset.pattern.permute.xlu0 6
    %3349 = vperm.xlu0 %3348, %v3163
    %v3350 = vpop.permute.xlu0 %3349
    %3352 = vset.pattern.permute.xlu0 6
    %3353 = vperm.xlu0 %3352, %v3170
    %v3354 = vpop.permute.xlu0 %3353
    %v3356 = vlaneseq
    %v3357 = vshrl.u32 %v3356, 7
    %v3358 = vsub.s32 6, %v3357
    %v3359 = vrot.slane %v3171, %v3358
    %v3360 = vmul.f32 %v3342, %v3359
    %v3361 = vmul.f32 %v3346, %v3359
    %v3362 = vmul.f32 %v3350, %v3359
    %v3363 = vmul.f32 %v3354, %v3359
    %v3364 = vadd.f32 %v3336, %v3360
    %v3365 = vadd.f32 %v3337, %v3361
    %v3366 = vadd.f32 %v3338, %v3362
    %v3367 = vadd.f32 %v3339, %v3363
    %3368 = vset.pattern.permute.xlu0 7
    %3369 = vperm.xlu0 %3368, %v3096
    %v3370 = vpop.permute.xlu0 %3369
    %3372 = vset.pattern.permute.xlu0 7
    %3373 = vperm.xlu0 %3372, %v3103
    %v3374 = vpop.permute.xlu0 %3373
    %3376 = vset.pattern.permute.xlu0 7
    %3377 = vperm.xlu0 %3376, %v3163
    %v3378 = vpop.permute.xlu0 %3377
    %3380 = vset.pattern.permute.xlu0 7
    %3381 = vperm.xlu0 %3380, %v3170
    %v3382 = vpop.permute.xlu0 %3381
    %v3384 = vlaneseq
    %v3385 = vshrl.u32 %v3384, 7
    %v3386 = vsub.s32 7, %v3385
    %v3387 = vrot.slane %v3171, %v3386
    %v3388 = vmul.f32 %v3370, %v3387
    %v3389 = vmul.f32 %v3374, %v3387
    %v3390 = vmul.f32 %v3378, %v3387
    %v3391 = vmul.f32 %v3382, %v3387
    %v3392 = vadd.f32 %v3364, %v3388
    %v3393 = vadd.f32 %v3365, %v3389
    %v3394 = vadd.f32 %v3366, %v3390
    %v3395 = vadd.f32 %v3367, %v3391
    %v3396 = vld [vmem:[%s11] sm:$0x1]
    %v3398 = vlaneseq
    %v3399 = vshrl.u32 %v3398, 7
    %v3400 = vsub.s32 0, %v3399
    %v3401 = vrot.slane %v3396, %v3400
    %v3403 = vadd.f32 %v3392, %v3401
    %v3404 = vadd.f32 %v3393, %v3401
    %v3405 = vadd.f32 %v3394, %v3401
    %v3406 = vadd.f32 %v3395, %v3401
    %vm3407 = vcmask 80896
    %3408 = vst.msk [vmem:[%s12] sm:$0xff] %vm3407, %v3403
    %3409 = vst.msk [vmem:[%s12 + $0x8] sm:$0xff] %vm3407, %v3404
    %3410 = vst.msk [vmem:[%s12 + $0x10] sm:$0xff] %vm3407, %v3405
    %3411 = vst.msk [vmem:[%s12 + $0x18] sm:$0xff] %vm3407, %v3406
    // Predicated region
    $region90: #{tpu_custom_call.1} parent=1 // pred_check
      _
    $region91: #{tpu_custom_call.1} parent=1 // pred_check_branch
      %3413 = sbr.rel (0) target = $region93
    $region92: #{tpu_custom_call.1} parent=1 // pred_region
      _
    $region93: #{tpu_custom_call.1} parent=1 // pred_fallthru
      _
    // Predicated region
    $region94: #{tpu_custom_call.1} parent=1 // pred_check
      _
    $region95: #{tpu_custom_call.1} parent=1 // pred_check_branch
      %3415 = sbr.rel (0) target = $region97
    $region96: #{tpu_custom_call.1} parent=1 // pred_region
      _
    $region97: #{tpu_custom_call.1} parent=1 // pred_fallthru
      _
    %3416 = vsyncpa [#allocation3], 1
    %3417 = vsyncpa [#allocation6], 1
    %3418 = vsyncpa [#allocation15], 1
    %3419 = vsyncpa [#allocation4], 1
    %3420 = vsyncpa [#allocation9], 1
    %3421 = vsyncpa [#allocation13], 1
    %3422 = vsyncpa [#allocation18], 1

</llo_original>
